<compile_context>
chip_gen: v7x
topology: tpu7x:2x2x1
jax: 0.10.0
libtpu: 0.0.40
codegen_flags: <defaults>
</compile_context>

<pallas_src>
import functools

import jax
import jax.numpy as jnp
from jax.experimental import pallas as pl
from jax.experimental.pallas import tpu as pltpu


# ----------------------------------------------------------------------------
# Kernel
# ----------------------------------------------------------------------------
def _fused_forward_kernel(x_ref, w_in_ref,
                          wih1_ref, whh1_ref,
                          wih2_ref, whh2_ref,
                          wv1_ref, wv2_ref,
                          wo1h_ref, wo1v_ref, wo2_ref,
                          bias_ref,
                          o_ref, gx_sc, seq_sc, *, BP, T, H, DOP):
    f32 = jnp.float32
    bf16 = jnp.bfloat16

    # ---- bias slab slices (all 128-lane aligned, loaded once) ----
    off = 0
    b_in = bias_ref[:, off:off + H]; off += H
    b1 = bias_ref[:, off:off + 4 * H]; off += 4 * H
    b2 = bias_ref[:, off:off + 4 * H]; off += 4 * H
    bv1 = bias_ref[:, off:off + 128]; off += 128
    bv2 = bias_ref[:, off:off + 128]; off += 128
    bo1 = bias_ref[:, off:off + H]; off += H
    bo2 = bias_ref[:, off:off + DOP]

    # ---- input_layer + ReLU over the whole (T*BP, Din) slab ----
    xb = x_ref[...].astype(bf16)
    h0 = jax.nn.relu(jnp.dot(xb, w_in_ref[...], preferred_element_type=f32) + b_in)

    # ---- hoisted x-projection of LSTM layer 1 (all T steps in one matmul) ----
    gx_sc[...] = jnp.dot(h0.astype(bf16), wih1_ref[...],
                         preferred_element_type=f32) + b1

    # Recurrence weights: loaded once, remain bf16 & VMEM-resident.
    whh1 = whh1_ref[...]
    wih2 = wih2_ref[...]
    whh2 = whh2_ref[...]
    b2b = jnp.broadcast_to(b2, (BP, 4 * H))  # hoisted broadcast (no per-step bcast)

    def lstm_cell(g, c_prev):
        # PyTorch gate order (i, f, g, o); H is a multiple of 128 -> lane-aligned.
        i = jax.nn.sigmoid(g[:, 0 * H:1 * H])
        f = jax.nn.sigmoid(g[:, 1 * H:2 * H])
        gg = jnp.tanh(g[:, 2 * H:3 * H])
        o = jax.nn.sigmoid(g[:, 3 * H:4 * H])
        c_new = f * c_prev + i * gg
        h_new = o * jnp.tanh(c_new)
        return h_new, c_new

    zeros = jnp.zeros((BP, H), f32)
    h1, c1 = zeros, zeros
    h2, c2 = zeros, zeros

    # ---- interleaved LSTM recurrences (static T -> fully unrolled) ----
    # Within one iteration the layer-1(t) and layer-2(t) matmuls share only the
    # h1_t dependency; across iterations layer-2(t) overlaps layer-1(t+1).
    for t in range(T):
        g1 = gx_sc[pl.ds(t * BP, BP), :] + jnp.dot(
            h1.astype(bf16), whh1, preferred_element_type=f32)
        h1, c1 = lstm_cell(g1, c1)

        g2 = (jnp.dot(h1.astype(bf16), wih2, preferred_element_type=f32)
              + jnp.dot(h2.astype(bf16), whh2, preferred_element_type=f32)
              + b2b)
        h2, c2 = lstm_cell(g2, c2)
        seq_sc[pl.ds(t * BP, BP), :] = h2          # aligned (8, H) f32 tile store

    # ---- voice_embedding + concat + output_layer over the whole slab ----
    # concat([h, v]) @ Wo1 is rewritten as h @ Wo1[:H] + v @ Wo1[H:].
    s = seq_sc[...].astype(bf16)                                     # (T*BP, H)
    v = jax.nn.relu(jnp.dot(s, wv1_ref[...], preferred_element_type=f32) + bv1)
    v = jnp.tanh(jnp.dot(v.astype(bf16), wv2_ref[...],
                         preferred_element_type=f32) + bv2)          # (T*BP, 128)
    z = jax.nn.relu(jnp.dot(s, wo1h_ref[...], preferred_element_type=f32)
                    + jnp.dot(v.astype(bf16), wo1v_ref[...],
                              preferred_element_type=f32)
                    + bo1)                                           # (T*BP, H)
    # TODO(synk): nn.Dropout(0.3 / 0.2) are identity at inference; training-mode
    # dropout is not implemented.
    o_ref[...] = (jnp.dot(z.astype(bf16), wo2_ref[...],
                          preferred_element_type=f32)
                  + bo2).astype(o_ref.dtype)                         # (T*BP, DOP)


# ----------------------------------------------------------------------------
# Wrapper (pallas_call plumbing)
# ----------------------------------------------------------------------------
def _fused_forward(x2, packed, *, BP, T, H, DOP):
    M = T * BP
    kernel = functools.partial(_fused_forward_kernel, BP=BP, T=T, H=H, DOP=DOP)

    args = (x2, packed["w_in"],
            packed["wih1"], packed["whh1"],
            packed["wih2"], packed["whh2"],
            packed["wv1"], packed["wv2"],
            packed["wo1h"], packed["wo1v"], packed["wo2"],
            packed["bias"])

    def full(a):
        return pl.BlockSpec(a.shape, lambda i: (0,) * a.ndim)

    return pl.pallas_call(
        kernel,
        out_shape=jax.ShapeDtypeStruct((M, DOP), jnp.float32),
        grid=(1,),
        in_specs=[full(a) for a in args],
        out_specs=pl.BlockSpec((M, DOP), lambda i: (0, 0)),
        scratch_shapes=[pltpu.VMEM((M, 4 * H), jnp.float32),   # hoisted layer-1 gates
                        pltpu.VMEM((M, H), jnp.float32)],      # layer-2 hidden sequence
        compiler_params=pltpu.CompilerParams(
            dimension_semantics=("arbitrary",)),
    )(*args)


@functools.partial(jax.jit, static_argnames=("output_dim",))
def damus_voice_forward(x, packed, output_dim):
    """x: (B, T, input_dim) float32  ->  (B, T, output_dim) float32."""
    B, T, Din = x.shape
    H = packed["whh1"].shape[0]
    DinP = packed["w_in"].shape[0]
    DOP = packed["wo2"].shape[1]
    BP = ((B + 7) // 8) * 8            # pad batch to a full f32 sublane tile

    # Layout plumbing: time-major, batch- and feature-padded rows in;
    # lane-dense output slab out (sliced back on the host side).
    xp = jnp.pad(x, ((0, BP - B), (0, 0), (0, DinP - Din)))
    x2 = jnp.transpose(xp, (1, 0, 2)).reshape(T * BP, DinP)

    out2 = _fused_forward(x2, packed, BP=BP, T=T, H=H, DOP=DOP)
    out = out2.reshape(T, BP, DOP)[:, :B, :output_dim]
    return jnp.transpose(out, (1, 0, 2))


# ----------------------------------------------------------------------------
# Parameter construction & packing (synthetic; mirrors module shapes)
# ----------------------------------------------------------------------------
def _xavier_uniform(key, fan_in, fan_out):
    limit = (6.0 / (fan_in + fan_out)) ** 0.5
    return jax.random.uniform(key, (fan_in, fan_out), jnp.float32, -limit, limit)


def _orthogonal_T(key, rows, cols):
    # semi-orthogonal (rows, cols) like torch.nn.init.orthogonal_, stored transposed
    a = jax.random.normal(key, (rows, cols), jnp.float32)
    q, _ = jnp.linalg.qr(a)
    return q.T  # (cols, rows)


def make_params(key, input_dim=19, hidden_dim=256, output_dim=80):
    ks = jax.random.split(key, 16)
    H = hidden_dim
    bf16 = jnp.bfloat16
    p = {}
    # input layer (weights bf16 for halved HBM traffic; biases stay f32)
    p["w_in"] = _xavier_uniform(ks[0], input_dim, H).astype(bf16)
    p["b_in"] = jnp.zeros((1, H), jnp.float32)
    # lstm1 / lstm2: W_ih (4H, in) stored transposed (in, 4H); combined bias b_ih+b_hh
    p["l1_wih"] = _orthogonal_T(ks[1], 4 * H, H).astype(bf16)
    p["l1_whh"] = _orthogonal_T(ks[2], 4 * H, H).astype(bf16)
    p["l1_b"] = (jax.random.normal(ks[3], (1, 4 * H), jnp.float32)
                 + jax.random.normal(ks[4], (1, 4 * H), jnp.float32))
    p["l2_wih"] = _orthogonal_T(ks[5], 4 * H, H).astype(bf16)
    p["l2_whh"] = _orthogonal_T(ks[6], 4 * H, H).astype(bf16)
    p["l2_b"] = (jax.random.normal(ks[7], (1, 4 * H), jnp.float32)
                 + jax.random.normal(ks[8], (1, 4 * H), jnp.float32))
    # voice embedding: Linear(H,128) ReLU Linear(128,64) Tanh
    p["wv1"] = _xavier_uniform(ks[9], H, 128).astype(bf16)
    p["bv1"] = jnp.zeros((1, 128), jnp.float32)
    p["wv2"] = _xavier_uniform(ks[10], 128, 64).astype(bf16)
    p["bv2"] = jnp.zeros((1, 64), jnp.float32)
    # output layer: Linear(H+64, H) ReLU Dropout Linear(H, output_dim)
    wo1 = _xavier_uniform(ks[11], H + 64, H)
    p["wo1h"] = wo1[:H].astype(bf16)
    p["wo1v"] = wo1[H:].astype(bf16)
    p["bo1"] = jnp.zeros((1, H), jnp.float32)
    p["wo2"] = _xavier_uniform(ks[12], H, output_dim).astype(bf16)
    p["bo2"] = jnp.zeros((1, output_dim), jnp.float32)
    return p


def pack_params(p):
    """Pad small weights to lane-dense shapes and pack biases into one slab."""
    bf16 = jnp.bfloat16
    Din, H = p["w_in"].shape
    Dout = p["wo2"].shape[1]
    DinP = ((Din + 31) // 32) * 32
    DOP = ((Dout + 127) // 128) * 128

    w_in = jnp.pad(p["w_in"], ((0, DinP - Din), (0, 0)))
    wv2 = jnp.pad(p["wv2"], ((0, 0), (0, 128 - p["wv2"].shape[1])))     # (128,128)
    bv2 = jnp.pad(p["bv2"], ((0, 0), (0, 128 - p["bv2"].shape[1])))     # (1,128)
    wo1v = jnp.pad(p["wo1v"], ((0, 128 - p["wo1v"].shape[0]), (0, 0)))  # (128,H)
    wo2 = jnp.pad(p["wo2"], ((0, 0), (0, DOP - Dout)))                  # (H,DOP)
    bo2 = jnp.pad(p["bo2"], ((0, 0), (0, DOP - Dout)))                  # (1,DOP)

    bias = jnp.concatenate(
        [p["b_in"], p["l1_b"], p["l2_b"], p["bv1"], bv2, p["bo1"], bo2],
        axis=1).astype(jnp.float32)                                     # (1,10H+256+DOP)

    return {
        "w_in": w_in.astype(bf16),
        "wih1": p["l1_wih"], "whh1": p["l1_whh"],
        "wih2": p["l2_wih"], "whh2": p["l2_whh"],
        "wv1": p["wv1"], "wv2": wv2.astype(bf16),
        "wo1h": p["wo1h"], "wo1v": wo1v.astype(bf16), "wo2": wo2.astype(bf16),
        "bias": bias,
    }


# ----------------------------------------------------------------------------
# Pure-JAX reference (same bf16-input / f32-accumulate numerics as the kernel)
# ----------------------------------------------------------------------------
def ref_forward(x, p):
    f32, bf16 = jnp.float32, jnp.bfloat16
    B, T, _ = x.shape
    H = p["w_in"].shape[1]

    def bdot(a, w):
        return jnp.dot(a.astype(bf16), w.astype(bf16), preferred_element_type=f32)

    h0 = jax.nn.relu(bdot(x, p["w_in"]) + p["b_in"][0])

    def lstm(seq, wih, whh, b):
        def step(carry, x_t):
            hp, cp = carry
            g = bdot(x_t, wih) + bdot(hp, whh) + b[0]
            i = jax.nn.sigmoid(g[:, :H])
            f = jax.nn.sigmoid(g[:, H:2 * H])
            gg = jnp.tanh(g[:, 2 * H:3 * H])
            o = jax.nn.sigmoid(g[:, 3 * H:])
            c = f * cp + i * gg
            hh = o * jnp.tanh(c)
            return (hh, c), hh

        xs = jnp.swapaxes(seq, 0, 1)
        _, ys = jax.lax.scan(
            step, (jnp.zeros((B, H), f32), jnp.zeros((B, H), f32)), xs)
        return jnp.swapaxes(ys, 0, 1)

    s = lstm(h0, p["l1_wih"], p["l1_whh"], p["l1_b"])
    s = lstm(s, p["l2_wih"], p["l2_whh"], p["l2_b"])
    v = jax.nn.relu(bdot(s, p["wv1"]) + p["bv1"][0])
    v = jnp.tanh(bdot(v, p["wv2"]) + p["bv2"][0])
    z = jax.nn.relu(bdot(s, p["wo1h"]) + bdot(v, p["wo1v"]) + p["bo1"][0])
    return bdot(z, p["wo2"]) + p["bo2"][0]


# ----------------------------------------------------------------------------
if __name__ == "__main__":
    key = jax.random.PRNGKey(0)
    k_p, k_x = jax.random.split(key)

    B, T, INPUT_DIM, HIDDEN_DIM, OUTPUT_DIM = 2, 8, 19, 256, 80
    raw = make_params(k_p, INPUT_DIM, HIDDEN_DIM, OUTPUT_DIM)
    packed = pack_params(raw)
    x = jax.random.normal(k_x, (B, T, INPUT_DIM), jnp.float32)

    out = jax.block_until_ready(damus_voice_forward(x, packed, OUTPUT_DIM))
    assert out.shape == (B, T, OUTPUT_DIM), out.shape

    ref = jax.block_until_ready(ref_forward(x, raw))
    err = float(jnp.max(jnp.abs(out - ref)))
    if err > 1e-2:
        raise AssertionError(f"kernel/reference mismatch: max abs err = {err}")

    print("KERNEL_OK")
</pallas_src>

<mosaic_0001>
module attributes {stable_mosaic.version = 11 : i64} {
  func.func @_fused_forward_kernel(%arg0: i32, %arg1: memref<64x32xf32, #tpu.memory_space<vmem>>, %arg2: memref<32x256xbf16, #tpu.memory_space<vmem>>, %arg3: memref<256x1024xbf16, #tpu.memory_space<vmem>>, %arg4: memref<256x1024xbf16, #tpu.memory_space<vmem>>, %arg5: memref<256x1024xbf16, #tpu.memory_space<vmem>>, %arg6: memref<256x1024xbf16, #tpu.memory_space<vmem>>, %arg7: memref<256x128xbf16, #tpu.memory_space<vmem>>, %arg8: memref<128x128xbf16, #tpu.memory_space<vmem>>, %arg9: memref<256x256xbf16, #tpu.memory_space<vmem>>, %arg10: memref<128x256xbf16, #tpu.memory_space<vmem>>, %arg11: memref<256x128xbf16, #tpu.memory_space<vmem>>, %arg12: memref<1x2944xf32, #tpu.memory_space<vmem>>, %arg13: memref<64x128xf32, #tpu.memory_space<vmem>>, %arg14: memref<64x1024xf32, #tpu.memory_space<vmem>>, %arg15: memref<64x256xf32, #tpu.memory_space<vmem>>) attributes {dimension_semantics = [#tpu.dimension_semantics<arbitrary>], iteration_bounds = array<i64: 1>, scalar_prefetch = 0 : i64, scratch_operands = 2 : i64, tpu.core_type = #tpu.core_type<tc>, window_params = [{pipeline_mode = #tpu.pipeline_mode<synchronous>, transform_indices = @transform_0, window_bounds = array<i64: 64, 32>}, {pipeline_mode = #tpu.pipeline_mode<synchronous>, transform_indices = @transform_1, window_bounds = array<i64: 32, 256>}, {pipeline_mode = #tpu.pipeline_mode<synchronous>, transform_indices = @transform_2, window_bounds = array<i64: 256, 1024>}, {pipeline_mode = #tpu.pipeline_mode<synchronous>, transform_indices = @transform_3, window_bounds = array<i64: 256, 1024>}, {pipeline_mode = #tpu.pipeline_mode<synchronous>, transform_indices = @transform_4, window_bounds = array<i64: 256, 1024>}, {pipeline_mode = #tpu.pipeline_mode<synchronous>, transform_indices = @transform_5, window_bounds = array<i64: 256, 1024>}, {pipeline_mode = #tpu.pipeline_mode<synchronous>, transform_indices = @transform_6, window_bounds = array<i64: 256, 128>}, {pipeline_mode = #tpu.pipeline_mode<synchronous>, transform_indices = @transform_7, window_bounds = array<i64: 128, 128>}, {pipeline_mode = #tpu.pipeline_mode<synchronous>, transform_indices = @transform_8, window_bounds = array<i64: 256, 256>}, {pipeline_mode = #tpu.pipeline_mode<synchronous>, transform_indices = @transform_9, window_bounds = array<i64: 128, 256>}, {pipeline_mode = #tpu.pipeline_mode<synchronous>, transform_indices = @transform_10, window_bounds = array<i64: 256, 128>}, {pipeline_mode = #tpu.pipeline_mode<synchronous>, transform_indices = @transform_11, window_bounds = array<i64: 1, 2944>}, {pipeline_mode = #tpu.pipeline_mode<synchronous>, transform_indices = @transform_12, window_bounds = array<i64: 64, 128>}]} {
    %c0 = arith.constant 0 : index
    %c0_0 = arith.constant 0 : index
    %0 = vector.load %arg12[%c0, %c0_0] : memref<1x2944xf32, #tpu.memory_space<vmem>>, vector<1x256xf32>
    %c0_1 = arith.constant 0 : index
    %c256 = arith.constant 256 : index
    %1 = vector.load %arg12[%c0_1, %c256] : memref<1x2944xf32, #tpu.memory_space<vmem>>, vector<1x1024xf32>
    %c0_2 = arith.constant 0 : index
    %c1280 = arith.constant 1280 : index
    %2 = vector.load %arg12[%c0_2, %c1280] : memref<1x2944xf32, #tpu.memory_space<vmem>>, vector<1x1024xf32>
    %c0_3 = arith.constant 0 : index
    %c2304 = arith.constant 2304 : index
    %3 = vector.load %arg12[%c0_3, %c2304] : memref<1x2944xf32, #tpu.memory_space<vmem>>, vector<1x128xf32>
    %c0_4 = arith.constant 0 : index
    %c2432 = arith.constant 2432 : index
    %4 = vector.load %arg12[%c0_4, %c2432] : memref<1x2944xf32, #tpu.memory_space<vmem>>, vector<1x128xf32>
    %c0_5 = arith.constant 0 : index
    %c2560 = arith.constant 2560 : index
    %5 = vector.load %arg12[%c0_5, %c2560] : memref<1x2944xf32, #tpu.memory_space<vmem>>, vector<1x256xf32>
    %c0_6 = arith.constant 0 : index
    %c2816 = arith.constant 2816 : index
    %6 = vector.load %arg12[%c0_6, %c2816] : memref<1x2944xf32, #tpu.memory_space<vmem>>, vector<1x128xf32>
    %c0_7 = arith.constant 0 : index
    %c0_8 = arith.constant 0 : index
    %7 = vector.load %arg1[%c0_7, %c0_8] : memref<64x32xf32, #tpu.memory_space<vmem>>, vector<64x32xf32>
    %8 = arith.truncf %7 : vector<64x32xf32> to vector<64x32xbf16>
    %c0_9 = arith.constant 0 : index
    %c0_10 = arith.constant 0 : index
    %9 = vector.load %arg2[%c0_9, %c0_10] : memref<32x256xbf16, #tpu.memory_space<vmem>>, vector<32x256xbf16>
    %cst = arith.constant dense<0.000000e+00> : vector<64x256xf32>
    %10 = tpu.matmul %8, %9, %cst {dimension_numbers = #tpu.dot_dimension_numbers<[1], [0], [0], [1], [0, 0, 1, 1], [], []>} : vector<64x32xbf16>, vector<32x256xbf16>, vector<64x256xf32> -> vector<64x256xf32>
    %11 = vector.broadcast %0 : vector<1x256xf32> to vector<64x256xf32>
    %12 = arith.addf %10, %11 : vector<64x256xf32>
    %cst_11 = arith.constant 0.000000e+00 : f32
    %13 = vector.broadcast %cst_11 : f32 to vector<64x256xf32>
    %14 = arith.maximumf %12, %13 : vector<64x256xf32>
    %15 = arith.truncf %14 : vector<64x256xf32> to vector<64x256xbf16>
    %c0_12 = arith.constant 0 : index
    %c0_13 = arith.constant 0 : index
    %16 = vector.load %arg3[%c0_12, %c0_13] : memref<256x1024xbf16, #tpu.memory_space<vmem>>, vector<256x1024xbf16>
    %cst_14 = arith.constant dense<0.000000e+00> : vector<64x1024xf32>
    %17 = tpu.matmul %15, %16, %cst_14 {dimension_numbers = #tpu.dot_dimension_numbers<[1], [0], [0], [1], [0, 0, 1, 1], [], []>} : vector<64x256xbf16>, vector<256x1024xbf16>, vector<64x1024xf32> -> vector<64x1024xf32>
    %18 = vector.broadcast %1 : vector<1x1024xf32> to vector<64x1024xf32>
    %19 = arith.addf %17, %18 : vector<64x1024xf32>
    %c0_15 = arith.constant 0 : index
    %c0_16 = arith.constant 0 : index
    %20 = vector.load %arg14[%c0_15, %c0_16] : memref<64x1024xf32, #tpu.memory_space<vmem>>, vector<64x1024xf32>
    tpu.vector_store %arg14[%c0_15, %c0_16], %19 {strides = array<i32>} : memref<64x1024xf32, #tpu.memory_space<vmem>>, vector<64x1024xf32>,
    %c0_17 = arith.constant 0 : index
    %c0_18 = arith.constant 0 : index
    %21 = vector.load %arg4[%c0_17, %c0_18] : memref<256x1024xbf16, #tpu.memory_space<vmem>>, vector<256x1024xbf16>
    %c0_19 = arith.constant 0 : index
    %c0_20 = arith.constant 0 : index
    %22 = vector.load %arg5[%c0_19, %c0_20] : memref<256x1024xbf16, #tpu.memory_space<vmem>>, vector<256x1024xbf16>
    %c0_21 = arith.constant 0 : index
    %c0_22 = arith.constant 0 : index
    %23 = vector.load %arg6[%c0_21, %c0_22] : memref<256x1024xbf16, #tpu.memory_space<vmem>>, vector<256x1024xbf16>
    %24 = vector.shape_cast %2 : vector<1x1024xf32> to vector<1x1024xf32>
    %25 = vector.broadcast %24 : vector<1x1024xf32> to vector<8x1024xf32>
    %cst_23 = arith.constant 0.000000e+00 : f32
    %26 = vector.broadcast %cst_23 : f32 to vector<8x256xf32>
    %c0_24 = arith.constant 0 : index
    %c0_25 = arith.constant 0 : index
    %27 = vector.load %arg14[%c0_24, %c0_25] : memref<64x1024xf32, #tpu.memory_space<vmem>>, vector<8x1024xf32>
    %28 = arith.truncf %26 : vector<8x256xf32> to vector<8x256xbf16>
    %cst_26 = arith.constant dense<0.000000e+00> : vector<8x1024xf32>
    %29 = tpu.matmul %28, %21, %cst_26 {dimension_numbers = #tpu.dot_dimension_numbers<[1], [0], [0], [1], [0, 0, 1, 1], [], []>} : vector<8x256xbf16>, vector<256x1024xbf16>, vector<8x1024xf32> -> vector<8x1024xf32>
    %30 = arith.addf %27, %29 : vector<8x1024xf32>
    %31 = vector.extract_strided_slice %30 {offsets = [0, 0], sizes = [8, 256], strides = [1, 1]} : vector<8x1024xf32> to vector<8x256xf32>
    %32 = arith.negf %31 : vector<8x256xf32>
    %33 = math.exp %32 : vector<8x256xf32>
    %cst_27 = arith.constant 1.000000e+00 : f32
    %34 = vector.broadcast %cst_27 : f32 to vector<8x256xf32>
    %35 = arith.addf %34, %33 : vector<8x256xf32>
    %36 = arith.divf %34, %35 : vector<8x256xf32>
    %37 = vector.extract_strided_slice %30 {offsets = [0, 256], sizes = [8, 256], strides = [1, 1]} : vector<8x1024xf32> to vector<8x256xf32>
    %38 = arith.negf %37 : vector<8x256xf32>
    %39 = math.exp %38 : vector<8x256xf32>
    %cst_28 = arith.constant 1.000000e+00 : f32
    %40 = vector.broadcast %cst_28 : f32 to vector<8x256xf32>
    %41 = arith.addf %40, %39 : vector<8x256xf32>
    %42 = arith.divf %40, %41 : vector<8x256xf32>
    %43 = vector.extract_strided_slice %30 {offsets = [0, 512], sizes = [8, 256], strides = [1, 1]} : vector<8x1024xf32> to vector<8x256xf32>
    %44 = math.tanh %43 : vector<8x256xf32>
    %45 = vector.extract_strided_slice %30 {offsets = [0, 768], sizes = [8, 256], strides = [1, 1]} : vector<8x1024xf32> to vector<8x256xf32>
    %46 = arith.negf %45 : vector<8x256xf32>
    %47 = math.exp %46 : vector<8x256xf32>
    %cst_29 = arith.constant 1.000000e+00 : f32
    %48 = vector.broadcast %cst_29 : f32 to vector<8x256xf32>
    %49 = arith.addf %48, %47 : vector<8x256xf32>
    %50 = arith.divf %48, %49 : vector<8x256xf32>
    %51 = arith.mulf %42, %26 : vector<8x256xf32>
    %52 = arith.mulf %36, %44 : vector<8x256xf32>
    %53 = arith.addf %51, %52 : vector<8x256xf32>
    %54 = math.tanh %53 : vector<8x256xf32>
    %55 = arith.mulf %50, %54 : vector<8x256xf32>
    %56 = arith.truncf %55 : vector<8x256xf32> to vector<8x256xbf16>
    %cst_30 = arith.constant dense<0.000000e+00> : vector<8x1024xf32>
    %57 = tpu.matmul %56, %22, %cst_30 {dimension_numbers = #tpu.dot_dimension_numbers<[1], [0], [0], [1], [0, 0, 1, 1], [], []>} : vector<8x256xbf16>, vector<256x1024xbf16>, vector<8x1024xf32> -> vector<8x1024xf32>
    %58 = arith.truncf %26 : vector<8x256xf32> to vector<8x256xbf16>
    %cst_31 = arith.constant dense<0.000000e+00> : vector<8x1024xf32>
    %59 = tpu.matmul %58, %23, %cst_31 {dimension_numbers = #tpu.dot_dimension_numbers<[1], [0], [0], [1], [0, 0, 1, 1], [], []>} : vector<8x256xbf16>, vector<256x1024xbf16>, vector<8x1024xf32> -> vector<8x1024xf32>
    %60 = arith.addf %57, %59 : vector<8x1024xf32>
    %61 = arith.addf %60, %25 : vector<8x1024xf32>
    %62 = vector.extract_strided_slice %61 {offsets = [0, 0], sizes = [8, 256], strides = [1, 1]} : vector<8x1024xf32> to vector<8x256xf32>
    %63 = arith.negf %62 : vector<8x256xf32>
    %64 = math.exp %63 : vector<8x256xf32>
    %cst_32 = arith.constant 1.000000e+00 : f32
    %65 = vector.broadcast %cst_32 : f32 to vector<8x256xf32>
    %66 = arith.addf %65, %64 : vector<8x256xf32>
    %67 = arith.divf %65, %66 : vector<8x256xf32>
    %68 = vector.extract_strided_slice %61 {offsets = [0, 256], sizes = [8, 256], strides = [1, 1]} : vector<8x1024xf32> to vector<8x256xf32>
    %69 = arith.negf %68 : vector<8x256xf32>
    %70 = math.exp %69 : vector<8x256xf32>
    %cst_33 = arith.constant 1.000000e+00 : f32
    %71 = vector.broadcast %cst_33 : f32 to vector<8x256xf32>
    %72 = arith.addf %71, %70 : vector<8x256xf32>
    %73 = arith.divf %71, %72 : vector<8x256xf32>
    %74 = vector.extract_strided_slice %61 {offsets = [0, 512], sizes = [8, 256], strides = [1, 1]} : vector<8x1024xf32> to vector<8x256xf32>
    %75 = math.tanh %74 : vector<8x256xf32>
    %76 = vector.extract_strided_slice %61 {offsets = [0, 768], sizes = [8, 256], strides = [1, 1]} : vector<8x1024xf32> to vector<8x256xf32>
    %77 = arith.negf %76 : vector<8x256xf32>
    %78 = math.exp %77 : vector<8x256xf32>
    %cst_34 = arith.constant 1.000000e+00 : f32
    %79 = vector.broadcast %cst_34 : f32 to vector<8x256xf32>
    %80 = arith.addf %79, %78 : vector<8x256xf32>
    %81 = arith.divf %79, %80 : vector<8x256xf32>
    %82 = arith.mulf %73, %26 : vector<8x256xf32>
    %83 = arith.mulf %67, %75 : vector<8x256xf32>
    %84 = arith.addf %82, %83 : vector<8x256xf32>
    %85 = math.tanh %84 : vector<8x256xf32>
    %86 = arith.mulf %81, %85 : vector<8x256xf32>
    %c0_35 = arith.constant 0 : index
    %c0_36 = arith.constant 0 : index
    %87 = vector.load %arg15[%c0_35, %c0_36] : memref<64x256xf32, #tpu.memory_space<vmem>>, vector<8x256xf32>
    tpu.vector_store %arg15[%c0_35, %c0_36], %86 {strides = array<i32>} : memref<64x256xf32, #tpu.memory_space<vmem>>, vector<8x256xf32>,
    %c8 = arith.constant 8 : index
    %c0_37 = arith.constant 0 : index
    %88 = vector.load %arg14[%c8, %c0_37] : memref<64x1024xf32, #tpu.memory_space<vmem>>, vector<8x1024xf32>
    %89 = arith.truncf %55 : vector<8x256xf32> to vector<8x256xbf16>
    %cst_38 = arith.constant dense<0.000000e+00> : vector<8x1024xf32>
    %90 = tpu.matmul %89, %21, %cst_38 {dimension_numbers = #tpu.dot_dimension_numbers<[1], [0], [0], [1], [0, 0, 1, 1], [], []>} : vector<8x256xbf16>, vector<256x1024xbf16>, vector<8x1024xf32> -> vector<8x1024xf32>
    %91 = arith.addf %88, %90 : vector<8x1024xf32>
    %92 = vector.extract_strided_slice %91 {offsets = [0, 0], sizes = [8, 256], strides = [1, 1]} : vector<8x1024xf32> to vector<8x256xf32>
    %93 = arith.negf %92 : vector<8x256xf32>
    %94 = math.exp %93 : vector<8x256xf32>
    %cst_39 = arith.constant 1.000000e+00 : f32
    %95 = vector.broadcast %cst_39 : f32 to vector<8x256xf32>
    %96 = arith.addf %95, %94 : vector<8x256xf32>
    %97 = arith.divf %95, %96 : vector<8x256xf32>
    %98 = vector.extract_strided_slice %91 {offsets = [0, 256], sizes = [8, 256], strides = [1, 1]} : vector<8x1024xf32> to vector<8x256xf32>
    %99 = arith.negf %98 : vector<8x256xf32>
    %100 = math.exp %99 : vector<8x256xf32>
    %cst_40 = arith.constant 1.000000e+00 : f32
    %101 = vector.broadcast %cst_40 : f32 to vector<8x256xf32>
    %102 = arith.addf %101, %100 : vector<8x256xf32>
    %103 = arith.divf %101, %102 : vector<8x256xf32>
    %104 = vector.extract_strided_slice %91 {offsets = [0, 512], sizes = [8, 256], strides = [1, 1]} : vector<8x1024xf32> to vector<8x256xf32>
    %105 = math.tanh %104 : vector<8x256xf32>
    %106 = vector.extract_strided_slice %91 {offsets = [0, 768], sizes = [8, 256], strides = [1, 1]} : vector<8x1024xf32> to vector<8x256xf32>
    %107 = arith.negf %106 : vector<8x256xf32>
    %108 = math.exp %107 : vector<8x256xf32>
    %cst_41 = arith.constant 1.000000e+00 : f32
    %109 = vector.broadcast %cst_41 : f32 to vector<8x256xf32>
    %110 = arith.addf %109, %108 : vector<8x256xf32>
    %111 = arith.divf %109, %110 : vector<8x256xf32>
    %112 = arith.mulf %103, %53 : vector<8x256xf32>
    %113 = arith.mulf %97, %105 : vector<8x256xf32>
    %114 = arith.addf %112, %113 : vector<8x256xf32>
    %115 = math.tanh %114 : vector<8x256xf32>
    %116 = arith.mulf %111, %115 : vector<8x256xf32>
    %117 = arith.truncf %116 : vector<8x256xf32> to vector<8x256xbf16>
    %cst_42 = arith.constant dense<0.000000e+00> : vector<8x1024xf32>
    %118 = tpu.matmul %117, %22, %cst_42 {dimension_numbers = #tpu.dot_dimension_numbers<[1], [0], [0], [1], [0, 0, 1, 1], [], []>} : vector<8x256xbf16>, vector<256x1024xbf16>, vector<8x1024xf32> -> vector<8x1024xf32>
    %119 = arith.truncf %86 : vector<8x256xf32> to vector<8x256xbf16>
    %cst_43 = arith.constant dense<0.000000e+00> : vector<8x1024xf32>
    %120 = tpu.matmul %119, %23, %cst_43 {dimension_numbers = #tpu.dot_dimension_numbers<[1], [0], [0], [1], [0, 0, 1, 1], [], []>} : vector<8x256xbf16>, vector<256x1024xbf16>, vector<8x1024xf32> -> vector<8x1024xf32>
    %121 = arith.addf %118, %120 : vector<8x1024xf32>
    %122 = arith.addf %121, %25 : vector<8x1024xf32>
    %123 = vector.extract_strided_slice %122 {offsets = [0, 0], sizes = [8, 256], strides = [1, 1]} : vector<8x1024xf32> to vector<8x256xf32>
    %124 = arith.negf %123 : vector<8x256xf32>
    %125 = math.exp %124 : vector<8x256xf32>
    %cst_44 = arith.constant 1.000000e+00 : f32
    %126 = vector.broadcast %cst_44 : f32 to vector<8x256xf32>
    %127 = arith.addf %126, %125 : vector<8x256xf32>
    %128 = arith.divf %126, %127 : vector<8x256xf32>
    %129 = vector.extract_strided_slice %122 {offsets = [0, 256], sizes = [8, 256], strides = [1, 1]} : vector<8x1024xf32> to vector<8x256xf32>
    %130 = arith.negf %129 : vector<8x256xf32>
    %131 = math.exp %130 : vector<8x256xf32>
    %cst_45 = arith.constant 1.000000e+00 : f32
    %132 = vector.broadcast %cst_45 : f32 to vector<8x256xf32>
    %133 = arith.addf %132, %131 : vector<8x256xf32>
    %134 = arith.divf %132, %133 : vector<8x256xf32>
    %135 = vector.extract_strided_slice %122 {offsets = [0, 512], sizes = [8, 256], strides = [1, 1]} : vector<8x1024xf32> to vector<8x256xf32>
    %136 = math.tanh %135 : vector<8x256xf32>
    %137 = vector.extract_strided_slice %122 {offsets = [0, 768], sizes = [8, 256], strides = [1, 1]} : vector<8x1024xf32> to vector<8x256xf32>
    %138 = arith.negf %137 : vector<8x256xf32>
    %139 = math.exp %138 : vector<8x256xf32>
    %cst_46 = arith.constant 1.000000e+00 : f32
    %140 = vector.broadcast %cst_46 : f32 to vector<8x256xf32>
    %141 = arith.addf %140, %139 : vector<8x256xf32>
    %142 = arith.divf %140, %141 : vector<8x256xf32>
    %143 = arith.mulf %134, %84 : vector<8x256xf32>
    %144 = arith.mulf %128, %136 : vector<8x256xf32>
    %145 = arith.addf %143, %144 : vector<8x256xf32>
    %146 = math.tanh %145 : vector<8x256xf32>
    %147 = arith.mulf %142, %146 : vector<8x256xf32>
    %c8_47 = arith.constant 8 : index
    %c0_48 = arith.constant 0 : index
    %148 = vector.load %arg15[%c8_47, %c0_48] : memref<64x256xf32, #tpu.memory_space<vmem>>, vector<8x256xf32>
    tpu.vector_store %arg15[%c8_47, %c0_48], %147 {strides = array<i32>} : memref<64x256xf32, #tpu.memory_space<vmem>>, vector<8x256xf32>,
    %c16 = arith.constant 16 : index
    %c0_49 = arith.constant 0 : index
    %149 = vector.load %arg14[%c16, %c0_49] : memref<64x1024xf32, #tpu.memory_space<vmem>>, vector<8x1024xf32>
    %150 = arith.truncf %116 : vector<8x256xf32> to vector<8x256xbf16>
    %cst_50 = arith.constant dense<0.000000e+00> : vector<8x1024xf32>
    %151 = tpu.matmul %150, %21, %cst_50 {dimension_numbers = #tpu.dot_dimension_numbers<[1], [0], [0], [1], [0, 0, 1, 1], [], []>} : vector<8x256xbf16>, vector<256x1024xbf16>, vector<8x1024xf32> -> vector<8x1024xf32>
    %152 = arith.addf %149, %151 : vector<8x1024xf32>
    %153 = vector.extract_strided_slice %152 {offsets = [0, 0], sizes = [8, 256], strides = [1, 1]} : vector<8x1024xf32> to vector<8x256xf32>
    %154 = arith.negf %153 : vector<8x256xf32>
    %155 = math.exp %154 : vector<8x256xf32>
    %cst_51 = arith.constant 1.000000e+00 : f32
    %156 = vector.broadcast %cst_51 : f32 to vector<8x256xf32>
    %157 = arith.addf %156, %155 : vector<8x256xf32>
    %158 = arith.divf %156, %157 : vector<8x256xf32>
    %159 = vector.extract_strided_slice %152 {offsets = [0, 256], sizes = [8, 256], strides = [1, 1]} : vector<8x1024xf32> to vector<8x256xf32>
    %160 = arith.negf %159 : vector<8x256xf32>
    %161 = math.exp %160 : vector<8x256xf32>
    %cst_52 = arith.constant 1.000000e+00 : f32
    %162 = vector.broadcast %cst_52 : f32 to vector<8x256xf32>
    %163 = arith.addf %162, %161 : vector<8x256xf32>
    %164 = arith.divf %162, %163 : vector<8x256xf32>
    %165 = vector.extract_strided_slice %152 {offsets = [0, 512], sizes = [8, 256], strides = [1, 1]} : vector<8x1024xf32> to vector<8x256xf32>
    %166 = math.tanh %165 : vector<8x256xf32>
    %167 = vector.extract_strided_slice %152 {offsets = [0, 768], sizes = [8, 256], strides = [1, 1]} : vector<8x1024xf32> to vector<8x256xf32>
    %168 = arith.negf %167 : vector<8x256xf32>
    %169 = math.exp %168 : vector<8x256xf32>
    %cst_53 = arith.constant 1.000000e+00 : f32
    %170 = vector.broadcast %cst_53 : f32 to vector<8x256xf32>
    %171 = arith.addf %170, %169 : vector<8x256xf32>
    %172 = arith.divf %170, %171 : vector<8x256xf32>
    %173 = arith.mulf %164, %114 : vector<8x256xf32>
    %174 = arith.mulf %158, %166 : vector<8x256xf32>
    %175 = arith.addf %173, %174 : vector<8x256xf32>
    %176 = math.tanh %175 : vector<8x256xf32>
    %177 = arith.mulf %172, %176 : vector<8x256xf32>
    %178 = arith.truncf %177 : vector<8x256xf32> to vector<8x256xbf16>
    %cst_54 = arith.constant dense<0.000000e+00> : vector<8x1024xf32>
    %179 = tpu.matmul %178, %22, %cst_54 {dimension_numbers = #tpu.dot_dimension_numbers<[1], [0], [0], [1], [0, 0, 1, 1], [], []>} : vector<8x256xbf16>, vector<256x1024xbf16>, vector<8x1024xf32> -> vector<8x1024xf32>
    %180 = arith.truncf %147 : vector<8x256xf32> to vector<8x256xbf16>
    %cst_55 = arith.constant dense<0.000000e+00> : vector<8x1024xf32>
    %181 = tpu.matmul %180, %23, %cst_55 {dimension_numbers = #tpu.dot_dimension_numbers<[1], [0], [0], [1], [0, 0, 1, 1], [], []>} : vector<8x256xbf16>, vector<256x1024xbf16>, vector<8x1024xf32> -> vector<8x1024xf32>
    %182 = arith.addf %179, %181 : vector<8x1024xf32>
    %183 = arith.addf %182, %25 : vector<8x1024xf32>
    %184 = vector.extract_strided_slice %183 {offsets = [0, 0], sizes = [8, 256], strides = [1, 1]} : vector<8x1024xf32> to vector<8x256xf32>
    %185 = arith.negf %184 : vector<8x256xf32>
    %186 = math.exp %185 : vector<8x256xf32>
    %cst_56 = arith.constant 1.000000e+00 : f32
    %187 = vector.broadcast %cst_56 : f32 to vector<8x256xf32>
    %188 = arith.addf %187, %186 : vector<8x256xf32>
    %189 = arith.divf %187, %188 : vector<8x256xf32>
    %190 = vector.extract_strided_slice %183 {offsets = [0, 256], sizes = [8, 256], strides = [1, 1]} : vector<8x1024xf32> to vector<8x256xf32>
    %191 = arith.negf %190 : vector<8x256xf32>
    %192 = math.exp %191 : vector<8x256xf32>
    %cst_57 = arith.constant 1.000000e+00 : f32
    %193 = vector.broadcast %cst_57 : f32 to vector<8x256xf32>
    %194 = arith.addf %193, %192 : vector<8x256xf32>
    %195 = arith.divf %193, %194 : vector<8x256xf32>
    %196 = vector.extract_strided_slice %183 {offsets = [0, 512], sizes = [8, 256], strides = [1, 1]} : vector<8x1024xf32> to vector<8x256xf32>
    %197 = math.tanh %196 : vector<8x256xf32>
    %198 = vector.extract_strided_slice %183 {offsets = [0, 768], sizes = [8, 256], strides = [1, 1]} : vector<8x1024xf32> to vector<8x256xf32>
    %199 = arith.negf %198 : vector<8x256xf32>
    %200 = math.exp %199 : vector<8x256xf32>
    %cst_58 = arith.constant 1.000000e+00 : f32
    %201 = vector.broadcast %cst_58 : f32 to vector<8x256xf32>
    %202 = arith.addf %201, %200 : vector<8x256xf32>
    %203 = arith.divf %201, %202 : vector<8x256xf32>
    %204 = arith.mulf %195, %145 : vector<8x256xf32>
    %205 = arith.mulf %189, %197 : vector<8x256xf32>
    %206 = arith.addf %204, %205 : vector<8x256xf32>
    %207 = math.tanh %206 : vector<8x256xf32>
    %208 = arith.mulf %203, %207 : vector<8x256xf32>
    %c16_59 = arith.constant 16 : index
    %c0_60 = arith.constant 0 : index
    %209 = vector.load %arg15[%c16_59, %c0_60] : memref<64x256xf32, #tpu.memory_space<vmem>>, vector<8x256xf32>
    tpu.vector_store %arg15[%c16_59, %c0_60], %208 {strides = array<i32>} : memref<64x256xf32, #tpu.memory_space<vmem>>, vector<8x256xf32>,
    %c24 = arith.constant 24 : index
    %c0_61 = arith.constant 0 : index
    %210 = vector.load %arg14[%c24, %c0_61] : memref<64x1024xf32, #tpu.memory_space<vmem>>, vector<8x1024xf32>
    %211 = arith.truncf %177 : vector<8x256xf32> to vector<8x256xbf16>
    %cst_62 = arith.constant dense<0.000000e+00> : vector<8x1024xf32>
    %212 = tpu.matmul %211, %21, %cst_62 {dimension_numbers = #tpu.dot_dimension_numbers<[1], [0], [0], [1], [0, 0, 1, 1], [], []>} : vector<8x256xbf16>, vector<256x1024xbf16>, vector<8x1024xf32> -> vector<8x1024xf32>
    %213 = arith.addf %210, %212 : vector<8x1024xf32>
    %214 = vector.extract_strided_slice %213 {offsets = [0, 0], sizes = [8, 256], strides = [1, 1]} : vector<8x1024xf32> to vector<8x256xf32>
    %215 = arith.negf %214 : vector<8x256xf32>
    %216 = math.exp %215 : vector<8x256xf32>
    %cst_63 = arith.constant 1.000000e+00 : f32
    %217 = vector.broadcast %cst_63 : f32 to vector<8x256xf32>
    %218 = arith.addf %217, %216 : vector<8x256xf32>
    %219 = arith.divf %217, %218 : vector<8x256xf32>
    %220 = vector.extract_strided_slice %213 {offsets = [0, 256], sizes = [8, 256], strides = [1, 1]} : vector<8x1024xf32> to vector<8x256xf32>
    %221 = arith.negf %220 : vector<8x256xf32>
    %222 = math.exp %221 : vector<8x256xf32>
    %cst_64 = arith.constant 1.000000e+00 : f32
    %223 = vector.broadcast %cst_64 : f32 to vector<8x256xf32>
    %224 = arith.addf %223, %222 : vector<8x256xf32>
    %225 = arith.divf %223, %224 : vector<8x256xf32>
    %226 = vector.extract_strided_slice %213 {offsets = [0, 512], sizes = [8, 256], strides = [1, 1]} : vector<8x1024xf32> to vector<8x256xf32>
    %227 = math.tanh %226 : vector<8x256xf32>
    %228 = vector.extract_strided_slice %213 {offsets = [0, 768], sizes = [8, 256], strides = [1, 1]} : vector<8x1024xf32> to vector<8x256xf32>
    %229 = arith.negf %228 : vector<8x256xf32>
    %230 = math.exp %229 : vector<8x256xf32>
    %cst_65 = arith.constant 1.000000e+00 : f32
    %231 = vector.broadcast %cst_65 : f32 to vector<8x256xf32>
    %232 = arith.addf %231, %230 : vector<8x256xf32>
    %233 = arith.divf %231, %232 : vector<8x256xf32>
    %234 = arith.mulf %225, %175 : vector<8x256xf32>
    %235 = arith.mulf %219, %227 : vector<8x256xf32>
    %236 = arith.addf %234, %235 : vector<8x256xf32>
    %237 = math.tanh %236 : vector<8x256xf32>
    %238 = arith.mulf %233, %237 : vector<8x256xf32>
    %239 = arith.truncf %238 : vector<8x256xf32> to vector<8x256xbf16>
    %cst_66 = arith.constant dense<0.000000e+00> : vector<8x1024xf32>
    %240 = tpu.matmul %239, %22, %cst_66 {dimension_numbers = #tpu.dot_dimension_numbers<[1], [0], [0], [1], [0, 0, 1, 1], [], []>} : vector<8x256xbf16>, vector<256x1024xbf16>, vector<8x1024xf32> -> vector<8x1024xf32>
    %241 = arith.truncf %208 : vector<8x256xf32> to vector<8x256xbf16>
    %cst_67 = arith.constant dense<0.000000e+00> : vector<8x1024xf32>
    %242 = tpu.matmul %241, %23, %cst_67 {dimension_numbers = #tpu.dot_dimension_numbers<[1], [0], [0], [1], [0, 0, 1, 1], [], []>} : vector<8x256xbf16>, vector<256x1024xbf16>, vector<8x1024xf32> -> vector<8x1024xf32>
    %243 = arith.addf %240, %242 : vector<8x1024xf32>
    %244 = arith.addf %243, %25 : vector<8x1024xf32>
    %245 = vector.extract_strided_slice %244 {offsets = [0, 0], sizes = [8, 256], strides = [1, 1]} : vector<8x1024xf32> to vector<8x256xf32>
    %246 = arith.negf %245 : vector<8x256xf32>
    %247 = math.exp %246 : vector<8x256xf32>
    %cst_68 = arith.constant 1.000000e+00 : f32
    %248 = vector.broadcast %cst_68 : f32 to vector<8x256xf32>
    %249 = arith.addf %248, %247 : vector<8x256xf32>
    %250 = arith.divf %248, %249 : vector<8x256xf32>
    %251 = vector.extract_strided_slice %244 {offsets = [0, 256], sizes = [8, 256], strides = [1, 1]} : vector<8x1024xf32> to vector<8x256xf32>
    %252 = arith.negf %251 : vector<8x256xf32>
    %253 = math.exp %252 : vector<8x256xf32>
    %cst_69 = arith.constant 1.000000e+00 : f32
    %254 = vector.broadcast %cst_69 : f32 to vector<8x256xf32>
    %255 = arith.addf %254, %253 : vector<8x256xf32>
    %256 = arith.divf %254, %255 : vector<8x256xf32>
    %257 = vector.extract_strided_slice %244 {offsets = [0, 512], sizes = [8, 256], strides = [1, 1]} : vector<8x1024xf32> to vector<8x256xf32>
    %258 = math.tanh %257 : vector<8x256xf32>
    %259 = vector.extract_strided_slice %244 {offsets = [0, 768], sizes = [8, 256], strides = [1, 1]} : vector<8x1024xf32> to vector<8x256xf32>
    %260 = arith.negf %259 : vector<8x256xf32>
    %261 = math.exp %260 : vector<8x256xf32>
    %cst_70 = arith.constant 1.000000e+00 : f32
    %262 = vector.broadcast %cst_70 : f32 to vector<8x256xf32>
    %263 = arith.addf %262, %261 : vector<8x256xf32>
    %264 = arith.divf %262, %263 : vector<8x256xf32>
    %265 = arith.mulf %256, %206 : vector<8x256xf32>
    %266 = arith.mulf %250, %258 : vector<8x256xf32>
    %267 = arith.addf %265, %266 : vector<8x256xf32>
    %268 = math.tanh %267 : vector<8x256xf32>
    %269 = arith.mulf %264, %268 : vector<8x256xf32>
    %c24_71 = arith.constant 24 : index
    %c0_72 = arith.constant 0 : index
    %270 = vector.load %arg15[%c24_71, %c0_72] : memref<64x256xf32, #tpu.memory_space<vmem>>, vector<8x256xf32>
    tpu.vector_store %arg15[%c24_71, %c0_72], %269 {strides = array<i32>} : memref<64x256xf32, #tpu.memory_space<vmem>>, vector<8x256xf32>,
    %c32 = arith.constant 32 : index
    %c0_73 = arith.constant 0 : index
    %271 = vector.load %arg14[%c32, %c0_73] : memref<64x1024xf32, #tpu.memory_space<vmem>>, vector<8x1024xf32>
    %272 = arith.truncf %238 : vector<8x256xf32> to vector<8x256xbf16>
    %cst_74 = arith.constant dense<0.000000e+00> : vector<8x1024xf32>
    %273 = tpu.matmul %272, %21, %cst_74 {dimension_numbers = #tpu.dot_dimension_numbers<[1], [0], [0], [1], [0, 0, 1, 1], [], []>} : vector<8x256xbf16>, vector<256x1024xbf16>, vector<8x1024xf32> -> vector<8x1024xf32>
    %274 = arith.addf %271, %273 : vector<8x1024xf32>
    %275 = vector.extract_strided_slice %274 {offsets = [0, 0], sizes = [8, 256], strides = [1, 1]} : vector<8x1024xf32> to vector<8x256xf32>
    %276 = arith.negf %275 : vector<8x256xf32>
    %277 = math.exp %276 : vector<8x256xf32>
    %cst_75 = arith.constant 1.000000e+00 : f32
    %278 = vector.broadcast %cst_75 : f32 to vector<8x256xf32>
    %279 = arith.addf %278, %277 : vector<8x256xf32>
    %280 = arith.divf %278, %279 : vector<8x256xf32>
    %281 = vector.extract_strided_slice %274 {offsets = [0, 256], sizes = [8, 256], strides = [1, 1]} : vector<8x1024xf32> to vector<8x256xf32>
    %282 = arith.negf %281 : vector<8x256xf32>
    %283 = math.exp %282 : vector<8x256xf32>
    %cst_76 = arith.constant 1.000000e+00 : f32
    %284 = vector.broadcast %cst_76 : f32 to vector<8x256xf32>
    %285 = arith.addf %284, %283 : vector<8x256xf32>
    %286 = arith.divf %284, %285 : vector<8x256xf32>
    %287 = vector.extract_strided_slice %274 {offsets = [0, 512], sizes = [8, 256], strides = [1, 1]} : vector<8x1024xf32> to vector<8x256xf32>
    %288 = math.tanh %287 : vector<8x256xf32>
    %289 = vector.extract_strided_slice %274 {offsets = [0, 768], sizes = [8, 256], strides = [1, 1]} : vector<8x1024xf32> to vector<8x256xf32>
    %290 = arith.negf %289 : vector<8x256xf32>
    %291 = math.exp %290 : vector<8x256xf32>
    %cst_77 = arith.constant 1.000000e+00 : f32
    %292 = vector.broadcast %cst_77 : f32 to vector<8x256xf32>
    %293 = arith.addf %292, %291 : vector<8x256xf32>
    %294 = arith.divf %292, %293 : vector<8x256xf32>
    %295 = arith.mulf %286, %236 : vector<8x256xf32>
    %296 = arith.mulf %280, %288 : vector<8x256xf32>
    %297 = arith.addf %295, %296 : vector<8x256xf32>
    %298 = math.tanh %297 : vector<8x256xf32>
    %299 = arith.mulf %294, %298 : vector<8x256xf32>
    %300 = arith.truncf %299 : vector<8x256xf32> to vector<8x256xbf16>
    %cst_78 = arith.constant dense<0.000000e+00> : vector<8x1024xf32>
    %301 = tpu.matmul %300, %22, %cst_78 {dimension_numbers = #tpu.dot_dimension_numbers<[1], [0], [0], [1], [0, 0, 1, 1], [], []>} : vector<8x256xbf16>, vector<256x1024xbf16>, vector<8x1024xf32> -> vector<8x1024xf32>
    %302 = arith.truncf %269 : vector<8x256xf32> to vector<8x256xbf16>
    %cst_79 = arith.constant dense<0.000000e+00> : vector<8x1024xf32>
    %303 = tpu.matmul %302, %23, %cst_79 {dimension_numbers = #tpu.dot_dimension_numbers<[1], [0], [0], [1], [0, 0, 1, 1], [], []>} : vector<8x256xbf16>, vector<256x1024xbf16>, vector<8x1024xf32> -> vector<8x1024xf32>
    %304 = arith.addf %301, %303 : vector<8x1024xf32>
    %305 = arith.addf %304, %25 : vector<8x1024xf32>
    %306 = vector.extract_strided_slice %305 {offsets = [0, 0], sizes = [8, 256], strides = [1, 1]} : vector<8x1024xf32> to vector<8x256xf32>
    %307 = arith.negf %306 : vector<8x256xf32>
    %308 = math.exp %307 : vector<8x256xf32>
    %cst_80 = arith.constant 1.000000e+00 : f32
    %309 = vector.broadcast %cst_80 : f32 to vector<8x256xf32>
    %310 = arith.addf %309, %308 : vector<8x256xf32>
    %311 = arith.divf %309, %310 : vector<8x256xf32>
    %312 = vector.extract_strided_slice %305 {offsets = [0, 256], sizes = [8, 256], strides = [1, 1]} : vector<8x1024xf32> to vector<8x256xf32>
    %313 = arith.negf %312 : vector<8x256xf32>
    %314 = math.exp %313 : vector<8x256xf32>
    %cst_81 = arith.constant 1.000000e+00 : f32
    %315 = vector.broadcast %cst_81 : f32 to vector<8x256xf32>
    %316 = arith.addf %315, %314 : vector<8x256xf32>
    %317 = arith.divf %315, %316 : vector<8x256xf32>
    %318 = vector.extract_strided_slice %305 {offsets = [0, 512], sizes = [8, 256], strides = [1, 1]} : vector<8x1024xf32> to vector<8x256xf32>
    %319 = math.tanh %318 : vector<8x256xf32>
    %320 = vector.extract_strided_slice %305 {offsets = [0, 768], sizes = [8, 256], strides = [1, 1]} : vector<8x1024xf32> to vector<8x256xf32>
    %321 = arith.negf %320 : vector<8x256xf32>
    %322 = math.exp %321 : vector<8x256xf32>
    %cst_82 = arith.constant 1.000000e+00 : f32
    %323 = vector.broadcast %cst_82 : f32 to vector<8x256xf32>
    %324 = arith.addf %323, %322 : vector<8x256xf32>
    %325 = arith.divf %323, %324 : vector<8x256xf32>
    %326 = arith.mulf %317, %267 : vector<8x256xf32>
    %327 = arith.mulf %311, %319 : vector<8x256xf32>
    %328 = arith.addf %326, %327 : vector<8x256xf32>
    %329 = math.tanh %328 : vector<8x256xf32>
    %330 = arith.mulf %325, %329 : vector<8x256xf32>
    %c32_83 = arith.constant 32 : index
    %c0_84 = arith.constant 0 : index
    %331 = vector.load %arg15[%c32_83, %c0_84] : memref<64x256xf32, #tpu.memory_space<vmem>>, vector<8x256xf32>
    tpu.vector_store %arg15[%c32_83, %c0_84], %330 {strides = array<i32>} : memref<64x256xf32, #tpu.memory_space<vmem>>, vector<8x256xf32>,
    %c40 = arith.constant 40 : index
    %c0_85 = arith.constant 0 : index
    %332 = vector.load %arg14[%c40, %c0_85] : memref<64x1024xf32, #tpu.memory_space<vmem>>, vector<8x1024xf32>
    %333 = arith.truncf %299 : vector<8x256xf32> to vector<8x256xbf16>
    %cst_86 = arith.constant dense<0.000000e+00> : vector<8x1024xf32>
    %334 = tpu.matmul %333, %21, %cst_86 {dimension_numbers = #tpu.dot_dimension_numbers<[1], [0], [0], [1], [0, 0, 1, 1], [], []>} : vector<8x256xbf16>, vector<256x1024xbf16>, vector<8x1024xf32> -> vector<8x1024xf32>
    %335 = arith.addf %332, %334 : vector<8x1024xf32>
    %336 = vector.extract_strided_slice %335 {offsets = [0, 0], sizes = [8, 256], strides = [1, 1]} : vector<8x1024xf32> to vector<8x256xf32>
    %337 = arith.negf %336 : vector<8x256xf32>
    %338 = math.exp %337 : vector<8x256xf32>
    %cst_87 = arith.constant 1.000000e+00 : f32
    %339 = vector.broadcast %cst_87 : f32 to vector<8x256xf32>
    %340 = arith.addf %339, %338 : vector<8x256xf32>
    %341 = arith.divf %339, %340 : vector<8x256xf32>
    %342 = vector.extract_strided_slice %335 {offsets = [0, 256], sizes = [8, 256], strides = [1, 1]} : vector<8x1024xf32> to vector<8x256xf32>
    %343 = arith.negf %342 : vector<8x256xf32>
    %344 = math.exp %343 : vector<8x256xf32>
    %cst_88 = arith.constant 1.000000e+00 : f32
    %345 = vector.broadcast %cst_88 : f32 to vector<8x256xf32>
    %346 = arith.addf %345, %344 : vector<8x256xf32>
    %347 = arith.divf %345, %346 : vector<8x256xf32>
    %348 = vector.extract_strided_slice %335 {offsets = [0, 512], sizes = [8, 256], strides = [1, 1]} : vector<8x1024xf32> to vector<8x256xf32>
    %349 = math.tanh %348 : vector<8x256xf32>
    %350 = vector.extract_strided_slice %335 {offsets = [0, 768], sizes = [8, 256], strides = [1, 1]} : vector<8x1024xf32> to vector<8x256xf32>
    %351 = arith.negf %350 : vector<8x256xf32>
    %352 = math.exp %351 : vector<8x256xf32>
    %cst_89 = arith.constant 1.000000e+00 : f32
    %353 = vector.broadcast %cst_89 : f32 to vector<8x256xf32>
    %354 = arith.addf %353, %352 : vector<8x256xf32>
    %355 = arith.divf %353, %354 : vector<8x256xf32>
    %356 = arith.mulf %347, %297 : vector<8x256xf32>
    %357 = arith.mulf %341, %349 : vector<8x256xf32>
    %358 = arith.addf %356, %357 : vector<8x256xf32>
    %359 = math.tanh %358 : vector<8x256xf32>
    %360 = arith.mulf %355, %359 : vector<8x256xf32>
    %361 = arith.truncf %360 : vector<8x256xf32> to vector<8x256xbf16>
    %cst_90 = arith.constant dense<0.000000e+00> : vector<8x1024xf32>
    %362 = tpu.matmul %361, %22, %cst_90 {dimension_numbers = #tpu.dot_dimension_numbers<[1], [0], [0], [1], [0, 0, 1, 1], [], []>} : vector<8x256xbf16>, vector<256x1024xbf16>, vector<8x1024xf32> -> vector<8x1024xf32>
    %363 = arith.truncf %330 : vector<8x256xf32> to vector<8x256xbf16>
    %cst_91 = arith.constant dense<0.000000e+00> : vector<8x1024xf32>
    %364 = tpu.matmul %363, %23, %cst_91 {dimension_numbers = #tpu.dot_dimension_numbers<[1], [0], [0], [1], [0, 0, 1, 1], [], []>} : vector<8x256xbf16>, vector<256x1024xbf16>, vector<8x1024xf32> -> vector<8x1024xf32>
    %365 = arith.addf %362, %364 : vector<8x1024xf32>
    %366 = arith.addf %365, %25 : vector<8x1024xf32>
    %367 = vector.extract_strided_slice %366 {offsets = [0, 0], sizes = [8, 256], strides = [1, 1]} : vector<8x1024xf32> to vector<8x256xf32>
    %368 = arith.negf %367 : vector<8x256xf32>
    %369 = math.exp %368 : vector<8x256xf32>
    %cst_92 = arith.constant 1.000000e+00 : f32
    %370 = vector.broadcast %cst_92 : f32 to vector<8x256xf32>
    %371 = arith.addf %370, %369 : vector<8x256xf32>
    %372 = arith.divf %370, %371 : vector<8x256xf32>
    %373 = vector.extract_strided_slice %366 {offsets = [0, 256], sizes = [8, 256], strides = [1, 1]} : vector<8x1024xf32> to vector<8x256xf32>
    %374 = arith.negf %373 : vector<8x256xf32>
    %375 = math.exp %374 : vector<8x256xf32>
    %cst_93 = arith.constant 1.000000e+00 : f32
    %376 = vector.broadcast %cst_93 : f32 to vector<8x256xf32>
    %377 = arith.addf %376, %375 : vector<8x256xf32>
    %378 = arith.divf %376, %377 : vector<8x256xf32>
    %379 = vector.extract_strided_slice %366 {offsets = [0, 512], sizes = [8, 256], strides = [1, 1]} : vector<8x1024xf32> to vector<8x256xf32>
    %380 = math.tanh %379 : vector<8x256xf32>
    %381 = vector.extract_strided_slice %366 {offsets = [0, 768], sizes = [8, 256], strides = [1, 1]} : vector<8x1024xf32> to vector<8x256xf32>
    %382 = arith.negf %381 : vector<8x256xf32>
    %383 = math.exp %382 : vector<8x256xf32>
    %cst_94 = arith.constant 1.000000e+00 : f32
    %384 = vector.broadcast %cst_94 : f32 to vector<8x256xf32>
    %385 = arith.addf %384, %383 : vector<8x256xf32>
    %386 = arith.divf %384, %385 : vector<8x256xf32>
    %387 = arith.mulf %378, %328 : vector<8x256xf32>
    %388 = arith.mulf %372, %380 : vector<8x256xf32>
    %389 = arith.addf %387, %388 : vector<8x256xf32>
    %390 = math.tanh %389 : vector<8x256xf32>
    %391 = arith.mulf %386, %390 : vector<8x256xf32>
    %c40_95 = arith.constant 40 : index
    %c0_96 = arith.constant 0 : index
    %392 = vector.load %arg15[%c40_95, %c0_96] : memref<64x256xf32, #tpu.memory_space<vmem>>, vector<8x256xf32>
    tpu.vector_store %arg15[%c40_95, %c0_96], %391 {strides = array<i32>} : memref<64x256xf32, #tpu.memory_space<vmem>>, vector<8x256xf32>,
    %c48 = arith.constant 48 : index
    %c0_97 = arith.constant 0 : index
    %393 = vector.load %arg14[%c48, %c0_97] : memref<64x1024xf32, #tpu.memory_space<vmem>>, vector<8x1024xf32>
    %394 = arith.truncf %360 : vector<8x256xf32> to vector<8x256xbf16>
    %cst_98 = arith.constant dense<0.000000e+00> : vector<8x1024xf32>
    %395 = tpu.matmul %394, %21, %cst_98 {dimension_numbers = #tpu.dot_dimension_numbers<[1], [0], [0], [1], [0, 0, 1, 1], [], []>} : vector<8x256xbf16>, vector<256x1024xbf16>, vector<8x1024xf32> -> vector<8x1024xf32>
    %396 = arith.addf %393, %395 : vector<8x1024xf32>
    %397 = vector.extract_strided_slice %396 {offsets = [0, 0], sizes = [8, 256], strides = [1, 1]} : vector<8x1024xf32> to vector<8x256xf32>
    %398 = arith.negf %397 : vector<8x256xf32>
    %399 = math.exp %398 : vector<8x256xf32>
    %cst_99 = arith.constant 1.000000e+00 : f32
    %400 = vector.broadcast %cst_99 : f32 to vector<8x256xf32>
    %401 = arith.addf %400, %399 : vector<8x256xf32>
    %402 = arith.divf %400, %401 : vector<8x256xf32>
    %403 = vector.extract_strided_slice %396 {offsets = [0, 256], sizes = [8, 256], strides = [1, 1]} : vector<8x1024xf32> to vector<8x256xf32>
    %404 = arith.negf %403 : vector<8x256xf32>
    %405 = math.exp %404 : vector<8x256xf32>
    %cst_100 = arith.constant 1.000000e+00 : f32
    %406 = vector.broadcast %cst_100 : f32 to vector<8x256xf32>
    %407 = arith.addf %406, %405 : vector<8x256xf32>
    %408 = arith.divf %406, %407 : vector<8x256xf32>
    %409 = vector.extract_strided_slice %396 {offsets = [0, 512], sizes = [8, 256], strides = [1, 1]} : vector<8x1024xf32> to vector<8x256xf32>
    %410 = math.tanh %409 : vector<8x256xf32>
    %411 = vector.extract_strided_slice %396 {offsets = [0, 768], sizes = [8, 256], strides = [1, 1]} : vector<8x1024xf32> to vector<8x256xf32>
    %412 = arith.negf %411 : vector<8x256xf32>
    %413 = math.exp %412 : vector<8x256xf32>
    %cst_101 = arith.constant 1.000000e+00 : f32
    %414 = vector.broadcast %cst_101 : f32 to vector<8x256xf32>
    %415 = arith.addf %414, %413 : vector<8x256xf32>
    %416 = arith.divf %414, %415 : vector<8x256xf32>
    %417 = arith.mulf %408, %358 : vector<8x256xf32>
    %418 = arith.mulf %402, %410 : vector<8x256xf32>
    %419 = arith.addf %417, %418 : vector<8x256xf32>
    %420 = math.tanh %419 : vector<8x256xf32>
    %421 = arith.mulf %416, %420 : vector<8x256xf32>
    %422 = arith.truncf %421 : vector<8x256xf32> to vector<8x256xbf16>
    %cst_102 = arith.constant dense<0.000000e+00> : vector<8x1024xf32>
    %423 = tpu.matmul %422, %22, %cst_102 {dimension_numbers = #tpu.dot_dimension_numbers<[1], [0], [0], [1], [0, 0, 1, 1], [], []>} : vector<8x256xbf16>, vector<256x1024xbf16>, vector<8x1024xf32> -> vector<8x1024xf32>
    %424 = arith.truncf %391 : vector<8x256xf32> to vector<8x256xbf16>
    %cst_103 = arith.constant dense<0.000000e+00> : vector<8x1024xf32>
    %425 = tpu.matmul %424, %23, %cst_103 {dimension_numbers = #tpu.dot_dimension_numbers<[1], [0], [0], [1], [0, 0, 1, 1], [], []>} : vector<8x256xbf16>, vector<256x1024xbf16>, vector<8x1024xf32> -> vector<8x1024xf32>
    %426 = arith.addf %423, %425 : vector<8x1024xf32>
    %427 = arith.addf %426, %25 : vector<8x1024xf32>
    %428 = vector.extract_strided_slice %427 {offsets = [0, 0], sizes = [8, 256], strides = [1, 1]} : vector<8x1024xf32> to vector<8x256xf32>
    %429 = arith.negf %428 : vector<8x256xf32>
    %430 = math.exp %429 : vector<8x256xf32>
    %cst_104 = arith.constant 1.000000e+00 : f32
    %431 = vector.broadcast %cst_104 : f32 to vector<8x256xf32>
    %432 = arith.addf %431, %430 : vector<8x256xf32>
    %433 = arith.divf %431, %432 : vector<8x256xf32>
    %434 = vector.extract_strided_slice %427 {offsets = [0, 256], sizes = [8, 256], strides = [1, 1]} : vector<8x1024xf32> to vector<8x256xf32>
    %435 = arith.negf %434 : vector<8x256xf32>
    %436 = math.exp %435 : vector<8x256xf32>
    %cst_105 = arith.constant 1.000000e+00 : f32
    %437 = vector.broadcast %cst_105 : f32 to vector<8x256xf32>
    %438 = arith.addf %437, %436 : vector<8x256xf32>
    %439 = arith.divf %437, %438 : vector<8x256xf32>
    %440 = vector.extract_strided_slice %427 {offsets = [0, 512], sizes = [8, 256], strides = [1, 1]} : vector<8x1024xf32> to vector<8x256xf32>
    %441 = math.tanh %440 : vector<8x256xf32>
    %442 = vector.extract_strided_slice %427 {offsets = [0, 768], sizes = [8, 256], strides = [1, 1]} : vector<8x1024xf32> to vector<8x256xf32>
    %443 = arith.negf %442 : vector<8x256xf32>
    %444 = math.exp %443 : vector<8x256xf32>
    %cst_106 = arith.constant 1.000000e+00 : f32
    %445 = vector.broadcast %cst_106 : f32 to vector<8x256xf32>
    %446 = arith.addf %445, %444 : vector<8x256xf32>
    %447 = arith.divf %445, %446 : vector<8x256xf32>
    %448 = arith.mulf %439, %389 : vector<8x256xf32>
    %449 = arith.mulf %433, %441 : vector<8x256xf32>
    %450 = arith.addf %448, %449 : vector<8x256xf32>
    %451 = math.tanh %450 : vector<8x256xf32>
    %452 = arith.mulf %447, %451 : vector<8x256xf32>
    %c48_107 = arith.constant 48 : index
    %c0_108 = arith.constant 0 : index
    %453 = vector.load %arg15[%c48_107, %c0_108] : memref<64x256xf32, #tpu.memory_space<vmem>>, vector<8x256xf32>
    tpu.vector_store %arg15[%c48_107, %c0_108], %452 {strides = array<i32>} : memref<64x256xf32, #tpu.memory_space<vmem>>, vector<8x256xf32>,
    %c56 = arith.constant 56 : index
    %c0_109 = arith.constant 0 : index
    %454 = vector.load %arg14[%c56, %c0_109] : memref<64x1024xf32, #tpu.memory_space<vmem>>, vector<8x1024xf32>
    %455 = arith.truncf %421 : vector<8x256xf32> to vector<8x256xbf16>
    %cst_110 = arith.constant dense<0.000000e+00> : vector<8x1024xf32>
    %456 = tpu.matmul %455, %21, %cst_110 {dimension_numbers = #tpu.dot_dimension_numbers<[1], [0], [0], [1], [0, 0, 1, 1], [], []>} : vector<8x256xbf16>, vector<256x1024xbf16>, vector<8x1024xf32> -> vector<8x1024xf32>
    %457 = arith.addf %454, %456 : vector<8x1024xf32>
    %458 = vector.extract_strided_slice %457 {offsets = [0, 0], sizes = [8, 256], strides = [1, 1]} : vector<8x1024xf32> to vector<8x256xf32>
    %459 = arith.negf %458 : vector<8x256xf32>
    %460 = math.exp %459 : vector<8x256xf32>
    %cst_111 = arith.constant 1.000000e+00 : f32
    %461 = vector.broadcast %cst_111 : f32 to vector<8x256xf32>
    %462 = arith.addf %461, %460 : vector<8x256xf32>
    %463 = arith.divf %461, %462 : vector<8x256xf32>
    %464 = vector.extract_strided_slice %457 {offsets = [0, 256], sizes = [8, 256], strides = [1, 1]} : vector<8x1024xf32> to vector<8x256xf32>
    %465 = arith.negf %464 : vector<8x256xf32>
    %466 = math.exp %465 : vector<8x256xf32>
    %cst_112 = arith.constant 1.000000e+00 : f32
    %467 = vector.broadcast %cst_112 : f32 to vector<8x256xf32>
    %468 = arith.addf %467, %466 : vector<8x256xf32>
    %469 = arith.divf %467, %468 : vector<8x256xf32>
    %470 = vector.extract_strided_slice %457 {offsets = [0, 512], sizes = [8, 256], strides = [1, 1]} : vector<8x1024xf32> to vector<8x256xf32>
    %471 = math.tanh %470 : vector<8x256xf32>
    %472 = vector.extract_strided_slice %457 {offsets = [0, 768], sizes = [8, 256], strides = [1, 1]} : vector<8x1024xf32> to vector<8x256xf32>
    %473 = arith.negf %472 : vector<8x256xf32>
    %474 = math.exp %473 : vector<8x256xf32>
    %cst_113 = arith.constant 1.000000e+00 : f32
    %475 = vector.broadcast %cst_113 : f32 to vector<8x256xf32>
    %476 = arith.addf %475, %474 : vector<8x256xf32>
    %477 = arith.divf %475, %476 : vector<8x256xf32>
    %478 = arith.mulf %469, %419 : vector<8x256xf32>
    %479 = arith.mulf %463, %471 : vector<8x256xf32>
    %480 = arith.addf %478, %479 : vector<8x256xf32>
    %481 = math.tanh %480 : vector<8x256xf32>
    %482 = arith.mulf %477, %481 : vector<8x256xf32>
    %483 = arith.truncf %482 : vector<8x256xf32> to vector<8x256xbf16>
    %cst_114 = arith.constant dense<0.000000e+00> : vector<8x1024xf32>
    %484 = tpu.matmul %483, %22, %cst_114 {dimension_numbers = #tpu.dot_dimension_numbers<[1], [0], [0], [1], [0, 0, 1, 1], [], []>} : vector<8x256xbf16>, vector<256x1024xbf16>, vector<8x1024xf32> -> vector<8x1024xf32>
    %485 = arith.truncf %452 : vector<8x256xf32> to vector<8x256xbf16>
    %cst_115 = arith.constant dense<0.000000e+00> : vector<8x1024xf32>
    %486 = tpu.matmul %485, %23, %cst_115 {dimension_numbers = #tpu.dot_dimension_numbers<[1], [0], [0], [1], [0, 0, 1, 1], [], []>} : vector<8x256xbf16>, vector<256x1024xbf16>, vector<8x1024xf32> -> vector<8x1024xf32>
    %487 = arith.addf %484, %486 : vector<8x1024xf32>
    %488 = arith.addf %487, %25 : vector<8x1024xf32>
    %489 = vector.extract_strided_slice %488 {offsets = [0, 0], sizes = [8, 256], strides = [1, 1]} : vector<8x1024xf32> to vector<8x256xf32>
    %490 = arith.negf %489 : vector<8x256xf32>
    %491 = math.exp %490 : vector<8x256xf32>
    %cst_116 = arith.constant 1.000000e+00 : f32
    %492 = vector.broadcast %cst_116 : f32 to vector<8x256xf32>
    %493 = arith.addf %492, %491 : vector<8x256xf32>
    %494 = arith.divf %492, %493 : vector<8x256xf32>
    %495 = vector.extract_strided_slice %488 {offsets = [0, 256], sizes = [8, 256], strides = [1, 1]} : vector<8x1024xf32> to vector<8x256xf32>
    %496 = arith.negf %495 : vector<8x256xf32>
    %497 = math.exp %496 : vector<8x256xf32>
    %cst_117 = arith.constant 1.000000e+00 : f32
    %498 = vector.broadcast %cst_117 : f32 to vector<8x256xf32>
    %499 = arith.addf %498, %497 : vector<8x256xf32>
    %500 = arith.divf %498, %499 : vector<8x256xf32>
    %501 = vector.extract_strided_slice %488 {offsets = [0, 512], sizes = [8, 256], strides = [1, 1]} : vector<8x1024xf32> to vector<8x256xf32>
    %502 = math.tanh %501 : vector<8x256xf32>
    %503 = vector.extract_strided_slice %488 {offsets = [0, 768], sizes = [8, 256], strides = [1, 1]} : vector<8x1024xf32> to vector<8x256xf32>
    %504 = arith.negf %503 : vector<8x256xf32>
    %505 = math.exp %504 : vector<8x256xf32>
    %cst_118 = arith.constant 1.000000e+00 : f32
    %506 = vector.broadcast %cst_118 : f32 to vector<8x256xf32>
    %507 = arith.addf %506, %505 : vector<8x256xf32>
    %508 = arith.divf %506, %507 : vector<8x256xf32>
    %509 = arith.mulf %500, %450 : vector<8x256xf32>
    %510 = arith.mulf %494, %502 : vector<8x256xf32>
    %511 = arith.addf %509, %510 : vector<8x256xf32>
    %512 = math.tanh %511 : vector<8x256xf32>
    %513 = arith.mulf %508, %512 : vector<8x256xf32>
    %c56_119 = arith.constant 56 : index
    %c0_120 = arith.constant 0 : index
    %514 = vector.load %arg15[%c56_119, %c0_120] : memref<64x256xf32, #tpu.memory_space<vmem>>, vector<8x256xf32>
    tpu.vector_store %arg15[%c56_119, %c0_120], %513 {strides = array<i32>} : memref<64x256xf32, #tpu.memory_space<vmem>>, vector<8x256xf32>,
    %c0_121 = arith.constant 0 : index
    %c0_122 = arith.constant 0 : index
    %515 = vector.load %arg15[%c0_121, %c0_122] : memref<64x256xf32, #tpu.memory_space<vmem>>, vector<64x256xf32>
    %516 = arith.truncf %515 : vector<64x256xf32> to vector<64x256xbf16>
    %c0_123 = arith.constant 0 : index
    %c0_124 = arith.constant 0 : index
    %517 = vector.load %arg7[%c0_123, %c0_124] : memref<256x128xbf16, #tpu.memory_space<vmem>>, vector<256x128xbf16>
    %cst_125 = arith.constant dense<0.000000e+00> : vector<64x128xf32>
    %518 = tpu.matmul %516, %517, %cst_125 {dimension_numbers = #tpu.dot_dimension_numbers<[1], [0], [0], [1], [0, 0, 1, 1], [], []>} : vector<64x256xbf16>, vector<256x128xbf16>, vector<64x128xf32> -> vector<64x128xf32>
    %519 = vector.broadcast %3 : vector<1x128xf32> to vector<64x128xf32>
    %520 = arith.addf %518, %519 : vector<64x128xf32>
    %cst_126 = arith.constant 0.000000e+00 : f32
    %521 = vector.broadcast %cst_126 : f32 to vector<64x128xf32>
    %522 = arith.maximumf %520, %521 : vector<64x128xf32>
    %523 = arith.truncf %522 : vector<64x128xf32> to vector<64x128xbf16>
    %c0_127 = arith.constant 0 : index
    %c0_128 = arith.constant 0 : index
    %524 = vector.load %arg8[%c0_127, %c0_128] : memref<128x128xbf16, #tpu.memory_space<vmem>>, vector<128x128xbf16>
    %cst_129 = arith.constant dense<0.000000e+00> : vector<64x128xf32>
    %525 = tpu.matmul %523, %524, %cst_129 {dimension_numbers = #tpu.dot_dimension_numbers<[1], [0], [0], [1], [0, 0, 1, 1], [], []>} : vector<64x128xbf16>, vector<128x128xbf16>, vector<64x128xf32> -> vector<64x128xf32>
    %526 = vector.broadcast %4 : vector<1x128xf32> to vector<64x128xf32>
    %527 = arith.addf %525, %526 : vector<64x128xf32>
    %528 = math.tanh %527 : vector<64x128xf32>
    %c0_130 = arith.constant 0 : index
    %c0_131 = arith.constant 0 : index
    %529 = vector.load %arg9[%c0_130, %c0_131] : memref<256x256xbf16, #tpu.memory_space<vmem>>, vector<256x256xbf16>
    %cst_132 = arith.constant dense<0.000000e+00> : vector<64x256xf32>
    %530 = tpu.matmul %516, %529, %cst_132 {dimension_numbers = #tpu.dot_dimension_numbers<[1], [0], [0], [1], [0, 0, 1, 1], [], []>} : vector<64x256xbf16>, vector<256x256xbf16>, vector<64x256xf32> -> vector<64x256xf32>
    %531 = arith.truncf %528 : vector<64x128xf32> to vector<64x128xbf16>
    %c0_133 = arith.constant 0 : index
    %c0_134 = arith.constant 0 : index
    %532 = vector.load %arg10[%c0_133, %c0_134] : memref<128x256xbf16, #tpu.memory_space<vmem>>, vector<128x256xbf16>
    %cst_135 = arith.constant dense<0.000000e+00> : vector<64x256xf32>
    %533 = tpu.matmul %531, %532, %cst_135 {dimension_numbers = #tpu.dot_dimension_numbers<[1], [0], [0], [1], [0, 0, 1, 1], [], []>} : vector<64x128xbf16>, vector<128x256xbf16>, vector<64x256xf32> -> vector<64x256xf32>
    %534 = arith.addf %530, %533 : vector<64x256xf32>
    %535 = vector.broadcast %5 : vector<1x256xf32> to vector<64x256xf32>
    %536 = arith.addf %534, %535 : vector<64x256xf32>
    %cst_136 = arith.constant 0.000000e+00 : f32
    %537 = vector.broadcast %cst_136 : f32 to vector<64x256xf32>
    %538 = arith.maximumf %536, %537 : vector<64x256xf32>
    %539 = arith.truncf %538 : vector<64x256xf32> to vector<64x256xbf16>
    %c0_137 = arith.constant 0 : index
    %c0_138 = arith.constant 0 : index
    %540 = vector.load %arg11[%c0_137, %c0_138] : memref<256x128xbf16, #tpu.memory_space<vmem>>, vector<256x128xbf16>
    %cst_139 = arith.constant dense<0.000000e+00> : vector<64x128xf32>
    %541 = tpu.matmul %539, %540, %cst_139 {dimension_numbers = #tpu.dot_dimension_numbers<[1], [0], [0], [1], [0, 0, 1, 1], [], []>} : vector<64x256xbf16>, vector<256x128xbf16>, vector<64x128xf32> -> vector<64x128xf32>
    %542 = vector.broadcast %6 : vector<1x128xf32> to vector<64x128xf32>
    %543 = arith.addf %541, %542 : vector<64x128xf32>
    %c0_140 = arith.constant 0 : index
    %c0_141 = arith.constant 0 : index
    %544 = vector.load %arg13[%c0_140, %c0_141] : memref<64x128xf32, #tpu.memory_space<vmem>>, vector<64x128xf32>
    tpu.vector_store %arg13[%c0_140, %c0_141], %543 {strides = array<i32>} : memref<64x128xf32, #tpu.memory_space<vmem>>, vector<64x128xf32>,
    return
  }
  func.func @transform_0(%arg0: i32) -> (i32, i32) {
    %c0_i32 = arith.constant 0 : i32
    %c0_i32_0 = arith.constant 0 : i32
    %c0_i32_1 = arith.constant 0 : i32
    return %c0_i32, %c0_i32_0 : i32, i32
  }
  func.func @transform_1(%arg0: i32) -> (i32, i32) {
    %c0_i32 = arith.constant 0 : i32
    %c0_i32_0 = arith.constant 0 : i32
    %c0_i32_1 = arith.constant 0 : i32
    return %c0_i32, %c0_i32_0 : i32, i32
  }
  func.func @transform_2(%arg0: i32) -> (i32, i32) {
    %c0_i32 = arith.constant 0 : i32
    %c0_i32_0 = arith.constant 0 : i32
    %c0_i32_1 = arith.constant 0 : i32
    return %c0_i32, %c0_i32_0 : i32, i32
  }
  func.func @transform_3(%arg0: i32) -> (i32, i32) {
    %c0_i32 = arith.constant 0 : i32
    %c0_i32_0 = arith.constant 0 : i32
    %c0_i32_1 = arith.constant 0 : i32
    return %c0_i32, %c0_i32_0 : i32, i32
  }
  func.func @transform_4(%arg0: i32) -> (i32, i32) {
    %c0_i32 = arith.constant 0 : i32
    %c0_i32_0 = arith.constant 0 : i32
    %c0_i32_1 = arith.constant 0 : i32
    return %c0_i32, %c0_i32_0 : i32, i32
  }
  func.func @transform_5(%arg0: i32) -> (i32, i32) {
    %c0_i32 = arith.constant 0 : i32
    %c0_i32_0 = arith.constant 0 : i32
    %c0_i32_1 = arith.constant 0 : i32
    return %c0_i32, %c0_i32_0 : i32, i32
  }
  func.func @transform_6(%arg0: i32) -> (i32, i32) {
    %c0_i32 = arith.constant 0 : i32
    %c0_i32_0 = arith.constant 0 : i32
    %c0_i32_1 = arith.constant 0 : i32
    return %c0_i32, %c0_i32_0 : i32, i32
  }
  func.func @transform_7(%arg0: i32) -> (i32, i32) {
    %c0_i32 = arith.constant 0 : i32
    %c0_i32_0 = arith.constant 0 : i32
    %c0_i32_1 = arith.constant 0 : i32
    return %c0_i32, %c0_i32_0 : i32, i32
  }
  func.func @transform_8(%arg0: i32) -> (i32, i32) {
    %c0_i32 = arith.constant 0 : i32
    %c0_i32_0 = arith.constant 0 : i32
    %c0_i32_1 = arith.constant 0 : i32
    return %c0_i32, %c0_i32_0 : i32, i32
  }
  func.func @transform_9(%arg0: i32) -> (i32, i32) {
    %c0_i32 = arith.constant 0 : i32
    %c0_i32_0 = arith.constant 0 : i32
    %c0_i32_1 = arith.constant 0 : i32
    return %c0_i32, %c0_i32_0 : i32, i32
  }
  func.func @transform_10(%arg0: i32) -> (i32, i32) {
    %c0_i32 = arith.constant 0 : i32
    %c0_i32_0 = arith.constant 0 : i32
    %c0_i32_1 = arith.constant 0 : i32
    return %c0_i32, %c0_i32_0 : i32, i32
  }
  func.func @transform_11(%arg0: i32) -> (i32, i32) {
    %c0_i32 = arith.constant 0 : i32
    %c0_i32_0 = arith.constant 0 : i32
    %c0_i32_1 = arith.constant 0 : i32
    return %c0_i32, %c0_i32_0 : i32, i32
  }
  func.func @transform_12(%arg0: i32) -> (i32, i32) {
    %c0_i32 = arith.constant 0 : i32
    %c0_i32_0 = arith.constant 0 : i32
    %c0_i32_1 = arith.constant 0 : i32
    return %c0_i32, %c0_i32_0 : i32, i32
  }
}

</mosaic_0001>

<llo_original>
// kernel: damus_voice_forward.1
$region0: #{damus_voice_forward.1}
  #allocation0 [shape = 'u32[]', space=smem, size = 0x4, offset = 0x4, fixed_abs, tag = 'smem constant byte address 0x4 - core index']
  #allocation1 [shape = 'u32[144,128]{1,0:T(1,128)}', space=vmem, size = 0x12000, scoped, tag = 'internal scratch']
  #allocation2 [shape = 'f32[64,1024]{1,0:T(8,128)}', space=vmem, size = 0x40000, scoped, tag = 'scratch operand']
  #allocation3 [shape = 'f32[64,256]{1,0:T(8,128)}', space=vmem, size = 0x10000, scoped, tag = 'scratch operand']
  %s0 = inlined_call_operand.vmem [shape: f32[64,32], index: 0, kind: input, shape index: {}]
  %s1 = inlined_call_operand.vmem [shape: bf16[32,256], index: 1, kind: input, shape index: {}]
  %s2 = inlined_call_operand.hbm [shape: bf16[256,1024], index: 2, kind: input, shape index: {}]
  %s3 = inlined_call_operand.hbm [shape: bf16[256,1024], index: 3, kind: input, shape index: {}]
  %s4 = inlined_call_operand.hbm [shape: bf16[256,1024], index: 4, kind: input, shape index: {}]
  %s5 = inlined_call_operand.hbm [shape: bf16[256,1024], index: 5, kind: input, shape index: {}]
  %s6 = inlined_call_operand.vmem [shape: bf16[256,128], index: 6, kind: input, shape index: {}]
  %s7 = inlined_call_operand.vmem [shape: bf16[128,128], index: 7, kind: input, shape index: {}]
  %s8 = inlined_call_operand.hbm [shape: bf16[256,256], index: 8, kind: input, shape index: {}]
  %s9 = inlined_call_operand.hbm [shape: bf16[128,256], index: 9, kind: input, shape index: {}]
  %s10 = inlined_call_operand.hbm [shape: bf16[256,128], index: 10, kind: input, shape index: {}]
  %s11 = inlined_call_operand.hbm [shape: f32[1,2944], index: 11, kind: input, shape index: {}]
  %s12 = inlined_call_operand.vmem [shape: f32[64,128], index: 12, kind: output, shape index: {}]
  %s13 = sld [smem:[#allocation0]]
  $region90: #{damus_voice_forward.1} parent=0
    _
  %s15 = ssub.s32 1, %s13
  %s16 = scalar_select 0, %s15, %s13
  $region1: #{damus_voice_forward.1} parent=0
    #allocation4 [shape = 'u8[524288]{0}', space=vmem, size = 0x80000, scoped, tag = 'input window, operand 2, single buffered']
    #allocation5 [shape = 's32[1]{0}', space=sflag, size = 0x4, scoped, tag = 'scoped memory for damus_voice_forward.1']
    #allocation6 [shape = 'u8[524288]{0}', space=vmem, size = 0x80000, scoped, tag = 'input window, operand 3, single buffered']
    #allocation7 [shape = 's32[1]{0}', space=sflag, size = 0x4, scoped, tag = 'scoped memory for damus_voice_forward.1']
    #allocation8 [shape = 'u8[524288]{0}', space=vmem, size = 0x80000, scoped, tag = 'input window, operand 4, single buffered']
    #allocation9 [shape = 'u8[524288]{0}', space=vmem, size = 0x80000, scoped, tag = 'input window, operand 5, single buffered']
    #allocation10 [shape = 's32[1]{0}', space=sflag, size = 0x4, scoped, tag = 'scoped memory for damus_voice_forward.1']
    #allocation11 [shape = 'u8[131072]{0}', space=vmem, size = 0x20000, scoped, tag = 'input window, operand 8, single buffered']
    #allocation12 [shape = 'u8[65536]{0}', space=vmem, size = 0x10000, scoped, tag = 'input window, operand 9, single buffered']
    #allocation13 [shape = 's32[1]{0}', space=sflag, size = 0x4, scoped, tag = 'scoped memory for damus_voice_forward.1']
    #allocation14 [shape = 'u8[65536]{0}', space=vmem, size = 0x10000, scoped, tag = 'input window, operand 10, single buffered']
    #allocation15 [shape = 'u8[11776]{0}', space=vmem, size = 0x3000, scoped, tag = 'input window, operand 11, single buffered']
    #allocation16 [shape = 's32[1]{0}', space=sflag, size = 0x4, scoped, tag = 'scoped memory for damus_voice_forward.1']
    %17 = vsyncpa [#allocation5], 0
    %18 = vsyncpa [#allocation7], 0
    %19 = vsyncpa [#allocation10], 0
    %20 = vsyncpa [#allocation13], 0
    %21 = vsyncpa [#allocation16], 0
    // Predicated region
    $region2: #{damus_voice_forward.1} parent=1 // pred_check
      _
    $region3: #{damus_voice_forward.1} parent=1 // pred_check_branch
      %23 = sbr.rel (0) target = $region5
    $region4: #{damus_voice_forward.1} parent=1 // pred_region
      _
    $region5: #{damus_voice_forward.1} parent=1 // pred_fallthru
      _
    // Predicated region
    $region6: #{damus_voice_forward.1} parent=1 // pred_check
      _
    $region7: #{damus_voice_forward.1} parent=1 // pred_check_branch
      %25 = sbr.rel (0) target = $region9
    $region8: #{damus_voice_forward.1} parent=1 // pred_region
      _
    $region9: #{damus_voice_forward.1} parent=1 // pred_fallthru
      _
    // Predicated region
    $region10: #{damus_voice_forward.1} parent=1 // pred_check
      _
    $region11: #{damus_voice_forward.1} parent=1 // pred_check_branch
      %27 = sbr.rel (0) target = $region13
    $region12: #{damus_voice_forward.1} parent=1 // pred_region
      %s29 = ssub.s32 16384, 16384
      %30 = vsyncadd [#allocation5], %s29
      %s31 = sshll.u32 [#allocation4], 4
      %s32 = int_to_ptr.vmem [resolvable:$true] %s31
      %37 = dma.hbm_to_vmem [thread:$0]  %s2, 16384, %s32, [#allocation5], 512, 512, 32
    $region13: #{damus_voice_forward.1} parent=1 // pred_fallthru
      _
    // Predicated region
    $region14: #{damus_voice_forward.1} parent=1 // pred_check
      _
    $region15: #{damus_voice_forward.1} parent=1 // pred_check_branch
      %39 = sbr.rel (0) target = $region17
    $region16: #{damus_voice_forward.1} parent=1 // pred_region
      %s41 = ssub.s32 16384, 16384
      %42 = vsyncadd [#allocation7], %s41
      %s43 = sshll.u32 [#allocation6], 4
      %s44 = int_to_ptr.vmem [resolvable:$true] %s43
      %49 = dma.hbm_to_vmem [thread:$0]  %s3, 16384, %s44, [#allocation7], 512, 512, 32
    $region17: #{damus_voice_forward.1} parent=1 // pred_fallthru
      _
    // Predicated region
    $region18: #{damus_voice_forward.1} parent=1 // pred_check
      _
    $region19: #{damus_voice_forward.1} parent=1 // pred_check_branch
      %51 = sbr.rel (0) target = $region21
    $region20: #{damus_voice_forward.1} parent=1 // pred_region
      %s53 = ssub.s32 16384, 16384
      %54 = vsyncadd [#allocation7], %s53
      %s55 = sshll.u32 [#allocation8], 4
      %s56 = int_to_ptr.vmem [resolvable:$true] %s55
      %61 = dma.hbm_to_vmem [thread:$0]  %s4, 16384, %s56, [#allocation7], 512, 512, 32
    $region21: #{damus_voice_forward.1} parent=1 // pred_fallthru
      _
    // Predicated region
    $region22: #{damus_voice_forward.1} parent=1 // pred_check
      _
    $region23: #{damus_voice_forward.1} parent=1 // pred_check_branch
      %63 = sbr.rel (0) target = $region25
    $region24: #{damus_voice_forward.1} parent=1 // pred_region
      %s65 = ssub.s32 16384, 16384
      %66 = vsyncadd [#allocation10], %s65
      %s67 = sshll.u32 [#allocation9], 4
      %s68 = int_to_ptr.vmem [resolvable:$true] %s67
      %73 = dma.hbm_to_vmem [thread:$0]  %s5, 16384, %s68, [#allocation10], 512, 512, 32
    $region25: #{damus_voice_forward.1} parent=1 // pred_fallthru
      _
    // Predicated region
    $region26: #{damus_voice_forward.1} parent=1 // pred_check
      _
    $region27: #{damus_voice_forward.1} parent=1 // pred_check_branch
      %75 = sbr.rel (0) target = $region29
    $region28: #{damus_voice_forward.1} parent=1 // pred_region
      _
    $region29: #{damus_voice_forward.1} parent=1 // pred_fallthru
      _
    // Predicated region
    $region30: #{damus_voice_forward.1} parent=1 // pred_check
      _
    $region31: #{damus_voice_forward.1} parent=1 // pred_check_branch
      %77 = sbr.rel (0) target = $region33
    $region32: #{damus_voice_forward.1} parent=1 // pred_region
      _
    $region33: #{damus_voice_forward.1} parent=1 // pred_fallthru
      _
    // Predicated region
    $region34: #{damus_voice_forward.1} parent=1 // pred_check
      _
    $region35: #{damus_voice_forward.1} parent=1 // pred_check_branch
      %79 = sbr.rel (0) target = $region37
    $region36: #{damus_voice_forward.1} parent=1 // pred_region
      %s81 = ssub.s32 4096, 4096
      %82 = vsyncadd [#allocation10], %s81
      %s83 = sshll.u32 [#allocation11], 4
      %s84 = int_to_ptr.vmem [resolvable:$true] %s83
      %89 = dma.hbm_to_vmem [thread:$0]  %s8, 4096, %s84, [#allocation10], 128, 128, 8
    $region37: #{damus_voice_forward.1} parent=1 // pred_fallthru
      _
    // Predicated region
    $region38: #{damus_voice_forward.1} parent=1 // pred_check
      _
    $region39: #{damus_voice_forward.1} parent=1 // pred_check_branch
      %91 = sbr.rel (0) target = $region41
    $region40: #{damus_voice_forward.1} parent=1 // pred_region
      %s93 = ssub.s32 2048, 2048
      %94 = vsyncadd [#allocation13], %s93
      %s95 = sshll.u32 [#allocation12], 4
      %s96 = int_to_ptr.vmem [resolvable:$true] %s95
      %101 = dma.hbm_to_vmem [thread:$0]  %s9, 2048, %s96, [#allocation13], 128, 128, 8
    $region41: #{damus_voice_forward.1} parent=1 // pred_fallthru
      _
    // Predicated region
    $region42: #{damus_voice_forward.1} parent=1 // pred_check
      _
    $region43: #{damus_voice_forward.1} parent=1 // pred_check_branch
      %103 = sbr.rel (0) target = $region45
    $region44: #{damus_voice_forward.1} parent=1 // pred_region
      %s105 = ssub.s32 2048, 2048
      %106 = vsyncadd [#allocation13], %s105
      %s107 = sshll.u32 [#allocation14], 4
      %s108 = int_to_ptr.vmem [resolvable:$true] %s107
      %113 = dma.hbm_to_vmem [thread:$0]  %s10, 2048, %s108, [#allocation13], 64, 64, 4
    $region45: #{damus_voice_forward.1} parent=1 // pred_fallthru
      _
    // Predicated region
    $region46: #{damus_voice_forward.1} parent=1 // pred_check
      _
    $region47: #{damus_voice_forward.1} parent=1 // pred_check_branch
      %115 = sbr.rel (0) target = $region49
    $region48: #{damus_voice_forward.1} parent=1 // pred_region
      %s117 = ssub.s32 368, 368
      %118 = vsyncadd [#allocation16], %s117
      %s120 = sshll.u32 [#allocation15], 4
      %s121 = int_to_ptr.vmem [resolvable:$true] %s120
      %123 = dma.hbm_to_vmem [thread:$0]  %s11, 368, %s121, [#allocation16]
    $region49: #{damus_voice_forward.1} parent=1 // pred_fallthru
      _
    // Predicated region
    $region50: #{damus_voice_forward.1} parent=1 // pred_check
      _
    $region51: #{damus_voice_forward.1} parent=1 // pred_check_branch
      %125 = sbr.rel (0) target = $region53
    $region52: #{damus_voice_forward.1} parent=1 // pred_region
      %126 = dma.done [#allocation5], 16384
    $region53: #{damus_voice_forward.1} parent=1 // pred_fallthru
      _
    // Predicated region
    $region54: #{damus_voice_forward.1} parent=1 // pred_check
      _
    $region55: #{damus_voice_forward.1} parent=1 // pred_check_branch
      %128 = sbr.rel (0) target = $region57
    $region56: #{damus_voice_forward.1} parent=1 // pred_region
      %129 = dma.done [#allocation7], 16384
    $region57: #{damus_voice_forward.1} parent=1 // pred_fallthru
      _
    // Predicated region
    $region58: #{damus_voice_forward.1} parent=1 // pred_check
      _
    $region59: #{damus_voice_forward.1} parent=1 // pred_check_branch
      %131 = sbr.rel (0) target = $region61
    $region60: #{damus_voice_forward.1} parent=1 // pred_region
      %132 = dma.done [#allocation7], 16384
    $region61: #{damus_voice_forward.1} parent=1 // pred_fallthru
      _
    // Predicated region
    $region62: #{damus_voice_forward.1} parent=1 // pred_check
      _
    $region63: #{damus_voice_forward.1} parent=1 // pred_check_branch
      %134 = sbr.rel (0) target = $region65
    $region64: #{damus_voice_forward.1} parent=1 // pred_region
      %135 = dma.done [#allocation10], 16384
    $region65: #{damus_voice_forward.1} parent=1 // pred_fallthru
      _
    // Predicated region
    $region66: #{damus_voice_forward.1} parent=1 // pred_check
      _
    $region67: #{damus_voice_forward.1} parent=1 // pred_check_branch
      %137 = sbr.rel (0) target = $region69
    $region68: #{damus_voice_forward.1} parent=1 // pred_region
      %138 = dma.done [#allocation10], 4096
    $region69: #{damus_voice_forward.1} parent=1 // pred_fallthru
      _
    // Predicated region
    $region70: #{damus_voice_forward.1} parent=1 // pred_check
      _
    $region71: #{damus_voice_forward.1} parent=1 // pred_check_branch
      %140 = sbr.rel (0) target = $region73
    $region72: #{damus_voice_forward.1} parent=1 // pred_region
      %141 = dma.done [#allocation13], 2048
    $region73: #{damus_voice_forward.1} parent=1 // pred_fallthru
      _
    // Predicated region
    $region74: #{damus_voice_forward.1} parent=1 // pred_check
      _
    $region75: #{damus_voice_forward.1} parent=1 // pred_check_branch
      %143 = sbr.rel (0) target = $region77
    $region76: #{damus_voice_forward.1} parent=1 // pred_region
      %144 = dma.done [#allocation13], 2048
    $region77: #{damus_voice_forward.1} parent=1 // pred_fallthru
      _
    // Predicated region
    $region78: #{damus_voice_forward.1} parent=1 // pred_check
      _
    $region79: #{damus_voice_forward.1} parent=1 // pred_check_branch
      %146 = sbr.rel (0) target = $region81
    $region80: #{damus_voice_forward.1} parent=1 // pred_region
      %147 = dma.done [#allocation16], 368
    $region81: #{damus_voice_forward.1} parent=1 // pred_fallthru
      _
    %v149 = vld [vmem:[#allocation15] sm:$0x3]
    %v150 = vld [vmem:[#allocation15 + $0x2] sm:$0xff]
    %v151 = vld [vmem:[#allocation15 + $0xa] sm:$0xff]
    %v152 = vld [vmem:[#allocation15 + $0x12] sm:$0x1]
    %v153 = vld [vmem:[#allocation15 + $0x13] sm:$0x1]
    %v154 = vld [vmem:[#allocation15 + $0x14] sm:$0x3]
    %v155 = vld [vmem:[#allocation15 + $0x16] sm:$0x1]
    %v156 = vld [vmem:[%s0] sm:$0xff]
    %v157 = vld [vmem:[%s0 + $0x8] sm:$0xff]
    %v158 = vld [vmem:[%s0 + $0x10] sm:$0xff]
    %v159 = vld [vmem:[%s0 + $0x18] sm:$0xff]
    %v160 = vld [vmem:[%s0 + $0x20] sm:$0xff]
    %v161 = vld [vmem:[%s0 + $0x28] sm:$0xff]
    %v162 = vld [vmem:[%s0 + $0x30] sm:$0xff]
    %v163 = vld [vmem:[%s0 + $0x38] sm:$0xff]
    %v164 = vpack.c.bf16 %v157, %v156
    %v165 = vpack.c.bf16 %v159, %v158
    %v166 = vpack.c.bf16 %v161, %v160
    %v167 = vpack.c.bf16 %v163, %v162
    %v168 = vld [vmem:[%s1] sm:$0xff]
    %v169 = vld [vmem:[%s1 + $0x8] sm:$0xff]
    %v170 = vld [vmem:[%s1 + $0x10] sm:$0xff]
    %v171 = vld [vmem:[%s1 + $0x18] sm:$0xff]
    %v173 = vlaneseq
    %v174 = vshrl.u32 %v173, 7
    %v175 = vsub.s32 0, %v174
    %v176 = vrot.slane %v149, %v175
    %v177 = vlaneseq
    %v178 = vshrl.u32 %v177, 7
    %v179 = vsub.s32 1, %v178
    %v180 = vrot.slane %v149, %v179
    %v187 = vunpack.c.l.b16 %v168
    %v188 = vunpack.c.h.b16 %v168
    %v189 = vunpack.c.l.b16 %v169
    %v190 = vunpack.c.h.b16 %v169
    %v191 = vunpack.c.l.b16 %v170
    %v192 = vunpack.c.h.b16 %v170
    %v193 = vunpack.c.l.b16 %v171
    %v194 = vunpack.c.h.b16 %v171
    %v195 = vpack.c.b16 %v189, %v187
    %v196 = vpack.c.b16 %v190, %v188
    %v197 = vpack.c.b16 %v193, %v191
    %v198 = vpack.c.b16 %v194, %v192
    %vm203 = vcmask 261120
    %v205 = vsel %vm203, %v164, 0
    %v208 = vsel %vm203, %v165, 0
    %v211 = vsel %vm203, %v166, 0
    %v214 = vsel %vm203, %v167, 0
    %216 = vmatprep.subr.bf16.mxu0 %v196
    %217 = vmatpush1.bf16.msra.mxu0 %v195
    %218 = vmatprep.subr.bf16.mxu0 %v198
    %219 = vmatpush1.bf16.msra.mxu0 %v197
    %220 = vmatprep.subr.bf16.mxu0 0
    %221 = vmatpush1.bf16.msra.mxu0 0
    %222 = vmatprep.subr.bf16.mxu0 0
    %223 = vmatpush1.bf16.msra.mxu0 0
    %224 = vmatprep.subr.bf16.mxu0 0
    %225 = vmatpush1.bf16.msra.mxu0 0
    %226 = vmatprep.subr.bf16.mxu0 0
    %227 = vmatpush1.bf16.msra.mxu0 0
    %228 = vmatprep.subr.bf16.mxu0 0
    %229 = vmatpush1.bf16.msra.mxu0 0
    %230 = vmatprep.subr.bf16.mxu0 0
    %231 = vmatpush1.bf16.msra.mxu0 0
    %232 = vmatprep.subr.bf16.mxu0 0
    %233 = vmatpush1.bf16.msra.mxu0 0
    %234 = vmatprep.subr.bf16.mxu0 0
    %235 = vmatpush1.bf16.msra.mxu0 0
    %236 = vmatprep.subr.bf16.mxu0 0
    %237 = vmatpush1.bf16.msra.mxu0 0
    %238 = vmatprep.subr.bf16.mxu0 0
    %239 = vmatpush1.bf16.msra.mxu0 0
    %240 = vmatprep.subr.bf16.mxu0 0
    %241 = vmatpush1.bf16.msra.mxu0 0
    %242 = vmatprep.subr.bf16.mxu0 0
    %243 = vmatpush1.bf16.msra.mxu0 0
    %244 = vmatprep.subr.bf16.mxu0 0
    %245 = vmatpush1.bf16.msra.mxu0 0
    %246 = vmatprep.subr.bf16.mxu0 0
    %247 = vmatpush1.bf16.msra.mxu0 0
    %248 = vmatprep.mubr.bf16.mxu0 0
    %249 = vmatmul.mubr.bf16.gmra.mrb[0].mxu0 %v205
    %v250 = vpop.f32.mrb[0].mxu0
    %v251 = vadd.f32 %v176, %v250
    %v252 = vpop.f32.mrb[0].mxu0
    %v253 = vadd.f32 %v180, %v252
    %v254 = vpop.f32.mrb[0].mxu0
    %v255 = vadd.f32 %v176, %v254
    %v256 = vpop.f32.mrb[0].mxu0
    %v257 = vadd.f32 %v180, %v256
    %258 = vmatprep.mubr.bf16.mxu0 0
    %259 = vmatmul.mubr.bf16.gmra.mrb[0].mxu0 %v208
    %v260 = vpop.f32.mrb[0].mxu0
    %v261 = vadd.f32 %v176, %v260
    %v262 = vpop.f32.mrb[0].mxu0
    %v263 = vadd.f32 %v180, %v262
    %v264 = vpop.f32.mrb[0].mxu0
    %v265 = vadd.f32 %v176, %v264
    %v266 = vpop.f32.mrb[0].mxu0
    %v267 = vadd.f32 %v180, %v266
    %268 = vmatprep.mubr.bf16.mxu0 0
    %269 = vmatmul.mubr.bf16.gmra.mrb[0].mxu0 %v211
    %v270 = vpop.f32.mrb[0].mxu0
    %v271 = vadd.f32 %v176, %v270
    %v272 = vpop.f32.mrb[0].mxu0
    %v273 = vadd.f32 %v180, %v272
    %v274 = vpop.f32.mrb[0].mxu0
    %v275 = vadd.f32 %v176, %v274
    %v276 = vpop.f32.mrb[0].mxu0
    %v277 = vadd.f32 %v180, %v276
    %278 = vmatprep.mubr.bf16.mxu0 0
    %279 = vmatmul.mubr.bf16.gmra.mrb[0].mxu0 %v214
    %v280 = vpop.f32.mrb[0].mxu0
    %v281 = vadd.f32 %v176, %v280
    %v282 = vpop.f32.mrb[0].mxu0
    %v283 = vadd.f32 %v180, %v282
    %v284 = vpop.f32.mrb[0].mxu0
    %v285 = vadd.f32 %v176, %v284
    %v286 = vpop.f32.mrb[0].mxu0
    %v287 = vadd.f32 %v180, %v286
    %288 = vdwg.mxu0
    %v289 = vmax.f32 %v251, 0.0
    %v290 = vmax.f32 %v253, 0.0
    %v291 = vmax.f32 %v255, 0.0
    %v292 = vmax.f32 %v257, 0.0
    %v293 = vmax.f32 %v261, 0.0
    %v294 = vmax.f32 %v263, 0.0
    %v295 = vmax.f32 %v265, 0.0
    %v296 = vmax.f32 %v267, 0.0
    %v297 = vmax.f32 %v271, 0.0
    %v298 = vmax.f32 %v273, 0.0
    %v299 = vmax.f32 %v275, 0.0
    %v300 = vmax.f32 %v277, 0.0
    %v301 = vmax.f32 %v281, 0.0
    %v302 = vmax.f32 %v283, 0.0
    %v303 = vmax.f32 %v285, 0.0
    %v304 = vmax.f32 %v287, 0.0
    %v305 = vpack.c.bf16 %v291, %v289
    %v306 = vpack.c.bf16 %v292, %v290
    %v307 = vpack.c.bf16 %v295, %v293
    %v308 = vpack.c.bf16 %v296, %v294
    %v309 = vpack.c.bf16 %v299, %v297
    %v310 = vpack.c.bf16 %v300, %v298
    %v311 = vpack.c.bf16 %v303, %v301
    %v312 = vpack.c.bf16 %v304, %v302
    %v313 = vld [vmem:[#allocation4] sm:$0xff]
    %v314 = vld [vmem:[#allocation4 + $0x8] sm:$0xff]
    %v315 = vld [vmem:[#allocation4 + $0x10] sm:$0xff]
    %v316 = vld [vmem:[#allocation4 + $0x18] sm:$0xff]
    %v317 = vld [vmem:[#allocation4 + $0x20] sm:$0xff]
    %v318 = vld [vmem:[#allocation4 + $0x28] sm:$0xff]
    %v319 = vld [vmem:[#allocation4 + $0x30] sm:$0xff]
    %v320 = vld [vmem:[#allocation4 + $0x38] sm:$0xff]
    %v321 = vld [vmem:[#allocation4 + $0x40] sm:$0xff]
    %v322 = vld [vmem:[#allocation4 + $0x48] sm:$0xff]
    %v323 = vld [vmem:[#allocation4 + $0x50] sm:$0xff]
    %v324 = vld [vmem:[#allocation4 + $0x58] sm:$0xff]
    %v325 = vld [vmem:[#allocation4 + $0x60] sm:$0xff]
    %v326 = vld [vmem:[#allocation4 + $0x68] sm:$0xff]
    %v327 = vld [vmem:[#allocation4 + $0x70] sm:$0xff]
    %v328 = vld [vmem:[#allocation4 + $0x78] sm:$0xff]
    %v329 = vld [vmem:[#allocation4 + $0x80] sm:$0xff]
    %v330 = vld [vmem:[#allocation4 + $0x88] sm:$0xff]
    %v331 = vld [vmem:[#allocation4 + $0x90] sm:$0xff]
    %v332 = vld [vmem:[#allocation4 + $0x98] sm:$0xff]
    %v333 = vld [vmem:[#allocation4 + $0xa0] sm:$0xff]
    %v334 = vld [vmem:[#allocation4 + $0xa8] sm:$0xff]
    %v335 = vld [vmem:[#allocation4 + $0xb0] sm:$0xff]
    %v336 = vld [vmem:[#allocation4 + $0xb8] sm:$0xff]
    %v337 = vld [vmem:[#allocation4 + $0xc0] sm:$0xff]
    %v338 = vld [vmem:[#allocation4 + $0xc8] sm:$0xff]
    %v339 = vld [vmem:[#allocation4 + $0xd0] sm:$0xff]
    %v340 = vld [vmem:[#allocation4 + $0xd8] sm:$0xff]
    %v341 = vld [vmem:[#allocation4 + $0xe0] sm:$0xff]
    %v342 = vld [vmem:[#allocation4 + $0xe8] sm:$0xff]
    %v343 = vld [vmem:[#allocation4 + $0xf0] sm:$0xff]
    %v344 = vld [vmem:[#allocation4 + $0xf8] sm:$0xff]
    %v345 = vld [vmem:[#allocation4 + $0x100] sm:$0xff]
    %v346 = vld [vmem:[#allocation4 + $0x108] sm:$0xff]
    %v347 = vld [vmem:[#allocation4 + $0x110] sm:$0xff]
    %v348 = vld [vmem:[#allocation4 + $0x118] sm:$0xff]
    %v349 = vld [vmem:[#allocation4 + $0x120] sm:$0xff]
    %v350 = vld [vmem:[#allocation4 + $0x128] sm:$0xff]
    %v351 = vld [vmem:[#allocation4 + $0x130] sm:$0xff]
    %v352 = vld [vmem:[#allocation4 + $0x138] sm:$0xff]
    %v353 = vld [vmem:[#allocation4 + $0x140] sm:$0xff]
    %v354 = vld [vmem:[#allocation4 + $0x148] sm:$0xff]
    %v355 = vld [vmem:[#allocation4 + $0x150] sm:$0xff]
    %v356 = vld [vmem:[#allocation4 + $0x158] sm:$0xff]
    %v357 = vld [vmem:[#allocation4 + $0x160] sm:$0xff]
    %v358 = vld [vmem:[#allocation4 + $0x168] sm:$0xff]
    %v359 = vld [vmem:[#allocation4 + $0x170] sm:$0xff]
    %v360 = vld [vmem:[#allocation4 + $0x178] sm:$0xff]
    %v361 = vld [vmem:[#allocation4 + $0x180] sm:$0xff]
    %v362 = vld [vmem:[#allocation4 + $0x188] sm:$0xff]
    %v363 = vld [vmem:[#allocation4 + $0x190] sm:$0xff]
    %v364 = vld [vmem:[#allocation4 + $0x198] sm:$0xff]
    %v365 = vld [vmem:[#allocation4 + $0x1a0] sm:$0xff]
    %v366 = vld [vmem:[#allocation4 + $0x1a8] sm:$0xff]
    %v367 = vld [vmem:[#allocation4 + $0x1b0] sm:$0xff]
    %v368 = vld [vmem:[#allocation4 + $0x1b8] sm:$0xff]
    %v369 = vld [vmem:[#allocation4 + $0x1c0] sm:$0xff]
    %v370 = vld [vmem:[#allocation4 + $0x1c8] sm:$0xff]
    %v371 = vld [vmem:[#allocation4 + $0x1d0] sm:$0xff]
    %v372 = vld [vmem:[#allocation4 + $0x1d8] sm:$0xff]
    %v373 = vld [vmem:[#allocation4 + $0x1e0] sm:$0xff]
    %v374 = vld [vmem:[#allocation4 + $0x1e8] sm:$0xff]
    %v375 = vld [vmem:[#allocation4 + $0x1f0] sm:$0xff]
    %v376 = vld [vmem:[#allocation4 + $0x1f8] sm:$0xff]
    %v377 = vld [vmem:[#allocation4 + $0x200] sm:$0xff]
    %v378 = vld [vmem:[#allocation4 + $0x208] sm:$0xff]
    %v379 = vld [vmem:[#allocation4 + $0x210] sm:$0xff]
    %v380 = vld [vmem:[#allocation4 + $0x218] sm:$0xff]
    %v381 = vld [vmem:[#allocation4 + $0x220] sm:$0xff]
    %v382 = vld [vmem:[#allocation4 + $0x228] sm:$0xff]
    %v383 = vld [vmem:[#allocation4 + $0x230] sm:$0xff]
    %v384 = vld [vmem:[#allocation4 + $0x238] sm:$0xff]
    %v385 = vld [vmem:[#allocation4 + $0x240] sm:$0xff]
    %v386 = vld [vmem:[#allocation4 + $0x248] sm:$0xff]
    %v387 = vld [vmem:[#allocation4 + $0x250] sm:$0xff]
    %v388 = vld [vmem:[#allocation4 + $0x258] sm:$0xff]
    %v389 = vld [vmem:[#allocation4 + $0x260] sm:$0xff]
    %v390 = vld [vmem:[#allocation4 + $0x268] sm:$0xff]
    %v391 = vld [vmem:[#allocation4 + $0x270] sm:$0xff]
    %v392 = vld [vmem:[#allocation4 + $0x278] sm:$0xff]
    %v393 = vld [vmem:[#allocation4 + $0x280] sm:$0xff]
    %v394 = vld [vmem:[#allocation4 + $0x288] sm:$0xff]
    %v395 = vld [vmem:[#allocation4 + $0x290] sm:$0xff]
    %v396 = vld [vmem:[#allocation4 + $0x298] sm:$0xff]
    %v397 = vld [vmem:[#allocation4 + $0x2a0] sm:$0xff]
    %v398 = vld [vmem:[#allocation4 + $0x2a8] sm:$0xff]
    %v399 = vld [vmem:[#allocation4 + $0x2b0] sm:$0xff]
    %v400 = vld [vmem:[#allocation4 + $0x2b8] sm:$0xff]
    %v401 = vld [vmem:[#allocation4 + $0x2c0] sm:$0xff]
    %v402 = vld [vmem:[#allocation4 + $0x2c8] sm:$0xff]
    %v403 = vld [vmem:[#allocation4 + $0x2d0] sm:$0xff]
    %v404 = vld [vmem:[#allocation4 + $0x2d8] sm:$0xff]
    %v405 = vld [vmem:[#allocation4 + $0x2e0] sm:$0xff]
    %v406 = vld [vmem:[#allocation4 + $0x2e8] sm:$0xff]
    %v407 = vld [vmem:[#allocation4 + $0x2f0] sm:$0xff]
    %v408 = vld [vmem:[#allocation4 + $0x2f8] sm:$0xff]
    %v409 = vld [vmem:[#allocation4 + $0x300] sm:$0xff]
    %v410 = vld [vmem:[#allocation4 + $0x308] sm:$0xff]
    %v411 = vld [vmem:[#allocation4 + $0x310] sm:$0xff]
    %v412 = vld [vmem:[#allocation4 + $0x318] sm:$0xff]
    %v413 = vld [vmem:[#allocation4 + $0x320] sm:$0xff]
    %v414 = vld [vmem:[#allocation4 + $0x328] sm:$0xff]
    %v415 = vld [vmem:[#allocation4 + $0x330] sm:$0xff]
    %v416 = vld [vmem:[#allocation4 + $0x338] sm:$0xff]
    %v417 = vld [vmem:[#allocation4 + $0x340] sm:$0xff]
    %v418 = vld [vmem:[#allocation4 + $0x348] sm:$0xff]
    %v419 = vld [vmem:[#allocation4 + $0x350] sm:$0xff]
    %v420 = vld [vmem:[#allocation4 + $0x358] sm:$0xff]
    %v421 = vld [vmem:[#allocation4 + $0x360] sm:$0xff]
    %v422 = vld [vmem:[#allocation4 + $0x368] sm:$0xff]
    %v423 = vld [vmem:[#allocation4 + $0x370] sm:$0xff]
    %v424 = vld [vmem:[#allocation4 + $0x378] sm:$0xff]
    %v425 = vld [vmem:[#allocation4 + $0x380] sm:$0xff]
    %v426 = vld [vmem:[#allocation4 + $0x388] sm:$0xff]
    %v427 = vld [vmem:[#allocation4 + $0x390] sm:$0xff]
    %v428 = vld [vmem:[#allocation4 + $0x398] sm:$0xff]
    %v429 = vld [vmem:[#allocation4 + $0x3a0] sm:$0xff]
    %v430 = vld [vmem:[#allocation4 + $0x3a8] sm:$0xff]
    %v431 = vld [vmem:[#allocation4 + $0x3b0] sm:$0xff]
    %v432 = vld [vmem:[#allocation4 + $0x3b8] sm:$0xff]
    %v433 = vld [vmem:[#allocation4 + $0x3c0] sm:$0xff]
    %v434 = vld [vmem:[#allocation4 + $0x3c8] sm:$0xff]
    %v435 = vld [vmem:[#allocation4 + $0x3d0] sm:$0xff]
    %v436 = vld [vmem:[#allocation4 + $0x3d8] sm:$0xff]
    %v437 = vld [vmem:[#allocation4 + $0x3e0] sm:$0xff]
    %v438 = vld [vmem:[#allocation4 + $0x3e8] sm:$0xff]
    %v439 = vld [vmem:[#allocation4 + $0x3f0] sm:$0xff]
    %v440 = vld [vmem:[#allocation4 + $0x3f8] sm:$0xff]
    %v442 = vlaneseq
    %v443 = vshrl.u32 %v442, 7
    %v444 = vsub.s32 0, %v443
    %v445 = vrot.slane %v150, %v444
    %v446 = vlaneseq
    %v447 = vshrl.u32 %v446, 7
    %v448 = vsub.s32 1, %v447
    %v449 = vrot.slane %v150, %v448
    %v450 = vlaneseq
    %v451 = vshrl.u32 %v450, 7
    %v452 = vsub.s32 2, %v451
    %v453 = vrot.slane %v150, %v452
    %v454 = vlaneseq
    %v455 = vshrl.u32 %v454, 7
    %v456 = vsub.s32 3, %v455
    %v457 = vrot.slane %v150, %v456
    %v458 = vlaneseq
    %v459 = vshrl.u32 %v458, 7
    %v460 = vsub.s32 4, %v459
    %v461 = vrot.slane %v150, %v460
    %v462 = vlaneseq
    %v463 = vshrl.u32 %v462, 7
    %v464 = vsub.s32 5, %v463
    %v465 = vrot.slane %v150, %v464
    %v466 = vlaneseq
    %v467 = vshrl.u32 %v466, 7
    %v468 = vsub.s32 6, %v467
    %v469 = vrot.slane %v150, %v468
    %v470 = vlaneseq
    %v471 = vshrl.u32 %v470, 7
    %v472 = vsub.s32 7, %v471
    %v473 = vrot.slane %v150, %v472
    %v610 = vunpack.c.l.b16 %v313
    %v611 = vunpack.c.h.b16 %v313
    %v612 = vunpack.c.l.b16 %v314
    %v613 = vunpack.c.h.b16 %v314
    %v614 = vunpack.c.l.b16 %v315
    %v615 = vunpack.c.h.b16 %v315
    %v616 = vunpack.c.l.b16 %v316
    %v617 = vunpack.c.h.b16 %v316
    %v618 = vunpack.c.l.b16 %v317
    %v619 = vunpack.c.h.b16 %v317
    %v620 = vunpack.c.l.b16 %v318
    %v621 = vunpack.c.h.b16 %v318
    %v622 = vunpack.c.l.b16 %v319
    %v623 = vunpack.c.h.b16 %v319
    %v624 = vunpack.c.l.b16 %v320
    %v625 = vunpack.c.h.b16 %v320
    %v626 = vunpack.c.l.b16 %v321
    %v627 = vunpack.c.h.b16 %v321
    %v628 = vunpack.c.l.b16 %v322
    %v629 = vunpack.c.h.b16 %v322
    %v630 = vunpack.c.l.b16 %v323
    %v631 = vunpack.c.h.b16 %v323
    %v632 = vunpack.c.l.b16 %v324
    %v633 = vunpack.c.h.b16 %v324
    %v634 = vunpack.c.l.b16 %v325
    %v635 = vunpack.c.h.b16 %v325
    %v636 = vunpack.c.l.b16 %v326
    %v637 = vunpack.c.h.b16 %v326
    %v638 = vunpack.c.l.b16 %v327
    %v639 = vunpack.c.h.b16 %v327
    %v640 = vunpack.c.l.b16 %v328
    %v641 = vunpack.c.h.b16 %v328
    %v642 = vunpack.c.l.b16 %v329
    %v643 = vunpack.c.h.b16 %v329
    %v644 = vunpack.c.l.b16 %v330
    %v645 = vunpack.c.h.b16 %v330
    %v646 = vunpack.c.l.b16 %v331
    %v647 = vunpack.c.h.b16 %v331
    %v648 = vunpack.c.l.b16 %v332
    %v649 = vunpack.c.h.b16 %v332
    %v650 = vunpack.c.l.b16 %v333
    %v651 = vunpack.c.h.b16 %v333
    %v652 = vunpack.c.l.b16 %v334
    %v653 = vunpack.c.h.b16 %v334
    %v654 = vunpack.c.l.b16 %v335
    %v655 = vunpack.c.h.b16 %v335
    %v656 = vunpack.c.l.b16 %v336
    %v657 = vunpack.c.h.b16 %v336
    %v658 = vunpack.c.l.b16 %v337
    %v659 = vunpack.c.h.b16 %v337
    %v660 = vunpack.c.l.b16 %v338
    %v661 = vunpack.c.h.b16 %v338
    %v662 = vunpack.c.l.b16 %v339
    %v663 = vunpack.c.h.b16 %v339
    %v664 = vunpack.c.l.b16 %v340
    %v665 = vunpack.c.h.b16 %v340
    %v666 = vunpack.c.l.b16 %v341
    %v667 = vunpack.c.h.b16 %v341
    %v668 = vunpack.c.l.b16 %v342
    %v669 = vunpack.c.h.b16 %v342
    %v670 = vunpack.c.l.b16 %v343
    %v671 = vunpack.c.h.b16 %v343
    %v672 = vunpack.c.l.b16 %v344
    %v673 = vunpack.c.h.b16 %v344
    %v674 = vunpack.c.l.b16 %v345
    %v675 = vunpack.c.h.b16 %v345
    %v676 = vunpack.c.l.b16 %v346
    %v677 = vunpack.c.h.b16 %v346
    %v678 = vunpack.c.l.b16 %v347
    %v679 = vunpack.c.h.b16 %v347
    %v680 = vunpack.c.l.b16 %v348
    %v681 = vunpack.c.h.b16 %v348
    %v682 = vunpack.c.l.b16 %v349
    %v683 = vunpack.c.h.b16 %v349
    %v684 = vunpack.c.l.b16 %v350
    %v685 = vunpack.c.h.b16 %v350
    %v686 = vunpack.c.l.b16 %v351
    %v687 = vunpack.c.h.b16 %v351
    %v688 = vunpack.c.l.b16 %v352
    %v689 = vunpack.c.h.b16 %v352
    %v690 = vunpack.c.l.b16 %v353
    %v691 = vunpack.c.h.b16 %v353
    %v692 = vunpack.c.l.b16 %v354
    %v693 = vunpack.c.h.b16 %v354
    %v694 = vunpack.c.l.b16 %v355
    %v695 = vunpack.c.h.b16 %v355
    %v696 = vunpack.c.l.b16 %v356
    %v697 = vunpack.c.h.b16 %v356
    %v698 = vunpack.c.l.b16 %v357
    %v699 = vunpack.c.h.b16 %v357
    %v700 = vunpack.c.l.b16 %v358
    %v701 = vunpack.c.h.b16 %v358
    %v702 = vunpack.c.l.b16 %v359
    %v703 = vunpack.c.h.b16 %v359
    %v704 = vunpack.c.l.b16 %v360
    %v705 = vunpack.c.h.b16 %v360
    %v706 = vunpack.c.l.b16 %v361
    %v707 = vunpack.c.h.b16 %v361
    %v708 = vunpack.c.l.b16 %v362
    %v709 = vunpack.c.h.b16 %v362
    %v710 = vunpack.c.l.b16 %v363
    %v711 = vunpack.c.h.b16 %v363
    %v712 = vunpack.c.l.b16 %v364
    %v713 = vunpack.c.h.b16 %v364
    %v714 = vunpack.c.l.b16 %v365
    %v715 = vunpack.c.h.b16 %v365
    %v716 = vunpack.c.l.b16 %v366
    %v717 = vunpack.c.h.b16 %v366
    %v718 = vunpack.c.l.b16 %v367
    %v719 = vunpack.c.h.b16 %v367
    %v720 = vunpack.c.l.b16 %v368
    %v721 = vunpack.c.h.b16 %v368
    %v722 = vunpack.c.l.b16 %v369
    %v723 = vunpack.c.h.b16 %v369
    %v724 = vunpack.c.l.b16 %v370
    %v725 = vunpack.c.h.b16 %v370
    %v726 = vunpack.c.l.b16 %v371
    %v727 = vunpack.c.h.b16 %v371
    %v728 = vunpack.c.l.b16 %v372
    %v729 = vunpack.c.h.b16 %v372
    %v730 = vunpack.c.l.b16 %v373
    %v731 = vunpack.c.h.b16 %v373
    %v732 = vunpack.c.l.b16 %v374
    %v733 = vunpack.c.h.b16 %v374
    %v734 = vunpack.c.l.b16 %v375
    %v735 = vunpack.c.h.b16 %v375
    %v736 = vunpack.c.l.b16 %v376
    %v737 = vunpack.c.h.b16 %v376
    %v738 = vunpack.c.l.b16 %v377
    %v739 = vunpack.c.h.b16 %v377
    %v740 = vunpack.c.l.b16 %v378
    %v741 = vunpack.c.h.b16 %v378
    %v742 = vunpack.c.l.b16 %v379
    %v743 = vunpack.c.h.b16 %v379
    %v744 = vunpack.c.l.b16 %v380
    %v745 = vunpack.c.h.b16 %v380
    %v746 = vunpack.c.l.b16 %v381
    %v747 = vunpack.c.h.b16 %v381
    %v748 = vunpack.c.l.b16 %v382
    %v749 = vunpack.c.h.b16 %v382
    %v750 = vunpack.c.l.b16 %v383
    %v751 = vunpack.c.h.b16 %v383
    %v752 = vunpack.c.l.b16 %v384
    %v753 = vunpack.c.h.b16 %v384
    %v754 = vunpack.c.l.b16 %v385
    %v755 = vunpack.c.h.b16 %v385
    %v756 = vunpack.c.l.b16 %v386
    %v757 = vunpack.c.h.b16 %v386
    %v758 = vunpack.c.l.b16 %v387
    %v759 = vunpack.c.h.b16 %v387
    %v760 = vunpack.c.l.b16 %v388
    %v761 = vunpack.c.h.b16 %v388
    %v762 = vunpack.c.l.b16 %v389
    %v763 = vunpack.c.h.b16 %v389
    %v764 = vunpack.c.l.b16 %v390
    %v765 = vunpack.c.h.b16 %v390
    %v766 = vunpack.c.l.b16 %v391
    %v767 = vunpack.c.h.b16 %v391
    %v768 = vunpack.c.l.b16 %v392
    %v769 = vunpack.c.h.b16 %v392
    %v770 = vunpack.c.l.b16 %v393
    %v771 = vunpack.c.h.b16 %v393
    %v772 = vunpack.c.l.b16 %v394
    %v773 = vunpack.c.h.b16 %v394
    %v774 = vunpack.c.l.b16 %v395
    %v775 = vunpack.c.h.b16 %v395
    %v776 = vunpack.c.l.b16 %v396
    %v777 = vunpack.c.h.b16 %v396
    %v778 = vunpack.c.l.b16 %v397
    %v779 = vunpack.c.h.b16 %v397
    %v780 = vunpack.c.l.b16 %v398
    %v781 = vunpack.c.h.b16 %v398
    %v782 = vunpack.c.l.b16 %v399
    %v783 = vunpack.c.h.b16 %v399
    %v784 = vunpack.c.l.b16 %v400
    %v785 = vunpack.c.h.b16 %v400
    %v786 = vunpack.c.l.b16 %v401
    %v787 = vunpack.c.h.b16 %v401
    %v788 = vunpack.c.l.b16 %v402
    %v789 = vunpack.c.h.b16 %v402
    %v790 = vunpack.c.l.b16 %v403
    %v791 = vunpack.c.h.b16 %v403
    %v792 = vunpack.c.l.b16 %v404
    %v793 = vunpack.c.h.b16 %v404
    %v794 = vunpack.c.l.b16 %v405
    %v795 = vunpack.c.h.b16 %v405
    %v796 = vunpack.c.l.b16 %v406
    %v797 = vunpack.c.h.b16 %v406
    %v798 = vunpack.c.l.b16 %v407
    %v799 = vunpack.c.h.b16 %v407
    %v800 = vunpack.c.l.b16 %v408
    %v801 = vunpack.c.h.b16 %v408
    %v802 = vunpack.c.l.b16 %v409
    %v803 = vunpack.c.h.b16 %v409
    %v804 = vunpack.c.l.b16 %v410
    %v805 = vunpack.c.h.b16 %v410
    %v806 = vunpack.c.l.b16 %v411
    %v807 = vunpack.c.h.b16 %v411
    %v808 = vunpack.c.l.b16 %v412
    %v809 = vunpack.c.h.b16 %v412
    %v810 = vunpack.c.l.b16 %v413
    %v811 = vunpack.c.h.b16 %v413
    %v812 = vunpack.c.l.b16 %v414
    %v813 = vunpack.c.h.b16 %v414
    %v814 = vunpack.c.l.b16 %v415
    %v815 = vunpack.c.h.b16 %v415
    %v816 = vunpack.c.l.b16 %v416
    %v817 = vunpack.c.h.b16 %v416
    %v818 = vunpack.c.l.b16 %v417
    %v819 = vunpack.c.h.b16 %v417
    %v820 = vunpack.c.l.b16 %v418
    %v821 = vunpack.c.h.b16 %v418
    %v822 = vunpack.c.l.b16 %v419
    %v823 = vunpack.c.h.b16 %v419
    %v824 = vunpack.c.l.b16 %v420
    %v825 = vunpack.c.h.b16 %v420
    %v826 = vunpack.c.l.b16 %v421
    %v827 = vunpack.c.h.b16 %v421
    %v828 = vunpack.c.l.b16 %v422
    %v829 = vunpack.c.h.b16 %v422
    %v830 = vunpack.c.l.b16 %v423
    %v831 = vunpack.c.h.b16 %v423
    %v832 = vunpack.c.l.b16 %v424
    %v833 = vunpack.c.h.b16 %v424
    %v834 = vunpack.c.l.b16 %v425
    %v835 = vunpack.c.h.b16 %v425
    %v836 = vunpack.c.l.b16 %v426
    %v837 = vunpack.c.h.b16 %v426
    %v838 = vunpack.c.l.b16 %v427
    %v839 = vunpack.c.h.b16 %v427
    %v840 = vunpack.c.l.b16 %v428
    %v841 = vunpack.c.h.b16 %v428
    %v842 = vunpack.c.l.b16 %v429
    %v843 = vunpack.c.h.b16 %v429
    %v844 = vunpack.c.l.b16 %v430
    %v845 = vunpack.c.h.b16 %v430
    %v846 = vunpack.c.l.b16 %v431
    %v847 = vunpack.c.h.b16 %v431
    %v848 = vunpack.c.l.b16 %v432
    %v849 = vunpack.c.h.b16 %v432
    %v850 = vunpack.c.l.b16 %v433
    %v851 = vunpack.c.h.b16 %v433
    %v852 = vunpack.c.l.b16 %v434
    %v853 = vunpack.c.h.b16 %v434
    %v854 = vunpack.c.l.b16 %v435
    %v855 = vunpack.c.h.b16 %v435
    %v856 = vunpack.c.l.b16 %v436
    %v857 = vunpack.c.h.b16 %v436
    %v858 = vunpack.c.l.b16 %v437
    %v859 = vunpack.c.h.b16 %v437
    %v860 = vunpack.c.l.b16 %v438
    %v861 = vunpack.c.h.b16 %v438
    %v862 = vunpack.c.l.b16 %v439
    %v863 = vunpack.c.h.b16 %v439
    %v864 = vunpack.c.l.b16 %v440
    %v865 = vunpack.c.h.b16 %v440
    %v866 = vpack.c.b16 %v618, %v610
    %v867 = vpack.c.b16 %v619, %v611
    %v868 = vpack.c.b16 %v620, %v612
    %v869 = vpack.c.b16 %v621, %v613
    %v870 = vpack.c.b16 %v622, %v614
    %v871 = vpack.c.b16 %v623, %v615
    %v872 = vpack.c.b16 %v624, %v616
    %v873 = vpack.c.b16 %v625, %v617
    %v874 = vpack.c.b16 %v634, %v626
    %v875 = vpack.c.b16 %v635, %v627
    %v876 = vpack.c.b16 %v636, %v628
    %v877 = vpack.c.b16 %v637, %v629
    %v878 = vpack.c.b16 %v638, %v630
    %v879 = vpack.c.b16 %v639, %v631
    %v880 = vpack.c.b16 %v640, %v632
    %v881 = vpack.c.b16 %v641, %v633
    %v882 = vpack.c.b16 %v650, %v642
    %v883 = vpack.c.b16 %v651, %v643
    %v884 = vpack.c.b16 %v652, %v644
    %v885 = vpack.c.b16 %v653, %v645
    %v886 = vpack.c.b16 %v654, %v646
    %v887 = vpack.c.b16 %v655, %v647
    %v888 = vpack.c.b16 %v656, %v648
    %v889 = vpack.c.b16 %v657, %v649
    %v890 = vpack.c.b16 %v666, %v658
    %v891 = vpack.c.b16 %v667, %v659
    %v892 = vpack.c.b16 %v668, %v660
    %v893 = vpack.c.b16 %v669, %v661
    %v894 = vpack.c.b16 %v670, %v662
    %v895 = vpack.c.b16 %v671, %v663
    %v896 = vpack.c.b16 %v672, %v664
    %v897 = vpack.c.b16 %v673, %v665
    %v898 = vpack.c.b16 %v682, %v674
    %v899 = vpack.c.b16 %v683, %v675
    %v900 = vpack.c.b16 %v684, %v676
    %v901 = vpack.c.b16 %v685, %v677
    %v902 = vpack.c.b16 %v686, %v678
    %v903 = vpack.c.b16 %v687, %v679
    %v904 = vpack.c.b16 %v688, %v680
    %v905 = vpack.c.b16 %v689, %v681
    %v906 = vpack.c.b16 %v698, %v690
    %v907 = vpack.c.b16 %v699, %v691
    %v908 = vpack.c.b16 %v700, %v692
    %v909 = vpack.c.b16 %v701, %v693
    %v910 = vpack.c.b16 %v702, %v694
    %v911 = vpack.c.b16 %v703, %v695
    %v912 = vpack.c.b16 %v704, %v696
    %v913 = vpack.c.b16 %v705, %v697
    %v914 = vpack.c.b16 %v714, %v706
    %v915 = vpack.c.b16 %v715, %v707
    %v916 = vpack.c.b16 %v716, %v708
    %v917 = vpack.c.b16 %v717, %v709
    %v918 = vpack.c.b16 %v718, %v710
    %v919 = vpack.c.b16 %v719, %v711
    %v920 = vpack.c.b16 %v720, %v712
    %v921 = vpack.c.b16 %v721, %v713
    %v922 = vpack.c.b16 %v730, %v722
    %v923 = vpack.c.b16 %v731, %v723
    %v924 = vpack.c.b16 %v732, %v724
    %v925 = vpack.c.b16 %v733, %v725
    %v926 = vpack.c.b16 %v734, %v726
    %v927 = vpack.c.b16 %v735, %v727
    %v928 = vpack.c.b16 %v736, %v728
    %v929 = vpack.c.b16 %v737, %v729
    %v930 = vpack.c.b16 %v746, %v738
    %v931 = vpack.c.b16 %v747, %v739
    %v932 = vpack.c.b16 %v748, %v740
    %v933 = vpack.c.b16 %v749, %v741
    %v934 = vpack.c.b16 %v750, %v742
    %v935 = vpack.c.b16 %v751, %v743
    %v936 = vpack.c.b16 %v752, %v744
    %v937 = vpack.c.b16 %v753, %v745
    %v938 = vpack.c.b16 %v762, %v754
    %v939 = vpack.c.b16 %v763, %v755
    %v940 = vpack.c.b16 %v764, %v756
    %v941 = vpack.c.b16 %v765, %v757
    %v942 = vpack.c.b16 %v766, %v758
    %v943 = vpack.c.b16 %v767, %v759
    %v944 = vpack.c.b16 %v768, %v760
    %v945 = vpack.c.b16 %v769, %v761
    %v946 = vpack.c.b16 %v778, %v770
    %v947 = vpack.c.b16 %v779, %v771
    %v948 = vpack.c.b16 %v780, %v772
    %v949 = vpack.c.b16 %v781, %v773
    %v950 = vpack.c.b16 %v782, %v774
    %v951 = vpack.c.b16 %v783, %v775
    %v952 = vpack.c.b16 %v784, %v776
    %v953 = vpack.c.b16 %v785, %v777
    %v954 = vpack.c.b16 %v794, %v786
    %v955 = vpack.c.b16 %v795, %v787
    %v956 = vpack.c.b16 %v796, %v788
    %v957 = vpack.c.b16 %v797, %v789
    %v958 = vpack.c.b16 %v798, %v790
    %v959 = vpack.c.b16 %v799, %v791
    %v960 = vpack.c.b16 %v800, %v792
    %v961 = vpack.c.b16 %v801, %v793
    %v962 = vpack.c.b16 %v810, %v802
    %v963 = vpack.c.b16 %v811, %v803
    %v964 = vpack.c.b16 %v812, %v804
    %v965 = vpack.c.b16 %v813, %v805
    %v966 = vpack.c.b16 %v814, %v806
    %v967 = vpack.c.b16 %v815, %v807
    %v968 = vpack.c.b16 %v816, %v808
    %v969 = vpack.c.b16 %v817, %v809
    %v970 = vpack.c.b16 %v826, %v818
    %v971 = vpack.c.b16 %v827, %v819
    %v972 = vpack.c.b16 %v828, %v820
    %v973 = vpack.c.b16 %v829, %v821
    %v974 = vpack.c.b16 %v830, %v822
    %v975 = vpack.c.b16 %v831, %v823
    %v976 = vpack.c.b16 %v832, %v824
    %v977 = vpack.c.b16 %v833, %v825
    %v978 = vpack.c.b16 %v842, %v834
    %v979 = vpack.c.b16 %v843, %v835
    %v980 = vpack.c.b16 %v844, %v836
    %v981 = vpack.c.b16 %v845, %v837
    %v982 = vpack.c.b16 %v846, %v838
    %v983 = vpack.c.b16 %v847, %v839
    %v984 = vpack.c.b16 %v848, %v840
    %v985 = vpack.c.b16 %v849, %v841
    %v986 = vpack.c.b16 %v858, %v850
    %v987 = vpack.c.b16 %v859, %v851
    %v988 = vpack.c.b16 %v860, %v852
    %v989 = vpack.c.b16 %v861, %v853
    %v990 = vpack.c.b16 %v862, %v854
    %v991 = vpack.c.b16 %v863, %v855
    %v992 = vpack.c.b16 %v864, %v856
    %v993 = vpack.c.b16 %v865, %v857
    %1122 = vmatprep.subr.bf16.mxu0 %v867
    %1123 = vmatpush1.bf16.msra.mxu0 %v866
    %1124 = vmatprep.subr.bf16.mxu0 %v875
    %1125 = vmatpush1.bf16.msra.mxu0 %v874
    %1126 = vmatprep.subr.bf16.mxu0 %v883
    %1127 = vmatpush1.bf16.msra.mxu0 %v882
    %1128 = vmatprep.subr.bf16.mxu0 %v891
    %1129 = vmatpush1.bf16.msra.mxu0 %v890
    %1130 = vmatprep.subr.bf16.mxu0 %v899
    %1131 = vmatpush1.bf16.msra.mxu0 %v898
    %1132 = vmatprep.subr.bf16.mxu0 %v907
    %1133 = vmatpush1.bf16.msra.mxu0 %v906
    %1134 = vmatprep.subr.bf16.mxu0 %v915
    %1135 = vmatpush1.bf16.msra.mxu0 %v914
    %1136 = vmatprep.subr.bf16.mxu0 %v923
    %1137 = vmatpush1.bf16.msra.mxu0 %v922
    %1138 = vmatprep.subr.bf16.mxu0 %v931
    %1139 = vmatpush1.bf16.msra.mxu0 %v930
    %1140 = vmatprep.subr.bf16.mxu0 %v939
    %1141 = vmatpush1.bf16.msra.mxu0 %v938
    %1142 = vmatprep.subr.bf16.mxu0 %v947
    %1143 = vmatpush1.bf16.msra.mxu0 %v946
    %1144 = vmatprep.subr.bf16.mxu0 %v955
    %1145 = vmatpush1.bf16.msra.mxu0 %v954
    %1146 = vmatprep.subr.bf16.mxu0 %v963
    %1147 = vmatpush1.bf16.msra.mxu0 %v962
    %1148 = vmatprep.subr.bf16.mxu0 %v971
    %1149 = vmatpush1.bf16.msra.mxu0 %v970
    %1150 = vmatprep.subr.bf16.mxu0 %v979
    %1151 = vmatpush1.bf16.msra.mxu0 %v978
    %1152 = vmatprep.subr.bf16.mxu0 %v987
    %1153 = vmatpush1.bf16.msra.mxu0 %v986
    %1154 = vmatprep.mubr.bf16.mxu0 %v306
    %1155 = vmatmul.mubr.bf16.gmra.mrb[0].mxu0 %v305
    %v1156 = vpop.f32.mrb[0].mxu0
    %v1157 = vadd.f32 %v445, %v1156
    %v1158 = vpop.f32.mrb[0].mxu0
    %v1159 = vadd.f32 %v449, %v1158
    %v1160 = vpop.f32.mrb[0].mxu0
    %v1161 = vadd.f32 %v445, %v1160
    %v1162 = vpop.f32.mrb[0].mxu0
    %v1163 = vadd.f32 %v449, %v1162
    %1164 = vmatprep.mubr.bf16.mxu0 %v308
    %1165 = vmatmul.mubr.bf16.gmra.mrb[0].mxu0 %v307
    %v1166 = vpop.f32.mrb[0].mxu0
    %v1167 = vadd.f32 %v445, %v1166
    %v1168 = vpop.f32.mrb[0].mxu0
    %v1169 = vadd.f32 %v449, %v1168
    %v1170 = vpop.f32.mrb[0].mxu0
    %v1171 = vadd.f32 %v445, %v1170
    %v1172 = vpop.f32.mrb[0].mxu0
    %v1173 = vadd.f32 %v449, %v1172
    %1174 = vmatprep.mubr.bf16.mxu0 %v310
    %1175 = vmatmul.mubr.bf16.gmra.mrb[0].mxu0 %v309
    %v1176 = vpop.f32.mrb[0].mxu0
    %v1177 = vadd.f32 %v445, %v1176
    %v1178 = vpop.f32.mrb[0].mxu0
    %v1179 = vadd.f32 %v449, %v1178
    %v1180 = vpop.f32.mrb[0].mxu0
    %v1181 = vadd.f32 %v445, %v1180
    %v1182 = vpop.f32.mrb[0].mxu0
    %v1183 = vadd.f32 %v449, %v1182
    %1184 = vmatprep.mubr.bf16.mxu0 %v312
    %1185 = vmatmul.mubr.bf16.gmra.mrb[0].mxu0 %v311
    %v1186 = vpop.f32.mrb[0].mxu0
    %v1187 = vadd.f32 %v445, %v1186
    %v1188 = vpop.f32.mrb[0].mxu0
    %v1189 = vadd.f32 %v449, %v1188
    %v1190 = vpop.f32.mrb[0].mxu0
    %v1191 = vadd.f32 %v445, %v1190
    %v1192 = vpop.f32.mrb[0].mxu0
    %v1193 = vadd.f32 %v449, %v1192
    %1194 = vdwg.mxu0
    %1195 = vmatprep.subr.bf16.mxu0 %v869
    %1196 = vmatpush1.bf16.msra.mxu0 %v868
    %1197 = vmatprep.subr.bf16.mxu0 %v877
    %1198 = vmatpush1.bf16.msra.mxu0 %v876
    %1199 = vmatprep.subr.bf16.mxu0 %v885
    %1200 = vmatpush1.bf16.msra.mxu0 %v884
    %1201 = vmatprep.subr.bf16.mxu0 %v893
    %1202 = vmatpush1.bf16.msra.mxu0 %v892
    %1203 = vmatprep.subr.bf16.mxu0 %v901
    %1204 = vmatpush1.bf16.msra.mxu0 %v900
    %1205 = vmatprep.subr.bf16.mxu0 %v909
    %1206 = vmatpush1.bf16.msra.mxu0 %v908
    %1207 = vmatprep.subr.bf16.mxu0 %v917
    %1208 = vmatpush1.bf16.msra.mxu0 %v916
    %1209 = vmatprep.subr.bf16.mxu0 %v925
    %1210 = vmatpush1.bf16.msra.mxu0 %v924
    %1211 = vmatprep.subr.bf16.mxu0 %v933
    %1212 = vmatpush1.bf16.msra.mxu0 %v932
    %1213 = vmatprep.subr.bf16.mxu0 %v941
    %1214 = vmatpush1.bf16.msra.mxu0 %v940
    %1215 = vmatprep.subr.bf16.mxu0 %v949
    %1216 = vmatpush1.bf16.msra.mxu0 %v948
    %1217 = vmatprep.subr.bf16.mxu0 %v957
    %1218 = vmatpush1.bf16.msra.mxu0 %v956
    %1219 = vmatprep.subr.bf16.mxu0 %v965
    %1220 = vmatpush1.bf16.msra.mxu0 %v964
    %1221 = vmatprep.subr.bf16.mxu0 %v973
    %1222 = vmatpush1.bf16.msra.mxu0 %v972
    %1223 = vmatprep.subr.bf16.mxu0 %v981
    %1224 = vmatpush1.bf16.msra.mxu0 %v980
    %1225 = vmatprep.subr.bf16.mxu0 %v989
    %1226 = vmatpush1.bf16.msra.mxu0 %v988
    %1227 = vmatprep.mubr.bf16.mxu0 %v306
    %1228 = vmatmul.mubr.bf16.gmra.mrb[0].mxu0 %v305
    %v1229 = vpop.f32.mrb[0].mxu0
    %v1230 = vadd.f32 %v453, %v1229
    %v1231 = vpop.f32.mrb[0].mxu0
    %v1232 = vadd.f32 %v457, %v1231
    %v1233 = vpop.f32.mrb[0].mxu0
    %v1234 = vadd.f32 %v453, %v1233
    %v1235 = vpop.f32.mrb[0].mxu0
    %v1236 = vadd.f32 %v457, %v1235
    %1237 = vmatprep.mubr.bf16.mxu0 %v308
    %1238 = vmatmul.mubr.bf16.gmra.mrb[0].mxu0 %v307
    %v1239 = vpop.f32.mrb[0].mxu0
    %v1240 = vadd.f32 %v453, %v1239
    %v1241 = vpop.f32.mrb[0].mxu0
    %v1242 = vadd.f32 %v457, %v1241
    %v1243 = vpop.f32.mrb[0].mxu0
    %v1244 = vadd.f32 %v453, %v1243
    %v1245 = vpop.f32.mrb[0].mxu0
    %v1246 = vadd.f32 %v457, %v1245
    %1247 = vmatprep.mubr.bf16.mxu0 %v310
    %1248 = vmatmul.mubr.bf16.gmra.mrb[0].mxu0 %v309
    %v1249 = vpop.f32.mrb[0].mxu0
    %v1250 = vadd.f32 %v453, %v1249
    %v1251 = vpop.f32.mrb[0].mxu0
    %v1252 = vadd.f32 %v457, %v1251
    %v1253 = vpop.f32.mrb[0].mxu0
    %v1254 = vadd.f32 %v453, %v1253
    %v1255 = vpop.f32.mrb[0].mxu0
    %v1256 = vadd.f32 %v457, %v1255
    %1257 = vmatprep.mubr.bf16.mxu0 %v312
    %1258 = vmatmul.mubr.bf16.gmra.mrb[0].mxu0 %v311
    %v1259 = vpop.f32.mrb[0].mxu0
    %v1260 = vadd.f32 %v453, %v1259
    %v1261 = vpop.f32.mrb[0].mxu0
    %v1262 = vadd.f32 %v457, %v1261
    %v1263 = vpop.f32.mrb[0].mxu0
    %v1264 = vadd.f32 %v453, %v1263
    %v1265 = vpop.f32.mrb[0].mxu0
    %v1266 = vadd.f32 %v457, %v1265
    %1267 = vdwg.mxu0
    %1268 = vmatprep.subr.bf16.mxu0 %v871
    %1269 = vmatpush1.bf16.msra.mxu0 %v870
    %1270 = vmatprep.subr.bf16.mxu0 %v879
    %1271 = vmatpush1.bf16.msra.mxu0 %v878
    %1272 = vmatprep.subr.bf16.mxu0 %v887
    %1273 = vmatpush1.bf16.msra.mxu0 %v886
    %1274 = vmatprep.subr.bf16.mxu0 %v895
    %1275 = vmatpush1.bf16.msra.mxu0 %v894
    %1276 = vmatprep.subr.bf16.mxu0 %v903
    %1277 = vmatpush1.bf16.msra.mxu0 %v902
    %1278 = vmatprep.subr.bf16.mxu0 %v911
    %1279 = vmatpush1.bf16.msra.mxu0 %v910
    %1280 = vmatprep.subr.bf16.mxu0 %v919
    %1281 = vmatpush1.bf16.msra.mxu0 %v918
    %1282 = vmatprep.subr.bf16.mxu0 %v927
    %1283 = vmatpush1.bf16.msra.mxu0 %v926
    %1284 = vmatprep.subr.bf16.mxu0 %v935
    %1285 = vmatpush1.bf16.msra.mxu0 %v934
    %1286 = vmatprep.subr.bf16.mxu0 %v943
    %1287 = vmatpush1.bf16.msra.mxu0 %v942
    %1288 = vmatprep.subr.bf16.mxu0 %v951
    %1289 = vmatpush1.bf16.msra.mxu0 %v950
    %1290 = vmatprep.subr.bf16.mxu0 %v959
    %1291 = vmatpush1.bf16.msra.mxu0 %v958
    %1292 = vmatprep.subr.bf16.mxu0 %v967
    %1293 = vmatpush1.bf16.msra.mxu0 %v966
    %1294 = vmatprep.subr.bf16.mxu0 %v975
    %1295 = vmatpush1.bf16.msra.mxu0 %v974
    %1296 = vmatprep.subr.bf16.mxu0 %v983
    %1297 = vmatpush1.bf16.msra.mxu0 %v982
    %1298 = vmatprep.subr.bf16.mxu0 %v991
    %1299 = vmatpush1.bf16.msra.mxu0 %v990
    %1300 = vmatprep.mubr.bf16.mxu0 %v306
    %1301 = vmatmul.mubr.bf16.gmra.mrb[0].mxu0 %v305
    %v1302 = vpop.f32.mrb[0].mxu0
    %v1303 = vadd.f32 %v461, %v1302
    %v1304 = vpop.f32.mrb[0].mxu0
    %v1305 = vadd.f32 %v465, %v1304
    %v1306 = vpop.f32.mrb[0].mxu0
    %v1307 = vadd.f32 %v461, %v1306
    %v1308 = vpop.f32.mrb[0].mxu0
    %v1309 = vadd.f32 %v465, %v1308
    %1310 = vmatprep.mubr.bf16.mxu0 %v308
    %1311 = vmatmul.mubr.bf16.gmra.mrb[0].mxu0 %v307
    %v1312 = vpop.f32.mrb[0].mxu0
    %v1313 = vadd.f32 %v461, %v1312
    %v1314 = vpop.f32.mrb[0].mxu0
    %v1315 = vadd.f32 %v465, %v1314
    %v1316 = vpop.f32.mrb[0].mxu0
    %v1317 = vadd.f32 %v461, %v1316
    %v1318 = vpop.f32.mrb[0].mxu0
    %v1319 = vadd.f32 %v465, %v1318
    %1320 = vmatprep.mubr.bf16.mxu0 %v310
    %1321 = vmatmul.mubr.bf16.gmra.mrb[0].mxu0 %v309
    %v1322 = vpop.f32.mrb[0].mxu0
    %v1323 = vadd.f32 %v461, %v1322
    %v1324 = vpop.f32.mrb[0].mxu0
    %v1325 = vadd.f32 %v465, %v1324
    %v1326 = vpop.f32.mrb[0].mxu0
    %v1327 = vadd.f32 %v461, %v1326
    %v1328 = vpop.f32.mrb[0].mxu0
    %v1329 = vadd.f32 %v465, %v1328
    %1330 = vmatprep.mubr.bf16.mxu0 %v312
    %1331 = vmatmul.mubr.bf16.gmra.mrb[0].mxu0 %v311
    %v1332 = vpop.f32.mrb[0].mxu0
    %v1333 = vadd.f32 %v461, %v1332
    %v1334 = vpop.f32.mrb[0].mxu0
    %v1335 = vadd.f32 %v465, %v1334
    %v1336 = vpop.f32.mrb[0].mxu0
    %v1337 = vadd.f32 %v461, %v1336
    %v1338 = vpop.f32.mrb[0].mxu0
    %v1339 = vadd.f32 %v465, %v1338
    %1340 = vdwg.mxu0
    %1341 = vmatprep.subr.bf16.mxu0 %v873
    %1342 = vmatpush1.bf16.msra.mxu0 %v872
    %1343 = vmatprep.subr.bf16.mxu0 %v881
    %1344 = vmatpush1.bf16.msra.mxu0 %v880
    %1345 = vmatprep.subr.bf16.mxu0 %v889
    %1346 = vmatpush1.bf16.msra.mxu0 %v888
    %1347 = vmatprep.subr.bf16.mxu0 %v897
    %1348 = vmatpush1.bf16.msra.mxu0 %v896
    %1349 = vmatprep.subr.bf16.mxu0 %v905
    %1350 = vmatpush1.bf16.msra.mxu0 %v904
    %1351 = vmatprep.subr.bf16.mxu0 %v913
    %1352 = vmatpush1.bf16.msra.mxu0 %v912
    %1353 = vmatprep.subr.bf16.mxu0 %v921
    %1354 = vmatpush1.bf16.msra.mxu0 %v920
    %1355 = vmatprep.subr.bf16.mxu0 %v929
    %1356 = vmatpush1.bf16.msra.mxu0 %v928
    %1357 = vmatprep.subr.bf16.mxu0 %v937
    %1358 = vmatpush1.bf16.msra.mxu0 %v936
    %1359 = vmatprep.subr.bf16.mxu0 %v945
    %1360 = vmatpush1.bf16.msra.mxu0 %v944
    %1361 = vmatprep.subr.bf16.mxu0 %v953
    %1362 = vmatpush1.bf16.msra.mxu0 %v952
    %1363 = vmatprep.subr.bf16.mxu0 %v961
    %1364 = vmatpush1.bf16.msra.mxu0 %v960
    %1365 = vmatprep.subr.bf16.mxu0 %v969
    %1366 = vmatpush1.bf16.msra.mxu0 %v968
    %1367 = vmatprep.subr.bf16.mxu0 %v977
    %1368 = vmatpush1.bf16.msra.mxu0 %v976
    %1369 = vmatprep.subr.bf16.mxu0 %v985
    %1370 = vmatpush1.bf16.msra.mxu0 %v984
    %1371 = vmatprep.subr.bf16.mxu0 %v993
    %1372 = vmatpush1.bf16.msra.mxu0 %v992
    %1373 = vmatprep.mubr.bf16.mxu0 %v306
    %1374 = vmatmul.mubr.bf16.gmra.mrb[0].mxu0 %v305
    %v1375 = vpop.f32.mrb[0].mxu0
    %v1376 = vadd.f32 %v469, %v1375
    %v1377 = vpop.f32.mrb[0].mxu0
    %v1378 = vadd.f32 %v473, %v1377
    %v1379 = vpop.f32.mrb[0].mxu0
    %v1380 = vadd.f32 %v469, %v1379
    %v1381 = vpop.f32.mrb[0].mxu0
    %v1382 = vadd.f32 %v473, %v1381
    %1383 = vmatprep.mubr.bf16.mxu0 %v308
    %1384 = vmatmul.mubr.bf16.gmra.mrb[0].mxu0 %v307
    %v1385 = vpop.f32.mrb[0].mxu0
    %v1386 = vadd.f32 %v469, %v1385
    %v1387 = vpop.f32.mrb[0].mxu0
    %v1388 = vadd.f32 %v473, %v1387
    %v1389 = vpop.f32.mrb[0].mxu0
    %v1390 = vadd.f32 %v469, %v1389
    %v1391 = vpop.f32.mrb[0].mxu0
    %v1392 = vadd.f32 %v473, %v1391
    %1393 = vmatprep.mubr.bf16.mxu0 %v310
    %1394 = vmatmul.mubr.bf16.gmra.mrb[0].mxu0 %v309
    %v1395 = vpop.f32.mrb[0].mxu0
    %v1396 = vadd.f32 %v469, %v1395
    %v1397 = vpop.f32.mrb[0].mxu0
    %v1398 = vadd.f32 %v473, %v1397
    %v1399 = vpop.f32.mrb[0].mxu0
    %v1400 = vadd.f32 %v469, %v1399
    %v1401 = vpop.f32.mrb[0].mxu0
    %v1402 = vadd.f32 %v473, %v1401
    %1403 = vmatprep.mubr.bf16.mxu0 %v312
    %1404 = vmatmul.mubr.bf16.gmra.mrb[0].mxu0 %v311
    %v1405 = vpop.f32.mrb[0].mxu0
    %v1406 = vadd.f32 %v469, %v1405
    %v1407 = vpop.f32.mrb[0].mxu0
    %v1408 = vadd.f32 %v473, %v1407
    %v1409 = vpop.f32.mrb[0].mxu0
    %v1410 = vadd.f32 %v469, %v1409
    %v1411 = vpop.f32.mrb[0].mxu0
    %v1412 = vadd.f32 %v473, %v1411
    %1413 = vdwg.mxu0
    %1414 = vst [vmem:[#allocation2] sm:$0xff] %v1157
    %1415 = vst [vmem:[#allocation2 + $0x8] sm:$0xff] %v1159
    %1416 = vst [vmem:[#allocation2 + $0x10] sm:$0xff] %v1230
    %1417 = vst [vmem:[#allocation2 + $0x18] sm:$0xff] %v1232
    %1418 = vst [vmem:[#allocation2 + $0x20] sm:$0xff] %v1303
    %1419 = vst [vmem:[#allocation2 + $0x28] sm:$0xff] %v1305
    %1420 = vst [vmem:[#allocation2 + $0x30] sm:$0xff] %v1376
    %1421 = vst [vmem:[#allocation2 + $0x38] sm:$0xff] %v1378
    %1422 = vst [vmem:[#allocation2 + $0x40] sm:$0xff] %v1161
    %1423 = vst [vmem:[#allocation2 + $0x48] sm:$0xff] %v1163
    %1424 = vst [vmem:[#allocation2 + $0x50] sm:$0xff] %v1234
    %1425 = vst [vmem:[#allocation2 + $0x58] sm:$0xff] %v1236
    %1426 = vst [vmem:[#allocation2 + $0x60] sm:$0xff] %v1307
    %1427 = vst [vmem:[#allocation2 + $0x68] sm:$0xff] %v1309
    %1428 = vst [vmem:[#allocation2 + $0x70] sm:$0xff] %v1380
    %1429 = vst [vmem:[#allocation2 + $0x78] sm:$0xff] %v1382
    %1430 = vst [vmem:[#allocation2 + $0x80] sm:$0xff] %v1167
    %1431 = vst [vmem:[#allocation2 + $0x88] sm:$0xff] %v1169
    %1432 = vst [vmem:[#allocation2 + $0x90] sm:$0xff] %v1240
    %1433 = vst [vmem:[#allocation2 + $0x98] sm:$0xff] %v1242
    %1434 = vst [vmem:[#allocation2 + $0xa0] sm:$0xff] %v1313
    %1435 = vst [vmem:[#allocation2 + $0xa8] sm:$0xff] %v1315
    %1436 = vst [vmem:[#allocation2 + $0xb0] sm:$0xff] %v1386
    %1437 = vst [vmem:[#allocation2 + $0xb8] sm:$0xff] %v1388
    %1438 = vst [vmem:[#allocation2 + $0xc0] sm:$0xff] %v1171
    %1439 = vst [vmem:[#allocation2 + $0xc8] sm:$0xff] %v1173
    %1440 = vst [vmem:[#allocation2 + $0xd0] sm:$0xff] %v1244
    %1441 = vst [vmem:[#allocation2 + $0xd8] sm:$0xff] %v1246
    %1442 = vst [vmem:[#allocation2 + $0xe0] sm:$0xff] %v1317
    %1443 = vst [vmem:[#allocation2 + $0xe8] sm:$0xff] %v1319
    %1444 = vst [vmem:[#allocation2 + $0xf0] sm:$0xff] %v1390
    %1445 = vst [vmem:[#allocation2 + $0xf8] sm:$0xff] %v1392
    %1446 = vst [vmem:[#allocation2 + $0x100] sm:$0xff] %v1177
    %1447 = vst [vmem:[#allocation2 + $0x108] sm:$0xff] %v1179
    %1448 = vst [vmem:[#allocation2 + $0x110] sm:$0xff] %v1250
    %1449 = vst [vmem:[#allocation2 + $0x118] sm:$0xff] %v1252
    %1450 = vst [vmem:[#allocation2 + $0x120] sm:$0xff] %v1323
    %1451 = vst [vmem:[#allocation2 + $0x128] sm:$0xff] %v1325
    %1452 = vst [vmem:[#allocation2 + $0x130] sm:$0xff] %v1396
    %1453 = vst [vmem:[#allocation2 + $0x138] sm:$0xff] %v1398
    %1454 = vst [vmem:[#allocation2 + $0x140] sm:$0xff] %v1181
    %1455 = vst [vmem:[#allocation2 + $0x148] sm:$0xff] %v1183
    %1456 = vst [vmem:[#allocation2 + $0x150] sm:$0xff] %v1254
    %1457 = vst [vmem:[#allocation2 + $0x158] sm:$0xff] %v1256
    %1458 = vst [vmem:[#allocation2 + $0x160] sm:$0xff] %v1327
    %1459 = vst [vmem:[#allocation2 + $0x168] sm:$0xff] %v1329
    %1460 = vst [vmem:[#allocation2 + $0x170] sm:$0xff] %v1400
    %1461 = vst [vmem:[#allocation2 + $0x178] sm:$0xff] %v1402
    %1462 = vst [vmem:[#allocation2 + $0x180] sm:$0xff] %v1187
    %1463 = vst [vmem:[#allocation2 + $0x188] sm:$0xff] %v1189
    %1464 = vst [vmem:[#allocation2 + $0x190] sm:$0xff] %v1260
    %1465 = vst [vmem:[#allocation2 + $0x198] sm:$0xff] %v1262
    %1466 = vst [vmem:[#allocation2 + $0x1a0] sm:$0xff] %v1333
    %1467 = vst [vmem:[#allocation2 + $0x1a8] sm:$0xff] %v1335
    %1468 = vst [vmem:[#allocation2 + $0x1b0] sm:$0xff] %v1406
    %1469 = vst [vmem:[#allocation2 + $0x1b8] sm:$0xff] %v1408
    %1470 = vst [vmem:[#allocation2 + $0x1c0] sm:$0xff] %v1191
    %1471 = vst [vmem:[#allocation2 + $0x1c8] sm:$0xff] %v1193
    %1472 = vst [vmem:[#allocation2 + $0x1d0] sm:$0xff] %v1264
    %1473 = vst [vmem:[#allocation2 + $0x1d8] sm:$0xff] %v1266
    %1474 = vst [vmem:[#allocation2 + $0x1e0] sm:$0xff] %v1337
    %1475 = vst [vmem:[#allocation2 + $0x1e8] sm:$0xff] %v1339
    %1476 = vst [vmem:[#allocation2 + $0x1f0] sm:$0xff] %v1410
    %1477 = vst [vmem:[#allocation2 + $0x1f8] sm:$0xff] %v1412
    %v1478 = vld [vmem:[#allocation6] sm:$0xff]
    %v1479 = vld [vmem:[#allocation6 + $0x8] sm:$0xff]
    %v1480 = vld [vmem:[#allocation6 + $0x10] sm:$0xff]
    %v1481 = vld [vmem:[#allocation6 + $0x18] sm:$0xff]
    %v1482 = vld [vmem:[#allocation6 + $0x20] sm:$0xff]
    %v1483 = vld [vmem:[#allocation6 + $0x28] sm:$0xff]
    %v1484 = vld [vmem:[#allocation6 + $0x30] sm:$0xff]
    %v1485 = vld [vmem:[#allocation6 + $0x38] sm:$0xff]
    %v1486 = vld [vmem:[#allocation6 + $0x40] sm:$0xff]
    %v1487 = vld [vmem:[#allocation6 + $0x48] sm:$0xff]
    %v1488 = vld [vmem:[#allocation6 + $0x50] sm:$0xff]
    %v1489 = vld [vmem:[#allocation6 + $0x58] sm:$0xff]
    %v1490 = vld [vmem:[#allocation6 + $0x60] sm:$0xff]
    %v1491 = vld [vmem:[#allocation6 + $0x68] sm:$0xff]
    %v1492 = vld [vmem:[#allocation6 + $0x70] sm:$0xff]
    %v1493 = vld [vmem:[#allocation6 + $0x78] sm:$0xff]
    %v1494 = vld [vmem:[#allocation6 + $0x80] sm:$0xff]
    %v1495 = vld [vmem:[#allocation6 + $0x88] sm:$0xff]
    %v1496 = vld [vmem:[#allocation6 + $0x90] sm:$0xff]
    %v1497 = vld [vmem:[#allocation6 + $0x98] sm:$0xff]
    %v1498 = vld [vmem:[#allocation6 + $0xa0] sm:$0xff]
    %v1499 = vld [vmem:[#allocation6 + $0xa8] sm:$0xff]
    %v1500 = vld [vmem:[#allocation6 + $0xb0] sm:$0xff]
    %v1501 = vld [vmem:[#allocation6 + $0xb8] sm:$0xff]
    %v1502 = vld [vmem:[#allocation6 + $0xc0] sm:$0xff]
    %v1503 = vld [vmem:[#allocation6 + $0xc8] sm:$0xff]
    %v1504 = vld [vmem:[#allocation6 + $0xd0] sm:$0xff]
    %v1505 = vld [vmem:[#allocation6 + $0xd8] sm:$0xff]
    %v1506 = vld [vmem:[#allocation6 + $0xe0] sm:$0xff]
    %v1507 = vld [vmem:[#allocation6 + $0xe8] sm:$0xff]
    %v1508 = vld [vmem:[#allocation6 + $0xf0] sm:$0xff]
    %v1509 = vld [vmem:[#allocation6 + $0xf8] sm:$0xff]
    %v1510 = vld [vmem:[#allocation6 + $0x100] sm:$0xff]
    %v1511 = vld [vmem:[#allocation6 + $0x108] sm:$0xff]
    %v1512 = vld [vmem:[#allocation6 + $0x110] sm:$0xff]
    %v1513 = vld [vmem:[#allocation6 + $0x118] sm:$0xff]
    %v1514 = vld [vmem:[#allocation6 + $0x120] sm:$0xff]
    %v1515 = vld [vmem:[#allocation6 + $0x128] sm:$0xff]
    %v1516 = vld [vmem:[#allocation6 + $0x130] sm:$0xff]
    %v1517 = vld [vmem:[#allocation6 + $0x138] sm:$0xff]
    %v1518 = vld [vmem:[#allocation6 + $0x140] sm:$0xff]
    %v1519 = vld [vmem:[#allocation6 + $0x148] sm:$0xff]
    %v1520 = vld [vmem:[#allocation6 + $0x150] sm:$0xff]
    %v1521 = vld [vmem:[#allocation6 + $0x158] sm:$0xff]
    %v1522 = vld [vmem:[#allocation6 + $0x160] sm:$0xff]
    %v1523 = vld [vmem:[#allocation6 + $0x168] sm:$0xff]
    %v1524 = vld [vmem:[#allocation6 + $0x170] sm:$0xff]
    %v1525 = vld [vmem:[#allocation6 + $0x178] sm:$0xff]
    %v1526 = vld [vmem:[#allocation6 + $0x180] sm:$0xff]
    %v1527 = vld [vmem:[#allocation6 + $0x188] sm:$0xff]
    %v1528 = vld [vmem:[#allocation6 + $0x190] sm:$0xff]
    %v1529 = vld [vmem:[#allocation6 + $0x198] sm:$0xff]
    %v1530 = vld [vmem:[#allocation6 + $0x1a0] sm:$0xff]
    %v1531 = vld [vmem:[#allocation6 + $0x1a8] sm:$0xff]
    %v1532 = vld [vmem:[#allocation6 + $0x1b0] sm:$0xff]
    %v1533 = vld [vmem:[#allocation6 + $0x1b8] sm:$0xff]
    %v1534 = vld [vmem:[#allocation6 + $0x1c0] sm:$0xff]
    %v1535 = vld [vmem:[#allocation6 + $0x1c8] sm:$0xff]
    %v1536 = vld [vmem:[#allocation6 + $0x1d0] sm:$0xff]
    %v1537 = vld [vmem:[#allocation6 + $0x1d8] sm:$0xff]
    %v1538 = vld [vmem:[#allocation6 + $0x1e0] sm:$0xff]
    %v1539 = vld [vmem:[#allocation6 + $0x1e8] sm:$0xff]
    %v1540 = vld [vmem:[#allocation6 + $0x1f0] sm:$0xff]
    %v1541 = vld [vmem:[#allocation6 + $0x1f8] sm:$0xff]
    %v1542 = vld [vmem:[#allocation6 + $0x200] sm:$0xff]
    %v1543 = vld [vmem:[#allocation6 + $0x208] sm:$0xff]
    %v1544 = vld [vmem:[#allocation6 + $0x210] sm:$0xff]
    %v1545 = vld [vmem:[#allocation6 + $0x218] sm:$0xff]
    %v1546 = vld [vmem:[#allocation6 + $0x220] sm:$0xff]
    %v1547 = vld [vmem:[#allocation6 + $0x228] sm:$0xff]
    %v1548 = vld [vmem:[#allocation6 + $0x230] sm:$0xff]
    %v1549 = vld [vmem:[#allocation6 + $0x238] sm:$0xff]
    %v1550 = vld [vmem:[#allocation6 + $0x240] sm:$0xff]
    %v1551 = vld [vmem:[#allocation6 + $0x248] sm:$0xff]
    %v1552 = vld [vmem:[#allocation6 + $0x250] sm:$0xff]
    %v1553 = vld [vmem:[#allocation6 + $0x258] sm:$0xff]
    %v1554 = vld [vmem:[#allocation6 + $0x260] sm:$0xff]
    %v1555 = vld [vmem:[#allocation6 + $0x268] sm:$0xff]
    %v1556 = vld [vmem:[#allocation6 + $0x270] sm:$0xff]
    %v1557 = vld [vmem:[#allocation6 + $0x278] sm:$0xff]
    %v1558 = vld [vmem:[#allocation6 + $0x280] sm:$0xff]
    %v1559 = vld [vmem:[#allocation6 + $0x288] sm:$0xff]
    %v1560 = vld [vmem:[#allocation6 + $0x290] sm:$0xff]
    %v1561 = vld [vmem:[#allocation6 + $0x298] sm:$0xff]
    %v1562 = vld [vmem:[#allocation6 + $0x2a0] sm:$0xff]
    %v1563 = vld [vmem:[#allocation6 + $0x2a8] sm:$0xff]
    %v1564 = vld [vmem:[#allocation6 + $0x2b0] sm:$0xff]
    %v1565 = vld [vmem:[#allocation6 + $0x2b8] sm:$0xff]
    %v1566 = vld [vmem:[#allocation6 + $0x2c0] sm:$0xff]
    %v1567 = vld [vmem:[#allocation6 + $0x2c8] sm:$0xff]
    %v1568 = vld [vmem:[#allocation6 + $0x2d0] sm:$0xff]
    %v1569 = vld [vmem:[#allocation6 + $0x2d8] sm:$0xff]
    %v1570 = vld [vmem:[#allocation6 + $0x2e0] sm:$0xff]
    %v1571 = vld [vmem:[#allocation6 + $0x2e8] sm:$0xff]
    %v1572 = vld [vmem:[#allocation6 + $0x2f0] sm:$0xff]
    %v1573 = vld [vmem:[#allocation6 + $0x2f8] sm:$0xff]
    %v1574 = vld [vmem:[#allocation6 + $0x300] sm:$0xff]
    %v1575 = vld [vmem:[#allocation6 + $0x308] sm:$0xff]
    %v1576 = vld [vmem:[#allocation6 + $0x310] sm:$0xff]
    %v1577 = vld [vmem:[#allocation6 + $0x318] sm:$0xff]
    %v1578 = vld [vmem:[#allocation6 + $0x320] sm:$0xff]
    %v1579 = vld [vmem:[#allocation6 + $0x328] sm:$0xff]
    %v1580 = vld [vmem:[#allocation6 + $0x330] sm:$0xff]
    %v1581 = vld [vmem:[#allocation6 + $0x338] sm:$0xff]
    %v1582 = vld [vmem:[#allocation6 + $0x340] sm:$0xff]
    %v1583 = vld [vmem:[#allocation6 + $0x348] sm:$0xff]
    %v1584 = vld [vmem:[#allocation6 + $0x350] sm:$0xff]
    %v1585 = vld [vmem:[#allocation6 + $0x358] sm:$0xff]
    %v1586 = vld [vmem:[#allocation6 + $0x360] sm:$0xff]
    %v1587 = vld [vmem:[#allocation6 + $0x368] sm:$0xff]
    %v1588 = vld [vmem:[#allocation6 + $0x370] sm:$0xff]
    %v1589 = vld [vmem:[#allocation6 + $0x378] sm:$0xff]
    %v1590 = vld [vmem:[#allocation6 + $0x380] sm:$0xff]
    %v1591 = vld [vmem:[#allocation6 + $0x388] sm:$0xff]
    %v1592 = vld [vmem:[#allocation6 + $0x390] sm:$0xff]
    %v1593 = vld [vmem:[#allocation6 + $0x398] sm:$0xff]
    %v1594 = vld [vmem:[#allocation6 + $0x3a0] sm:$0xff]
    %v1595 = vld [vmem:[#allocation6 + $0x3a8] sm:$0xff]
    %v1596 = vld [vmem:[#allocation6 + $0x3b0] sm:$0xff]
    %v1597 = vld [vmem:[#allocation6 + $0x3b8] sm:$0xff]
    %v1598 = vld [vmem:[#allocation6 + $0x3c0] sm:$0xff]
    %v1599 = vld [vmem:[#allocation6 + $0x3c8] sm:$0xff]
    %v1600 = vld [vmem:[#allocation6 + $0x3d0] sm:$0xff]
    %v1601 = vld [vmem:[#allocation6 + $0x3d8] sm:$0xff]
    %v1602 = vld [vmem:[#allocation6 + $0x3e0] sm:$0xff]
    %v1603 = vld [vmem:[#allocation6 + $0x3e8] sm:$0xff]
    %v1604 = vld [vmem:[#allocation6 + $0x3f0] sm:$0xff]
    %v1605 = vld [vmem:[#allocation6 + $0x3f8] sm:$0xff]
    %v1606 = vld [vmem:[#allocation8] sm:$0xff]
    %v1607 = vld [vmem:[#allocation8 + $0x8] sm:$0xff]
    %v1608 = vld [vmem:[#allocation8 + $0x10] sm:$0xff]
    %v1609 = vld [vmem:[#allocation8 + $0x18] sm:$0xff]
    %v1610 = vld [vmem:[#allocation8 + $0x20] sm:$0xff]
    %v1611 = vld [vmem:[#allocation8 + $0x28] sm:$0xff]
    %v1612 = vld [vmem:[#allocation8 + $0x30] sm:$0xff]
    %v1613 = vld [vmem:[#allocation8 + $0x38] sm:$0xff]
    %v1614 = vld [vmem:[#allocation8 + $0x40] sm:$0xff]
    %v1615 = vld [vmem:[#allocation8 + $0x48] sm:$0xff]
    %v1616 = vld [vmem:[#allocation8 + $0x50] sm:$0xff]
    %v1617 = vld [vmem:[#allocation8 + $0x58] sm:$0xff]
    %v1618 = vld [vmem:[#allocation8 + $0x60] sm:$0xff]
    %v1619 = vld [vmem:[#allocation8 + $0x68] sm:$0xff]
    %v1620 = vld [vmem:[#allocation8 + $0x70] sm:$0xff]
    %v1621 = vld [vmem:[#allocation8 + $0x78] sm:$0xff]
    %v1622 = vld [vmem:[#allocation8 + $0x80] sm:$0xff]
    %v1623 = vld [vmem:[#allocation8 + $0x88] sm:$0xff]
    %v1624 = vld [vmem:[#allocation8 + $0x90] sm:$0xff]
    %v1625 = vld [vmem:[#allocation8 + $0x98] sm:$0xff]
    %v1626 = vld [vmem:[#allocation8 + $0xa0] sm:$0xff]
    %v1627 = vld [vmem:[#allocation8 + $0xa8] sm:$0xff]
    %v1628 = vld [vmem:[#allocation8 + $0xb0] sm:$0xff]
    %v1629 = vld [vmem:[#allocation8 + $0xb8] sm:$0xff]
    %v1630 = vld [vmem:[#allocation8 + $0xc0] sm:$0xff]
    %v1631 = vld [vmem:[#allocation8 + $0xc8] sm:$0xff]
    %v1632 = vld [vmem:[#allocation8 + $0xd0] sm:$0xff]
    %v1633 = vld [vmem:[#allocation8 + $0xd8] sm:$0xff]
    %v1634 = vld [vmem:[#allocation8 + $0xe0] sm:$0xff]
    %v1635 = vld [vmem:[#allocation8 + $0xe8] sm:$0xff]
    %v1636 = vld [vmem:[#allocation8 + $0xf0] sm:$0xff]
    %v1637 = vld [vmem:[#allocation8 + $0xf8] sm:$0xff]
    %v1638 = vld [vmem:[#allocation8 + $0x100] sm:$0xff]
    %v1639 = vld [vmem:[#allocation8 + $0x108] sm:$0xff]
    %v1640 = vld [vmem:[#allocation8 + $0x110] sm:$0xff]
    %v1641 = vld [vmem:[#allocation8 + $0x118] sm:$0xff]
    %v1642 = vld [vmem:[#allocation8 + $0x120] sm:$0xff]
    %v1643 = vld [vmem:[#allocation8 + $0x128] sm:$0xff]
    %v1644 = vld [vmem:[#allocation8 + $0x130] sm:$0xff]
    %v1645 = vld [vmem:[#allocation8 + $0x138] sm:$0xff]
    %v1646 = vld [vmem:[#allocation8 + $0x140] sm:$0xff]
    %v1647 = vld [vmem:[#allocation8 + $0x148] sm:$0xff]
    %v1648 = vld [vmem:[#allocation8 + $0x150] sm:$0xff]
    %v1649 = vld [vmem:[#allocation8 + $0x158] sm:$0xff]
    %v1650 = vld [vmem:[#allocation8 + $0x160] sm:$0xff]
    %v1651 = vld [vmem:[#allocation8 + $0x168] sm:$0xff]
    %v1652 = vld [vmem:[#allocation8 + $0x170] sm:$0xff]
    %v1653 = vld [vmem:[#allocation8 + $0x178] sm:$0xff]
    %v1654 = vld [vmem:[#allocation8 + $0x180] sm:$0xff]
    %v1655 = vld [vmem:[#allocation8 + $0x188] sm:$0xff]
    %v1656 = vld [vmem:[#allocation8 + $0x190] sm:$0xff]
    %v1657 = vld [vmem:[#allocation8 + $0x198] sm:$0xff]
    %v1658 = vld [vmem:[#allocation8 + $0x1a0] sm:$0xff]
    %v1659 = vld [vmem:[#allocation8 + $0x1a8] sm:$0xff]
    %v1660 = vld [vmem:[#allocation8 + $0x1b0] sm:$0xff]
    %v1661 = vld [vmem:[#allocation8 + $0x1b8] sm:$0xff]
    %v1662 = vld [vmem:[#allocation8 + $0x1c0] sm:$0xff]
    %v1663 = vld [vmem:[#allocation8 + $0x1c8] sm:$0xff]
    %v1664 = vld [vmem:[#allocation8 + $0x1d0] sm:$0xff]
    %v1665 = vld [vmem:[#allocation8 + $0x1d8] sm:$0xff]
    %v1666 = vld [vmem:[#allocation8 + $0x1e0] sm:$0xff]
    %v1667 = vld [vmem:[#allocation8 + $0x1e8] sm:$0xff]
    %v1668 = vld [vmem:[#allocation8 + $0x1f0] sm:$0xff]
    %v1669 = vld [vmem:[#allocation8 + $0x1f8] sm:$0xff]
    %v1670 = vld [vmem:[#allocation8 + $0x200] sm:$0xff]
    %v1671 = vld [vmem:[#allocation8 + $0x208] sm:$0xff]
    %v1672 = vld [vmem:[#allocation8 + $0x210] sm:$0xff]
    %v1673 = vld [vmem:[#allocation8 + $0x218] sm:$0xff]
    %v1674 = vld [vmem:[#allocation8 + $0x220] sm:$0xff]
    %v1675 = vld [vmem:[#allocation8 + $0x228] sm:$0xff]
    %v1676 = vld [vmem:[#allocation8 + $0x230] sm:$0xff]
    %v1677 = vld [vmem:[#allocation8 + $0x238] sm:$0xff]
    %v1678 = vld [vmem:[#allocation8 + $0x240] sm:$0xff]
    %v1679 = vld [vmem:[#allocation8 + $0x248] sm:$0xff]
    %v1680 = vld [vmem:[#allocation8 + $0x250] sm:$0xff]
    %v1681 = vld [vmem:[#allocation8 + $0x258] sm:$0xff]
    %v1682 = vld [vmem:[#allocation8 + $0x260] sm:$0xff]
    %v1683 = vld [vmem:[#allocation8 + $0x268] sm:$0xff]
    %v1684 = vld [vmem:[#allocation8 + $0x270] sm:$0xff]
    %v1685 = vld [vmem:[#allocation8 + $0x278] sm:$0xff]
    %v1686 = vld [vmem:[#allocation8 + $0x280] sm:$0xff]
    %v1687 = vld [vmem:[#allocation8 + $0x288] sm:$0xff]
    %v1688 = vld [vmem:[#allocation8 + $0x290] sm:$0xff]
    %v1689 = vld [vmem:[#allocation8 + $0x298] sm:$0xff]
    %v1690 = vld [vmem:[#allocation8 + $0x2a0] sm:$0xff]
    %v1691 = vld [vmem:[#allocation8 + $0x2a8] sm:$0xff]
    %v1692 = vld [vmem:[#allocation8 + $0x2b0] sm:$0xff]
    %v1693 = vld [vmem:[#allocation8 + $0x2b8] sm:$0xff]
    %v1694 = vld [vmem:[#allocation8 + $0x2c0] sm:$0xff]
    %v1695 = vld [vmem:[#allocation8 + $0x2c8] sm:$0xff]
    %v1696 = vld [vmem:[#allocation8 + $0x2d0] sm:$0xff]
    %v1697 = vld [vmem:[#allocation8 + $0x2d8] sm:$0xff]
    %v1698 = vld [vmem:[#allocation8 + $0x2e0] sm:$0xff]
    %v1699 = vld [vmem:[#allocation8 + $0x2e8] sm:$0xff]
    %v1700 = vld [vmem:[#allocation8 + $0x2f0] sm:$0xff]
    %v1701 = vld [vmem:[#allocation8 + $0x2f8] sm:$0xff]
    %v1702 = vld [vmem:[#allocation8 + $0x300] sm:$0xff]
    %v1703 = vld [vmem:[#allocation8 + $0x308] sm:$0xff]
    %v1704 = vld [vmem:[#allocation8 + $0x310] sm:$0xff]
    %v1705 = vld [vmem:[#allocation8 + $0x318] sm:$0xff]
    %v1706 = vld [vmem:[#allocation8 + $0x320] sm:$0xff]
    %v1707 = vld [vmem:[#allocation8 + $0x328] sm:$0xff]
    %v1708 = vld [vmem:[#allocation8 + $0x330] sm:$0xff]
    %v1709 = vld [vmem:[#allocation8 + $0x338] sm:$0xff]
    %v1710 = vld [vmem:[#allocation8 + $0x340] sm:$0xff]
    %v1711 = vld [vmem:[#allocation8 + $0x348] sm:$0xff]
    %v1712 = vld [vmem:[#allocation8 + $0x350] sm:$0xff]
    %v1713 = vld [vmem:[#allocation8 + $0x358] sm:$0xff]
    %v1714 = vld [vmem:[#allocation8 + $0x360] sm:$0xff]
    %v1715 = vld [vmem:[#allocation8 + $0x368] sm:$0xff]
    %v1716 = vld [vmem:[#allocation8 + $0x370] sm:$0xff]
    %v1717 = vld [vmem:[#allocation8 + $0x378] sm:$0xff]
    %v1718 = vld [vmem:[#allocation8 + $0x380] sm:$0xff]
    %v1719 = vld [vmem:[#allocation8 + $0x388] sm:$0xff]
    %v1720 = vld [vmem:[#allocation8 + $0x390] sm:$0xff]
    %v1721 = vld [vmem:[#allocation8 + $0x398] sm:$0xff]
    %v1722 = vld [vmem:[#allocation8 + $0x3a0] sm:$0xff]
    %v1723 = vld [vmem:[#allocation8 + $0x3a8] sm:$0xff]
    %v1724 = vld [vmem:[#allocation8 + $0x3b0] sm:$0xff]
    %v1725 = vld [vmem:[#allocation8 + $0x3b8] sm:$0xff]
    %v1726 = vld [vmem:[#allocation8 + $0x3c0] sm:$0xff]
    %v1727 = vld [vmem:[#allocation8 + $0x3c8] sm:$0xff]
    %v1728 = vld [vmem:[#allocation8 + $0x3d0] sm:$0xff]
    %v1729 = vld [vmem:[#allocation8 + $0x3d8] sm:$0xff]
    %v1730 = vld [vmem:[#allocation8 + $0x3e0] sm:$0xff]
    %v1731 = vld [vmem:[#allocation8 + $0x3e8] sm:$0xff]
    %v1732 = vld [vmem:[#allocation8 + $0x3f0] sm:$0xff]
    %v1733 = vld [vmem:[#allocation8 + $0x3f8] sm:$0xff]
    %v1734 = vld [vmem:[#allocation9] sm:$0xff]
    %v1735 = vld [vmem:[#allocation9 + $0x8] sm:$0xff]
    %v1736 = vld [vmem:[#allocation9 + $0x10] sm:$0xff]
    %v1737 = vld [vmem:[#allocation9 + $0x18] sm:$0xff]
    %v1738 = vld [vmem:[#allocation9 + $0x20] sm:$0xff]
    %v1739 = vld [vmem:[#allocation9 + $0x28] sm:$0xff]
    %v1740 = vld [vmem:[#allocation9 + $0x30] sm:$0xff]
    %v1741 = vld [vmem:[#allocation9 + $0x38] sm:$0xff]
    %v1742 = vld [vmem:[#allocation9 + $0x40] sm:$0xff]
    %v1743 = vld [vmem:[#allocation9 + $0x48] sm:$0xff]
    %v1744 = vld [vmem:[#allocation9 + $0x50] sm:$0xff]
    %v1745 = vld [vmem:[#allocation9 + $0x58] sm:$0xff]
    %v1746 = vld [vmem:[#allocation9 + $0x60] sm:$0xff]
    %v1747 = vld [vmem:[#allocation9 + $0x68] sm:$0xff]
    %v1748 = vld [vmem:[#allocation9 + $0x70] sm:$0xff]
    %v1749 = vld [vmem:[#allocation9 + $0x78] sm:$0xff]
    %v1750 = vld [vmem:[#allocation9 + $0x80] sm:$0xff]
    %v1751 = vld [vmem:[#allocation9 + $0x88] sm:$0xff]
    %v1752 = vld [vmem:[#allocation9 + $0x90] sm:$0xff]
    %v1753 = vld [vmem:[#allocation9 + $0x98] sm:$0xff]
    %v1754 = vld [vmem:[#allocation9 + $0xa0] sm:$0xff]
    %v1755 = vld [vmem:[#allocation9 + $0xa8] sm:$0xff]
    %v1756 = vld [vmem:[#allocation9 + $0xb0] sm:$0xff]
    %v1757 = vld [vmem:[#allocation9 + $0xb8] sm:$0xff]
    %v1758 = vld [vmem:[#allocation9 + $0xc0] sm:$0xff]
    %v1759 = vld [vmem:[#allocation9 + $0xc8] sm:$0xff]
    %v1760 = vld [vmem:[#allocation9 + $0xd0] sm:$0xff]
    %v1761 = vld [vmem:[#allocation9 + $0xd8] sm:$0xff]
    %v1762 = vld [vmem:[#allocation9 + $0xe0] sm:$0xff]
    %v1763 = vld [vmem:[#allocation9 + $0xe8] sm:$0xff]
    %v1764 = vld [vmem:[#allocation9 + $0xf0] sm:$0xff]
    %v1765 = vld [vmem:[#allocation9 + $0xf8] sm:$0xff]
    %v1766 = vld [vmem:[#allocation9 + $0x100] sm:$0xff]
    %v1767 = vld [vmem:[#allocation9 + $0x108] sm:$0xff]
    %v1768 = vld [vmem:[#allocation9 + $0x110] sm:$0xff]
    %v1769 = vld [vmem:[#allocation9 + $0x118] sm:$0xff]
    %v1770 = vld [vmem:[#allocation9 + $0x120] sm:$0xff]
    %v1771 = vld [vmem:[#allocation9 + $0x128] sm:$0xff]
    %v1772 = vld [vmem:[#allocation9 + $0x130] sm:$0xff]
    %v1773 = vld [vmem:[#allocation9 + $0x138] sm:$0xff]
    %v1774 = vld [vmem:[#allocation9 + $0x140] sm:$0xff]
    %v1775 = vld [vmem:[#allocation9 + $0x148] sm:$0xff]
    %v1776 = vld [vmem:[#allocation9 + $0x150] sm:$0xff]
    %v1777 = vld [vmem:[#allocation9 + $0x158] sm:$0xff]
    %v1778 = vld [vmem:[#allocation9 + $0x160] sm:$0xff]
    %v1779 = vld [vmem:[#allocation9 + $0x168] sm:$0xff]
    %v1780 = vld [vmem:[#allocation9 + $0x170] sm:$0xff]
    %v1781 = vld [vmem:[#allocation9 + $0x178] sm:$0xff]
    %v1782 = vld [vmem:[#allocation9 + $0x180] sm:$0xff]
    %v1783 = vld [vmem:[#allocation9 + $0x188] sm:$0xff]
    %v1784 = vld [vmem:[#allocation9 + $0x190] sm:$0xff]
    %v1785 = vld [vmem:[#allocation9 + $0x198] sm:$0xff]
    %v1786 = vld [vmem:[#allocation9 + $0x1a0] sm:$0xff]
    %v1787 = vld [vmem:[#allocation9 + $0x1a8] sm:$0xff]
    %v1788 = vld [vmem:[#allocation9 + $0x1b0] sm:$0xff]
    %v1789 = vld [vmem:[#allocation9 + $0x1b8] sm:$0xff]
    %v1790 = vld [vmem:[#allocation9 + $0x1c0] sm:$0xff]
    %v1791 = vld [vmem:[#allocation9 + $0x1c8] sm:$0xff]
    %v1792 = vld [vmem:[#allocation9 + $0x1d0] sm:$0xff]
    %v1793 = vld [vmem:[#allocation9 + $0x1d8] sm:$0xff]
    %v1794 = vld [vmem:[#allocation9 + $0x1e0] sm:$0xff]
    %v1795 = vld [vmem:[#allocation9 + $0x1e8] sm:$0xff]
    %v1796 = vld [vmem:[#allocation9 + $0x1f0] sm:$0xff]
    %v1797 = vld [vmem:[#allocation9 + $0x1f8] sm:$0xff]
    %v1798 = vld [vmem:[#allocation9 + $0x200] sm:$0xff]
    %v1799 = vld [vmem:[#allocation9 + $0x208] sm:$0xff]
    %v1800 = vld [vmem:[#allocation9 + $0x210] sm:$0xff]
    %v1801 = vld [vmem:[#allocation9 + $0x218] sm:$0xff]
    %v1802 = vld [vmem:[#allocation9 + $0x220] sm:$0xff]
    %v1803 = vld [vmem:[#allocation9 + $0x228] sm:$0xff]
    %v1804 = vld [vmem:[#allocation9 + $0x230] sm:$0xff]
    %v1805 = vld [vmem:[#allocation9 + $0x238] sm:$0xff]
    %v1806 = vld [vmem:[#allocation9 + $0x240] sm:$0xff]
    %v1807 = vld [vmem:[#allocation9 + $0x248] sm:$0xff]
    %v1808 = vld [vmem:[#allocation9 + $0x250] sm:$0xff]
    %v1809 = vld [vmem:[#allocation9 + $0x258] sm:$0xff]
    %v1810 = vld [vmem:[#allocation9 + $0x260] sm:$0xff]
    %v1811 = vld [vmem:[#allocation9 + $0x268] sm:$0xff]
    %v1812 = vld [vmem:[#allocation9 + $0x270] sm:$0xff]
    %v1813 = vld [vmem:[#allocation9 + $0x278] sm:$0xff]
    %v1814 = vld [vmem:[#allocation9 + $0x280] sm:$0xff]
    %v1815 = vld [vmem:[#allocation9 + $0x288] sm:$0xff]
    %v1816 = vld [vmem:[#allocation9 + $0x290] sm:$0xff]
    %v1817 = vld [vmem:[#allocation9 + $0x298] sm:$0xff]
    %v1818 = vld [vmem:[#allocation9 + $0x2a0] sm:$0xff]
    %v1819 = vld [vmem:[#allocation9 + $0x2a8] sm:$0xff]
    %v1820 = vld [vmem:[#allocation9 + $0x2b0] sm:$0xff]
    %v1821 = vld [vmem:[#allocation9 + $0x2b8] sm:$0xff]
    %v1822 = vld [vmem:[#allocation9 + $0x2c0] sm:$0xff]
    %v1823 = vld [vmem:[#allocation9 + $0x2c8] sm:$0xff]
    %v1824 = vld [vmem:[#allocation9 + $0x2d0] sm:$0xff]
    %v1825 = vld [vmem:[#allocation9 + $0x2d8] sm:$0xff]
    %v1826 = vld [vmem:[#allocation9 + $0x2e0] sm:$0xff]
    %v1827 = vld [vmem:[#allocation9 + $0x2e8] sm:$0xff]
    %v1828 = vld [vmem:[#allocation9 + $0x2f0] sm:$0xff]
    %v1829 = vld [vmem:[#allocation9 + $0x2f8] sm:$0xff]
    %v1830 = vld [vmem:[#allocation9 + $0x300] sm:$0xff]
    %v1831 = vld [vmem:[#allocation9 + $0x308] sm:$0xff]
    %v1832 = vld [vmem:[#allocation9 + $0x310] sm:$0xff]
    %v1833 = vld [vmem:[#allocation9 + $0x318] sm:$0xff]
    %v1834 = vld [vmem:[#allocation9 + $0x320] sm:$0xff]
    %v1835 = vld [vmem:[#allocation9 + $0x328] sm:$0xff]
    %v1836 = vld [vmem:[#allocation9 + $0x330] sm:$0xff]
    %v1837 = vld [vmem:[#allocation9 + $0x338] sm:$0xff]
    %v1838 = vld [vmem:[#allocation9 + $0x340] sm:$0xff]
    %v1839 = vld [vmem:[#allocation9 + $0x348] sm:$0xff]
    %v1840 = vld [vmem:[#allocation9 + $0x350] sm:$0xff]
    %v1841 = vld [vmem:[#allocation9 + $0x358] sm:$0xff]
    %v1842 = vld [vmem:[#allocation9 + $0x360] sm:$0xff]
    %v1843 = vld [vmem:[#allocation9 + $0x368] sm:$0xff]
    %v1844 = vld [vmem:[#allocation9 + $0x370] sm:$0xff]
    %v1845 = vld [vmem:[#allocation9 + $0x378] sm:$0xff]
    %v1846 = vld [vmem:[#allocation9 + $0x380] sm:$0xff]
    %v1847 = vld [vmem:[#allocation9 + $0x388] sm:$0xff]
    %v1848 = vld [vmem:[#allocation9 + $0x390] sm:$0xff]
    %v1849 = vld [vmem:[#allocation9 + $0x398] sm:$0xff]
    %v1850 = vld [vmem:[#allocation9 + $0x3a0] sm:$0xff]
    %v1851 = vld [vmem:[#allocation9 + $0x3a8] sm:$0xff]
    %v1852 = vld [vmem:[#allocation9 + $0x3b0] sm:$0xff]
    %v1853 = vld [vmem:[#allocation9 + $0x3b8] sm:$0xff]
    %v1854 = vld [vmem:[#allocation9 + $0x3c0] sm:$0xff]
    %v1855 = vld [vmem:[#allocation9 + $0x3c8] sm:$0xff]
    %v1856 = vld [vmem:[#allocation9 + $0x3d0] sm:$0xff]
    %v1857 = vld [vmem:[#allocation9 + $0x3d8] sm:$0xff]
    %v1858 = vld [vmem:[#allocation9 + $0x3e0] sm:$0xff]
    %v1859 = vld [vmem:[#allocation9 + $0x3e8] sm:$0xff]
    %v1860 = vld [vmem:[#allocation9 + $0x3f0] sm:$0xff]
    %v1861 = vld [vmem:[#allocation9 + $0x3f8] sm:$0xff]
    %v1863 = vlaneseq
    %v1864 = vshrl.u32 %v1863, 7
    %v1865 = vsub.s32 0, %v1864
    %v1866 = vrot.slane %v151, %v1865
    %v1867 = vlaneseq
    %v1868 = vshrl.u32 %v1867, 7
    %v1869 = vsub.s32 1, %v1868
    %v1870 = vrot.slane %v151, %v1869
    %v1871 = vlaneseq
    %v1872 = vshrl.u32 %v1871, 7
    %v1873 = vsub.s32 2, %v1872
    %v1874 = vrot.slane %v151, %v1873
    %v1875 = vlaneseq
    %v1876 = vshrl.u32 %v1875, 7
    %v1877 = vsub.s32 3, %v1876
    %v1878 = vrot.slane %v151, %v1877
    %v1879 = vlaneseq
    %v1880 = vshrl.u32 %v1879, 7
    %v1881 = vsub.s32 4, %v1880
    %v1882 = vrot.slane %v151, %v1881
    %v1883 = vlaneseq
    %v1884 = vshrl.u32 %v1883, 7
    %v1885 = vsub.s32 5, %v1884
    %v1886 = vrot.slane %v151, %v1885
    %v1887 = vlaneseq
    %v1888 = vshrl.u32 %v1887, 7
    %v1889 = vsub.s32 6, %v1888
    %v1890 = vrot.slane %v151, %v1889
    %v1891 = vlaneseq
    %v1892 = vshrl.u32 %v1891, 7
    %v1893 = vsub.s32 7, %v1892
    %v1894 = vrot.slane %v151, %v1893
    %v1903 = vld [vmem:[#allocation2] sm:$0xff]
    %v1904 = vld [vmem:[#allocation2 + $0x8] sm:$0xff]
    %v1905 = vld [vmem:[#allocation2 + $0x10] sm:$0xff]
    %v1906 = vld [vmem:[#allocation2 + $0x18] sm:$0xff]
    %v1907 = vld [vmem:[#allocation2 + $0x20] sm:$0xff]
    %v1908 = vld [vmem:[#allocation2 + $0x28] sm:$0xff]
    %v1909 = vld [vmem:[#allocation2 + $0x30] sm:$0xff]
    %v1910 = vld [vmem:[#allocation2 + $0x38] sm:$0xff]
    %v2039 = vunpack.c.l.b16 %v1478
    %v2040 = vunpack.c.h.b16 %v1478
    %v2041 = vunpack.c.l.b16 %v1479
    %v2042 = vunpack.c.h.b16 %v1479
    %v2043 = vunpack.c.l.b16 %v1480
    %v2044 = vunpack.c.h.b16 %v1480
    %v2045 = vunpack.c.l.b16 %v1481
    %v2046 = vunpack.c.h.b16 %v1481
    %v2047 = vunpack.c.l.b16 %v1482
    %v2048 = vunpack.c.h.b16 %v1482
    %v2049 = vunpack.c.l.b16 %v1483
    %v2050 = vunpack.c.h.b16 %v1483
    %v2051 = vunpack.c.l.b16 %v1484
    %v2052 = vunpack.c.h.b16 %v1484
    %v2053 = vunpack.c.l.b16 %v1485
    %v2054 = vunpack.c.h.b16 %v1485
    %v2055 = vunpack.c.l.b16 %v1486
    %v2056 = vunpack.c.h.b16 %v1486
    %v2057 = vunpack.c.l.b16 %v1487
    %v2058 = vunpack.c.h.b16 %v1487
    %v2059 = vunpack.c.l.b16 %v1488
    %v2060 = vunpack.c.h.b16 %v1488
    %v2061 = vunpack.c.l.b16 %v1489
    %v2062 = vunpack.c.h.b16 %v1489
    %v2063 = vunpack.c.l.b16 %v1490
    %v2064 = vunpack.c.h.b16 %v1490
    %v2065 = vunpack.c.l.b16 %v1491
    %v2066 = vunpack.c.h.b16 %v1491
    %v2067 = vunpack.c.l.b16 %v1492
    %v2068 = vunpack.c.h.b16 %v1492
    %v2069 = vunpack.c.l.b16 %v1493
    %v2070 = vunpack.c.h.b16 %v1493
    %v2071 = vunpack.c.l.b16 %v1494
    %v2072 = vunpack.c.h.b16 %v1494
    %v2073 = vunpack.c.l.b16 %v1495
    %v2074 = vunpack.c.h.b16 %v1495
    %v2075 = vunpack.c.l.b16 %v1496
    %v2076 = vunpack.c.h.b16 %v1496
    %v2077 = vunpack.c.l.b16 %v1497
    %v2078 = vunpack.c.h.b16 %v1497
    %v2079 = vunpack.c.l.b16 %v1498
    %v2080 = vunpack.c.h.b16 %v1498
    %v2081 = vunpack.c.l.b16 %v1499
    %v2082 = vunpack.c.h.b16 %v1499
    %v2083 = vunpack.c.l.b16 %v1500
    %v2084 = vunpack.c.h.b16 %v1500
    %v2085 = vunpack.c.l.b16 %v1501
    %v2086 = vunpack.c.h.b16 %v1501
    %v2087 = vunpack.c.l.b16 %v1502
    %v2088 = vunpack.c.h.b16 %v1502
    %v2089 = vunpack.c.l.b16 %v1503
    %v2090 = vunpack.c.h.b16 %v1503
    %v2091 = vunpack.c.l.b16 %v1504
    %v2092 = vunpack.c.h.b16 %v1504
    %v2093 = vunpack.c.l.b16 %v1505
    %v2094 = vunpack.c.h.b16 %v1505
    %v2095 = vunpack.c.l.b16 %v1506
    %v2096 = vunpack.c.h.b16 %v1506
    %v2097 = vunpack.c.l.b16 %v1507
    %v2098 = vunpack.c.h.b16 %v1507
    %v2099 = vunpack.c.l.b16 %v1508
    %v2100 = vunpack.c.h.b16 %v1508
    %v2101 = vunpack.c.l.b16 %v1509
    %v2102 = vunpack.c.h.b16 %v1509
    %v2103 = vunpack.c.l.b16 %v1510
    %v2104 = vunpack.c.h.b16 %v1510
    %v2105 = vunpack.c.l.b16 %v1511
    %v2106 = vunpack.c.h.b16 %v1511
    %v2107 = vunpack.c.l.b16 %v1512
    %v2108 = vunpack.c.h.b16 %v1512
    %v2109 = vunpack.c.l.b16 %v1513
    %v2110 = vunpack.c.h.b16 %v1513
    %v2111 = vunpack.c.l.b16 %v1514
    %v2112 = vunpack.c.h.b16 %v1514
    %v2113 = vunpack.c.l.b16 %v1515
    %v2114 = vunpack.c.h.b16 %v1515
    %v2115 = vunpack.c.l.b16 %v1516
    %v2116 = vunpack.c.h.b16 %v1516
    %v2117 = vunpack.c.l.b16 %v1517
    %v2118 = vunpack.c.h.b16 %v1517
    %v2119 = vunpack.c.l.b16 %v1518
    %v2120 = vunpack.c.h.b16 %v1518
    %v2121 = vunpack.c.l.b16 %v1519
    %v2122 = vunpack.c.h.b16 %v1519
    %v2123 = vunpack.c.l.b16 %v1520
    %v2124 = vunpack.c.h.b16 %v1520
    %v2125 = vunpack.c.l.b16 %v1521
    %v2126 = vunpack.c.h.b16 %v1521
    %v2127 = vunpack.c.l.b16 %v1522
    %v2128 = vunpack.c.h.b16 %v1522
    %v2129 = vunpack.c.l.b16 %v1523
    %v2130 = vunpack.c.h.b16 %v1523
    %v2131 = vunpack.c.l.b16 %v1524
    %v2132 = vunpack.c.h.b16 %v1524
    %v2133 = vunpack.c.l.b16 %v1525
    %v2134 = vunpack.c.h.b16 %v1525
    %v2135 = vunpack.c.l.b16 %v1526
    %v2136 = vunpack.c.h.b16 %v1526
    %v2137 = vunpack.c.l.b16 %v1527
    %v2138 = vunpack.c.h.b16 %v1527
    %v2139 = vunpack.c.l.b16 %v1528
    %v2140 = vunpack.c.h.b16 %v1528
    %v2141 = vunpack.c.l.b16 %v1529
    %v2142 = vunpack.c.h.b16 %v1529
    %v2143 = vunpack.c.l.b16 %v1530
    %v2144 = vunpack.c.h.b16 %v1530
    %v2145 = vunpack.c.l.b16 %v1531
    %v2146 = vunpack.c.h.b16 %v1531
    %v2147 = vunpack.c.l.b16 %v1532
    %v2148 = vunpack.c.h.b16 %v1532
    %v2149 = vunpack.c.l.b16 %v1533
    %v2150 = vunpack.c.h.b16 %v1533
    %v2151 = vunpack.c.l.b16 %v1534
    %v2152 = vunpack.c.h.b16 %v1534
    %v2153 = vunpack.c.l.b16 %v1535
    %v2154 = vunpack.c.h.b16 %v1535
    %v2155 = vunpack.c.l.b16 %v1536
    %v2156 = vunpack.c.h.b16 %v1536
    %v2157 = vunpack.c.l.b16 %v1537
    %v2158 = vunpack.c.h.b16 %v1537
    %v2159 = vunpack.c.l.b16 %v1538
    %v2160 = vunpack.c.h.b16 %v1538
    %v2161 = vunpack.c.l.b16 %v1539
    %v2162 = vunpack.c.h.b16 %v1539
    %v2163 = vunpack.c.l.b16 %v1540
    %v2164 = vunpack.c.h.b16 %v1540
    %v2165 = vunpack.c.l.b16 %v1541
    %v2166 = vunpack.c.h.b16 %v1541
    %v2167 = vunpack.c.l.b16 %v1542
    %v2168 = vunpack.c.h.b16 %v1542
    %v2169 = vunpack.c.l.b16 %v1543
    %v2170 = vunpack.c.h.b16 %v1543
    %v2171 = vunpack.c.l.b16 %v1544
    %v2172 = vunpack.c.h.b16 %v1544
    %v2173 = vunpack.c.l.b16 %v1545
    %v2174 = vunpack.c.h.b16 %v1545
    %v2175 = vunpack.c.l.b16 %v1546
    %v2176 = vunpack.c.h.b16 %v1546
    %v2177 = vunpack.c.l.b16 %v1547
    %v2178 = vunpack.c.h.b16 %v1547
    %v2179 = vunpack.c.l.b16 %v1548
    %v2180 = vunpack.c.h.b16 %v1548
    %v2181 = vunpack.c.l.b16 %v1549
    %v2182 = vunpack.c.h.b16 %v1549
    %v2183 = vunpack.c.l.b16 %v1550
    %v2184 = vunpack.c.h.b16 %v1550
    %v2185 = vunpack.c.l.b16 %v1551
    %v2186 = vunpack.c.h.b16 %v1551
    %v2187 = vunpack.c.l.b16 %v1552
    %v2188 = vunpack.c.h.b16 %v1552
    %v2189 = vunpack.c.l.b16 %v1553
    %v2190 = vunpack.c.h.b16 %v1553
    %v2191 = vunpack.c.l.b16 %v1554
    %v2192 = vunpack.c.h.b16 %v1554
    %v2193 = vunpack.c.l.b16 %v1555
    %v2194 = vunpack.c.h.b16 %v1555
    %v2195 = vunpack.c.l.b16 %v1556
    %v2196 = vunpack.c.h.b16 %v1556
    %v2197 = vunpack.c.l.b16 %v1557
    %v2198 = vunpack.c.h.b16 %v1557
    %v2199 = vunpack.c.l.b16 %v1558
    %v2200 = vunpack.c.h.b16 %v1558
    %v2201 = vunpack.c.l.b16 %v1559
    %v2202 = vunpack.c.h.b16 %v1559
    %v2203 = vunpack.c.l.b16 %v1560
    %v2204 = vunpack.c.h.b16 %v1560
    %v2205 = vunpack.c.l.b16 %v1561
    %v2206 = vunpack.c.h.b16 %v1561
    %v2207 = vunpack.c.l.b16 %v1562
    %v2208 = vunpack.c.h.b16 %v1562
    %v2209 = vunpack.c.l.b16 %v1563
    %v2210 = vunpack.c.h.b16 %v1563
    %v2211 = vunpack.c.l.b16 %v1564
    %v2212 = vunpack.c.h.b16 %v1564
    %v2213 = vunpack.c.l.b16 %v1565
    %v2214 = vunpack.c.h.b16 %v1565
    %v2215 = vunpack.c.l.b16 %v1566
    %v2216 = vunpack.c.h.b16 %v1566
    %v2217 = vunpack.c.l.b16 %v1567
    %v2218 = vunpack.c.h.b16 %v1567
    %v2219 = vunpack.c.l.b16 %v1568
    %v2220 = vunpack.c.h.b16 %v1568
    %v2221 = vunpack.c.l.b16 %v1569
    %v2222 = vunpack.c.h.b16 %v1569
    %v2223 = vunpack.c.l.b16 %v1570
    %v2224 = vunpack.c.h.b16 %v1570
    %v2225 = vunpack.c.l.b16 %v1571
    %v2226 = vunpack.c.h.b16 %v1571
    %v2227 = vunpack.c.l.b16 %v1572
    %v2228 = vunpack.c.h.b16 %v1572
    %v2229 = vunpack.c.l.b16 %v1573
    %v2230 = vunpack.c.h.b16 %v1573
    %v2231 = vunpack.c.l.b16 %v1574
    %v2232 = vunpack.c.h.b16 %v1574
    %v2233 = vunpack.c.l.b16 %v1575
    %v2234 = vunpack.c.h.b16 %v1575
    %v2235 = vunpack.c.l.b16 %v1576
    %v2236 = vunpack.c.h.b16 %v1576
    %v2237 = vunpack.c.l.b16 %v1577
    %v2238 = vunpack.c.h.b16 %v1577
    %v2239 = vunpack.c.l.b16 %v1578
    %v2240 = vunpack.c.h.b16 %v1578
    %v2241 = vunpack.c.l.b16 %v1579
    %v2242 = vunpack.c.h.b16 %v1579
    %v2243 = vunpack.c.l.b16 %v1580
    %v2244 = vunpack.c.h.b16 %v1580
    %v2245 = vunpack.c.l.b16 %v1581
    %v2246 = vunpack.c.h.b16 %v1581
    %v2247 = vunpack.c.l.b16 %v1582
    %v2248 = vunpack.c.h.b16 %v1582
    %v2249 = vunpack.c.l.b16 %v1583
    %v2250 = vunpack.c.h.b16 %v1583
    %v2251 = vunpack.c.l.b16 %v1584
    %v2252 = vunpack.c.h.b16 %v1584
    %v2253 = vunpack.c.l.b16 %v1585
    %v2254 = vunpack.c.h.b16 %v1585
    %v2255 = vunpack.c.l.b16 %v1586
    %v2256 = vunpack.c.h.b16 %v1586
    %v2257 = vunpack.c.l.b16 %v1587
    %v2258 = vunpack.c.h.b16 %v1587
    %v2259 = vunpack.c.l.b16 %v1588
    %v2260 = vunpack.c.h.b16 %v1588
    %v2261 = vunpack.c.l.b16 %v1589
    %v2262 = vunpack.c.h.b16 %v1589
    %v2263 = vunpack.c.l.b16 %v1590
    %v2264 = vunpack.c.h.b16 %v1590
    %v2265 = vunpack.c.l.b16 %v1591
    %v2266 = vunpack.c.h.b16 %v1591
    %v2267 = vunpack.c.l.b16 %v1592
    %v2268 = vunpack.c.h.b16 %v1592
    %v2269 = vunpack.c.l.b16 %v1593
    %v2270 = vunpack.c.h.b16 %v1593
    %v2271 = vunpack.c.l.b16 %v1594
    %v2272 = vunpack.c.h.b16 %v1594
    %v2273 = vunpack.c.l.b16 %v1595
    %v2274 = vunpack.c.h.b16 %v1595
    %v2275 = vunpack.c.l.b16 %v1596
    %v2276 = vunpack.c.h.b16 %v1596
    %v2277 = vunpack.c.l.b16 %v1597
    %v2278 = vunpack.c.h.b16 %v1597
    %v2279 = vunpack.c.l.b16 %v1598
    %v2280 = vunpack.c.h.b16 %v1598
    %v2281 = vunpack.c.l.b16 %v1599
    %v2282 = vunpack.c.h.b16 %v1599
    %v2283 = vunpack.c.l.b16 %v1600
    %v2284 = vunpack.c.h.b16 %v1600
    %v2285 = vunpack.c.l.b16 %v1601
    %v2286 = vunpack.c.h.b16 %v1601
    %v2287 = vunpack.c.l.b16 %v1602
    %v2288 = vunpack.c.h.b16 %v1602
    %v2289 = vunpack.c.l.b16 %v1603
    %v2290 = vunpack.c.h.b16 %v1603
    %v2291 = vunpack.c.l.b16 %v1604
    %v2292 = vunpack.c.h.b16 %v1604
    %v2293 = vunpack.c.l.b16 %v1605
    %v2294 = vunpack.c.h.b16 %v1605
    %v2295 = vpack.c.b16 %v2047, %v2039
    %v2296 = vpack.c.b16 %v2048, %v2040
    %v2297 = vpack.c.b16 %v2049, %v2041
    %v2298 = vpack.c.b16 %v2050, %v2042
    %v2299 = vpack.c.b16 %v2051, %v2043
    %v2300 = vpack.c.b16 %v2052, %v2044
    %v2301 = vpack.c.b16 %v2053, %v2045
    %v2302 = vpack.c.b16 %v2054, %v2046
    %v2303 = vpack.c.b16 %v2063, %v2055
    %v2304 = vpack.c.b16 %v2064, %v2056
    %v2305 = vpack.c.b16 %v2065, %v2057
    %v2306 = vpack.c.b16 %v2066, %v2058
    %v2307 = vpack.c.b16 %v2067, %v2059
    %v2308 = vpack.c.b16 %v2068, %v2060
    %v2309 = vpack.c.b16 %v2069, %v2061
    %v2310 = vpack.c.b16 %v2070, %v2062
    %v2311 = vpack.c.b16 %v2079, %v2071
    %v2312 = vpack.c.b16 %v2080, %v2072
    %v2313 = vpack.c.b16 %v2081, %v2073
    %v2314 = vpack.c.b16 %v2082, %v2074
    %v2315 = vpack.c.b16 %v2083, %v2075
    %v2316 = vpack.c.b16 %v2084, %v2076
    %v2317 = vpack.c.b16 %v2085, %v2077
    %v2318 = vpack.c.b16 %v2086, %v2078
    %v2319 = vpack.c.b16 %v2095, %v2087
    %v2320 = vpack.c.b16 %v2096, %v2088
    %v2321 = vpack.c.b16 %v2097, %v2089
    %v2322 = vpack.c.b16 %v2098, %v2090
    %v2323 = vpack.c.b16 %v2099, %v2091
    %v2324 = vpack.c.b16 %v2100, %v2092
    %v2325 = vpack.c.b16 %v2101, %v2093
    %v2326 = vpack.c.b16 %v2102, %v2094
    %v2327 = vpack.c.b16 %v2111, %v2103
    %v2328 = vpack.c.b16 %v2112, %v2104
    %v2329 = vpack.c.b16 %v2113, %v2105
    %v2330 = vpack.c.b16 %v2114, %v2106
    %v2331 = vpack.c.b16 %v2115, %v2107
    %v2332 = vpack.c.b16 %v2116, %v2108
    %v2333 = vpack.c.b16 %v2117, %v2109
    %v2334 = vpack.c.b16 %v2118, %v2110
    %v2335 = vpack.c.b16 %v2127, %v2119
    %v2336 = vpack.c.b16 %v2128, %v2120
    %v2337 = vpack.c.b16 %v2129, %v2121
    %v2338 = vpack.c.b16 %v2130, %v2122
    %v2339 = vpack.c.b16 %v2131, %v2123
    %v2340 = vpack.c.b16 %v2132, %v2124
    %v2341 = vpack.c.b16 %v2133, %v2125
    %v2342 = vpack.c.b16 %v2134, %v2126
    %v2343 = vpack.c.b16 %v2143, %v2135
    %v2344 = vpack.c.b16 %v2144, %v2136
    %v2345 = vpack.c.b16 %v2145, %v2137
    %v2346 = vpack.c.b16 %v2146, %v2138
    %v2347 = vpack.c.b16 %v2147, %v2139
    %v2348 = vpack.c.b16 %v2148, %v2140
    %v2349 = vpack.c.b16 %v2149, %v2141
    %v2350 = vpack.c.b16 %v2150, %v2142
    %v2351 = vpack.c.b16 %v2159, %v2151
    %v2352 = vpack.c.b16 %v2160, %v2152
    %v2353 = vpack.c.b16 %v2161, %v2153
    %v2354 = vpack.c.b16 %v2162, %v2154
    %v2355 = vpack.c.b16 %v2163, %v2155
    %v2356 = vpack.c.b16 %v2164, %v2156
    %v2357 = vpack.c.b16 %v2165, %v2157
    %v2358 = vpack.c.b16 %v2166, %v2158
    %v2359 = vpack.c.b16 %v2175, %v2167
    %v2360 = vpack.c.b16 %v2176, %v2168
    %v2361 = vpack.c.b16 %v2177, %v2169
    %v2362 = vpack.c.b16 %v2178, %v2170
    %v2363 = vpack.c.b16 %v2179, %v2171
    %v2364 = vpack.c.b16 %v2180, %v2172
    %v2365 = vpack.c.b16 %v2181, %v2173
    %v2366 = vpack.c.b16 %v2182, %v2174
    %v2367 = vpack.c.b16 %v2191, %v2183
    %v2368 = vpack.c.b16 %v2192, %v2184
    %v2369 = vpack.c.b16 %v2193, %v2185
    %v2370 = vpack.c.b16 %v2194, %v2186
    %v2371 = vpack.c.b16 %v2195, %v2187
    %v2372 = vpack.c.b16 %v2196, %v2188
    %v2373 = vpack.c.b16 %v2197, %v2189
    %v2374 = vpack.c.b16 %v2198, %v2190
    %v2375 = vpack.c.b16 %v2207, %v2199
    %v2376 = vpack.c.b16 %v2208, %v2200
    %v2377 = vpack.c.b16 %v2209, %v2201
    %v2378 = vpack.c.b16 %v2210, %v2202
    %v2379 = vpack.c.b16 %v2211, %v2203
    %v2380 = vpack.c.b16 %v2212, %v2204
    %v2381 = vpack.c.b16 %v2213, %v2205
    %v2382 = vpack.c.b16 %v2214, %v2206
    %v2383 = vpack.c.b16 %v2223, %v2215
    %v2384 = vpack.c.b16 %v2224, %v2216
    %v2385 = vpack.c.b16 %v2225, %v2217
    %v2386 = vpack.c.b16 %v2226, %v2218
    %v2387 = vpack.c.b16 %v2227, %v2219
    %v2388 = vpack.c.b16 %v2228, %v2220
    %v2389 = vpack.c.b16 %v2229, %v2221
    %v2390 = vpack.c.b16 %v2230, %v2222
    %v2391 = vpack.c.b16 %v2239, %v2231
    %v2392 = vpack.c.b16 %v2240, %v2232
    %v2393 = vpack.c.b16 %v2241, %v2233
    %v2394 = vpack.c.b16 %v2242, %v2234
    %v2395 = vpack.c.b16 %v2243, %v2235
    %v2396 = vpack.c.b16 %v2244, %v2236
    %v2397 = vpack.c.b16 %v2245, %v2237
    %v2398 = vpack.c.b16 %v2246, %v2238
    %v2399 = vpack.c.b16 %v2255, %v2247
    %v2400 = vpack.c.b16 %v2256, %v2248
    %v2401 = vpack.c.b16 %v2257, %v2249
    %v2402 = vpack.c.b16 %v2258, %v2250
    %v2403 = vpack.c.b16 %v2259, %v2251
    %v2404 = vpack.c.b16 %v2260, %v2252
    %v2405 = vpack.c.b16 %v2261, %v2253
    %v2406 = vpack.c.b16 %v2262, %v2254
    %v2407 = vpack.c.b16 %v2271, %v2263
    %v2408 = vpack.c.b16 %v2272, %v2264
    %v2409 = vpack.c.b16 %v2273, %v2265
    %v2410 = vpack.c.b16 %v2274, %v2266
    %v2411 = vpack.c.b16 %v2275, %v2267
    %v2412 = vpack.c.b16 %v2276, %v2268
    %v2413 = vpack.c.b16 %v2277, %v2269
    %v2414 = vpack.c.b16 %v2278, %v2270
    %v2415 = vpack.c.b16 %v2287, %v2279
    %v2416 = vpack.c.b16 %v2288, %v2280
    %v2417 = vpack.c.b16 %v2289, %v2281
    %v2418 = vpack.c.b16 %v2290, %v2282
    %v2419 = vpack.c.b16 %v2291, %v2283
    %v2420 = vpack.c.b16 %v2292, %v2284
    %v2421 = vpack.c.b16 %v2293, %v2285
    %v2422 = vpack.c.b16 %v2294, %v2286
    %2551 = vmatprep.subr.bf16.mxu0 %v2296
    %2552 = vmatpush1.bf16.msra.mxu0 %v2295
    %2553 = vmatprep.subr.bf16.mxu0 %v2304
    %2554 = vmatpush1.bf16.msra.mxu0 %v2303
    %2555 = vmatprep.subr.bf16.mxu0 %v2312
    %2556 = vmatpush1.bf16.msra.mxu0 %v2311
    %2557 = vmatprep.subr.bf16.mxu0 %v2320
    %2558 = vmatpush1.bf16.msra.mxu0 %v2319
    %2559 = vmatprep.subr.bf16.mxu0 %v2328
    %2560 = vmatpush1.bf16.msra.mxu0 %v2327
    %2561 = vmatprep.subr.bf16.mxu0 %v2336
    %2562 = vmatpush1.bf16.msra.mxu0 %v2335
    %2563 = vmatprep.subr.bf16.mxu0 %v2344
    %2564 = vmatpush1.bf16.msra.mxu0 %v2343
    %2565 = vmatprep.subr.bf16.mxu0 %v2352
    %2566 = vmatpush1.bf16.msra.mxu0 %v2351
    %2567 = vmatprep.subr.bf16.mxu0 %v2360
    %2568 = vmatpush1.bf16.msra.mxu0 %v2359
    %2569 = vmatprep.subr.bf16.mxu0 %v2368
    %2570 = vmatpush1.bf16.msra.mxu0 %v2367
    %2571 = vmatprep.subr.bf16.mxu0 %v2376
    %2572 = vmatpush1.bf16.msra.mxu0 %v2375
    %2573 = vmatprep.subr.bf16.mxu0 %v2384
    %2574 = vmatpush1.bf16.msra.mxu0 %v2383
    %2575 = vmatprep.subr.bf16.mxu0 %v2392
    %2576 = vmatpush1.bf16.msra.mxu0 %v2391
    %2577 = vmatprep.subr.bf16.mxu0 %v2400
    %2578 = vmatpush1.bf16.msra.mxu0 %v2399
    %2579 = vmatprep.subr.bf16.mxu0 %v2408
    %2580 = vmatpush1.bf16.msra.mxu0 %v2407
    %2581 = vmatprep.subr.bf16.mxu0 %v2416
    %2582 = vmatpush1.bf16.msra.mxu0 %v2415
    %2583 = vmatprep.mubr.bf16.mxu0 0
    %2584 = vmatmul.mubr.bf16.gmra.mrb[0].mxu0 0
    %v2585 = vpop.f32.mrb[0].mxu0
    %v2586 = vadd.f32 0.0, %v2585
    %v2587 = vpop.f32.mrb[0].mxu0
    %v2588 = vadd.f32 0.0, %v2587
    %v2589 = vpop.f32.mrb[0].mxu0
    %v2590 = vpop.f32.mrb[0].mxu0
    %2591 = vdwg.mxu0
    %2592 = vmatprep.subr.bf16.mxu0 %v2298
    %2593 = vmatpush1.bf16.msra.mxu0 %v2297
    %2594 = vmatprep.subr.bf16.mxu0 %v2306
    %2595 = vmatpush1.bf16.msra.mxu0 %v2305
    %2596 = vmatprep.subr.bf16.mxu0 %v2314
    %2597 = vmatpush1.bf16.msra.mxu0 %v2313
    %2598 = vmatprep.subr.bf16.mxu0 %v2322
    %2599 = vmatpush1.bf16.msra.mxu0 %v2321
    %2600 = vmatprep.subr.bf16.mxu0 %v2330
    %2601 = vmatpush1.bf16.msra.mxu0 %v2329
    %2602 = vmatprep.subr.bf16.mxu0 %v2338
    %2603 = vmatpush1.bf16.msra.mxu0 %v2337
    %2604 = vmatprep.subr.bf16.mxu0 %v2346
    %2605 = vmatpush1.bf16.msra.mxu0 %v2345
    %2606 = vmatprep.subr.bf16.mxu0 %v2354
    %2607 = vmatpush1.bf16.msra.mxu0 %v2353
    %2608 = vmatprep.subr.bf16.mxu0 %v2362
    %2609 = vmatpush1.bf16.msra.mxu0 %v2361
    %2610 = vmatprep.subr.bf16.mxu0 %v2370
    %2611 = vmatpush1.bf16.msra.mxu0 %v2369
    %2612 = vmatprep.subr.bf16.mxu0 %v2378
    %2613 = vmatpush1.bf16.msra.mxu0 %v2377
    %2614 = vmatprep.subr.bf16.mxu0 %v2386
    %2615 = vmatpush1.bf16.msra.mxu0 %v2385
    %2616 = vmatprep.subr.bf16.mxu0 %v2394
    %2617 = vmatpush1.bf16.msra.mxu0 %v2393
    %2618 = vmatprep.subr.bf16.mxu0 %v2402
    %2619 = vmatpush1.bf16.msra.mxu0 %v2401
    %2620 = vmatprep.subr.bf16.mxu0 %v2410
    %2621 = vmatpush1.bf16.msra.mxu0 %v2409
    %2622 = vmatprep.subr.bf16.mxu0 %v2418
    %2623 = vmatpush1.bf16.msra.mxu0 %v2417
    %2624 = vmatprep.mubr.bf16.mxu0 0
    %2625 = vmatmul.mubr.bf16.gmra.mrb[0].mxu0 0
    %v2626 = vpop.f32.mrb[0].mxu0
    %v2627 = vadd.f32 0.0, %v2626
    %v2628 = vpop.f32.mrb[0].mxu0
    %v2629 = vadd.f32 0.0, %v2628
    %v2630 = vpop.f32.mrb[0].mxu0
    %v2631 = vpop.f32.mrb[0].mxu0
    %2632 = vdwg.mxu0
    %2633 = vmatprep.subr.bf16.mxu0 %v2300
    %2634 = vmatpush1.bf16.msra.mxu0 %v2299
    %2635 = vmatprep.subr.bf16.mxu0 %v2308
    %2636 = vmatpush1.bf16.msra.mxu0 %v2307
    %2637 = vmatprep.subr.bf16.mxu0 %v2316
    %2638 = vmatpush1.bf16.msra.mxu0 %v2315
    %2639 = vmatprep.subr.bf16.mxu0 %v2324
    %2640 = vmatpush1.bf16.msra.mxu0 %v2323
    %2641 = vmatprep.subr.bf16.mxu0 %v2332
    %2642 = vmatpush1.bf16.msra.mxu0 %v2331
    %2643 = vmatprep.subr.bf16.mxu0 %v2340
    %2644 = vmatpush1.bf16.msra.mxu0 %v2339
    %2645 = vmatprep.subr.bf16.mxu0 %v2348
    %2646 = vmatpush1.bf16.msra.mxu0 %v2347
    %2647 = vmatprep.subr.bf16.mxu0 %v2356
    %2648 = vmatpush1.bf16.msra.mxu0 %v2355
    %2649 = vmatprep.subr.bf16.mxu0 %v2364
    %2650 = vmatpush1.bf16.msra.mxu0 %v2363
    %2651 = vmatprep.subr.bf16.mxu0 %v2372
    %2652 = vmatpush1.bf16.msra.mxu0 %v2371
    %2653 = vmatprep.subr.bf16.mxu0 %v2380
    %2654 = vmatpush1.bf16.msra.mxu0 %v2379
    %2655 = vmatprep.subr.bf16.mxu0 %v2388
    %2656 = vmatpush1.bf16.msra.mxu0 %v2387
    %2657 = vmatprep.subr.bf16.mxu0 %v2396
    %2658 = vmatpush1.bf16.msra.mxu0 %v2395
    %2659 = vmatprep.subr.bf16.mxu0 %v2404
    %2660 = vmatpush1.bf16.msra.mxu0 %v2403
    %2661 = vmatprep.subr.bf16.mxu0 %v2412
    %2662 = vmatpush1.bf16.msra.mxu0 %v2411
    %2663 = vmatprep.subr.bf16.mxu0 %v2420
    %2664 = vmatpush1.bf16.msra.mxu0 %v2419
    %2665 = vmatprep.mubr.bf16.mxu0 0
    %2666 = vmatmul.mubr.bf16.gmra.mrb[0].mxu0 0
    %v2667 = vpop.f32.mrb[0].mxu0
    %v2668 = vadd.f32 0.0, %v2667
    %v2669 = vpop.f32.mrb[0].mxu0
    %v2670 = vadd.f32 0.0, %v2669
    %v2671 = vpop.f32.mrb[0].mxu0
    %v2672 = vpop.f32.mrb[0].mxu0
    %2673 = vdwg.mxu0
    %2674 = vmatprep.subr.bf16.mxu0 %v2302
    %2675 = vmatpush1.bf16.msra.mxu0 %v2301
    %2676 = vmatprep.subr.bf16.mxu0 %v2310
    %2677 = vmatpush1.bf16.msra.mxu0 %v2309
    %2678 = vmatprep.subr.bf16.mxu0 %v2318
    %2679 = vmatpush1.bf16.msra.mxu0 %v2317
    %2680 = vmatprep.subr.bf16.mxu0 %v2326
    %2681 = vmatpush1.bf16.msra.mxu0 %v2325
    %2682 = vmatprep.subr.bf16.mxu0 %v2334
    %2683 = vmatpush1.bf16.msra.mxu0 %v2333
    %2684 = vmatprep.subr.bf16.mxu0 %v2342
    %2685 = vmatpush1.bf16.msra.mxu0 %v2341
    %2686 = vmatprep.subr.bf16.mxu0 %v2350
    %2687 = vmatpush1.bf16.msra.mxu0 %v2349
    %2688 = vmatprep.subr.bf16.mxu0 %v2358
    %2689 = vmatpush1.bf16.msra.mxu0 %v2357
    %2690 = vmatprep.subr.bf16.mxu0 %v2366
    %2691 = vmatpush1.bf16.msra.mxu0 %v2365
    %2692 = vmatprep.subr.bf16.mxu0 %v2374
    %2693 = vmatpush1.bf16.msra.mxu0 %v2373
    %2694 = vmatprep.subr.bf16.mxu0 %v2382
    %2695 = vmatpush1.bf16.msra.mxu0 %v2381
    %2696 = vmatprep.subr.bf16.mxu0 %v2390
    %2697 = vmatpush1.bf16.msra.mxu0 %v2389
    %2698 = vmatprep.subr.bf16.mxu0 %v2398
    %2699 = vmatpush1.bf16.msra.mxu0 %v2397
    %2700 = vmatprep.subr.bf16.mxu0 %v2406
    %2701 = vmatpush1.bf16.msra.mxu0 %v2405
    %2702 = vmatprep.subr.bf16.mxu0 %v2414
    %2703 = vmatpush1.bf16.msra.mxu0 %v2413
    %2704 = vmatprep.subr.bf16.mxu0 %v2422
    %2705 = vmatpush1.bf16.msra.mxu0 %v2421
    %2706 = vmatprep.mubr.bf16.mxu0 0
    %2707 = vmatmul.mubr.bf16.gmra.mrb[0].mxu0 0
    %v2708 = vpop.f32.mrb[0].mxu0
    %v2709 = vadd.f32 0.0, %v2708
    %v2710 = vpop.f32.mrb[0].mxu0
    %v2711 = vadd.f32 0.0, %v2710
    %v2712 = vpop.f32.mrb[0].mxu0
    %v2713 = vpop.f32.mrb[0].mxu0
    %2714 = vdwg.mxu0
    %v2715 = vadd.f32 %v1903, %v2586
    %v2716 = vadd.f32 %v1904, %v2588
    %v2717 = vadd.f32 %v1905, %v2627
    %v2718 = vadd.f32 %v1906, %v2629
    %v2719 = vadd.f32 %v1907, %v2668
    %v2720 = vadd.f32 %v1908, %v2670
    %v2721 = vadd.f32 %v1909, %v2709
    %v2722 = vadd.f32 %v1910, %v2711
    %v2723 = vxor.u32 %v2715, 2147483648
    %v2724 = vxor.u32 %v2716, 2147483648
    %v2725 = vmul.f32 %v2723, 1.442695
    %v2726 = vpow.pop %v2725
    %v2727 = vmul.f32 %v2724, 1.442695
    %v2728 = vpow.pop %v2727
    %v2729 = vadd.f32 %v2726, 1.0
    %v2730 = vadd.f32 %v2728, 1.0
    %v2731 = vrcp.pop %v2729
    %v2732 = vmul.f32 1.0, %v2731
    %v2733 = vrcp.pop %v2730
    %v2734 = vmul.f32 1.0, %v2733
    %v2735 = vxor.u32 %v2717, 2147483648
    %v2736 = vxor.u32 %v2718, 2147483648
    %v2737 = vmul.f32 %v2735, 1.442695
    %v2738 = vpow.pop %v2737
    %v2739 = vmul.f32 %v2736, 1.442695
    %v2740 = vpow.pop %v2739
    %v2741 = vadd.f32 %v2738, 1.0
    %v2742 = vadd.f32 %v2740, 1.0
    %v2743 = vrcp.pop %v2741
    %v2744 = vmul.f32 1.0, %v2743
    %v2745 = vrcp.pop %v2742
    %v2746 = vmul.f32 1.0, %v2745
    %v2747 = vtanh.pop %v2719
    %v2748 = vtanh.pop %v2720
    %v2749 = vxor.u32 %v2721, 2147483648
    %v2750 = vxor.u32 %v2722, 2147483648
    %v2751 = vmul.f32 %v2749, 1.442695
    %v2752 = vpow.pop %v2751
    %v2753 = vmul.f32 %v2750, 1.442695
    %v2754 = vpow.pop %v2753
    %v2755 = vadd.f32 %v2752, 1.0
    %v2756 = vadd.f32 %v2754, 1.0
    %v2757 = vrcp.pop %v2755
    %v2758 = vmul.f32 1.0, %v2757
    %v2759 = vrcp.pop %v2756
    %v2760 = vmul.f32 1.0, %v2759
    %v2761 = vmul.f32 %v2744, 0.0
    %v2762 = vmul.f32 %v2746, 0.0
    %v2763 = vmul.f32 %v2732, %v2747
    %v2764 = vmul.f32 %v2734, %v2748
    %v2765 = vadd.f32 %v2761, %v2763
    %v2766 = vadd.f32 %v2762, %v2764
    %v2767 = vtanh.pop %v2765
    %v2768 = vtanh.pop %v2766
    %v2769 = vmul.f32 %v2758, %v2767
    %v2770 = vmul.f32 %v2760, %v2768
    %v2771 = vpack.c.bf16 %v2769, %v2769
    %v2772 = vpack.c.bf16 %v2770, %v2770
    %v2901 = vunpack.c.l.b16 %v1734
    %v2902 = vunpack.c.h.b16 %v1734
    %v2903 = vunpack.c.l.b16 %v1735
    %v2904 = vunpack.c.h.b16 %v1735
    %v2905 = vunpack.c.l.b16 %v1736
    %v2906 = vunpack.c.h.b16 %v1736
    %v2907 = vunpack.c.l.b16 %v1737
    %v2908 = vunpack.c.h.b16 %v1737
    %v2909 = vunpack.c.l.b16 %v1738
    %v2910 = vunpack.c.h.b16 %v1738
    %v2911 = vunpack.c.l.b16 %v1739
    %v2912 = vunpack.c.h.b16 %v1739
    %v2913 = vunpack.c.l.b16 %v1740
    %v2914 = vunpack.c.h.b16 %v1740
    %v2915 = vunpack.c.l.b16 %v1741
    %v2916 = vunpack.c.h.b16 %v1741
    %v2917 = vunpack.c.l.b16 %v1742
    %v2918 = vunpack.c.h.b16 %v1742
    %v2919 = vunpack.c.l.b16 %v1743
    %v2920 = vunpack.c.h.b16 %v1743
    %v2921 = vunpack.c.l.b16 %v1744
    %v2922 = vunpack.c.h.b16 %v1744
    %v2923 = vunpack.c.l.b16 %v1745
    %v2924 = vunpack.c.h.b16 %v1745
    %v2925 = vunpack.c.l.b16 %v1746
    %v2926 = vunpack.c.h.b16 %v1746
    %v2927 = vunpack.c.l.b16 %v1747
    %v2928 = vunpack.c.h.b16 %v1747
    %v2929 = vunpack.c.l.b16 %v1748
    %v2930 = vunpack.c.h.b16 %v1748
    %v2931 = vunpack.c.l.b16 %v1749
    %v2932 = vunpack.c.h.b16 %v1749
    %v2933 = vunpack.c.l.b16 %v1750
    %v2934 = vunpack.c.h.b16 %v1750
    %v2935 = vunpack.c.l.b16 %v1751
    %v2936 = vunpack.c.h.b16 %v1751
    %v2937 = vunpack.c.l.b16 %v1752
    %v2938 = vunpack.c.h.b16 %v1752
    %v2939 = vunpack.c.l.b16 %v1753
    %v2940 = vunpack.c.h.b16 %v1753
    %v2941 = vunpack.c.l.b16 %v1754
    %v2942 = vunpack.c.h.b16 %v1754
    %v2943 = vunpack.c.l.b16 %v1755
    %v2944 = vunpack.c.h.b16 %v1755
    %v2945 = vunpack.c.l.b16 %v1756
    %v2946 = vunpack.c.h.b16 %v1756
    %v2947 = vunpack.c.l.b16 %v1757
    %v2948 = vunpack.c.h.b16 %v1757
    %v2949 = vunpack.c.l.b16 %v1758
    %v2950 = vunpack.c.h.b16 %v1758
    %v2951 = vunpack.c.l.b16 %v1759
    %v2952 = vunpack.c.h.b16 %v1759
    %v2953 = vunpack.c.l.b16 %v1760
    %v2954 = vunpack.c.h.b16 %v1760
    %v2955 = vunpack.c.l.b16 %v1761
    %v2956 = vunpack.c.h.b16 %v1761
    %v2957 = vunpack.c.l.b16 %v1762
    %v2958 = vunpack.c.h.b16 %v1762
    %v2959 = vunpack.c.l.b16 %v1763
    %v2960 = vunpack.c.h.b16 %v1763
    %v2961 = vunpack.c.l.b16 %v1764
    %v2962 = vunpack.c.h.b16 %v1764
    %v2963 = vunpack.c.l.b16 %v1765
    %v2964 = vunpack.c.h.b16 %v1765
    %v2965 = vunpack.c.l.b16 %v1766
    %v2966 = vunpack.c.h.b16 %v1766
    %v2967 = vunpack.c.l.b16 %v1767
    %v2968 = vunpack.c.h.b16 %v1767
    %v2969 = vunpack.c.l.b16 %v1768
    %v2970 = vunpack.c.h.b16 %v1768
    %v2971 = vunpack.c.l.b16 %v1769
    %v2972 = vunpack.c.h.b16 %v1769
    %v2973 = vunpack.c.l.b16 %v1770
    %v2974 = vunpack.c.h.b16 %v1770
    %v2975 = vunpack.c.l.b16 %v1771
    %v2976 = vunpack.c.h.b16 %v1771
    %v2977 = vunpack.c.l.b16 %v1772
    %v2978 = vunpack.c.h.b16 %v1772
    %v2979 = vunpack.c.l.b16 %v1773
    %v2980 = vunpack.c.h.b16 %v1773
    %v2981 = vunpack.c.l.b16 %v1774
    %v2982 = vunpack.c.h.b16 %v1774
    %v2983 = vunpack.c.l.b16 %v1775
    %v2984 = vunpack.c.h.b16 %v1775
    %v2985 = vunpack.c.l.b16 %v1776
    %v2986 = vunpack.c.h.b16 %v1776
    %v2987 = vunpack.c.l.b16 %v1777
    %v2988 = vunpack.c.h.b16 %v1777
    %v2989 = vunpack.c.l.b16 %v1778
    %v2990 = vunpack.c.h.b16 %v1778
    %v2991 = vunpack.c.l.b16 %v1779
    %v2992 = vunpack.c.h.b16 %v1779
    %v2993 = vunpack.c.l.b16 %v1780
    %v2994 = vunpack.c.h.b16 %v1780
    %v2995 = vunpack.c.l.b16 %v1781
    %v2996 = vunpack.c.h.b16 %v1781
    %v2997 = vunpack.c.l.b16 %v1782
    %v2998 = vunpack.c.h.b16 %v1782
    %v2999 = vunpack.c.l.b16 %v1783
    %v3000 = vunpack.c.h.b16 %v1783
    %v3001 = vunpack.c.l.b16 %v1784
    %v3002 = vunpack.c.h.b16 %v1784
    %v3003 = vunpack.c.l.b16 %v1785
    %v3004 = vunpack.c.h.b16 %v1785
    %v3005 = vunpack.c.l.b16 %v1786
    %v3006 = vunpack.c.h.b16 %v1786
    %v3007 = vunpack.c.l.b16 %v1787
    %v3008 = vunpack.c.h.b16 %v1787
    %v3009 = vunpack.c.l.b16 %v1788
    %v3010 = vunpack.c.h.b16 %v1788
    %v3011 = vunpack.c.l.b16 %v1789
    %v3012 = vunpack.c.h.b16 %v1789
    %v3013 = vunpack.c.l.b16 %v1790
    %v3014 = vunpack.c.h.b16 %v1790
    %v3015 = vunpack.c.l.b16 %v1791
    %v3016 = vunpack.c.h.b16 %v1791
    %v3017 = vunpack.c.l.b16 %v1792
    %v3018 = vunpack.c.h.b16 %v1792
    %v3019 = vunpack.c.l.b16 %v1793
    %v3020 = vunpack.c.h.b16 %v1793
    %v3021 = vunpack.c.l.b16 %v1794
    %v3022 = vunpack.c.h.b16 %v1794
    %v3023 = vunpack.c.l.b16 %v1795
    %v3024 = vunpack.c.h.b16 %v1795
    %v3025 = vunpack.c.l.b16 %v1796
    %v3026 = vunpack.c.h.b16 %v1796
    %v3027 = vunpack.c.l.b16 %v1797
    %v3028 = vunpack.c.h.b16 %v1797
    %v3029 = vunpack.c.l.b16 %v1798
    %v3030 = vunpack.c.h.b16 %v1798
    %v3031 = vunpack.c.l.b16 %v1799
    %v3032 = vunpack.c.h.b16 %v1799
    %v3033 = vunpack.c.l.b16 %v1800
    %v3034 = vunpack.c.h.b16 %v1800
    %v3035 = vunpack.c.l.b16 %v1801
    %v3036 = vunpack.c.h.b16 %v1801
    %v3037 = vunpack.c.l.b16 %v1802
    %v3038 = vunpack.c.h.b16 %v1802
    %v3039 = vunpack.c.l.b16 %v1803
    %v3040 = vunpack.c.h.b16 %v1803
    %v3041 = vunpack.c.l.b16 %v1804
    %v3042 = vunpack.c.h.b16 %v1804
    %v3043 = vunpack.c.l.b16 %v1805
    %v3044 = vunpack.c.h.b16 %v1805
    %v3045 = vunpack.c.l.b16 %v1806
    %v3046 = vunpack.c.h.b16 %v1806
    %v3047 = vunpack.c.l.b16 %v1807
    %v3048 = vunpack.c.h.b16 %v1807
    %v3049 = vunpack.c.l.b16 %v1808
    %v3050 = vunpack.c.h.b16 %v1808
    %v3051 = vunpack.c.l.b16 %v1809
    %v3052 = vunpack.c.h.b16 %v1809
    %v3053 = vunpack.c.l.b16 %v1810
    %v3054 = vunpack.c.h.b16 %v1810
    %v3055 = vunpack.c.l.b16 %v1811
    %v3056 = vunpack.c.h.b16 %v1811
    %v3057 = vunpack.c.l.b16 %v1812
    %v3058 = vunpack.c.h.b16 %v1812
    %v3059 = vunpack.c.l.b16 %v1813
    %v3060 = vunpack.c.h.b16 %v1813
    %v3061 = vunpack.c.l.b16 %v1814
    %v3062 = vunpack.c.h.b16 %v1814
    %v3063 = vunpack.c.l.b16 %v1815
    %v3064 = vunpack.c.h.b16 %v1815
    %v3065 = vunpack.c.l.b16 %v1816
    %v3066 = vunpack.c.h.b16 %v1816
    %v3067 = vunpack.c.l.b16 %v1817
    %v3068 = vunpack.c.h.b16 %v1817
    %v3069 = vunpack.c.l.b16 %v1818
    %v3070 = vunpack.c.h.b16 %v1818
    %v3071 = vunpack.c.l.b16 %v1819
    %v3072 = vunpack.c.h.b16 %v1819
    %v3073 = vunpack.c.l.b16 %v1820
    %v3074 = vunpack.c.h.b16 %v1820
    %v3075 = vunpack.c.l.b16 %v1821
    %v3076 = vunpack.c.h.b16 %v1821
    %v3077 = vunpack.c.l.b16 %v1822
    %v3078 = vunpack.c.h.b16 %v1822
    %v3079 = vunpack.c.l.b16 %v1823
    %v3080 = vunpack.c.h.b16 %v1823
    %v3081 = vunpack.c.l.b16 %v1824
    %v3082 = vunpack.c.h.b16 %v1824
    %v3083 = vunpack.c.l.b16 %v1825
    %v3084 = vunpack.c.h.b16 %v1825
    %v3085 = vunpack.c.l.b16 %v1826
    %v3086 = vunpack.c.h.b16 %v1826
    %v3087 = vunpack.c.l.b16 %v1827
    %v3088 = vunpack.c.h.b16 %v1827
    %v3089 = vunpack.c.l.b16 %v1828
    %v3090 = vunpack.c.h.b16 %v1828
    %v3091 = vunpack.c.l.b16 %v1829
    %v3092 = vunpack.c.h.b16 %v1829
    %v3093 = vunpack.c.l.b16 %v1830
    %v3094 = vunpack.c.h.b16 %v1830
    %v3095 = vunpack.c.l.b16 %v1831
    %v3096 = vunpack.c.h.b16 %v1831
    %v3097 = vunpack.c.l.b16 %v1832
    %v3098 = vunpack.c.h.b16 %v1832
    %v3099 = vunpack.c.l.b16 %v1833
    %v3100 = vunpack.c.h.b16 %v1833
    %v3101 = vunpack.c.l.b16 %v1834
    %v3102 = vunpack.c.h.b16 %v1834
    %v3103 = vunpack.c.l.b16 %v1835
    %v3104 = vunpack.c.h.b16 %v1835
    %v3105 = vunpack.c.l.b16 %v1836
    %v3106 = vunpack.c.h.b16 %v1836
    %v3107 = vunpack.c.l.b16 %v1837
    %v3108 = vunpack.c.h.b16 %v1837
    %v3109 = vunpack.c.l.b16 %v1838
    %v3110 = vunpack.c.h.b16 %v1838
    %v3111 = vunpack.c.l.b16 %v1839
    %v3112 = vunpack.c.h.b16 %v1839
    %v3113 = vunpack.c.l.b16 %v1840
    %v3114 = vunpack.c.h.b16 %v1840
    %v3115 = vunpack.c.l.b16 %v1841
    %v3116 = vunpack.c.h.b16 %v1841
    %v3117 = vunpack.c.l.b16 %v1842
    %v3118 = vunpack.c.h.b16 %v1842
    %v3119 = vunpack.c.l.b16 %v1843
    %v3120 = vunpack.c.h.b16 %v1843
    %v3121 = vunpack.c.l.b16 %v1844
    %v3122 = vunpack.c.h.b16 %v1844
    %v3123 = vunpack.c.l.b16 %v1845
    %v3124 = vunpack.c.h.b16 %v1845
    %v3125 = vunpack.c.l.b16 %v1846
    %v3126 = vunpack.c.h.b16 %v1846
    %v3127 = vunpack.c.l.b16 %v1847
    %v3128 = vunpack.c.h.b16 %v1847
    %v3129 = vunpack.c.l.b16 %v1848
    %v3130 = vunpack.c.h.b16 %v1848
    %v3131 = vunpack.c.l.b16 %v1849
    %v3132 = vunpack.c.h.b16 %v1849
    %v3133 = vunpack.c.l.b16 %v1850
    %v3134 = vunpack.c.h.b16 %v1850
    %v3135 = vunpack.c.l.b16 %v1851
    %v3136 = vunpack.c.h.b16 %v1851
    %v3137 = vunpack.c.l.b16 %v1852
    %v3138 = vunpack.c.h.b16 %v1852
    %v3139 = vunpack.c.l.b16 %v1853
    %v3140 = vunpack.c.h.b16 %v1853
    %v3141 = vunpack.c.l.b16 %v1854
    %v3142 = vunpack.c.h.b16 %v1854
    %v3143 = vunpack.c.l.b16 %v1855
    %v3144 = vunpack.c.h.b16 %v1855
    %v3145 = vunpack.c.l.b16 %v1856
    %v3146 = vunpack.c.h.b16 %v1856
    %v3147 = vunpack.c.l.b16 %v1857
    %v3148 = vunpack.c.h.b16 %v1857
    %v3149 = vunpack.c.l.b16 %v1858
    %v3150 = vunpack.c.h.b16 %v1858
    %v3151 = vunpack.c.l.b16 %v1859
    %v3152 = vunpack.c.h.b16 %v1859
    %v3153 = vunpack.c.l.b16 %v1860
    %v3154 = vunpack.c.h.b16 %v1860
    %v3155 = vunpack.c.l.b16 %v1861
    %v3156 = vunpack.c.h.b16 %v1861
    %v3157 = vpack.c.b16 %v2909, %v2901
    %v3158 = vpack.c.b16 %v2910, %v2902
    %v3159 = vpack.c.b16 %v2911, %v2903
    %v3160 = vpack.c.b16 %v2912, %v2904
    %v3161 = vpack.c.b16 %v2913, %v2905
    %v3162 = vpack.c.b16 %v2914, %v2906
    %v3163 = vpack.c.b16 %v2915, %v2907
    %v3164 = vpack.c.b16 %v2916, %v2908
    %v3165 = vpack.c.b16 %v2925, %v2917
    %v3166 = vpack.c.b16 %v2926, %v2918
    %v3167 = vpack.c.b16 %v2927, %v2919
    %v3168 = vpack.c.b16 %v2928, %v2920
    %v3169 = vpack.c.b16 %v2929, %v2921
    %v3170 = vpack.c.b16 %v2930, %v2922
    %v3171 = vpack.c.b16 %v2931, %v2923
    %v3172 = vpack.c.b16 %v2932, %v2924
    %v3173 = vpack.c.b16 %v2941, %v2933
    %v3174 = vpack.c.b16 %v2942, %v2934
    %v3175 = vpack.c.b16 %v2943, %v2935
    %v3176 = vpack.c.b16 %v2944, %v2936
    %v3177 = vpack.c.b16 %v2945, %v2937
    %v3178 = vpack.c.b16 %v2946, %v2938
    %v3179 = vpack.c.b16 %v2947, %v2939
    %v3180 = vpack.c.b16 %v2948, %v2940
    %v3181 = vpack.c.b16 %v2957, %v2949
    %v3182 = vpack.c.b16 %v2958, %v2950
    %v3183 = vpack.c.b16 %v2959, %v2951
    %v3184 = vpack.c.b16 %v2960, %v2952
    %v3185 = vpack.c.b16 %v2961, %v2953
    %v3186 = vpack.c.b16 %v2962, %v2954
    %v3187 = vpack.c.b16 %v2963, %v2955
    %v3188 = vpack.c.b16 %v2964, %v2956
    %v3189 = vpack.c.b16 %v2973, %v2965
    %v3190 = vpack.c.b16 %v2974, %v2966
    %v3191 = vpack.c.b16 %v2975, %v2967
    %v3192 = vpack.c.b16 %v2976, %v2968
    %v3193 = vpack.c.b16 %v2977, %v2969
    %v3194 = vpack.c.b16 %v2978, %v2970
    %v3195 = vpack.c.b16 %v2979, %v2971
    %v3196 = vpack.c.b16 %v2980, %v2972
    %v3197 = vpack.c.b16 %v2989, %v2981
    %v3198 = vpack.c.b16 %v2990, %v2982
    %v3199 = vpack.c.b16 %v2991, %v2983
    %v3200 = vpack.c.b16 %v2992, %v2984
    %v3201 = vpack.c.b16 %v2993, %v2985
    %v3202 = vpack.c.b16 %v2994, %v2986
    %v3203 = vpack.c.b16 %v2995, %v2987
    %v3204 = vpack.c.b16 %v2996, %v2988
    %v3205 = vpack.c.b16 %v3005, %v2997
    %v3206 = vpack.c.b16 %v3006, %v2998
    %v3207 = vpack.c.b16 %v3007, %v2999
    %v3208 = vpack.c.b16 %v3008, %v3000
    %v3209 = vpack.c.b16 %v3009, %v3001
    %v3210 = vpack.c.b16 %v3010, %v3002
    %v3211 = vpack.c.b16 %v3011, %v3003
    %v3212 = vpack.c.b16 %v3012, %v3004
    %v3213 = vpack.c.b16 %v3021, %v3013
    %v3214 = vpack.c.b16 %v3022, %v3014
    %v3215 = vpack.c.b16 %v3023, %v3015
    %v3216 = vpack.c.b16 %v3024, %v3016
    %v3217 = vpack.c.b16 %v3025, %v3017
    %v3218 = vpack.c.b16 %v3026, %v3018
    %v3219 = vpack.c.b16 %v3027, %v3019
    %v3220 = vpack.c.b16 %v3028, %v3020
    %v3221 = vpack.c.b16 %v3037, %v3029
    %v3222 = vpack.c.b16 %v3038, %v3030
    %v3223 = vpack.c.b16 %v3039, %v3031
    %v3224 = vpack.c.b16 %v3040, %v3032
    %v3225 = vpack.c.b16 %v3041, %v3033
    %v3226 = vpack.c.b16 %v3042, %v3034
    %v3227 = vpack.c.b16 %v3043, %v3035
    %v3228 = vpack.c.b16 %v3044, %v3036
    %v3229 = vpack.c.b16 %v3053, %v3045
    %v3230 = vpack.c.b16 %v3054, %v3046
    %v3231 = vpack.c.b16 %v3055, %v3047
    %v3232 = vpack.c.b16 %v3056, %v3048
    %v3233 = vpack.c.b16 %v3057, %v3049
    %v3234 = vpack.c.b16 %v3058, %v3050
    %v3235 = vpack.c.b16 %v3059, %v3051
    %v3236 = vpack.c.b16 %v3060, %v3052
    %v3237 = vpack.c.b16 %v3069, %v3061
    %v3238 = vpack.c.b16 %v3070, %v3062
    %v3239 = vpack.c.b16 %v3071, %v3063
    %v3240 = vpack.c.b16 %v3072, %v3064
    %v3241 = vpack.c.b16 %v3073, %v3065
    %v3242 = vpack.c.b16 %v3074, %v3066
    %v3243 = vpack.c.b16 %v3075, %v3067
    %v3244 = vpack.c.b16 %v3076, %v3068
    %v3245 = vpack.c.b16 %v3085, %v3077
    %v3246 = vpack.c.b16 %v3086, %v3078
    %v3247 = vpack.c.b16 %v3087, %v3079
    %v3248 = vpack.c.b16 %v3088, %v3080
    %v3249 = vpack.c.b16 %v3089, %v3081
    %v3250 = vpack.c.b16 %v3090, %v3082
    %v3251 = vpack.c.b16 %v3091, %v3083
    %v3252 = vpack.c.b16 %v3092, %v3084
    %v3253 = vpack.c.b16 %v3101, %v3093
    %v3254 = vpack.c.b16 %v3102, %v3094
    %v3255 = vpack.c.b16 %v3103, %v3095
    %v3256 = vpack.c.b16 %v3104, %v3096
    %v3257 = vpack.c.b16 %v3105, %v3097
    %v3258 = vpack.c.b16 %v3106, %v3098
    %v3259 = vpack.c.b16 %v3107, %v3099
    %v3260 = vpack.c.b16 %v3108, %v3100
    %v3261 = vpack.c.b16 %v3117, %v3109
    %v3262 = vpack.c.b16 %v3118, %v3110
    %v3263 = vpack.c.b16 %v3119, %v3111
    %v3264 = vpack.c.b16 %v3120, %v3112
    %v3265 = vpack.c.b16 %v3121, %v3113
    %v3266 = vpack.c.b16 %v3122, %v3114
    %v3267 = vpack.c.b16 %v3123, %v3115
    %v3268 = vpack.c.b16 %v3124, %v3116
    %v3269 = vpack.c.b16 %v3133, %v3125
    %v3270 = vpack.c.b16 %v3134, %v3126
    %v3271 = vpack.c.b16 %v3135, %v3127
    %v3272 = vpack.c.b16 %v3136, %v3128
    %v3273 = vpack.c.b16 %v3137, %v3129
    %v3274 = vpack.c.b16 %v3138, %v3130
    %v3275 = vpack.c.b16 %v3139, %v3131
    %v3276 = vpack.c.b16 %v3140, %v3132
    %v3277 = vpack.c.b16 %v3149, %v3141
    %v3278 = vpack.c.b16 %v3150, %v3142
    %v3279 = vpack.c.b16 %v3151, %v3143
    %v3280 = vpack.c.b16 %v3152, %v3144
    %v3281 = vpack.c.b16 %v3153, %v3145
    %v3282 = vpack.c.b16 %v3154, %v3146
    %v3283 = vpack.c.b16 %v3155, %v3147
    %v3284 = vpack.c.b16 %v3156, %v3148
    %3413 = vmatprep.subr.bf16.mxu0 %v3158
    %3414 = vmatpush1.bf16.msra.mxu0 %v3157
    %3415 = vmatprep.subr.bf16.mxu0 %v3166
    %3416 = vmatpush1.bf16.msra.mxu0 %v3165
    %3417 = vmatprep.subr.bf16.mxu0 %v3174
    %3418 = vmatpush1.bf16.msra.mxu0 %v3173
    %3419 = vmatprep.subr.bf16.mxu0 %v3182
    %3420 = vmatpush1.bf16.msra.mxu0 %v3181
    %3421 = vmatprep.subr.bf16.mxu0 %v3190
    %3422 = vmatpush1.bf16.msra.mxu0 %v3189
    %3423 = vmatprep.subr.bf16.mxu0 %v3198
    %3424 = vmatpush1.bf16.msra.mxu0 %v3197
    %3425 = vmatprep.subr.bf16.mxu0 %v3206
    %3426 = vmatpush1.bf16.msra.mxu0 %v3205
    %3427 = vmatprep.subr.bf16.mxu0 %v3214
    %3428 = vmatpush1.bf16.msra.mxu0 %v3213
    %3429 = vmatprep.subr.bf16.mxu0 %v3222
    %3430 = vmatpush1.bf16.msra.mxu0 %v3221
    %3431 = vmatprep.subr.bf16.mxu0 %v3230
    %3432 = vmatpush1.bf16.msra.mxu0 %v3229
    %3433 = vmatprep.subr.bf16.mxu0 %v3238
    %3434 = vmatpush1.bf16.msra.mxu0 %v3237
    %3435 = vmatprep.subr.bf16.mxu0 %v3246
    %3436 = vmatpush1.bf16.msra.mxu0 %v3245
    %3437 = vmatprep.subr.bf16.mxu0 %v3254
    %3438 = vmatpush1.bf16.msra.mxu0 %v3253
    %3439 = vmatprep.subr.bf16.mxu0 %v3262
    %3440 = vmatpush1.bf16.msra.mxu0 %v3261
    %3441 = vmatprep.subr.bf16.mxu0 %v3270
    %3442 = vmatpush1.bf16.msra.mxu0 %v3269
    %3443 = vmatprep.subr.bf16.mxu0 %v3278
    %3444 = vmatpush1.bf16.msra.mxu0 %v3277
    %3445 = vmatprep.mubr.bf16.mxu0 0
    %3446 = vmatmul.mubr.bf16.gmra.mrb[0].mxu0 0
    %v3447 = vpop.f32.mrb[0].mxu0
    %v3448 = vadd.f32 0.0, %v3447
    %v3449 = vpop.f32.mrb[0].mxu0
    %v3450 = vadd.f32 0.0, %v3449
    %v3451 = vpop.f32.mrb[0].mxu0
    %v3452 = vpop.f32.mrb[0].mxu0
    %3453 = vdwg.mxu0
    %3454 = vmatprep.subr.bf16.mxu0 %v3160
    %3455 = vmatpush1.bf16.msra.mxu0 %v3159
    %3456 = vmatprep.subr.bf16.mxu0 %v3168
    %3457 = vmatpush1.bf16.msra.mxu0 %v3167
    %3458 = vmatprep.subr.bf16.mxu0 %v3176
    %3459 = vmatpush1.bf16.msra.mxu0 %v3175
    %3460 = vmatprep.subr.bf16.mxu0 %v3184
    %3461 = vmatpush1.bf16.msra.mxu0 %v3183
    %3462 = vmatprep.subr.bf16.mxu0 %v3192
    %3463 = vmatpush1.bf16.msra.mxu0 %v3191
    %3464 = vmatprep.subr.bf16.mxu0 %v3200
    %3465 = vmatpush1.bf16.msra.mxu0 %v3199
    %3466 = vmatprep.subr.bf16.mxu0 %v3208
    %3467 = vmatpush1.bf16.msra.mxu0 %v3207
    %3468 = vmatprep.subr.bf16.mxu0 %v3216
    %3469 = vmatpush1.bf16.msra.mxu0 %v3215
    %3470 = vmatprep.subr.bf16.mxu0 %v3224
    %3471 = vmatpush1.bf16.msra.mxu0 %v3223
    %3472 = vmatprep.subr.bf16.mxu0 %v3232
    %3473 = vmatpush1.bf16.msra.mxu0 %v3231
    %3474 = vmatprep.subr.bf16.mxu0 %v3240
    %3475 = vmatpush1.bf16.msra.mxu0 %v3239
    %3476 = vmatprep.subr.bf16.mxu0 %v3248
    %3477 = vmatpush1.bf16.msra.mxu0 %v3247
    %3478 = vmatprep.subr.bf16.mxu0 %v3256
    %3479 = vmatpush1.bf16.msra.mxu0 %v3255
    %3480 = vmatprep.subr.bf16.mxu0 %v3264
    %3481 = vmatpush1.bf16.msra.mxu0 %v3263
    %3482 = vmatprep.subr.bf16.mxu0 %v3272
    %3483 = vmatpush1.bf16.msra.mxu0 %v3271
    %3484 = vmatprep.subr.bf16.mxu0 %v3280
    %3485 = vmatpush1.bf16.msra.mxu0 %v3279
    %3486 = vmatprep.mubr.bf16.mxu0 0
    %3487 = vmatmul.mubr.bf16.gmra.mrb[0].mxu0 0
    %v3488 = vpop.f32.mrb[0].mxu0
    %v3489 = vadd.f32 0.0, %v3488
    %v3490 = vpop.f32.mrb[0].mxu0
    %v3491 = vadd.f32 0.0, %v3490
    %v3492 = vpop.f32.mrb[0].mxu0
    %v3493 = vpop.f32.mrb[0].mxu0
    %3494 = vdwg.mxu0
    %3495 = vmatprep.subr.bf16.mxu0 %v3162
    %3496 = vmatpush1.bf16.msra.mxu0 %v3161
    %3497 = vmatprep.subr.bf16.mxu0 %v3170
    %3498 = vmatpush1.bf16.msra.mxu0 %v3169
    %3499 = vmatprep.subr.bf16.mxu0 %v3178
    %3500 = vmatpush1.bf16.msra.mxu0 %v3177
    %3501 = vmatprep.subr.bf16.mxu0 %v3186
    %3502 = vmatpush1.bf16.msra.mxu0 %v3185
    %3503 = vmatprep.subr.bf16.mxu0 %v3194
    %3504 = vmatpush1.bf16.msra.mxu0 %v3193
    %3505 = vmatprep.subr.bf16.mxu0 %v3202
    %3506 = vmatpush1.bf16.msra.mxu0 %v3201
    %3507 = vmatprep.subr.bf16.mxu0 %v3210
    %3508 = vmatpush1.bf16.msra.mxu0 %v3209
    %3509 = vmatprep.subr.bf16.mxu0 %v3218
    %3510 = vmatpush1.bf16.msra.mxu0 %v3217
    %3511 = vmatprep.subr.bf16.mxu0 %v3226
    %3512 = vmatpush1.bf16.msra.mxu0 %v3225
    %3513 = vmatprep.subr.bf16.mxu0 %v3234
    %3514 = vmatpush1.bf16.msra.mxu0 %v3233
    %3515 = vmatprep.subr.bf16.mxu0 %v3242
    %3516 = vmatpush1.bf16.msra.mxu0 %v3241
    %3517 = vmatprep.subr.bf16.mxu0 %v3250
    %3518 = vmatpush1.bf16.msra.mxu0 %v3249
    %3519 = vmatprep.subr.bf16.mxu0 %v3258
    %3520 = vmatpush1.bf16.msra.mxu0 %v3257
    %3521 = vmatprep.subr.bf16.mxu0 %v3266
    %3522 = vmatpush1.bf16.msra.mxu0 %v3265
    %3523 = vmatprep.subr.bf16.mxu0 %v3274
    %3524 = vmatpush1.bf16.msra.mxu0 %v3273
    %3525 = vmatprep.subr.bf16.mxu0 %v3282
    %3526 = vmatpush1.bf16.msra.mxu0 %v3281
    %3527 = vmatprep.mubr.bf16.mxu0 0
    %3528 = vmatmul.mubr.bf16.gmra.mrb[0].mxu0 0
    %v3529 = vpop.f32.mrb[0].mxu0
    %v3530 = vadd.f32 0.0, %v3529
    %v3531 = vpop.f32.mrb[0].mxu0
    %v3532 = vadd.f32 0.0, %v3531
    %v3533 = vpop.f32.mrb[0].mxu0
    %v3534 = vpop.f32.mrb[0].mxu0
    %3535 = vdwg.mxu0
    %3536 = vmatprep.subr.bf16.mxu0 %v3164
    %3537 = vmatpush1.bf16.msra.mxu0 %v3163
    %3538 = vmatprep.subr.bf16.mxu0 %v3172
    %3539 = vmatpush1.bf16.msra.mxu0 %v3171
    %3540 = vmatprep.subr.bf16.mxu0 %v3180
    %3541 = vmatpush1.bf16.msra.mxu0 %v3179
    %3542 = vmatprep.subr.bf16.mxu0 %v3188
    %3543 = vmatpush1.bf16.msra.mxu0 %v3187
    %3544 = vmatprep.subr.bf16.mxu0 %v3196
    %3545 = vmatpush1.bf16.msra.mxu0 %v3195
    %3546 = vmatprep.subr.bf16.mxu0 %v3204
    %3547 = vmatpush1.bf16.msra.mxu0 %v3203
    %3548 = vmatprep.subr.bf16.mxu0 %v3212
    %3549 = vmatpush1.bf16.msra.mxu0 %v3211
    %3550 = vmatprep.subr.bf16.mxu0 %v3220
    %3551 = vmatpush1.bf16.msra.mxu0 %v3219
    %3552 = vmatprep.subr.bf16.mxu0 %v3228
    %3553 = vmatpush1.bf16.msra.mxu0 %v3227
    %3554 = vmatprep.subr.bf16.mxu0 %v3236
    %3555 = vmatpush1.bf16.msra.mxu0 %v3235
    %3556 = vmatprep.subr.bf16.mxu0 %v3244
    %3557 = vmatpush1.bf16.msra.mxu0 %v3243
    %3558 = vmatprep.subr.bf16.mxu0 %v3252
    %3559 = vmatpush1.bf16.msra.mxu0 %v3251
    %3560 = vmatprep.subr.bf16.mxu0 %v3260
    %3561 = vmatpush1.bf16.msra.mxu0 %v3259
    %3562 = vmatprep.subr.bf16.mxu0 %v3268
    %3563 = vmatpush1.bf16.msra.mxu0 %v3267
    %3564 = vmatprep.subr.bf16.mxu0 %v3276
    %3565 = vmatpush1.bf16.msra.mxu0 %v3275
    %3566 = vmatprep.subr.bf16.mxu0 %v3284
    %3567 = vmatpush1.bf16.msra.mxu0 %v3283
    %3568 = vmatprep.mubr.bf16.mxu0 0
    %3569 = vmatmul.mubr.bf16.gmra.mrb[0].mxu0 0
    %v3570 = vpop.f32.mrb[0].mxu0
    %v3571 = vadd.f32 0.0, %v3570
    %v3572 = vpop.f32.mrb[0].mxu0
    %v3573 = vadd.f32 0.0, %v3572
    %v3574 = vpop.f32.mrb[0].mxu0
    %v3575 = vpop.f32.mrb[0].mxu0
    %3576 = vdwg.mxu0
    %v3705 = vunpack.c.l.b16 %v1606
    %v3706 = vunpack.c.h.b16 %v1606
    %v3707 = vunpack.c.l.b16 %v1607
    %v3708 = vunpack.c.h.b16 %v1607
    %v3709 = vunpack.c.l.b16 %v1608
    %v3710 = vunpack.c.h.b16 %v1608
    %v3711 = vunpack.c.l.b16 %v1609
    %v3712 = vunpack.c.h.b16 %v1609
    %v3713 = vunpack.c.l.b16 %v1610
    %v3714 = vunpack.c.h.b16 %v1610
    %v3715 = vunpack.c.l.b16 %v1611
    %v3716 = vunpack.c.h.b16 %v1611
    %v3717 = vunpack.c.l.b16 %v1612
    %v3718 = vunpack.c.h.b16 %v1612
    %v3719 = vunpack.c.l.b16 %v1613
    %v3720 = vunpack.c.h.b16 %v1613
    %v3721 = vunpack.c.l.b16 %v1614
    %v3722 = vunpack.c.h.b16 %v1614
    %v3723 = vunpack.c.l.b16 %v1615
    %v3724 = vunpack.c.h.b16 %v1615
    %v3725 = vunpack.c.l.b16 %v1616
    %v3726 = vunpack.c.h.b16 %v1616
    %v3727 = vunpack.c.l.b16 %v1617
    %v3728 = vunpack.c.h.b16 %v1617
    %v3729 = vunpack.c.l.b16 %v1618
    %v3730 = vunpack.c.h.b16 %v1618
    %v3731 = vunpack.c.l.b16 %v1619
    %v3732 = vunpack.c.h.b16 %v1619
    %v3733 = vunpack.c.l.b16 %v1620
    %v3734 = vunpack.c.h.b16 %v1620
    %v3735 = vunpack.c.l.b16 %v1621
    %v3736 = vunpack.c.h.b16 %v1621
    %v3737 = vunpack.c.l.b16 %v1622
    %v3738 = vunpack.c.h.b16 %v1622
    %v3739 = vunpack.c.l.b16 %v1623
    %v3740 = vunpack.c.h.b16 %v1623
    %v3741 = vunpack.c.l.b16 %v1624
    %v3742 = vunpack.c.h.b16 %v1624
    %v3743 = vunpack.c.l.b16 %v1625
    %v3744 = vunpack.c.h.b16 %v1625
    %v3745 = vunpack.c.l.b16 %v1626
    %v3746 = vunpack.c.h.b16 %v1626
    %v3747 = vunpack.c.l.b16 %v1627
    %v3748 = vunpack.c.h.b16 %v1627
    %v3749 = vunpack.c.l.b16 %v1628
    %v3750 = vunpack.c.h.b16 %v1628
    %v3751 = vunpack.c.l.b16 %v1629
    %v3752 = vunpack.c.h.b16 %v1629
    %v3753 = vunpack.c.l.b16 %v1630
    %v3754 = vunpack.c.h.b16 %v1630
    %v3755 = vunpack.c.l.b16 %v1631
    %v3756 = vunpack.c.h.b16 %v1631
    %v3757 = vunpack.c.l.b16 %v1632
    %v3758 = vunpack.c.h.b16 %v1632
    %v3759 = vunpack.c.l.b16 %v1633
    %v3760 = vunpack.c.h.b16 %v1633
    %v3761 = vunpack.c.l.b16 %v1634
    %v3762 = vunpack.c.h.b16 %v1634
    %v3763 = vunpack.c.l.b16 %v1635
    %v3764 = vunpack.c.h.b16 %v1635
    %v3765 = vunpack.c.l.b16 %v1636
    %v3766 = vunpack.c.h.b16 %v1636
    %v3767 = vunpack.c.l.b16 %v1637
    %v3768 = vunpack.c.h.b16 %v1637
    %v3769 = vunpack.c.l.b16 %v1638
    %v3770 = vunpack.c.h.b16 %v1638
    %v3771 = vunpack.c.l.b16 %v1639
    %v3772 = vunpack.c.h.b16 %v1639
    %v3773 = vunpack.c.l.b16 %v1640
    %v3774 = vunpack.c.h.b16 %v1640
    %v3775 = vunpack.c.l.b16 %v1641
    %v3776 = vunpack.c.h.b16 %v1641
    %v3777 = vunpack.c.l.b16 %v1642
    %v3778 = vunpack.c.h.b16 %v1642
    %v3779 = vunpack.c.l.b16 %v1643
    %v3780 = vunpack.c.h.b16 %v1643
    %v3781 = vunpack.c.l.b16 %v1644
    %v3782 = vunpack.c.h.b16 %v1644
    %v3783 = vunpack.c.l.b16 %v1645
    %v3784 = vunpack.c.h.b16 %v1645
    %v3785 = vunpack.c.l.b16 %v1646
    %v3786 = vunpack.c.h.b16 %v1646
    %v3787 = vunpack.c.l.b16 %v1647
    %v3788 = vunpack.c.h.b16 %v1647
    %v3789 = vunpack.c.l.b16 %v1648
    %v3790 = vunpack.c.h.b16 %v1648
    %v3791 = vunpack.c.l.b16 %v1649
    %v3792 = vunpack.c.h.b16 %v1649
    %v3793 = vunpack.c.l.b16 %v1650
    %v3794 = vunpack.c.h.b16 %v1650
    %v3795 = vunpack.c.l.b16 %v1651
    %v3796 = vunpack.c.h.b16 %v1651
    %v3797 = vunpack.c.l.b16 %v1652
    %v3798 = vunpack.c.h.b16 %v1652
    %v3799 = vunpack.c.l.b16 %v1653
    %v3800 = vunpack.c.h.b16 %v1653
    %v3801 = vunpack.c.l.b16 %v1654
    %v3802 = vunpack.c.h.b16 %v1654
    %v3803 = vunpack.c.l.b16 %v1655
    %v3804 = vunpack.c.h.b16 %v1655
    %v3805 = vunpack.c.l.b16 %v1656
    %v3806 = vunpack.c.h.b16 %v1656
    %v3807 = vunpack.c.l.b16 %v1657
    %v3808 = vunpack.c.h.b16 %v1657
    %v3809 = vunpack.c.l.b16 %v1658
    %v3810 = vunpack.c.h.b16 %v1658
    %v3811 = vunpack.c.l.b16 %v1659
    %v3812 = vunpack.c.h.b16 %v1659
    %v3813 = vunpack.c.l.b16 %v1660
    %v3814 = vunpack.c.h.b16 %v1660
    %v3815 = vunpack.c.l.b16 %v1661
    %v3816 = vunpack.c.h.b16 %v1661
    %v3817 = vunpack.c.l.b16 %v1662
    %v3818 = vunpack.c.h.b16 %v1662
    %v3819 = vunpack.c.l.b16 %v1663
    %v3820 = vunpack.c.h.b16 %v1663
    %v3821 = vunpack.c.l.b16 %v1664
    %v3822 = vunpack.c.h.b16 %v1664
    %v3823 = vunpack.c.l.b16 %v1665
    %v3824 = vunpack.c.h.b16 %v1665
    %v3825 = vunpack.c.l.b16 %v1666
    %v3826 = vunpack.c.h.b16 %v1666
    %v3827 = vunpack.c.l.b16 %v1667
    %v3828 = vunpack.c.h.b16 %v1667
    %v3829 = vunpack.c.l.b16 %v1668
    %v3830 = vunpack.c.h.b16 %v1668
    %v3831 = vunpack.c.l.b16 %v1669
    %v3832 = vunpack.c.h.b16 %v1669
    %v3833 = vunpack.c.l.b16 %v1670
    %v3834 = vunpack.c.h.b16 %v1670
    %v3835 = vunpack.c.l.b16 %v1671
    %v3836 = vunpack.c.h.b16 %v1671
    %v3837 = vunpack.c.l.b16 %v1672
    %v3838 = vunpack.c.h.b16 %v1672
    %v3839 = vunpack.c.l.b16 %v1673
    %v3840 = vunpack.c.h.b16 %v1673
    %v3841 = vunpack.c.l.b16 %v1674
    %v3842 = vunpack.c.h.b16 %v1674
    %v3843 = vunpack.c.l.b16 %v1675
    %v3844 = vunpack.c.h.b16 %v1675
    %v3845 = vunpack.c.l.b16 %v1676
    %v3846 = vunpack.c.h.b16 %v1676
    %v3847 = vunpack.c.l.b16 %v1677
    %v3848 = vunpack.c.h.b16 %v1677
    %v3849 = vunpack.c.l.b16 %v1678
    %v3850 = vunpack.c.h.b16 %v1678
    %v3851 = vunpack.c.l.b16 %v1679
    %v3852 = vunpack.c.h.b16 %v1679
    %v3853 = vunpack.c.l.b16 %v1680
    %v3854 = vunpack.c.h.b16 %v1680
    %v3855 = vunpack.c.l.b16 %v1681
    %v3856 = vunpack.c.h.b16 %v1681
    %v3857 = vunpack.c.l.b16 %v1682
    %v3858 = vunpack.c.h.b16 %v1682
    %v3859 = vunpack.c.l.b16 %v1683
    %v3860 = vunpack.c.h.b16 %v1683
    %v3861 = vunpack.c.l.b16 %v1684
    %v3862 = vunpack.c.h.b16 %v1684
    %v3863 = vunpack.c.l.b16 %v1685
    %v3864 = vunpack.c.h.b16 %v1685
    %v3865 = vunpack.c.l.b16 %v1686
    %v3866 = vunpack.c.h.b16 %v1686
    %v3867 = vunpack.c.l.b16 %v1687
    %v3868 = vunpack.c.h.b16 %v1687
    %v3869 = vunpack.c.l.b16 %v1688
    %v3870 = vunpack.c.h.b16 %v1688
    %v3871 = vunpack.c.l.b16 %v1689
    %v3872 = vunpack.c.h.b16 %v1689
    %v3873 = vunpack.c.l.b16 %v1690
    %v3874 = vunpack.c.h.b16 %v1690
    %v3875 = vunpack.c.l.b16 %v1691
    %v3876 = vunpack.c.h.b16 %v1691
    %v3877 = vunpack.c.l.b16 %v1692
    %v3878 = vunpack.c.h.b16 %v1692
    %v3879 = vunpack.c.l.b16 %v1693
    %v3880 = vunpack.c.h.b16 %v1693
    %v3881 = vunpack.c.l.b16 %v1694
    %v3882 = vunpack.c.h.b16 %v1694
    %v3883 = vunpack.c.l.b16 %v1695
    %v3884 = vunpack.c.h.b16 %v1695
    %v3885 = vunpack.c.l.b16 %v1696
    %v3886 = vunpack.c.h.b16 %v1696
    %v3887 = vunpack.c.l.b16 %v1697
    %v3888 = vunpack.c.h.b16 %v1697
    %v3889 = vunpack.c.l.b16 %v1698
    %v3890 = vunpack.c.h.b16 %v1698
    %v3891 = vunpack.c.l.b16 %v1699
    %v3892 = vunpack.c.h.b16 %v1699
    %v3893 = vunpack.c.l.b16 %v1700
    %v3894 = vunpack.c.h.b16 %v1700
    %v3895 = vunpack.c.l.b16 %v1701
    %v3896 = vunpack.c.h.b16 %v1701
    %v3897 = vunpack.c.l.b16 %v1702
    %v3898 = vunpack.c.h.b16 %v1702
    %v3899 = vunpack.c.l.b16 %v1703
    %v3900 = vunpack.c.h.b16 %v1703
    %v3901 = vunpack.c.l.b16 %v1704
    %v3902 = vunpack.c.h.b16 %v1704
    %v3903 = vunpack.c.l.b16 %v1705
    %v3904 = vunpack.c.h.b16 %v1705
    %v3905 = vunpack.c.l.b16 %v1706
    %v3906 = vunpack.c.h.b16 %v1706
    %v3907 = vunpack.c.l.b16 %v1707
    %v3908 = vunpack.c.h.b16 %v1707
    %v3909 = vunpack.c.l.b16 %v1708
    %v3910 = vunpack.c.h.b16 %v1708
    %v3911 = vunpack.c.l.b16 %v1709
    %v3912 = vunpack.c.h.b16 %v1709
    %v3913 = vunpack.c.l.b16 %v1710
    %v3914 = vunpack.c.h.b16 %v1710
    %v3915 = vunpack.c.l.b16 %v1711
    %v3916 = vunpack.c.h.b16 %v1711
    %v3917 = vunpack.c.l.b16 %v1712
    %v3918 = vunpack.c.h.b16 %v1712
    %v3919 = vunpack.c.l.b16 %v1713
    %v3920 = vunpack.c.h.b16 %v1713
    %v3921 = vunpack.c.l.b16 %v1714
    %v3922 = vunpack.c.h.b16 %v1714
    %v3923 = vunpack.c.l.b16 %v1715
    %v3924 = vunpack.c.h.b16 %v1715
    %v3925 = vunpack.c.l.b16 %v1716
    %v3926 = vunpack.c.h.b16 %v1716
    %v3927 = vunpack.c.l.b16 %v1717
    %v3928 = vunpack.c.h.b16 %v1717
    %v3929 = vunpack.c.l.b16 %v1718
    %v3930 = vunpack.c.h.b16 %v1718
    %v3931 = vunpack.c.l.b16 %v1719
    %v3932 = vunpack.c.h.b16 %v1719
    %v3933 = vunpack.c.l.b16 %v1720
    %v3934 = vunpack.c.h.b16 %v1720
    %v3935 = vunpack.c.l.b16 %v1721
    %v3936 = vunpack.c.h.b16 %v1721
    %v3937 = vunpack.c.l.b16 %v1722
    %v3938 = vunpack.c.h.b16 %v1722
    %v3939 = vunpack.c.l.b16 %v1723
    %v3940 = vunpack.c.h.b16 %v1723
    %v3941 = vunpack.c.l.b16 %v1724
    %v3942 = vunpack.c.h.b16 %v1724
    %v3943 = vunpack.c.l.b16 %v1725
    %v3944 = vunpack.c.h.b16 %v1725
    %v3945 = vunpack.c.l.b16 %v1726
    %v3946 = vunpack.c.h.b16 %v1726
    %v3947 = vunpack.c.l.b16 %v1727
    %v3948 = vunpack.c.h.b16 %v1727
    %v3949 = vunpack.c.l.b16 %v1728
    %v3950 = vunpack.c.h.b16 %v1728
    %v3951 = vunpack.c.l.b16 %v1729
    %v3952 = vunpack.c.h.b16 %v1729
    %v3953 = vunpack.c.l.b16 %v1730
    %v3954 = vunpack.c.h.b16 %v1730
    %v3955 = vunpack.c.l.b16 %v1731
    %v3956 = vunpack.c.h.b16 %v1731
    %v3957 = vunpack.c.l.b16 %v1732
    %v3958 = vunpack.c.h.b16 %v1732
    %v3959 = vunpack.c.l.b16 %v1733
    %v3960 = vunpack.c.h.b16 %v1733
    %v3961 = vpack.c.b16 %v3713, %v3705
    %v3962 = vpack.c.b16 %v3714, %v3706
    %v3963 = vpack.c.b16 %v3715, %v3707
    %v3964 = vpack.c.b16 %v3716, %v3708
    %v3965 = vpack.c.b16 %v3717, %v3709
    %v3966 = vpack.c.b16 %v3718, %v3710
    %v3967 = vpack.c.b16 %v3719, %v3711
    %v3968 = vpack.c.b16 %v3720, %v3712
    %v3969 = vpack.c.b16 %v3729, %v3721
    %v3970 = vpack.c.b16 %v3730, %v3722
    %v3971 = vpack.c.b16 %v3731, %v3723
    %v3972 = vpack.c.b16 %v3732, %v3724
    %v3973 = vpack.c.b16 %v3733, %v3725
    %v3974 = vpack.c.b16 %v3734, %v3726
    %v3975 = vpack.c.b16 %v3735, %v3727
    %v3976 = vpack.c.b16 %v3736, %v3728
    %v3977 = vpack.c.b16 %v3745, %v3737
    %v3978 = vpack.c.b16 %v3746, %v3738
    %v3979 = vpack.c.b16 %v3747, %v3739
    %v3980 = vpack.c.b16 %v3748, %v3740
    %v3981 = vpack.c.b16 %v3749, %v3741
    %v3982 = vpack.c.b16 %v3750, %v3742
    %v3983 = vpack.c.b16 %v3751, %v3743
    %v3984 = vpack.c.b16 %v3752, %v3744
    %v3985 = vpack.c.b16 %v3761, %v3753
    %v3986 = vpack.c.b16 %v3762, %v3754
    %v3987 = vpack.c.b16 %v3763, %v3755
    %v3988 = vpack.c.b16 %v3764, %v3756
    %v3989 = vpack.c.b16 %v3765, %v3757
    %v3990 = vpack.c.b16 %v3766, %v3758
    %v3991 = vpack.c.b16 %v3767, %v3759
    %v3992 = vpack.c.b16 %v3768, %v3760
    %v3993 = vpack.c.b16 %v3777, %v3769
    %v3994 = vpack.c.b16 %v3778, %v3770
    %v3995 = vpack.c.b16 %v3779, %v3771
    %v3996 = vpack.c.b16 %v3780, %v3772
    %v3997 = vpack.c.b16 %v3781, %v3773
    %v3998 = vpack.c.b16 %v3782, %v3774
    %v3999 = vpack.c.b16 %v3783, %v3775
    %v4000 = vpack.c.b16 %v3784, %v3776
    %v4001 = vpack.c.b16 %v3793, %v3785
    %v4002 = vpack.c.b16 %v3794, %v3786
    %v4003 = vpack.c.b16 %v3795, %v3787
    %v4004 = vpack.c.b16 %v3796, %v3788
    %v4005 = vpack.c.b16 %v3797, %v3789
    %v4006 = vpack.c.b16 %v3798, %v3790
    %v4007 = vpack.c.b16 %v3799, %v3791
    %v4008 = vpack.c.b16 %v3800, %v3792
    %v4009 = vpack.c.b16 %v3809, %v3801
    %v4010 = vpack.c.b16 %v3810, %v3802
    %v4011 = vpack.c.b16 %v3811, %v3803
    %v4012 = vpack.c.b16 %v3812, %v3804
    %v4013 = vpack.c.b16 %v3813, %v3805
    %v4014 = vpack.c.b16 %v3814, %v3806
    %v4015 = vpack.c.b16 %v3815, %v3807
    %v4016 = vpack.c.b16 %v3816, %v3808
    %v4017 = vpack.c.b16 %v3825, %v3817
    %v4018 = vpack.c.b16 %v3826, %v3818
    %v4019 = vpack.c.b16 %v3827, %v3819
    %v4020 = vpack.c.b16 %v3828, %v3820
    %v4021 = vpack.c.b16 %v3829, %v3821
    %v4022 = vpack.c.b16 %v3830, %v3822
    %v4023 = vpack.c.b16 %v3831, %v3823
    %v4024 = vpack.c.b16 %v3832, %v3824
    %v4025 = vpack.c.b16 %v3841, %v3833
    %v4026 = vpack.c.b16 %v3842, %v3834
    %v4027 = vpack.c.b16 %v3843, %v3835
    %v4028 = vpack.c.b16 %v3844, %v3836
    %v4029 = vpack.c.b16 %v3845, %v3837
    %v4030 = vpack.c.b16 %v3846, %v3838
    %v4031 = vpack.c.b16 %v3847, %v3839
    %v4032 = vpack.c.b16 %v3848, %v3840
    %v4033 = vpack.c.b16 %v3857, %v3849
    %v4034 = vpack.c.b16 %v3858, %v3850
    %v4035 = vpack.c.b16 %v3859, %v3851
    %v4036 = vpack.c.b16 %v3860, %v3852
    %v4037 = vpack.c.b16 %v3861, %v3853
    %v4038 = vpack.c.b16 %v3862, %v3854
    %v4039 = vpack.c.b16 %v3863, %v3855
    %v4040 = vpack.c.b16 %v3864, %v3856
    %v4041 = vpack.c.b16 %v3873, %v3865
    %v4042 = vpack.c.b16 %v3874, %v3866
    %v4043 = vpack.c.b16 %v3875, %v3867
    %v4044 = vpack.c.b16 %v3876, %v3868
    %v4045 = vpack.c.b16 %v3877, %v3869
    %v4046 = vpack.c.b16 %v3878, %v3870
    %v4047 = vpack.c.b16 %v3879, %v3871
    %v4048 = vpack.c.b16 %v3880, %v3872
    %v4049 = vpack.c.b16 %v3889, %v3881
    %v4050 = vpack.c.b16 %v3890, %v3882
    %v4051 = vpack.c.b16 %v3891, %v3883
    %v4052 = vpack.c.b16 %v3892, %v3884
    %v4053 = vpack.c.b16 %v3893, %v3885
    %v4054 = vpack.c.b16 %v3894, %v3886
    %v4055 = vpack.c.b16 %v3895, %v3887
    %v4056 = vpack.c.b16 %v3896, %v3888
    %v4057 = vpack.c.b16 %v3905, %v3897
    %v4058 = vpack.c.b16 %v3906, %v3898
    %v4059 = vpack.c.b16 %v3907, %v3899
    %v4060 = vpack.c.b16 %v3908, %v3900
    %v4061 = vpack.c.b16 %v3909, %v3901
    %v4062 = vpack.c.b16 %v3910, %v3902
    %v4063 = vpack.c.b16 %v3911, %v3903
    %v4064 = vpack.c.b16 %v3912, %v3904
    %v4065 = vpack.c.b16 %v3921, %v3913
    %v4066 = vpack.c.b16 %v3922, %v3914
    %v4067 = vpack.c.b16 %v3923, %v3915
    %v4068 = vpack.c.b16 %v3924, %v3916
    %v4069 = vpack.c.b16 %v3925, %v3917
    %v4070 = vpack.c.b16 %v3926, %v3918
    %v4071 = vpack.c.b16 %v3927, %v3919
    %v4072 = vpack.c.b16 %v3928, %v3920
    %v4073 = vpack.c.b16 %v3937, %v3929
    %v4074 = vpack.c.b16 %v3938, %v3930
    %v4075 = vpack.c.b16 %v3939, %v3931
    %v4076 = vpack.c.b16 %v3940, %v3932
    %v4077 = vpack.c.b16 %v3941, %v3933
    %v4078 = vpack.c.b16 %v3942, %v3934
    %v4079 = vpack.c.b16 %v3943, %v3935
    %v4080 = vpack.c.b16 %v3944, %v3936
    %v4081 = vpack.c.b16 %v3953, %v3945
    %v4082 = vpack.c.b16 %v3954, %v3946
    %v4083 = vpack.c.b16 %v3955, %v3947
    %v4084 = vpack.c.b16 %v3956, %v3948
    %v4085 = vpack.c.b16 %v3957, %v3949
    %v4086 = vpack.c.b16 %v3958, %v3950
    %v4087 = vpack.c.b16 %v3959, %v3951
    %v4088 = vpack.c.b16 %v3960, %v3952
    %4217 = vmatprep.subr.bf16.mxu0 %v3962
    %4218 = vmatpush1.bf16.msra.mxu0 %v3961
    %4219 = vmatprep.subr.bf16.mxu0 %v3970
    %4220 = vmatpush1.bf16.msra.mxu0 %v3969
    %4221 = vmatprep.subr.bf16.mxu0 %v3978
    %4222 = vmatpush1.bf16.msra.mxu0 %v3977
    %4223 = vmatprep.subr.bf16.mxu0 %v3986
    %4224 = vmatpush1.bf16.msra.mxu0 %v3985
    %4225 = vmatprep.subr.bf16.mxu0 %v3994
    %4226 = vmatpush1.bf16.msra.mxu0 %v3993
    %4227 = vmatprep.subr.bf16.mxu0 %v4002
    %4228 = vmatpush1.bf16.msra.mxu0 %v4001
    %4229 = vmatprep.subr.bf16.mxu0 %v4010
    %4230 = vmatpush1.bf16.msra.mxu0 %v4009
    %4231 = vmatprep.subr.bf16.mxu0 %v4018
    %4232 = vmatpush1.bf16.msra.mxu0 %v4017
    %4233 = vmatprep.subr.bf16.mxu0 %v4026
    %4234 = vmatpush1.bf16.msra.mxu0 %v4025
    %4235 = vmatprep.subr.bf16.mxu0 %v4034
    %4236 = vmatpush1.bf16.msra.mxu0 %v4033
    %4237 = vmatprep.subr.bf16.mxu0 %v4042
    %4238 = vmatpush1.bf16.msra.mxu0 %v4041
    %4239 = vmatprep.subr.bf16.mxu0 %v4050
    %4240 = vmatpush1.bf16.msra.mxu0 %v4049
    %4241 = vmatprep.subr.bf16.mxu0 %v4058
    %4242 = vmatpush1.bf16.msra.mxu0 %v4057
    %4243 = vmatprep.subr.bf16.mxu0 %v4066
    %4244 = vmatpush1.bf16.msra.mxu0 %v4065
    %4245 = vmatprep.subr.bf16.mxu0 %v4074
    %4246 = vmatpush1.bf16.msra.mxu0 %v4073
    %4247 = vmatprep.subr.bf16.mxu0 %v4082
    %4248 = vmatpush1.bf16.msra.mxu0 %v4081
    %4249 = vmatprep.mubr.bf16.mxu0 %v2772
    %4250 = vmatmul.mubr.bf16.gmra.mrb[0].mxu0 %v2771
    %v4251 = vpop.f32.mrb[0].mxu0
    %v4252 = vadd.f32 %v3448, %v4251
    %v4253 = vpop.f32.mrb[0].mxu0
    %v4254 = vadd.f32 %v3450, %v4253
    %v4255 = vpop.f32.mrb[0].mxu0
    %v4256 = vpop.f32.mrb[0].mxu0
    %4257 = vdwg.mxu0
    %4258 = vmatprep.subr.bf16.mxu0 %v3964
    %4259 = vmatpush1.bf16.msra.mxu0 %v3963
    %4260 = vmatprep.subr.bf16.mxu0 %v3972
    %4261 = vmatpush1.bf16.msra.mxu0 %v3971
    %4262 = vmatprep.subr.bf16.mxu0 %v3980
    %4263 = vmatpush1.bf16.msra.mxu0 %v3979
    %4264 = vmatprep.subr.bf16.mxu0 %v3988
    %4265 = vmatpush1.bf16.msra.mxu0 %v3987
    %4266 = vmatprep.subr.bf16.mxu0 %v3996
    %4267 = vmatpush1.bf16.msra.mxu0 %v3995
    %4268 = vmatprep.subr.bf16.mxu0 %v4004
    %4269 = vmatpush1.bf16.msra.mxu0 %v4003
    %4270 = vmatprep.subr.bf16.mxu0 %v4012
    %4271 = vmatpush1.bf16.msra.mxu0 %v4011
    %4272 = vmatprep.subr.bf16.mxu0 %v4020
    %4273 = vmatpush1.bf16.msra.mxu0 %v4019
    %4274 = vmatprep.subr.bf16.mxu0 %v4028
    %4275 = vmatpush1.bf16.msra.mxu0 %v4027
    %4276 = vmatprep.subr.bf16.mxu0 %v4036
    %4277 = vmatpush1.bf16.msra.mxu0 %v4035
    %4278 = vmatprep.subr.bf16.mxu0 %v4044
    %4279 = vmatpush1.bf16.msra.mxu0 %v4043
    %4280 = vmatprep.subr.bf16.mxu0 %v4052
    %4281 = vmatpush1.bf16.msra.mxu0 %v4051
    %4282 = vmatprep.subr.bf16.mxu0 %v4060
    %4283 = vmatpush1.bf16.msra.mxu0 %v4059
    %4284 = vmatprep.subr.bf16.mxu0 %v4068
    %4285 = vmatpush1.bf16.msra.mxu0 %v4067
    %4286 = vmatprep.subr.bf16.mxu0 %v4076
    %4287 = vmatpush1.bf16.msra.mxu0 %v4075
    %4288 = vmatprep.subr.bf16.mxu0 %v4084
    %4289 = vmatpush1.bf16.msra.mxu0 %v4083
    %4290 = vmatprep.mubr.bf16.mxu0 %v2772
    %4291 = vmatmul.mubr.bf16.gmra.mrb[0].mxu0 %v2771
    %v4292 = vpop.f32.mrb[0].mxu0
    %v4293 = vadd.f32 %v3489, %v4292
    %v4294 = vpop.f32.mrb[0].mxu0
    %v4295 = vadd.f32 %v3491, %v4294
    %v4296 = vpop.f32.mrb[0].mxu0
    %v4297 = vpop.f32.mrb[0].mxu0
    %4298 = vdwg.mxu0
    %4299 = vmatprep.subr.bf16.mxu0 %v3966
    %4300 = vmatpush1.bf16.msra.mxu0 %v3965
    %4301 = vmatprep.subr.bf16.mxu0 %v3974
    %4302 = vmatpush1.bf16.msra.mxu0 %v3973
    %4303 = vmatprep.subr.bf16.mxu0 %v3982
    %4304 = vmatpush1.bf16.msra.mxu0 %v3981
    %4305 = vmatprep.subr.bf16.mxu0 %v3990
    %4306 = vmatpush1.bf16.msra.mxu0 %v3989
    %4307 = vmatprep.subr.bf16.mxu0 %v3998
    %4308 = vmatpush1.bf16.msra.mxu0 %v3997
    %4309 = vmatprep.subr.bf16.mxu0 %v4006
    %4310 = vmatpush1.bf16.msra.mxu0 %v4005
    %4311 = vmatprep.subr.bf16.mxu0 %v4014
    %4312 = vmatpush1.bf16.msra.mxu0 %v4013
    %4313 = vmatprep.subr.bf16.mxu0 %v4022
    %4314 = vmatpush1.bf16.msra.mxu0 %v4021
    %4315 = vmatprep.subr.bf16.mxu0 %v4030
    %4316 = vmatpush1.bf16.msra.mxu0 %v4029
    %4317 = vmatprep.subr.bf16.mxu0 %v4038
    %4318 = vmatpush1.bf16.msra.mxu0 %v4037
    %4319 = vmatprep.subr.bf16.mxu0 %v4046
    %4320 = vmatpush1.bf16.msra.mxu0 %v4045
    %4321 = vmatprep.subr.bf16.mxu0 %v4054
    %4322 = vmatpush1.bf16.msra.mxu0 %v4053
    %4323 = vmatprep.subr.bf16.mxu0 %v4062
    %4324 = vmatpush1.bf16.msra.mxu0 %v4061
    %4325 = vmatprep.subr.bf16.mxu0 %v4070
    %4326 = vmatpush1.bf16.msra.mxu0 %v4069
    %4327 = vmatprep.subr.bf16.mxu0 %v4078
    %4328 = vmatpush1.bf16.msra.mxu0 %v4077
    %4329 = vmatprep.subr.bf16.mxu0 %v4086
    %4330 = vmatpush1.bf16.msra.mxu0 %v4085
    %4331 = vmatprep.mubr.bf16.mxu0 %v2772
    %4332 = vmatmul.mubr.bf16.gmra.mrb[0].mxu0 %v2771
    %v4333 = vpop.f32.mrb[0].mxu0
    %v4334 = vadd.f32 %v3530, %v4333
    %v4335 = vpop.f32.mrb[0].mxu0
    %v4336 = vadd.f32 %v3532, %v4335
    %v4337 = vpop.f32.mrb[0].mxu0
    %v4338 = vpop.f32.mrb[0].mxu0
    %4339 = vdwg.mxu0
    %4340 = vmatprep.subr.bf16.mxu0 %v3968
    %4341 = vmatpush1.bf16.msra.mxu0 %v3967
    %4342 = vmatprep.subr.bf16.mxu0 %v3976
    %4343 = vmatpush1.bf16.msra.mxu0 %v3975
    %4344 = vmatprep.subr.bf16.mxu0 %v3984
    %4345 = vmatpush1.bf16.msra.mxu0 %v3983
    %4346 = vmatprep.subr.bf16.mxu0 %v3992
    %4347 = vmatpush1.bf16.msra.mxu0 %v3991
    %4348 = vmatprep.subr.bf16.mxu0 %v4000
    %4349 = vmatpush1.bf16.msra.mxu0 %v3999
    %4350 = vmatprep.subr.bf16.mxu0 %v4008
    %4351 = vmatpush1.bf16.msra.mxu0 %v4007
    %4352 = vmatprep.subr.bf16.mxu0 %v4016
    %4353 = vmatpush1.bf16.msra.mxu0 %v4015
    %4354 = vmatprep.subr.bf16.mxu0 %v4024
    %4355 = vmatpush1.bf16.msra.mxu0 %v4023
    %4356 = vmatprep.subr.bf16.mxu0 %v4032
    %4357 = vmatpush1.bf16.msra.mxu0 %v4031
    %4358 = vmatprep.subr.bf16.mxu0 %v4040
    %4359 = vmatpush1.bf16.msra.mxu0 %v4039
    %4360 = vmatprep.subr.bf16.mxu0 %v4048
    %4361 = vmatpush1.bf16.msra.mxu0 %v4047
    %4362 = vmatprep.subr.bf16.mxu0 %v4056
    %4363 = vmatpush1.bf16.msra.mxu0 %v4055
    %4364 = vmatprep.subr.bf16.mxu0 %v4064
    %4365 = vmatpush1.bf16.msra.mxu0 %v4063
    %4366 = vmatprep.subr.bf16.mxu0 %v4072
    %4367 = vmatpush1.bf16.msra.mxu0 %v4071
    %4368 = vmatprep.subr.bf16.mxu0 %v4080
    %4369 = vmatpush1.bf16.msra.mxu0 %v4079
    %4370 = vmatprep.subr.bf16.mxu0 %v4088
    %4371 = vmatpush1.bf16.msra.mxu0 %v4087
    %4372 = vmatprep.mubr.bf16.mxu0 %v2772
    %4373 = vmatmul.mubr.bf16.gmra.mrb[0].mxu0 %v2771
    %v4374 = vpop.f32.mrb[0].mxu0
    %v4375 = vadd.f32 %v3571, %v4374
    %v4376 = vpop.f32.mrb[0].mxu0
    %v4377 = vadd.f32 %v3573, %v4376
    %v4378 = vpop.f32.mrb[0].mxu0
    %v4379 = vpop.f32.mrb[0].mxu0
    %4380 = vdwg.mxu0
    %v4381 = vadd.f32 %v4252, %v1866
    %v4382 = vadd.f32 %v4254, %v1870
    %v4383 = vadd.f32 %v4293, %v1874
    %v4384 = vadd.f32 %v4295, %v1878
    %v4385 = vadd.f32 %v4334, %v1882
    %v4386 = vadd.f32 %v4336, %v1886
    %v4387 = vadd.f32 %v4375, %v1890
    %v4388 = vadd.f32 %v4377, %v1894
    %v4389 = vxor.u32 %v4381, 2147483648
    %v4390 = vxor.u32 %v4382, 2147483648
    %v4391 = vmul.f32 %v4389, 1.442695
    %v4392 = vpow.pop %v4391
    %v4393 = vmul.f32 %v4390, 1.442695
    %v4394 = vpow.pop %v4393
    %v4395 = vadd.f32 %v4392, 1.0
    %v4396 = vadd.f32 %v4394, 1.0
    %v4397 = vrcp.pop %v4395
    %v4398 = vmul.f32 1.0, %v4397
    %v4399 = vrcp.pop %v4396
    %v4400 = vmul.f32 1.0, %v4399
    %v4401 = vxor.u32 %v4383, 2147483648
    %v4402 = vxor.u32 %v4384, 2147483648
    %v4403 = vmul.f32 %v4401, 1.442695
    %v4404 = vpow.pop %v4403
    %v4405 = vmul.f32 %v4402, 1.442695
    %v4406 = vpow.pop %v4405
    %v4407 = vadd.f32 %v4404, 1.0
    %v4408 = vadd.f32 %v4406, 1.0
    %v4409 = vrcp.pop %v4407
    %v4410 = vmul.f32 1.0, %v4409
    %v4411 = vrcp.pop %v4408
    %v4412 = vmul.f32 1.0, %v4411
    %v4413 = vtanh.pop %v4385
    %v4414 = vtanh.pop %v4386
    %v4415 = vxor.u32 %v4387, 2147483648
    %v4416 = vxor.u32 %v4388, 2147483648
    %v4417 = vmul.f32 %v4415, 1.442695
    %v4418 = vpow.pop %v4417
    %v4419 = vmul.f32 %v4416, 1.442695
    %v4420 = vpow.pop %v4419
    %v4421 = vadd.f32 %v4418, 1.0
    %v4422 = vadd.f32 %v4420, 1.0
    %v4423 = vrcp.pop %v4421
    %v4424 = vmul.f32 1.0, %v4423
    %v4425 = vrcp.pop %v4422
    %v4426 = vmul.f32 1.0, %v4425
    %v4427 = vmul.f32 %v4410, 0.0
    %v4428 = vmul.f32 %v4412, 0.0
    %v4429 = vmul.f32 %v4398, %v4413
    %v4430 = vmul.f32 %v4400, %v4414
    %v4431 = vadd.f32 %v4427, %v4429
    %v4432 = vadd.f32 %v4428, %v4430
    %v4433 = vtanh.pop %v4431
    %v4434 = vtanh.pop %v4432
    %v4435 = vmul.f32 %v4424, %v4433
    %v4436 = vmul.f32 %v4426, %v4434
    %4437 = vst [vmem:[#allocation3] sm:$0xff] %v4435
    %4438 = vst [vmem:[#allocation3 + $0x8] sm:$0xff] %v4436
    %v4439 = vld [vmem:[#allocation2 + $0x40] sm:$0xff]
    %v4440 = vld [vmem:[#allocation2 + $0x48] sm:$0xff]
    %v4441 = vld [vmem:[#allocation2 + $0x50] sm:$0xff]
    %v4442 = vld [vmem:[#allocation2 + $0x58] sm:$0xff]
    %v4443 = vld [vmem:[#allocation2 + $0x60] sm:$0xff]
    %v4444 = vld [vmem:[#allocation2 + $0x68] sm:$0xff]
    %v4445 = vld [vmem:[#allocation2 + $0x70] sm:$0xff]
    %v4446 = vld [vmem:[#allocation2 + $0x78] sm:$0xff]
    %4447 = vmatprep.subr.bf16.mxu0 %v2296
    %4448 = vmatpush1.bf16.msra.mxu0 %v2295
    %4449 = vmatprep.subr.bf16.mxu0 %v2304
    %4450 = vmatpush1.bf16.msra.mxu0 %v2303
    %4451 = vmatprep.subr.bf16.mxu0 %v2312
    %4452 = vmatpush1.bf16.msra.mxu0 %v2311
    %4453 = vmatprep.subr.bf16.mxu0 %v2320
    %4454 = vmatpush1.bf16.msra.mxu0 %v2319
    %4455 = vmatprep.subr.bf16.mxu0 %v2328
    %4456 = vmatpush1.bf16.msra.mxu0 %v2327
    %4457 = vmatprep.subr.bf16.mxu0 %v2336
    %4458 = vmatpush1.bf16.msra.mxu0 %v2335
    %4459 = vmatprep.subr.bf16.mxu0 %v2344
    %4460 = vmatpush1.bf16.msra.mxu0 %v2343
    %4461 = vmatprep.subr.bf16.mxu0 %v2352
    %4462 = vmatpush1.bf16.msra.mxu0 %v2351
    %4463 = vmatprep.subr.bf16.mxu0 %v2360
    %4464 = vmatpush1.bf16.msra.mxu0 %v2359
    %4465 = vmatprep.subr.bf16.mxu0 %v2368
    %4466 = vmatpush1.bf16.msra.mxu0 %v2367
    %4467 = vmatprep.subr.bf16.mxu0 %v2376
    %4468 = vmatpush1.bf16.msra.mxu0 %v2375
    %4469 = vmatprep.subr.bf16.mxu0 %v2384
    %4470 = vmatpush1.bf16.msra.mxu0 %v2383
    %4471 = vmatprep.subr.bf16.mxu0 %v2392
    %4472 = vmatpush1.bf16.msra.mxu0 %v2391
    %4473 = vmatprep.subr.bf16.mxu0 %v2400
    %4474 = vmatpush1.bf16.msra.mxu0 %v2399
    %4475 = vmatprep.subr.bf16.mxu0 %v2408
    %4476 = vmatpush1.bf16.msra.mxu0 %v2407
    %4477 = vmatprep.subr.bf16.mxu0 %v2416
    %4478 = vmatpush1.bf16.msra.mxu0 %v2415
    %4479 = vmatprep.mubr.bf16.mxu0 %v2772
    %4480 = vmatmul.mubr.bf16.gmra.mrb[0].mxu0 %v2771
    %v4481 = vpop.f32.mrb[0].mxu0
    %v4482 = vadd.f32 0.0, %v4481
    %v4483 = vpop.f32.mrb[0].mxu0
    %v4484 = vadd.f32 0.0, %v4483
    %v4485 = vpop.f32.mrb[0].mxu0
    %v4486 = vpop.f32.mrb[0].mxu0
    %4487 = vdwg.mxu0
    %4488 = vmatprep.subr.bf16.mxu0 %v2298
    %4489 = vmatpush1.bf16.msra.mxu0 %v2297
    %4490 = vmatprep.subr.bf16.mxu0 %v2306
    %4491 = vmatpush1.bf16.msra.mxu0 %v2305
    %4492 = vmatprep.subr.bf16.mxu0 %v2314
    %4493 = vmatpush1.bf16.msra.mxu0 %v2313
    %4494 = vmatprep.subr.bf16.mxu0 %v2322
    %4495 = vmatpush1.bf16.msra.mxu0 %v2321
    %4496 = vmatprep.subr.bf16.mxu0 %v2330
    %4497 = vmatpush1.bf16.msra.mxu0 %v2329
    %4498 = vmatprep.subr.bf16.mxu0 %v2338
    %4499 = vmatpush1.bf16.msra.mxu0 %v2337
    %4500 = vmatprep.subr.bf16.mxu0 %v2346
    %4501 = vmatpush1.bf16.msra.mxu0 %v2345
    %4502 = vmatprep.subr.bf16.mxu0 %v2354
    %4503 = vmatpush1.bf16.msra.mxu0 %v2353
    %4504 = vmatprep.subr.bf16.mxu0 %v2362
    %4505 = vmatpush1.bf16.msra.mxu0 %v2361
    %4506 = vmatprep.subr.bf16.mxu0 %v2370
    %4507 = vmatpush1.bf16.msra.mxu0 %v2369
    %4508 = vmatprep.subr.bf16.mxu0 %v2378
    %4509 = vmatpush1.bf16.msra.mxu0 %v2377
    %4510 = vmatprep.subr.bf16.mxu0 %v2386
    %4511 = vmatpush1.bf16.msra.mxu0 %v2385
    %4512 = vmatprep.subr.bf16.mxu0 %v2394
    %4513 = vmatpush1.bf16.msra.mxu0 %v2393
    %4514 = vmatprep.subr.bf16.mxu0 %v2402
    %4515 = vmatpush1.bf16.msra.mxu0 %v2401
    %4516 = vmatprep.subr.bf16.mxu0 %v2410
    %4517 = vmatpush1.bf16.msra.mxu0 %v2409
    %4518 = vmatprep.subr.bf16.mxu0 %v2418
    %4519 = vmatpush1.bf16.msra.mxu0 %v2417
    %4520 = vmatprep.mubr.bf16.mxu0 %v2772
    %4521 = vmatmul.mubr.bf16.gmra.mrb[0].mxu0 %v2771
    %v4522 = vpop.f32.mrb[0].mxu0
    %v4523 = vadd.f32 0.0, %v4522
    %v4524 = vpop.f32.mrb[0].mxu0
    %v4525 = vadd.f32 0.0, %v4524
    %v4526 = vpop.f32.mrb[0].mxu0
    %v4527 = vpop.f32.mrb[0].mxu0
    %4528 = vdwg.mxu0
    %4529 = vmatprep.subr.bf16.mxu0 %v2300
    %4530 = vmatpush1.bf16.msra.mxu0 %v2299
    %4531 = vmatprep.subr.bf16.mxu0 %v2308
    %4532 = vmatpush1.bf16.msra.mxu0 %v2307
    %4533 = vmatprep.subr.bf16.mxu0 %v2316
    %4534 = vmatpush1.bf16.msra.mxu0 %v2315
    %4535 = vmatprep.subr.bf16.mxu0 %v2324
    %4536 = vmatpush1.bf16.msra.mxu0 %v2323
    %4537 = vmatprep.subr.bf16.mxu0 %v2332
    %4538 = vmatpush1.bf16.msra.mxu0 %v2331
    %4539 = vmatprep.subr.bf16.mxu0 %v2340
    %4540 = vmatpush1.bf16.msra.mxu0 %v2339
    %4541 = vmatprep.subr.bf16.mxu0 %v2348
    %4542 = vmatpush1.bf16.msra.mxu0 %v2347
    %4543 = vmatprep.subr.bf16.mxu0 %v2356
    %4544 = vmatpush1.bf16.msra.mxu0 %v2355
    %4545 = vmatprep.subr.bf16.mxu0 %v2364
    %4546 = vmatpush1.bf16.msra.mxu0 %v2363
    %4547 = vmatprep.subr.bf16.mxu0 %v2372
    %4548 = vmatpush1.bf16.msra.mxu0 %v2371
    %4549 = vmatprep.subr.bf16.mxu0 %v2380
    %4550 = vmatpush1.bf16.msra.mxu0 %v2379
    %4551 = vmatprep.subr.bf16.mxu0 %v2388
    %4552 = vmatpush1.bf16.msra.mxu0 %v2387
    %4553 = vmatprep.subr.bf16.mxu0 %v2396
    %4554 = vmatpush1.bf16.msra.mxu0 %v2395
    %4555 = vmatprep.subr.bf16.mxu0 %v2404
    %4556 = vmatpush1.bf16.msra.mxu0 %v2403
    %4557 = vmatprep.subr.bf16.mxu0 %v2412
    %4558 = vmatpush1.bf16.msra.mxu0 %v2411
    %4559 = vmatprep.subr.bf16.mxu0 %v2420
    %4560 = vmatpush1.bf16.msra.mxu0 %v2419
    %4561 = vmatprep.mubr.bf16.mxu0 %v2772
    %4562 = vmatmul.mubr.bf16.gmra.mrb[0].mxu0 %v2771
    %v4563 = vpop.f32.mrb[0].mxu0
    %v4564 = vadd.f32 0.0, %v4563
    %v4565 = vpop.f32.mrb[0].mxu0
    %v4566 = vadd.f32 0.0, %v4565
    %v4567 = vpop.f32.mrb[0].mxu0
    %v4568 = vpop.f32.mrb[0].mxu0
    %4569 = vdwg.mxu0
    %4570 = vmatprep.subr.bf16.mxu0 %v2302
    %4571 = vmatpush1.bf16.msra.mxu0 %v2301
    %4572 = vmatprep.subr.bf16.mxu0 %v2310
    %4573 = vmatpush1.bf16.msra.mxu0 %v2309
    %4574 = vmatprep.subr.bf16.mxu0 %v2318
    %4575 = vmatpush1.bf16.msra.mxu0 %v2317
    %4576 = vmatprep.subr.bf16.mxu0 %v2326
    %4577 = vmatpush1.bf16.msra.mxu0 %v2325
    %4578 = vmatprep.subr.bf16.mxu0 %v2334
    %4579 = vmatpush1.bf16.msra.mxu0 %v2333
    %4580 = vmatprep.subr.bf16.mxu0 %v2342
    %4581 = vmatpush1.bf16.msra.mxu0 %v2341
    %4582 = vmatprep.subr.bf16.mxu0 %v2350
    %4583 = vmatpush1.bf16.msra.mxu0 %v2349
    %4584 = vmatprep.subr.bf16.mxu0 %v2358
    %4585 = vmatpush1.bf16.msra.mxu0 %v2357
    %4586 = vmatprep.subr.bf16.mxu0 %v2366
    %4587 = vmatpush1.bf16.msra.mxu0 %v2365
    %4588 = vmatprep.subr.bf16.mxu0 %v2374
    %4589 = vmatpush1.bf16.msra.mxu0 %v2373
    %4590 = vmatprep.subr.bf16.mxu0 %v2382
    %4591 = vmatpush1.bf16.msra.mxu0 %v2381
    %4592 = vmatprep.subr.bf16.mxu0 %v2390
    %4593 = vmatpush1.bf16.msra.mxu0 %v2389
    %4594 = vmatprep.subr.bf16.mxu0 %v2398
    %4595 = vmatpush1.bf16.msra.mxu0 %v2397
    %4596 = vmatprep.subr.bf16.mxu0 %v2406
    %4597 = vmatpush1.bf16.msra.mxu0 %v2405
    %4598 = vmatprep.subr.bf16.mxu0 %v2414
    %4599 = vmatpush1.bf16.msra.mxu0 %v2413
    %4600 = vmatprep.subr.bf16.mxu0 %v2422
    %4601 = vmatpush1.bf16.msra.mxu0 %v2421
    %4602 = vmatprep.mubr.bf16.mxu0 %v2772
    %4603 = vmatmul.mubr.bf16.gmra.mrb[0].mxu0 %v2771
    %v4604 = vpop.f32.mrb[0].mxu0
    %v4605 = vadd.f32 0.0, %v4604
    %v4606 = vpop.f32.mrb[0].mxu0
    %v4607 = vadd.f32 0.0, %v4606
    %v4608 = vpop.f32.mrb[0].mxu0
    %v4609 = vpop.f32.mrb[0].mxu0
    %4610 = vdwg.mxu0
    %v4611 = vadd.f32 %v4439, %v4482
    %v4612 = vadd.f32 %v4440, %v4484
    %v4613 = vadd.f32 %v4441, %v4523
    %v4614 = vadd.f32 %v4442, %v4525
    %v4615 = vadd.f32 %v4443, %v4564
    %v4616 = vadd.f32 %v4444, %v4566
    %v4617 = vadd.f32 %v4445, %v4605
    %v4618 = vadd.f32 %v4446, %v4607
    %v4619 = vxor.u32 %v4611, 2147483648
    %v4620 = vxor.u32 %v4612, 2147483648
    %v4621 = vmul.f32 %v4619, 1.442695
    %v4622 = vpow.pop %v4621
    %v4623 = vmul.f32 %v4620, 1.442695
    %v4624 = vpow.pop %v4623
    %v4625 = vadd.f32 %v4622, 1.0
    %v4626 = vadd.f32 %v4624, 1.0
    %v4627 = vrcp.pop %v4625
    %v4628 = vmul.f32 1.0, %v4627
    %v4629 = vrcp.pop %v4626
    %v4630 = vmul.f32 1.0, %v4629
    %v4631 = vxor.u32 %v4613, 2147483648
    %v4632 = vxor.u32 %v4614, 2147483648
    %v4633 = vmul.f32 %v4631, 1.442695
    %v4634 = vpow.pop %v4633
    %v4635 = vmul.f32 %v4632, 1.442695
    %v4636 = vpow.pop %v4635
    %v4637 = vadd.f32 %v4634, 1.0
    %v4638 = vadd.f32 %v4636, 1.0
    %v4639 = vrcp.pop %v4637
    %v4640 = vmul.f32 1.0, %v4639
    %v4641 = vrcp.pop %v4638
    %v4642 = vmul.f32 1.0, %v4641
    %v4643 = vtanh.pop %v4615
    %v4644 = vtanh.pop %v4616
    %v4645 = vxor.u32 %v4617, 2147483648
    %v4646 = vxor.u32 %v4618, 2147483648
    %v4647 = vmul.f32 %v4645, 1.442695
    %v4648 = vpow.pop %v4647
    %v4649 = vmul.f32 %v4646, 1.442695
    %v4650 = vpow.pop %v4649
    %v4651 = vadd.f32 %v4648, 1.0
    %v4652 = vadd.f32 %v4650, 1.0
    %v4653 = vrcp.pop %v4651
    %v4654 = vmul.f32 1.0, %v4653
    %v4655 = vrcp.pop %v4652
    %v4656 = vmul.f32 1.0, %v4655
    %v4657 = vmul.f32 %v4640, %v2765
    %v4658 = vmul.f32 %v4642, %v2766
    %v4659 = vmul.f32 %v4628, %v4643
    %v4660 = vmul.f32 %v4630, %v4644
    %v4661 = vadd.f32 %v4657, %v4659
    %v4662 = vadd.f32 %v4658, %v4660
    %v4663 = vtanh.pop %v4661
    %v4664 = vtanh.pop %v4662
    %v4665 = vmul.f32 %v4654, %v4663
    %v4666 = vmul.f32 %v4656, %v4664
    %v4667 = vpack.c.bf16 %v4665, %v4665
    %v4668 = vpack.c.bf16 %v4666, %v4666
    %v4669 = vpack.c.bf16 %v4435, %v4435
    %v4670 = vpack.c.bf16 %v4436, %v4436
    %4671 = vmatprep.subr.bf16.mxu0 %v3158
    %4672 = vmatpush1.bf16.msra.mxu0 %v3157
    %4673 = vmatprep.subr.bf16.mxu0 %v3166
    %4674 = vmatpush1.bf16.msra.mxu0 %v3165
    %4675 = vmatprep.subr.bf16.mxu0 %v3174
    %4676 = vmatpush1.bf16.msra.mxu0 %v3173
    %4677 = vmatprep.subr.bf16.mxu0 %v3182
    %4678 = vmatpush1.bf16.msra.mxu0 %v3181
    %4679 = vmatprep.subr.bf16.mxu0 %v3190
    %4680 = vmatpush1.bf16.msra.mxu0 %v3189
    %4681 = vmatprep.subr.bf16.mxu0 %v3198
    %4682 = vmatpush1.bf16.msra.mxu0 %v3197
    %4683 = vmatprep.subr.bf16.mxu0 %v3206
    %4684 = vmatpush1.bf16.msra.mxu0 %v3205
    %4685 = vmatprep.subr.bf16.mxu0 %v3214
    %4686 = vmatpush1.bf16.msra.mxu0 %v3213
    %4687 = vmatprep.subr.bf16.mxu0 %v3222
    %4688 = vmatpush1.bf16.msra.mxu0 %v3221
    %4689 = vmatprep.subr.bf16.mxu0 %v3230
    %4690 = vmatpush1.bf16.msra.mxu0 %v3229
    %4691 = vmatprep.subr.bf16.mxu0 %v3238
    %4692 = vmatpush1.bf16.msra.mxu0 %v3237
    %4693 = vmatprep.subr.bf16.mxu0 %v3246
    %4694 = vmatpush1.bf16.msra.mxu0 %v3245
    %4695 = vmatprep.subr.bf16.mxu0 %v3254
    %4696 = vmatpush1.bf16.msra.mxu0 %v3253
    %4697 = vmatprep.subr.bf16.mxu0 %v3262
    %4698 = vmatpush1.bf16.msra.mxu0 %v3261
    %4699 = vmatprep.subr.bf16.mxu0 %v3270
    %4700 = vmatpush1.bf16.msra.mxu0 %v3269
    %4701 = vmatprep.subr.bf16.mxu0 %v3278
    %4702 = vmatpush1.bf16.msra.mxu0 %v3277
    %4703 = vmatprep.mubr.bf16.mxu0 %v4670
    %4704 = vmatmul.mubr.bf16.gmra.mrb[0].mxu0 %v4669
    %v4705 = vpop.f32.mrb[0].mxu0
    %v4706 = vadd.f32 0.0, %v4705
    %v4707 = vpop.f32.mrb[0].mxu0
    %v4708 = vadd.f32 0.0, %v4707
    %v4709 = vpop.f32.mrb[0].mxu0
    %v4710 = vpop.f32.mrb[0].mxu0
    %4711 = vdwg.mxu0
    %4712 = vmatprep.subr.bf16.mxu0 %v3160
    %4713 = vmatpush1.bf16.msra.mxu0 %v3159
    %4714 = vmatprep.subr.bf16.mxu0 %v3168
    %4715 = vmatpush1.bf16.msra.mxu0 %v3167
    %4716 = vmatprep.subr.bf16.mxu0 %v3176
    %4717 = vmatpush1.bf16.msra.mxu0 %v3175
    %4718 = vmatprep.subr.bf16.mxu0 %v3184
    %4719 = vmatpush1.bf16.msra.mxu0 %v3183
    %4720 = vmatprep.subr.bf16.mxu0 %v3192
    %4721 = vmatpush1.bf16.msra.mxu0 %v3191
    %4722 = vmatprep.subr.bf16.mxu0 %v3200
    %4723 = vmatpush1.bf16.msra.mxu0 %v3199
    %4724 = vmatprep.subr.bf16.mxu0 %v3208
    %4725 = vmatpush1.bf16.msra.mxu0 %v3207
    %4726 = vmatprep.subr.bf16.mxu0 %v3216
    %4727 = vmatpush1.bf16.msra.mxu0 %v3215
    %4728 = vmatprep.subr.bf16.mxu0 %v3224
    %4729 = vmatpush1.bf16.msra.mxu0 %v3223
    %4730 = vmatprep.subr.bf16.mxu0 %v3232
    %4731 = vmatpush1.bf16.msra.mxu0 %v3231
    %4732 = vmatprep.subr.bf16.mxu0 %v3240
    %4733 = vmatpush1.bf16.msra.mxu0 %v3239
    %4734 = vmatprep.subr.bf16.mxu0 %v3248
    %4735 = vmatpush1.bf16.msra.mxu0 %v3247
    %4736 = vmatprep.subr.bf16.mxu0 %v3256
    %4737 = vmatpush1.bf16.msra.mxu0 %v3255
    %4738 = vmatprep.subr.bf16.mxu0 %v3264
    %4739 = vmatpush1.bf16.msra.mxu0 %v3263
    %4740 = vmatprep.subr.bf16.mxu0 %v3272
    %4741 = vmatpush1.bf16.msra.mxu0 %v3271
    %4742 = vmatprep.subr.bf16.mxu0 %v3280
    %4743 = vmatpush1.bf16.msra.mxu0 %v3279
    %4744 = vmatprep.mubr.bf16.mxu0 %v4670
    %4745 = vmatmul.mubr.bf16.gmra.mrb[0].mxu0 %v4669
    %v4746 = vpop.f32.mrb[0].mxu0
    %v4747 = vadd.f32 0.0, %v4746
    %v4748 = vpop.f32.mrb[0].mxu0
    %v4749 = vadd.f32 0.0, %v4748
    %v4750 = vpop.f32.mrb[0].mxu0
    %v4751 = vpop.f32.mrb[0].mxu0
    %4752 = vdwg.mxu0
    %4753 = vmatprep.subr.bf16.mxu0 %v3162
    %4754 = vmatpush1.bf16.msra.mxu0 %v3161
    %4755 = vmatprep.subr.bf16.mxu0 %v3170
    %4756 = vmatpush1.bf16.msra.mxu0 %v3169
    %4757 = vmatprep.subr.bf16.mxu0 %v3178
    %4758 = vmatpush1.bf16.msra.mxu0 %v3177
    %4759 = vmatprep.subr.bf16.mxu0 %v3186
    %4760 = vmatpush1.bf16.msra.mxu0 %v3185
    %4761 = vmatprep.subr.bf16.mxu0 %v3194
    %4762 = vmatpush1.bf16.msra.mxu0 %v3193
    %4763 = vmatprep.subr.bf16.mxu0 %v3202
    %4764 = vmatpush1.bf16.msra.mxu0 %v3201
    %4765 = vmatprep.subr.bf16.mxu0 %v3210
    %4766 = vmatpush1.bf16.msra.mxu0 %v3209
    %4767 = vmatprep.subr.bf16.mxu0 %v3218
    %4768 = vmatpush1.bf16.msra.mxu0 %v3217
    %4769 = vmatprep.subr.bf16.mxu0 %v3226
    %4770 = vmatpush1.bf16.msra.mxu0 %v3225
    %4771 = vmatprep.subr.bf16.mxu0 %v3234
    %4772 = vmatpush1.bf16.msra.mxu0 %v3233
    %4773 = vmatprep.subr.bf16.mxu0 %v3242
    %4774 = vmatpush1.bf16.msra.mxu0 %v3241
    %4775 = vmatprep.subr.bf16.mxu0 %v3250
    %4776 = vmatpush1.bf16.msra.mxu0 %v3249
    %4777 = vmatprep.subr.bf16.mxu0 %v3258
    %4778 = vmatpush1.bf16.msra.mxu0 %v3257
    %4779 = vmatprep.subr.bf16.mxu0 %v3266
    %4780 = vmatpush1.bf16.msra.mxu0 %v3265
    %4781 = vmatprep.subr.bf16.mxu0 %v3274
    %4782 = vmatpush1.bf16.msra.mxu0 %v3273
    %4783 = vmatprep.subr.bf16.mxu0 %v3282
    %4784 = vmatpush1.bf16.msra.mxu0 %v3281
    %4785 = vmatprep.mubr.bf16.mxu0 %v4670
    %4786 = vmatmul.mubr.bf16.gmra.mrb[0].mxu0 %v4669
    %v4787 = vpop.f32.mrb[0].mxu0
    %v4788 = vadd.f32 0.0, %v4787
    %v4789 = vpop.f32.mrb[0].mxu0
    %v4790 = vadd.f32 0.0, %v4789
    %v4791 = vpop.f32.mrb[0].mxu0
    %v4792 = vpop.f32.mrb[0].mxu0
    %4793 = vdwg.mxu0
    %4794 = vmatprep.subr.bf16.mxu0 %v3164
    %4795 = vmatpush1.bf16.msra.mxu0 %v3163
    %4796 = vmatprep.subr.bf16.mxu0 %v3172
    %4797 = vmatpush1.bf16.msra.mxu0 %v3171
    %4798 = vmatprep.subr.bf16.mxu0 %v3180
    %4799 = vmatpush1.bf16.msra.mxu0 %v3179
    %4800 = vmatprep.subr.bf16.mxu0 %v3188
    %4801 = vmatpush1.bf16.msra.mxu0 %v3187
    %4802 = vmatprep.subr.bf16.mxu0 %v3196
    %4803 = vmatpush1.bf16.msra.mxu0 %v3195
    %4804 = vmatprep.subr.bf16.mxu0 %v3204
    %4805 = vmatpush1.bf16.msra.mxu0 %v3203
    %4806 = vmatprep.subr.bf16.mxu0 %v3212
    %4807 = vmatpush1.bf16.msra.mxu0 %v3211
    %4808 = vmatprep.subr.bf16.mxu0 %v3220
    %4809 = vmatpush1.bf16.msra.mxu0 %v3219
    %4810 = vmatprep.subr.bf16.mxu0 %v3228
    %4811 = vmatpush1.bf16.msra.mxu0 %v3227
    %4812 = vmatprep.subr.bf16.mxu0 %v3236
    %4813 = vmatpush1.bf16.msra.mxu0 %v3235
    %4814 = vmatprep.subr.bf16.mxu0 %v3244
    %4815 = vmatpush1.bf16.msra.mxu0 %v3243
    %4816 = vmatprep.subr.bf16.mxu0 %v3252
    %4817 = vmatpush1.bf16.msra.mxu0 %v3251
    %4818 = vmatprep.subr.bf16.mxu0 %v3260
    %4819 = vmatpush1.bf16.msra.mxu0 %v3259
    %4820 = vmatprep.subr.bf16.mxu0 %v3268
    %4821 = vmatpush1.bf16.msra.mxu0 %v3267
    %4822 = vmatprep.subr.bf16.mxu0 %v3276
    %4823 = vmatpush1.bf16.msra.mxu0 %v3275
    %4824 = vmatprep.subr.bf16.mxu0 %v3284
    %4825 = vmatpush1.bf16.msra.mxu0 %v3283
    %4826 = vmatprep.mubr.bf16.mxu0 %v4670
    %4827 = vmatmul.mubr.bf16.gmra.mrb[0].mxu0 %v4669
    %v4828 = vpop.f32.mrb[0].mxu0
    %v4829 = vadd.f32 0.0, %v4828
    %v4830 = vpop.f32.mrb[0].mxu0
    %v4831 = vadd.f32 0.0, %v4830
    %v4832 = vpop.f32.mrb[0].mxu0
    %v4833 = vpop.f32.mrb[0].mxu0
    %4834 = vdwg.mxu0
    %4835 = vmatprep.subr.bf16.mxu0 %v3962
    %4836 = vmatpush1.bf16.msra.mxu0 %v3961
    %4837 = vmatprep.subr.bf16.mxu0 %v3970
    %4838 = vmatpush1.bf16.msra.mxu0 %v3969
    %4839 = vmatprep.subr.bf16.mxu0 %v3978
    %4840 = vmatpush1.bf16.msra.mxu0 %v3977
    %4841 = vmatprep.subr.bf16.mxu0 %v3986
    %4842 = vmatpush1.bf16.msra.mxu0 %v3985
    %4843 = vmatprep.subr.bf16.mxu0 %v3994
    %4844 = vmatpush1.bf16.msra.mxu0 %v3993
    %4845 = vmatprep.subr.bf16.mxu0 %v4002
    %4846 = vmatpush1.bf16.msra.mxu0 %v4001
    %4847 = vmatprep.subr.bf16.mxu0 %v4010
    %4848 = vmatpush1.bf16.msra.mxu0 %v4009
    %4849 = vmatprep.subr.bf16.mxu0 %v4018
    %4850 = vmatpush1.bf16.msra.mxu0 %v4017
    %4851 = vmatprep.subr.bf16.mxu0 %v4026
    %4852 = vmatpush1.bf16.msra.mxu0 %v4025
    %4853 = vmatprep.subr.bf16.mxu0 %v4034
    %4854 = vmatpush1.bf16.msra.mxu0 %v4033
    %4855 = vmatprep.subr.bf16.mxu0 %v4042
    %4856 = vmatpush1.bf16.msra.mxu0 %v4041
    %4857 = vmatprep.subr.bf16.mxu0 %v4050
    %4858 = vmatpush1.bf16.msra.mxu0 %v4049
    %4859 = vmatprep.subr.bf16.mxu0 %v4058
    %4860 = vmatpush1.bf16.msra.mxu0 %v4057
    %4861 = vmatprep.subr.bf16.mxu0 %v4066
    %4862 = vmatpush1.bf16.msra.mxu0 %v4065
    %4863 = vmatprep.subr.bf16.mxu0 %v4074
    %4864 = vmatpush1.bf16.msra.mxu0 %v4073
    %4865 = vmatprep.subr.bf16.mxu0 %v4082
    %4866 = vmatpush1.bf16.msra.mxu0 %v4081
    %4867 = vmatprep.mubr.bf16.mxu0 %v4668
    %4868 = vmatmul.mubr.bf16.gmra.mrb[0].mxu0 %v4667
    %v4869 = vpop.f32.mrb[0].mxu0
    %v4870 = vadd.f32 %v4706, %v4869
    %v4871 = vpop.f32.mrb[0].mxu0
    %v4872 = vadd.f32 %v4708, %v4871
    %v4873 = vpop.f32.mrb[0].mxu0
    %v4874 = vpop.f32.mrb[0].mxu0
    %4875 = vdwg.mxu0
    %4876 = vmatprep.subr.bf16.mxu0 %v3964
    %4877 = vmatpush1.bf16.msra.mxu0 %v3963
    %4878 = vmatprep.subr.bf16.mxu0 %v3972
    %4879 = vmatpush1.bf16.msra.mxu0 %v3971
    %4880 = vmatprep.subr.bf16.mxu0 %v3980
    %4881 = vmatpush1.bf16.msra.mxu0 %v3979
    %4882 = vmatprep.subr.bf16.mxu0 %v3988
    %4883 = vmatpush1.bf16.msra.mxu0 %v3987
    %4884 = vmatprep.subr.bf16.mxu0 %v3996
    %4885 = vmatpush1.bf16.msra.mxu0 %v3995
    %4886 = vmatprep.subr.bf16.mxu0 %v4004
    %4887 = vmatpush1.bf16.msra.mxu0 %v4003
    %4888 = vmatprep.subr.bf16.mxu0 %v4012
    %4889 = vmatpush1.bf16.msra.mxu0 %v4011
    %4890 = vmatprep.subr.bf16.mxu0 %v4020
    %4891 = vmatpush1.bf16.msra.mxu0 %v4019
    %4892 = vmatprep.subr.bf16.mxu0 %v4028
    %4893 = vmatpush1.bf16.msra.mxu0 %v4027
    %4894 = vmatprep.subr.bf16.mxu0 %v4036
    %4895 = vmatpush1.bf16.msra.mxu0 %v4035
    %4896 = vmatprep.subr.bf16.mxu0 %v4044
    %4897 = vmatpush1.bf16.msra.mxu0 %v4043
    %4898 = vmatprep.subr.bf16.mxu0 %v4052
    %4899 = vmatpush1.bf16.msra.mxu0 %v4051
    %4900 = vmatprep.subr.bf16.mxu0 %v4060
    %4901 = vmatpush1.bf16.msra.mxu0 %v4059
    %4902 = vmatprep.subr.bf16.mxu0 %v4068
    %4903 = vmatpush1.bf16.msra.mxu0 %v4067
    %4904 = vmatprep.subr.bf16.mxu0 %v4076
    %4905 = vmatpush1.bf16.msra.mxu0 %v4075
    %4906 = vmatprep.subr.bf16.mxu0 %v4084
    %4907 = vmatpush1.bf16.msra.mxu0 %v4083
    %4908 = vmatprep.mubr.bf16.mxu0 %v4668
    %4909 = vmatmul.mubr.bf16.gmra.mrb[0].mxu0 %v4667
    %v4910 = vpop.f32.mrb[0].mxu0
    %v4911 = vadd.f32 %v4747, %v4910
    %v4912 = vpop.f32.mrb[0].mxu0
    %v4913 = vadd.f32 %v4749, %v4912
    %v4914 = vpop.f32.mrb[0].mxu0
    %v4915 = vpop.f32.mrb[0].mxu0
    %4916 = vdwg.mxu0
    %4917 = vmatprep.subr.bf16.mxu0 %v3966
    %4918 = vmatpush1.bf16.msra.mxu0 %v3965
    %4919 = vmatprep.subr.bf16.mxu0 %v3974
    %4920 = vmatpush1.bf16.msra.mxu0 %v3973
    %4921 = vmatprep.subr.bf16.mxu0 %v3982
    %4922 = vmatpush1.bf16.msra.mxu0 %v3981
    %4923 = vmatprep.subr.bf16.mxu0 %v3990
    %4924 = vmatpush1.bf16.msra.mxu0 %v3989
    %4925 = vmatprep.subr.bf16.mxu0 %v3998
    %4926 = vmatpush1.bf16.msra.mxu0 %v3997
    %4927 = vmatprep.subr.bf16.mxu0 %v4006
    %4928 = vmatpush1.bf16.msra.mxu0 %v4005
    %4929 = vmatprep.subr.bf16.mxu0 %v4014
    %4930 = vmatpush1.bf16.msra.mxu0 %v4013
    %4931 = vmatprep.subr.bf16.mxu0 %v4022
    %4932 = vmatpush1.bf16.msra.mxu0 %v4021
    %4933 = vmatprep.subr.bf16.mxu0 %v4030
    %4934 = vmatpush1.bf16.msra.mxu0 %v4029
    %4935 = vmatprep.subr.bf16.mxu0 %v4038
    %4936 = vmatpush1.bf16.msra.mxu0 %v4037
    %4937 = vmatprep.subr.bf16.mxu0 %v4046
    %4938 = vmatpush1.bf16.msra.mxu0 %v4045
    %4939 = vmatprep.subr.bf16.mxu0 %v4054
    %4940 = vmatpush1.bf16.msra.mxu0 %v4053
    %4941 = vmatprep.subr.bf16.mxu0 %v4062
    %4942 = vmatpush1.bf16.msra.mxu0 %v4061
    %4943 = vmatprep.subr.bf16.mxu0 %v4070
    %4944 = vmatpush1.bf16.msra.mxu0 %v4069
    %4945 = vmatprep.subr.bf16.mxu0 %v4078
    %4946 = vmatpush1.bf16.msra.mxu0 %v4077
    %4947 = vmatprep.subr.bf16.mxu0 %v4086
    %4948 = vmatpush1.bf16.msra.mxu0 %v4085
    %4949 = vmatprep.mubr.bf16.mxu0 %v4668
    %4950 = vmatmul.mubr.bf16.gmra.mrb[0].mxu0 %v4667
    %v4951 = vpop.f32.mrb[0].mxu0
    %v4952 = vadd.f32 %v4788, %v4951
    %v4953 = vpop.f32.mrb[0].mxu0
    %v4954 = vadd.f32 %v4790, %v4953
    %v4955 = vpop.f32.mrb[0].mxu0
    %v4956 = vpop.f32.mrb[0].mxu0
    %4957 = vdwg.mxu0
    %4958 = vmatprep.subr.bf16.mxu0 %v3968
    %4959 = vmatpush1.bf16.msra.mxu0 %v3967
    %4960 = vmatprep.subr.bf16.mxu0 %v3976
    %4961 = vmatpush1.bf16.msra.mxu0 %v3975
    %4962 = vmatprep.subr.bf16.mxu0 %v3984
    %4963 = vmatpush1.bf16.msra.mxu0 %v3983
    %4964 = vmatprep.subr.bf16.mxu0 %v3992
    %4965 = vmatpush1.bf16.msra.mxu0 %v3991
    %4966 = vmatprep.subr.bf16.mxu0 %v4000
    %4967 = vmatpush1.bf16.msra.mxu0 %v3999
    %4968 = vmatprep.subr.bf16.mxu0 %v4008
    %4969 = vmatpush1.bf16.msra.mxu0 %v4007
    %4970 = vmatprep.subr.bf16.mxu0 %v4016
    %4971 = vmatpush1.bf16.msra.mxu0 %v4015
    %4972 = vmatprep.subr.bf16.mxu0 %v4024
    %4973 = vmatpush1.bf16.msra.mxu0 %v4023
    %4974 = vmatprep.subr.bf16.mxu0 %v4032
    %4975 = vmatpush1.bf16.msra.mxu0 %v4031
    %4976 = vmatprep.subr.bf16.mxu0 %v4040
    %4977 = vmatpush1.bf16.msra.mxu0 %v4039
    %4978 = vmatprep.subr.bf16.mxu0 %v4048
    %4979 = vmatpush1.bf16.msra.mxu0 %v4047
    %4980 = vmatprep.subr.bf16.mxu0 %v4056
    %4981 = vmatpush1.bf16.msra.mxu0 %v4055
    %4982 = vmatprep.subr.bf16.mxu0 %v4064
    %4983 = vmatpush1.bf16.msra.mxu0 %v4063
    %4984 = vmatprep.subr.bf16.mxu0 %v4072
    %4985 = vmatpush1.bf16.msra.mxu0 %v4071
    %4986 = vmatprep.subr.bf16.mxu0 %v4080
    %4987 = vmatpush1.bf16.msra.mxu0 %v4079
    %4988 = vmatprep.subr.bf16.mxu0 %v4088
    %4989 = vmatpush1.bf16.msra.mxu0 %v4087
    %4990 = vmatprep.mubr.bf16.mxu0 %v4668
    %4991 = vmatmul.mubr.bf16.gmra.mrb[0].mxu0 %v4667
    %v4992 = vpop.f32.mrb[0].mxu0
    %v4993 = vadd.f32 %v4829, %v4992
    %v4994 = vpop.f32.mrb[0].mxu0
    %v4995 = vadd.f32 %v4831, %v4994
    %v4996 = vpop.f32.mrb[0].mxu0
    %v4997 = vpop.f32.mrb[0].mxu0
    %4998 = vdwg.mxu0
    %v4999 = vadd.f32 %v4870, %v1866
    %v5000 = vadd.f32 %v4872, %v1870
    %v5001 = vadd.f32 %v4911, %v1874
    %v5002 = vadd.f32 %v4913, %v1878
    %v5003 = vadd.f32 %v4952, %v1882
    %v5004 = vadd.f32 %v4954, %v1886
    %v5005 = vadd.f32 %v4993, %v1890
    %v5006 = vadd.f32 %v4995, %v1894
    %v5007 = vxor.u32 %v4999, 2147483648
    %v5008 = vxor.u32 %v5000, 2147483648
    %v5009 = vmul.f32 %v5007, 1.442695
    %v5010 = vpow.pop %v5009
    %v5011 = vmul.f32 %v5008, 1.442695
    %v5012 = vpow.pop %v5011
    %v5013 = vadd.f32 %v5010, 1.0
    %v5014 = vadd.f32 %v5012, 1.0
    %v5015 = vrcp.pop %v5013
    %v5016 = vmul.f32 1.0, %v5015
    %v5017 = vrcp.pop %v5014
    %v5018 = vmul.f32 1.0, %v5017
    %v5019 = vxor.u32 %v5001, 2147483648
    %v5020 = vxor.u32 %v5002, 2147483648
    %v5021 = vmul.f32 %v5019, 1.442695
    %v5022 = vpow.pop %v5021
    %v5023 = vmul.f32 %v5020, 1.442695
    %v5024 = vpow.pop %v5023
    %v5025 = vadd.f32 %v5022, 1.0
    %v5026 = vadd.f32 %v5024, 1.0
    %v5027 = vrcp.pop %v5025
    %v5028 = vmul.f32 1.0, %v5027
    %v5029 = vrcp.pop %v5026
    %v5030 = vmul.f32 1.0, %v5029
    %v5031 = vtanh.pop %v5003
    %v5032 = vtanh.pop %v5004
    %v5033 = vxor.u32 %v5005, 2147483648
    %v5034 = vxor.u32 %v5006, 2147483648
    %v5035 = vmul.f32 %v5033, 1.442695
    %v5036 = vpow.pop %v5035
    %v5037 = vmul.f32 %v5034, 1.442695
    %v5038 = vpow.pop %v5037
    %v5039 = vadd.f32 %v5036, 1.0
    %v5040 = vadd.f32 %v5038, 1.0
    %v5041 = vrcp.pop %v5039
    %v5042 = vmul.f32 1.0, %v5041
    %v5043 = vrcp.pop %v5040
    %v5044 = vmul.f32 1.0, %v5043
    %v5045 = vmul.f32 %v5028, %v4431
    %v5046 = vmul.f32 %v5030, %v4432
    %v5047 = vmul.f32 %v5016, %v5031
    %v5048 = vmul.f32 %v5018, %v5032
    %v5049 = vadd.f32 %v5045, %v5047
    %v5050 = vadd.f32 %v5046, %v5048
    %v5051 = vtanh.pop %v5049
    %v5052 = vtanh.pop %v5050
    %v5053 = vmul.f32 %v5042, %v5051
    %v5054 = vmul.f32 %v5044, %v5052
    %5055 = vst [vmem:[#allocation3 + $0x10] sm:$0xff] %v5053
    %5056 = vst [vmem:[#allocation3 + $0x18] sm:$0xff] %v5054
    %v5057 = vld [vmem:[#allocation2 + $0x80] sm:$0xff]
    %v5058 = vld [vmem:[#allocation2 + $0x88] sm:$0xff]
    %v5059 = vld [vmem:[#allocation2 + $0x90] sm:$0xff]
    %v5060 = vld [vmem:[#allocation2 + $0x98] sm:$0xff]
    %v5061 = vld [vmem:[#allocation2 + $0xa0] sm:$0xff]
    %v5062 = vld [vmem:[#allocation2 + $0xa8] sm:$0xff]
    %v5063 = vld [vmem:[#allocation2 + $0xb0] sm:$0xff]
    %v5064 = vld [vmem:[#allocation2 + $0xb8] sm:$0xff]
    %5065 = vmatprep.subr.bf16.mxu0 %v2296
    %5066 = vmatpush1.bf16.msra.mxu0 %v2295
    %5067 = vmatprep.subr.bf16.mxu0 %v2304
    %5068 = vmatpush1.bf16.msra.mxu0 %v2303
    %5069 = vmatprep.subr.bf16.mxu0 %v2312
    %5070 = vmatpush1.bf16.msra.mxu0 %v2311
    %5071 = vmatprep.subr.bf16.mxu0 %v2320
    %5072 = vmatpush1.bf16.msra.mxu0 %v2319
    %5073 = vmatprep.subr.bf16.mxu0 %v2328
    %5074 = vmatpush1.bf16.msra.mxu0 %v2327
    %5075 = vmatprep.subr.bf16.mxu0 %v2336
    %5076 = vmatpush1.bf16.msra.mxu0 %v2335
    %5077 = vmatprep.subr.bf16.mxu0 %v2344
    %5078 = vmatpush1.bf16.msra.mxu0 %v2343
    %5079 = vmatprep.subr.bf16.mxu0 %v2352
    %5080 = vmatpush1.bf16.msra.mxu0 %v2351
    %5081 = vmatprep.subr.bf16.mxu0 %v2360
    %5082 = vmatpush1.bf16.msra.mxu0 %v2359
    %5083 = vmatprep.subr.bf16.mxu0 %v2368
    %5084 = vmatpush1.bf16.msra.mxu0 %v2367
    %5085 = vmatprep.subr.bf16.mxu0 %v2376
    %5086 = vmatpush1.bf16.msra.mxu0 %v2375
    %5087 = vmatprep.subr.bf16.mxu0 %v2384
    %5088 = vmatpush1.bf16.msra.mxu0 %v2383
    %5089 = vmatprep.subr.bf16.mxu0 %v2392
    %5090 = vmatpush1.bf16.msra.mxu0 %v2391
    %5091 = vmatprep.subr.bf16.mxu0 %v2400
    %5092 = vmatpush1.bf16.msra.mxu0 %v2399
    %5093 = vmatprep.subr.bf16.mxu0 %v2408
    %5094 = vmatpush1.bf16.msra.mxu0 %v2407
    %5095 = vmatprep.subr.bf16.mxu0 %v2416
    %5096 = vmatpush1.bf16.msra.mxu0 %v2415
    %5097 = vmatprep.mubr.bf16.mxu0 %v4668
    %5098 = vmatmul.mubr.bf16.gmra.mrb[0].mxu0 %v4667
    %v5099 = vpop.f32.mrb[0].mxu0
    %v5100 = vadd.f32 0.0, %v5099
    %v5101 = vpop.f32.mrb[0].mxu0
    %v5102 = vadd.f32 0.0, %v5101
    %v5103 = vpop.f32.mrb[0].mxu0
    %v5104 = vpop.f32.mrb[0].mxu0
    %5105 = vdwg.mxu0
    %5106 = vmatprep.subr.bf16.mxu0 %v2298
    %5107 = vmatpush1.bf16.msra.mxu0 %v2297
    %5108 = vmatprep.subr.bf16.mxu0 %v2306
    %5109 = vmatpush1.bf16.msra.mxu0 %v2305
    %5110 = vmatprep.subr.bf16.mxu0 %v2314
    %5111 = vmatpush1.bf16.msra.mxu0 %v2313
    %5112 = vmatprep.subr.bf16.mxu0 %v2322
    %5113 = vmatpush1.bf16.msra.mxu0 %v2321
    %5114 = vmatprep.subr.bf16.mxu0 %v2330
    %5115 = vmatpush1.bf16.msra.mxu0 %v2329
    %5116 = vmatprep.subr.bf16.mxu0 %v2338
    %5117 = vmatpush1.bf16.msra.mxu0 %v2337
    %5118 = vmatprep.subr.bf16.mxu0 %v2346
    %5119 = vmatpush1.bf16.msra.mxu0 %v2345
    %5120 = vmatprep.subr.bf16.mxu0 %v2354
    %5121 = vmatpush1.bf16.msra.mxu0 %v2353
    %5122 = vmatprep.subr.bf16.mxu0 %v2362
    %5123 = vmatpush1.bf16.msra.mxu0 %v2361
    %5124 = vmatprep.subr.bf16.mxu0 %v2370
    %5125 = vmatpush1.bf16.msra.mxu0 %v2369
    %5126 = vmatprep.subr.bf16.mxu0 %v2378
    %5127 = vmatpush1.bf16.msra.mxu0 %v2377
    %5128 = vmatprep.subr.bf16.mxu0 %v2386
    %5129 = vmatpush1.bf16.msra.mxu0 %v2385
    %5130 = vmatprep.subr.bf16.mxu0 %v2394
    %5131 = vmatpush1.bf16.msra.mxu0 %v2393
    %5132 = vmatprep.subr.bf16.mxu0 %v2402
    %5133 = vmatpush1.bf16.msra.mxu0 %v2401
    %5134 = vmatprep.subr.bf16.mxu0 %v2410
    %5135 = vmatpush1.bf16.msra.mxu0 %v2409
    %5136 = vmatprep.subr.bf16.mxu0 %v2418
    %5137 = vmatpush1.bf16.msra.mxu0 %v2417
    %5138 = vmatprep.mubr.bf16.mxu0 %v4668
    %5139 = vmatmul.mubr.bf16.gmra.mrb[0].mxu0 %v4667
    %v5140 = vpop.f32.mrb[0].mxu0
    %v5141 = vadd.f32 0.0, %v5140
    %v5142 = vpop.f32.mrb[0].mxu0
    %v5143 = vadd.f32 0.0, %v5142
    %v5144 = vpop.f32.mrb[0].mxu0
    %v5145 = vpop.f32.mrb[0].mxu0
    %5146 = vdwg.mxu0
    %5147 = vmatprep.subr.bf16.mxu0 %v2300
    %5148 = vmatpush1.bf16.msra.mxu0 %v2299
    %5149 = vmatprep.subr.bf16.mxu0 %v2308
    %5150 = vmatpush1.bf16.msra.mxu0 %v2307
    %5151 = vmatprep.subr.bf16.mxu0 %v2316
    %5152 = vmatpush1.bf16.msra.mxu0 %v2315
    %5153 = vmatprep.subr.bf16.mxu0 %v2324
    %5154 = vmatpush1.bf16.msra.mxu0 %v2323
    %5155 = vmatprep.subr.bf16.mxu0 %v2332
    %5156 = vmatpush1.bf16.msra.mxu0 %v2331
    %5157 = vmatprep.subr.bf16.mxu0 %v2340
    %5158 = vmatpush1.bf16.msra.mxu0 %v2339
    %5159 = vmatprep.subr.bf16.mxu0 %v2348
    %5160 = vmatpush1.bf16.msra.mxu0 %v2347
    %5161 = vmatprep.subr.bf16.mxu0 %v2356
    %5162 = vmatpush1.bf16.msra.mxu0 %v2355
    %5163 = vmatprep.subr.bf16.mxu0 %v2364
    %5164 = vmatpush1.bf16.msra.mxu0 %v2363
    %5165 = vmatprep.subr.bf16.mxu0 %v2372
    %5166 = vmatpush1.bf16.msra.mxu0 %v2371
    %5167 = vmatprep.subr.bf16.mxu0 %v2380
    %5168 = vmatpush1.bf16.msra.mxu0 %v2379
    %5169 = vmatprep.subr.bf16.mxu0 %v2388
    %5170 = vmatpush1.bf16.msra.mxu0 %v2387
    %5171 = vmatprep.subr.bf16.mxu0 %v2396
    %5172 = vmatpush1.bf16.msra.mxu0 %v2395
    %5173 = vmatprep.subr.bf16.mxu0 %v2404
    %5174 = vmatpush1.bf16.msra.mxu0 %v2403
    %5175 = vmatprep.subr.bf16.mxu0 %v2412
    %5176 = vmatpush1.bf16.msra.mxu0 %v2411
    %5177 = vmatprep.subr.bf16.mxu0 %v2420
    %5178 = vmatpush1.bf16.msra.mxu0 %v2419
    %5179 = vmatprep.mubr.bf16.mxu0 %v4668
    %5180 = vmatmul.mubr.bf16.gmra.mrb[0].mxu0 %v4667
    %v5181 = vpop.f32.mrb[0].mxu0
    %v5182 = vadd.f32 0.0, %v5181
    %v5183 = vpop.f32.mrb[0].mxu0
    %v5184 = vadd.f32 0.0, %v5183
    %v5185 = vpop.f32.mrb[0].mxu0
    %v5186 = vpop.f32.mrb[0].mxu0
    %5187 = vdwg.mxu0
    %5188 = vmatprep.subr.bf16.mxu0 %v2302
    %5189 = vmatpush1.bf16.msra.mxu0 %v2301
    %5190 = vmatprep.subr.bf16.mxu0 %v2310
    %5191 = vmatpush1.bf16.msra.mxu0 %v2309
    %5192 = vmatprep.subr.bf16.mxu0 %v2318
    %5193 = vmatpush1.bf16.msra.mxu0 %v2317
    %5194 = vmatprep.subr.bf16.mxu0 %v2326
    %5195 = vmatpush1.bf16.msra.mxu0 %v2325
    %5196 = vmatprep.subr.bf16.mxu0 %v2334
    %5197 = vmatpush1.bf16.msra.mxu0 %v2333
    %5198 = vmatprep.subr.bf16.mxu0 %v2342
    %5199 = vmatpush1.bf16.msra.mxu0 %v2341
    %5200 = vmatprep.subr.bf16.mxu0 %v2350
    %5201 = vmatpush1.bf16.msra.mxu0 %v2349
    %5202 = vmatprep.subr.bf16.mxu0 %v2358
    %5203 = vmatpush1.bf16.msra.mxu0 %v2357
    %5204 = vmatprep.subr.bf16.mxu0 %v2366
    %5205 = vmatpush1.bf16.msra.mxu0 %v2365
    %5206 = vmatprep.subr.bf16.mxu0 %v2374
    %5207 = vmatpush1.bf16.msra.mxu0 %v2373
    %5208 = vmatprep.subr.bf16.mxu0 %v2382
    %5209 = vmatpush1.bf16.msra.mxu0 %v2381
    %5210 = vmatprep.subr.bf16.mxu0 %v2390
    %5211 = vmatpush1.bf16.msra.mxu0 %v2389
    %5212 = vmatprep.subr.bf16.mxu0 %v2398
    %5213 = vmatpush1.bf16.msra.mxu0 %v2397
    %5214 = vmatprep.subr.bf16.mxu0 %v2406
    %5215 = vmatpush1.bf16.msra.mxu0 %v2405
    %5216 = vmatprep.subr.bf16.mxu0 %v2414
    %5217 = vmatpush1.bf16.msra.mxu0 %v2413
    %5218 = vmatprep.subr.bf16.mxu0 %v2422
    %5219 = vmatpush1.bf16.msra.mxu0 %v2421
    %5220 = vmatprep.mubr.bf16.mxu0 %v4668
    %5221 = vmatmul.mubr.bf16.gmra.mrb[0].mxu0 %v4667
    %v5222 = vpop.f32.mrb[0].mxu0
    %v5223 = vadd.f32 0.0, %v5222
    %v5224 = vpop.f32.mrb[0].mxu0
    %v5225 = vadd.f32 0.0, %v5224
    %v5226 = vpop.f32.mrb[0].mxu0
    %v5227 = vpop.f32.mrb[0].mxu0
    %5228 = vdwg.mxu0
    %v5229 = vadd.f32 %v5057, %v5100
    %v5230 = vadd.f32 %v5058, %v5102
    %v5231 = vadd.f32 %v5059, %v5141
    %v5232 = vadd.f32 %v5060, %v5143
    %v5233 = vadd.f32 %v5061, %v5182
    %v5234 = vadd.f32 %v5062, %v5184
    %v5235 = vadd.f32 %v5063, %v5223
    %v5236 = vadd.f32 %v5064, %v5225
    %v5237 = vxor.u32 %v5229, 2147483648
    %v5238 = vxor.u32 %v5230, 2147483648
    %v5239 = vmul.f32 %v5237, 1.442695
    %v5240 = vpow.pop %v5239
    %v5241 = vmul.f32 %v5238, 1.442695
    %v5242 = vpow.pop %v5241
    %v5243 = vadd.f32 %v5240, 1.0
    %v5244 = vadd.f32 %v5242, 1.0
    %v5245 = vrcp.pop %v5243
    %v5246 = vmul.f32 1.0, %v5245
    %v5247 = vrcp.pop %v5244
    %v5248 = vmul.f32 1.0, %v5247
    %v5249 = vxor.u32 %v5231, 2147483648
    %v5250 = vxor.u32 %v5232, 2147483648
    %v5251 = vmul.f32 %v5249, 1.442695
    %v5252 = vpow.pop %v5251
    %v5253 = vmul.f32 %v5250, 1.442695
    %v5254 = vpow.pop %v5253
    %v5255 = vadd.f32 %v5252, 1.0
    %v5256 = vadd.f32 %v5254, 1.0
    %v5257 = vrcp.pop %v5255
    %v5258 = vmul.f32 1.0, %v5257
    %v5259 = vrcp.pop %v5256
    %v5260 = vmul.f32 1.0, %v5259
    %v5261 = vtanh.pop %v5233
    %v5262 = vtanh.pop %v5234
    %v5263 = vxor.u32 %v5235, 2147483648
    %v5264 = vxor.u32 %v5236, 2147483648
    %v5265 = vmul.f32 %v5263, 1.442695
    %v5266 = vpow.pop %v5265
    %v5267 = vmul.f32 %v5264, 1.442695
    %v5268 = vpow.pop %v5267
    %v5269 = vadd.f32 %v5266, 1.0
    %v5270 = vadd.f32 %v5268, 1.0
    %v5271 = vrcp.pop %v5269
    %v5272 = vmul.f32 1.0, %v5271
    %v5273 = vrcp.pop %v5270
    %v5274 = vmul.f32 1.0, %v5273
    %v5275 = vmul.f32 %v5258, %v4661
    %v5276 = vmul.f32 %v5260, %v4662
    %v5277 = vmul.f32 %v5246, %v5261
    %v5278 = vmul.f32 %v5248, %v5262
    %v5279 = vadd.f32 %v5275, %v5277
    %v5280 = vadd.f32 %v5276, %v5278
    %v5281 = vtanh.pop %v5279
    %v5282 = vtanh.pop %v5280
    %v5283 = vmul.f32 %v5272, %v5281
    %v5284 = vmul.f32 %v5274, %v5282
    %v5285 = vpack.c.bf16 %v5283, %v5283
    %v5286 = vpack.c.bf16 %v5284, %v5284
    %v5287 = vpack.c.bf16 %v5053, %v5053
    %v5288 = vpack.c.bf16 %v5054, %v5054
    %5289 = vmatprep.subr.bf16.mxu0 %v3158
    %5290 = vmatpush1.bf16.msra.mxu0 %v3157
    %5291 = vmatprep.subr.bf16.mxu0 %v3166
    %5292 = vmatpush1.bf16.msra.mxu0 %v3165
    %5293 = vmatprep.subr.bf16.mxu0 %v3174
    %5294 = vmatpush1.bf16.msra.mxu0 %v3173
    %5295 = vmatprep.subr.bf16.mxu0 %v3182
    %5296 = vmatpush1.bf16.msra.mxu0 %v3181
    %5297 = vmatprep.subr.bf16.mxu0 %v3190
    %5298 = vmatpush1.bf16.msra.mxu0 %v3189
    %5299 = vmatprep.subr.bf16.mxu0 %v3198
    %5300 = vmatpush1.bf16.msra.mxu0 %v3197
    %5301 = vmatprep.subr.bf16.mxu0 %v3206
    %5302 = vmatpush1.bf16.msra.mxu0 %v3205
    %5303 = vmatprep.subr.bf16.mxu0 %v3214
    %5304 = vmatpush1.bf16.msra.mxu0 %v3213
    %5305 = vmatprep.subr.bf16.mxu0 %v3222
    %5306 = vmatpush1.bf16.msra.mxu0 %v3221
    %5307 = vmatprep.subr.bf16.mxu0 %v3230
    %5308 = vmatpush1.bf16.msra.mxu0 %v3229
    %5309 = vmatprep.subr.bf16.mxu0 %v3238
    %5310 = vmatpush1.bf16.msra.mxu0 %v3237
    %5311 = vmatprep.subr.bf16.mxu0 %v3246
    %5312 = vmatpush1.bf16.msra.mxu0 %v3245
    %5313 = vmatprep.subr.bf16.mxu0 %v3254
    %5314 = vmatpush1.bf16.msra.mxu0 %v3253
    %5315 = vmatprep.subr.bf16.mxu0 %v3262
    %5316 = vmatpush1.bf16.msra.mxu0 %v3261
    %5317 = vmatprep.subr.bf16.mxu0 %v3270
    %5318 = vmatpush1.bf16.msra.mxu0 %v3269
    %5319 = vmatprep.subr.bf16.mxu0 %v3278
    %5320 = vmatpush1.bf16.msra.mxu0 %v3277
    %5321 = vmatprep.mubr.bf16.mxu0 %v5288
    %5322 = vmatmul.mubr.bf16.gmra.mrb[0].mxu0 %v5287
    %v5323 = vpop.f32.mrb[0].mxu0
    %v5324 = vadd.f32 0.0, %v5323
    %v5325 = vpop.f32.mrb[0].mxu0
    %v5326 = vadd.f32 0.0, %v5325
    %v5327 = vpop.f32.mrb[0].mxu0
    %v5328 = vpop.f32.mrb[0].mxu0
    %5329 = vdwg.mxu0
    %5330 = vmatprep.subr.bf16.mxu0 %v3160
    %5331 = vmatpush1.bf16.msra.mxu0 %v3159
    %5332 = vmatprep.subr.bf16.mxu0 %v3168
    %5333 = vmatpush1.bf16.msra.mxu0 %v3167
    %5334 = vmatprep.subr.bf16.mxu0 %v3176
    %5335 = vmatpush1.bf16.msra.mxu0 %v3175
    %5336 = vmatprep.subr.bf16.mxu0 %v3184
    %5337 = vmatpush1.bf16.msra.mxu0 %v3183
    %5338 = vmatprep.subr.bf16.mxu0 %v3192
    %5339 = vmatpush1.bf16.msra.mxu0 %v3191
    %5340 = vmatprep.subr.bf16.mxu0 %v3200
    %5341 = vmatpush1.bf16.msra.mxu0 %v3199
    %5342 = vmatprep.subr.bf16.mxu0 %v3208
    %5343 = vmatpush1.bf16.msra.mxu0 %v3207
    %5344 = vmatprep.subr.bf16.mxu0 %v3216
    %5345 = vmatpush1.bf16.msra.mxu0 %v3215
    %5346 = vmatprep.subr.bf16.mxu0 %v3224
    %5347 = vmatpush1.bf16.msra.mxu0 %v3223
    %5348 = vmatprep.subr.bf16.mxu0 %v3232
    %5349 = vmatpush1.bf16.msra.mxu0 %v3231
    %5350 = vmatprep.subr.bf16.mxu0 %v3240
    %5351 = vmatpush1.bf16.msra.mxu0 %v3239
    %5352 = vmatprep.subr.bf16.mxu0 %v3248
    %5353 = vmatpush1.bf16.msra.mxu0 %v3247
    %5354 = vmatprep.subr.bf16.mxu0 %v3256
    %5355 = vmatpush1.bf16.msra.mxu0 %v3255
    %5356 = vmatprep.subr.bf16.mxu0 %v3264
    %5357 = vmatpush1.bf16.msra.mxu0 %v3263
    %5358 = vmatprep.subr.bf16.mxu0 %v3272
    %5359 = vmatpush1.bf16.msra.mxu0 %v3271
    %5360 = vmatprep.subr.bf16.mxu0 %v3280
    %5361 = vmatpush1.bf16.msra.mxu0 %v3279
    %5362 = vmatprep.mubr.bf16.mxu0 %v5288
    %5363 = vmatmul.mubr.bf16.gmra.mrb[0].mxu0 %v5287
    %v5364 = vpop.f32.mrb[0].mxu0
    %v5365 = vadd.f32 0.0, %v5364
    %v5366 = vpop.f32.mrb[0].mxu0
    %v5367 = vadd.f32 0.0, %v5366
    %v5368 = vpop.f32.mrb[0].mxu0
    %v5369 = vpop.f32.mrb[0].mxu0
    %5370 = vdwg.mxu0
    %5371 = vmatprep.subr.bf16.mxu0 %v3162
    %5372 = vmatpush1.bf16.msra.mxu0 %v3161
    %5373 = vmatprep.subr.bf16.mxu0 %v3170
    %5374 = vmatpush1.bf16.msra.mxu0 %v3169
    %5375 = vmatprep.subr.bf16.mxu0 %v3178
    %5376 = vmatpush1.bf16.msra.mxu0 %v3177
    %5377 = vmatprep.subr.bf16.mxu0 %v3186
    %5378 = vmatpush1.bf16.msra.mxu0 %v3185
    %5379 = vmatprep.subr.bf16.mxu0 %v3194
    %5380 = vmatpush1.bf16.msra.mxu0 %v3193
    %5381 = vmatprep.subr.bf16.mxu0 %v3202
    %5382 = vmatpush1.bf16.msra.mxu0 %v3201
    %5383 = vmatprep.subr.bf16.mxu0 %v3210
    %5384 = vmatpush1.bf16.msra.mxu0 %v3209
    %5385 = vmatprep.subr.bf16.mxu0 %v3218
    %5386 = vmatpush1.bf16.msra.mxu0 %v3217
    %5387 = vmatprep.subr.bf16.mxu0 %v3226
    %5388 = vmatpush1.bf16.msra.mxu0 %v3225
    %5389 = vmatprep.subr.bf16.mxu0 %v3234
    %5390 = vmatpush1.bf16.msra.mxu0 %v3233
    %5391 = vmatprep.subr.bf16.mxu0 %v3242
    %5392 = vmatpush1.bf16.msra.mxu0 %v3241
    %5393 = vmatprep.subr.bf16.mxu0 %v3250
    %5394 = vmatpush1.bf16.msra.mxu0 %v3249
    %5395 = vmatprep.subr.bf16.mxu0 %v3258
    %5396 = vmatpush1.bf16.msra.mxu0 %v3257
    %5397 = vmatprep.subr.bf16.mxu0 %v3266
    %5398 = vmatpush1.bf16.msra.mxu0 %v3265
    %5399 = vmatprep.subr.bf16.mxu0 %v3274
    %5400 = vmatpush1.bf16.msra.mxu0 %v3273
    %5401 = vmatprep.subr.bf16.mxu0 %v3282
    %5402 = vmatpush1.bf16.msra.mxu0 %v3281
    %5403 = vmatprep.mubr.bf16.mxu0 %v5288
    %5404 = vmatmul.mubr.bf16.gmra.mrb[0].mxu0 %v5287
    %v5405 = vpop.f32.mrb[0].mxu0
    %v5406 = vadd.f32 0.0, %v5405
    %v5407 = vpop.f32.mrb[0].mxu0
    %v5408 = vadd.f32 0.0, %v5407
    %v5409 = vpop.f32.mrb[0].mxu0
    %v5410 = vpop.f32.mrb[0].mxu0
    %5411 = vdwg.mxu0
    %5412 = vmatprep.subr.bf16.mxu0 %v3164
    %5413 = vmatpush1.bf16.msra.mxu0 %v3163
    %5414 = vmatprep.subr.bf16.mxu0 %v3172
    %5415 = vmatpush1.bf16.msra.mxu0 %v3171
    %5416 = vmatprep.subr.bf16.mxu0 %v3180
    %5417 = vmatpush1.bf16.msra.mxu0 %v3179
    %5418 = vmatprep.subr.bf16.mxu0 %v3188
    %5419 = vmatpush1.bf16.msra.mxu0 %v3187
    %5420 = vmatprep.subr.bf16.mxu0 %v3196
    %5421 = vmatpush1.bf16.msra.mxu0 %v3195
    %5422 = vmatprep.subr.bf16.mxu0 %v3204
    %5423 = vmatpush1.bf16.msra.mxu0 %v3203
    %5424 = vmatprep.subr.bf16.mxu0 %v3212
    %5425 = vmatpush1.bf16.msra.mxu0 %v3211
    %5426 = vmatprep.subr.bf16.mxu0 %v3220
    %5427 = vmatpush1.bf16.msra.mxu0 %v3219
    %5428 = vmatprep.subr.bf16.mxu0 %v3228
    %5429 = vmatpush1.bf16.msra.mxu0 %v3227
    %5430 = vmatprep.subr.bf16.mxu0 %v3236
    %5431 = vmatpush1.bf16.msra.mxu0 %v3235
    %5432 = vmatprep.subr.bf16.mxu0 %v3244
    %5433 = vmatpush1.bf16.msra.mxu0 %v3243
    %5434 = vmatprep.subr.bf16.mxu0 %v3252
    %5435 = vmatpush1.bf16.msra.mxu0 %v3251
    %5436 = vmatprep.subr.bf16.mxu0 %v3260
    %5437 = vmatpush1.bf16.msra.mxu0 %v3259
    %5438 = vmatprep.subr.bf16.mxu0 %v3268
    %5439 = vmatpush1.bf16.msra.mxu0 %v3267
    %5440 = vmatprep.subr.bf16.mxu0 %v3276
    %5441 = vmatpush1.bf16.msra.mxu0 %v3275
    %5442 = vmatprep.subr.bf16.mxu0 %v3284
    %5443 = vmatpush1.bf16.msra.mxu0 %v3283
    %5444 = vmatprep.mubr.bf16.mxu0 %v5288
    %5445 = vmatmul.mubr.bf16.gmra.mrb[0].mxu0 %v5287
    %v5446 = vpop.f32.mrb[0].mxu0
    %v5447 = vadd.f32 0.0, %v5446
    %v5448 = vpop.f32.mrb[0].mxu0
    %v5449 = vadd.f32 0.0, %v5448
    %v5450 = vpop.f32.mrb[0].mxu0
    %v5451 = vpop.f32.mrb[0].mxu0
    %5452 = vdwg.mxu0
    %5453 = vmatprep.subr.bf16.mxu0 %v3962
    %5454 = vmatpush1.bf16.msra.mxu0 %v3961
    %5455 = vmatprep.subr.bf16.mxu0 %v3970
    %5456 = vmatpush1.bf16.msra.mxu0 %v3969
    %5457 = vmatprep.subr.bf16.mxu0 %v3978
    %5458 = vmatpush1.bf16.msra.mxu0 %v3977
    %5459 = vmatprep.subr.bf16.mxu0 %v3986
    %5460 = vmatpush1.bf16.msra.mxu0 %v3985
    %5461 = vmatprep.subr.bf16.mxu0 %v3994
    %5462 = vmatpush1.bf16.msra.mxu0 %v3993
    %5463 = vmatprep.subr.bf16.mxu0 %v4002
    %5464 = vmatpush1.bf16.msra.mxu0 %v4001
    %5465 = vmatprep.subr.bf16.mxu0 %v4010
    %5466 = vmatpush1.bf16.msra.mxu0 %v4009
    %5467 = vmatprep.subr.bf16.mxu0 %v4018
    %5468 = vmatpush1.bf16.msra.mxu0 %v4017
    %5469 = vmatprep.subr.bf16.mxu0 %v4026
    %5470 = vmatpush1.bf16.msra.mxu0 %v4025
    %5471 = vmatprep.subr.bf16.mxu0 %v4034
    %5472 = vmatpush1.bf16.msra.mxu0 %v4033
    %5473 = vmatprep.subr.bf16.mxu0 %v4042
    %5474 = vmatpush1.bf16.msra.mxu0 %v4041
    %5475 = vmatprep.subr.bf16.mxu0 %v4050
    %5476 = vmatpush1.bf16.msra.mxu0 %v4049
    %5477 = vmatprep.subr.bf16.mxu0 %v4058
    %5478 = vmatpush1.bf16.msra.mxu0 %v4057
    %5479 = vmatprep.subr.bf16.mxu0 %v4066
    %5480 = vmatpush1.bf16.msra.mxu0 %v4065
    %5481 = vmatprep.subr.bf16.mxu0 %v4074
    %5482 = vmatpush1.bf16.msra.mxu0 %v4073
    %5483 = vmatprep.subr.bf16.mxu0 %v4082
    %5484 = vmatpush1.bf16.msra.mxu0 %v4081
    %5485 = vmatprep.mubr.bf16.mxu0 %v5286
    %5486 = vmatmul.mubr.bf16.gmra.mrb[0].mxu0 %v5285
    %v5487 = vpop.f32.mrb[0].mxu0
    %v5488 = vadd.f32 %v5324, %v5487
    %v5489 = vpop.f32.mrb[0].mxu0
    %v5490 = vadd.f32 %v5326, %v5489
    %v5491 = vpop.f32.mrb[0].mxu0
    %v5492 = vpop.f32.mrb[0].mxu0
    %5493 = vdwg.mxu0
    %5494 = vmatprep.subr.bf16.mxu0 %v3964
    %5495 = vmatpush1.bf16.msra.mxu0 %v3963
    %5496 = vmatprep.subr.bf16.mxu0 %v3972
    %5497 = vmatpush1.bf16.msra.mxu0 %v3971
    %5498 = vmatprep.subr.bf16.mxu0 %v3980
    %5499 = vmatpush1.bf16.msra.mxu0 %v3979
    %5500 = vmatprep.subr.bf16.mxu0 %v3988
    %5501 = vmatpush1.bf16.msra.mxu0 %v3987
    %5502 = vmatprep.subr.bf16.mxu0 %v3996
    %5503 = vmatpush1.bf16.msra.mxu0 %v3995
    %5504 = vmatprep.subr.bf16.mxu0 %v4004
    %5505 = vmatpush1.bf16.msra.mxu0 %v4003
    %5506 = vmatprep.subr.bf16.mxu0 %v4012
    %5507 = vmatpush1.bf16.msra.mxu0 %v4011
    %5508 = vmatprep.subr.bf16.mxu0 %v4020
    %5509 = vmatpush1.bf16.msra.mxu0 %v4019
    %5510 = vmatprep.subr.bf16.mxu0 %v4028
    %5511 = vmatpush1.bf16.msra.mxu0 %v4027
    %5512 = vmatprep.subr.bf16.mxu0 %v4036
    %5513 = vmatpush1.bf16.msra.mxu0 %v4035
    %5514 = vmatprep.subr.bf16.mxu0 %v4044
    %5515 = vmatpush1.bf16.msra.mxu0 %v4043
    %5516 = vmatprep.subr.bf16.mxu0 %v4052
    %5517 = vmatpush1.bf16.msra.mxu0 %v4051
    %5518 = vmatprep.subr.bf16.mxu0 %v4060
    %5519 = vmatpush1.bf16.msra.mxu0 %v4059
    %5520 = vmatprep.subr.bf16.mxu0 %v4068
    %5521 = vmatpush1.bf16.msra.mxu0 %v4067
    %5522 = vmatprep.subr.bf16.mxu0 %v4076
    %5523 = vmatpush1.bf16.msra.mxu0 %v4075
    %5524 = vmatprep.subr.bf16.mxu0 %v4084
    %5525 = vmatpush1.bf16.msra.mxu0 %v4083
    %5526 = vmatprep.mubr.bf16.mxu0 %v5286
    %5527 = vmatmul.mubr.bf16.gmra.mrb[0].mxu0 %v5285
    %v5528 = vpop.f32.mrb[0].mxu0
    %v5529 = vadd.f32 %v5365, %v5528
    %v5530 = vpop.f32.mrb[0].mxu0
    %v5531 = vadd.f32 %v5367, %v5530
    %v5532 = vpop.f32.mrb[0].mxu0
    %v5533 = vpop.f32.mrb[0].mxu0
    %5534 = vdwg.mxu0
    %5535 = vmatprep.subr.bf16.mxu0 %v3966
    %5536 = vmatpush1.bf16.msra.mxu0 %v3965
    %5537 = vmatprep.subr.bf16.mxu0 %v3974
    %5538 = vmatpush1.bf16.msra.mxu0 %v3973
    %5539 = vmatprep.subr.bf16.mxu0 %v3982
    %5540 = vmatpush1.bf16.msra.mxu0 %v3981
    %5541 = vmatprep.subr.bf16.mxu0 %v3990
    %5542 = vmatpush1.bf16.msra.mxu0 %v3989
    %5543 = vmatprep.subr.bf16.mxu0 %v3998
    %5544 = vmatpush1.bf16.msra.mxu0 %v3997
    %5545 = vmatprep.subr.bf16.mxu0 %v4006
    %5546 = vmatpush1.bf16.msra.mxu0 %v4005
    %5547 = vmatprep.subr.bf16.mxu0 %v4014
    %5548 = vmatpush1.bf16.msra.mxu0 %v4013
    %5549 = vmatprep.subr.bf16.mxu0 %v4022
    %5550 = vmatpush1.bf16.msra.mxu0 %v4021
    %5551 = vmatprep.subr.bf16.mxu0 %v4030
    %5552 = vmatpush1.bf16.msra.mxu0 %v4029
    %5553 = vmatprep.subr.bf16.mxu0 %v4038
    %5554 = vmatpush1.bf16.msra.mxu0 %v4037
    %5555 = vmatprep.subr.bf16.mxu0 %v4046
    %5556 = vmatpush1.bf16.msra.mxu0 %v4045
    %5557 = vmatprep.subr.bf16.mxu0 %v4054
    %5558 = vmatpush1.bf16.msra.mxu0 %v4053
    %5559 = vmatprep.subr.bf16.mxu0 %v4062
    %5560 = vmatpush1.bf16.msra.mxu0 %v4061
    %5561 = vmatprep.subr.bf16.mxu0 %v4070
    %5562 = vmatpush1.bf16.msra.mxu0 %v4069
    %5563 = vmatprep.subr.bf16.mxu0 %v4078
    %5564 = vmatpush1.bf16.msra.mxu0 %v4077
    %5565 = vmatprep.subr.bf16.mxu0 %v4086
    %5566 = vmatpush1.bf16.msra.mxu0 %v4085
    %5567 = vmatprep.mubr.bf16.mxu0 %v5286
    %5568 = vmatmul.mubr.bf16.gmra.mrb[0].mxu0 %v5285
    %v5569 = vpop.f32.mrb[0].mxu0
    %v5570 = vadd.f32 %v5406, %v5569
    %v5571 = vpop.f32.mrb[0].mxu0
    %v5572 = vadd.f32 %v5408, %v5571
    %v5573 = vpop.f32.mrb[0].mxu0
    %v5574 = vpop.f32.mrb[0].mxu0
    %5575 = vdwg.mxu0
    %5576 = vmatprep.subr.bf16.mxu0 %v3968
    %5577 = vmatpush1.bf16.msra.mxu0 %v3967
    %5578 = vmatprep.subr.bf16.mxu0 %v3976
    %5579 = vmatpush1.bf16.msra.mxu0 %v3975
    %5580 = vmatprep.subr.bf16.mxu0 %v3984
    %5581 = vmatpush1.bf16.msra.mxu0 %v3983
    %5582 = vmatprep.subr.bf16.mxu0 %v3992
    %5583 = vmatpush1.bf16.msra.mxu0 %v3991
    %5584 = vmatprep.subr.bf16.mxu0 %v4000
    %5585 = vmatpush1.bf16.msra.mxu0 %v3999
    %5586 = vmatprep.subr.bf16.mxu0 %v4008
    %5587 = vmatpush1.bf16.msra.mxu0 %v4007
    %5588 = vmatprep.subr.bf16.mxu0 %v4016
    %5589 = vmatpush1.bf16.msra.mxu0 %v4015
    %5590 = vmatprep.subr.bf16.mxu0 %v4024
    %5591 = vmatpush1.bf16.msra.mxu0 %v4023
    %5592 = vmatprep.subr.bf16.mxu0 %v4032
    %5593 = vmatpush1.bf16.msra.mxu0 %v4031
    %5594 = vmatprep.subr.bf16.mxu0 %v4040
    %5595 = vmatpush1.bf16.msra.mxu0 %v4039
    %5596 = vmatprep.subr.bf16.mxu0 %v4048
    %5597 = vmatpush1.bf16.msra.mxu0 %v4047
    %5598 = vmatprep.subr.bf16.mxu0 %v4056
    %5599 = vmatpush1.bf16.msra.mxu0 %v4055
    %5600 = vmatprep.subr.bf16.mxu0 %v4064
    %5601 = vmatpush1.bf16.msra.mxu0 %v4063
    %5602 = vmatprep.subr.bf16.mxu0 %v4072
    %5603 = vmatpush1.bf16.msra.mxu0 %v4071
    %5604 = vmatprep.subr.bf16.mxu0 %v4080
    %5605 = vmatpush1.bf16.msra.mxu0 %v4079
    %5606 = vmatprep.subr.bf16.mxu0 %v4088
    %5607 = vmatpush1.bf16.msra.mxu0 %v4087
    %5608 = vmatprep.mubr.bf16.mxu0 %v5286
    %5609 = vmatmul.mubr.bf16.gmra.mrb[0].mxu0 %v5285
    %v5610 = vpop.f32.mrb[0].mxu0
    %v5611 = vadd.f32 %v5447, %v5610
    %v5612 = vpop.f32.mrb[0].mxu0
    %v5613 = vadd.f32 %v5449, %v5612
    %v5614 = vpop.f32.mrb[0].mxu0
    %v5615 = vpop.f32.mrb[0].mxu0
    %5616 = vdwg.mxu0
    %v5617 = vadd.f32 %v5488, %v1866
    %v5618 = vadd.f32 %v5490, %v1870
    %v5619 = vadd.f32 %v5529, %v1874
    %v5620 = vadd.f32 %v5531, %v1878
    %v5621 = vadd.f32 %v5570, %v1882
    %v5622 = vadd.f32 %v5572, %v1886
    %v5623 = vadd.f32 %v5611, %v1890
    %v5624 = vadd.f32 %v5613, %v1894
    %v5625 = vxor.u32 %v5617, 2147483648
    %v5626 = vxor.u32 %v5618, 2147483648
    %v5627 = vmul.f32 %v5625, 1.442695
    %v5628 = vpow.pop %v5627
    %v5629 = vmul.f32 %v5626, 1.442695
    %v5630 = vpow.pop %v5629
    %v5631 = vadd.f32 %v5628, 1.0
    %v5632 = vadd.f32 %v5630, 1.0
    %v5633 = vrcp.pop %v5631
    %v5634 = vmul.f32 1.0, %v5633
    %v5635 = vrcp.pop %v5632
    %v5636 = vmul.f32 1.0, %v5635
    %v5637 = vxor.u32 %v5619, 2147483648
    %v5638 = vxor.u32 %v5620, 2147483648
    %v5639 = vmul.f32 %v5637, 1.442695
    %v5640 = vpow.pop %v5639
    %v5641 = vmul.f32 %v5638, 1.442695
    %v5642 = vpow.pop %v5641
    %v5643 = vadd.f32 %v5640, 1.0
    %v5644 = vadd.f32 %v5642, 1.0
    %v5645 = vrcp.pop %v5643
    %v5646 = vmul.f32 1.0, %v5645
    %v5647 = vrcp.pop %v5644
    %v5648 = vmul.f32 1.0, %v5647
    %v5649 = vtanh.pop %v5621
    %v5650 = vtanh.pop %v5622
    %v5651 = vxor.u32 %v5623, 2147483648
    %v5652 = vxor.u32 %v5624, 2147483648
    %v5653 = vmul.f32 %v5651, 1.442695
    %v5654 = vpow.pop %v5653
    %v5655 = vmul.f32 %v5652, 1.442695
    %v5656 = vpow.pop %v5655
    %v5657 = vadd.f32 %v5654, 1.0
    %v5658 = vadd.f32 %v5656, 1.0
    %v5659 = vrcp.pop %v5657
    %v5660 = vmul.f32 1.0, %v5659
    %v5661 = vrcp.pop %v5658
    %v5662 = vmul.f32 1.0, %v5661
    %v5663 = vmul.f32 %v5646, %v5049
    %v5664 = vmul.f32 %v5648, %v5050
    %v5665 = vmul.f32 %v5634, %v5649
    %v5666 = vmul.f32 %v5636, %v5650
    %v5667 = vadd.f32 %v5663, %v5665
    %v5668 = vadd.f32 %v5664, %v5666
    %v5669 = vtanh.pop %v5667
    %v5670 = vtanh.pop %v5668
    %v5671 = vmul.f32 %v5660, %v5669
    %v5672 = vmul.f32 %v5662, %v5670
    %5673 = vst [vmem:[#allocation3 + $0x20] sm:$0xff] %v5671
    %5674 = vst [vmem:[#allocation3 + $0x28] sm:$0xff] %v5672
    %v5675 = vld [vmem:[#allocation2 + $0xc0] sm:$0xff]
    %v5676 = vld [vmem:[#allocation2 + $0xc8] sm:$0xff]
    %v5677 = vld [vmem:[#allocation2 + $0xd0] sm:$0xff]
    %v5678 = vld [vmem:[#allocation2 + $0xd8] sm:$0xff]
    %v5679 = vld [vmem:[#allocation2 + $0xe0] sm:$0xff]
    %v5680 = vld [vmem:[#allocation2 + $0xe8] sm:$0xff]
    %v5681 = vld [vmem:[#allocation2 + $0xf0] sm:$0xff]
    %v5682 = vld [vmem:[#allocation2 + $0xf8] sm:$0xff]
    %5683 = vmatprep.subr.bf16.mxu0 %v2296
    %5684 = vmatpush1.bf16.msra.mxu0 %v2295
    %5685 = vmatprep.subr.bf16.mxu0 %v2304
    %5686 = vmatpush1.bf16.msra.mxu0 %v2303
    %5687 = vmatprep.subr.bf16.mxu0 %v2312
    %5688 = vmatpush1.bf16.msra.mxu0 %v2311
    %5689 = vmatprep.subr.bf16.mxu0 %v2320
    %5690 = vmatpush1.bf16.msra.mxu0 %v2319
    %5691 = vmatprep.subr.bf16.mxu0 %v2328
    %5692 = vmatpush1.bf16.msra.mxu0 %v2327
    %5693 = vmatprep.subr.bf16.mxu0 %v2336
    %5694 = vmatpush1.bf16.msra.mxu0 %v2335
    %5695 = vmatprep.subr.bf16.mxu0 %v2344
    %5696 = vmatpush1.bf16.msra.mxu0 %v2343
    %5697 = vmatprep.subr.bf16.mxu0 %v2352
    %5698 = vmatpush1.bf16.msra.mxu0 %v2351
    %5699 = vmatprep.subr.bf16.mxu0 %v2360
    %5700 = vmatpush1.bf16.msra.mxu0 %v2359
    %5701 = vmatprep.subr.bf16.mxu0 %v2368
    %5702 = vmatpush1.bf16.msra.mxu0 %v2367
    %5703 = vmatprep.subr.bf16.mxu0 %v2376
    %5704 = vmatpush1.bf16.msra.mxu0 %v2375
    %5705 = vmatprep.subr.bf16.mxu0 %v2384
    %5706 = vmatpush1.bf16.msra.mxu0 %v2383
    %5707 = vmatprep.subr.bf16.mxu0 %v2392
    %5708 = vmatpush1.bf16.msra.mxu0 %v2391
    %5709 = vmatprep.subr.bf16.mxu0 %v2400
    %5710 = vmatpush1.bf16.msra.mxu0 %v2399
    %5711 = vmatprep.subr.bf16.mxu0 %v2408
    %5712 = vmatpush1.bf16.msra.mxu0 %v2407
    %5713 = vmatprep.subr.bf16.mxu0 %v2416
    %5714 = vmatpush1.bf16.msra.mxu0 %v2415
    %5715 = vmatprep.mubr.bf16.mxu0 %v5286
    %5716 = vmatmul.mubr.bf16.gmra.mrb[0].mxu0 %v5285
    %v5717 = vpop.f32.mrb[0].mxu0
    %v5718 = vadd.f32 0.0, %v5717
    %v5719 = vpop.f32.mrb[0].mxu0
    %v5720 = vadd.f32 0.0, %v5719
    %v5721 = vpop.f32.mrb[0].mxu0
    %v5722 = vpop.f32.mrb[0].mxu0
    %5723 = vdwg.mxu0
    %5724 = vmatprep.subr.bf16.mxu0 %v2298
    %5725 = vmatpush1.bf16.msra.mxu0 %v2297
    %5726 = vmatprep.subr.bf16.mxu0 %v2306
    %5727 = vmatpush1.bf16.msra.mxu0 %v2305
    %5728 = vmatprep.subr.bf16.mxu0 %v2314
    %5729 = vmatpush1.bf16.msra.mxu0 %v2313
    %5730 = vmatprep.subr.bf16.mxu0 %v2322
    %5731 = vmatpush1.bf16.msra.mxu0 %v2321
    %5732 = vmatprep.subr.bf16.mxu0 %v2330
    %5733 = vmatpush1.bf16.msra.mxu0 %v2329
    %5734 = vmatprep.subr.bf16.mxu0 %v2338
    %5735 = vmatpush1.bf16.msra.mxu0 %v2337
    %5736 = vmatprep.subr.bf16.mxu0 %v2346
    %5737 = vmatpush1.bf16.msra.mxu0 %v2345
    %5738 = vmatprep.subr.bf16.mxu0 %v2354
    %5739 = vmatpush1.bf16.msra.mxu0 %v2353
    %5740 = vmatprep.subr.bf16.mxu0 %v2362
    %5741 = vmatpush1.bf16.msra.mxu0 %v2361
    %5742 = vmatprep.subr.bf16.mxu0 %v2370
    %5743 = vmatpush1.bf16.msra.mxu0 %v2369
    %5744 = vmatprep.subr.bf16.mxu0 %v2378
    %5745 = vmatpush1.bf16.msra.mxu0 %v2377
    %5746 = vmatprep.subr.bf16.mxu0 %v2386
    %5747 = vmatpush1.bf16.msra.mxu0 %v2385
    %5748 = vmatprep.subr.bf16.mxu0 %v2394
    %5749 = vmatpush1.bf16.msra.mxu0 %v2393
    %5750 = vmatprep.subr.bf16.mxu0 %v2402
    %5751 = vmatpush1.bf16.msra.mxu0 %v2401
    %5752 = vmatprep.subr.bf16.mxu0 %v2410
    %5753 = vmatpush1.bf16.msra.mxu0 %v2409
    %5754 = vmatprep.subr.bf16.mxu0 %v2418
    %5755 = vmatpush1.bf16.msra.mxu0 %v2417
    %5756 = vmatprep.mubr.bf16.mxu0 %v5286
    %5757 = vmatmul.mubr.bf16.gmra.mrb[0].mxu0 %v5285
    %v5758 = vpop.f32.mrb[0].mxu0
    %v5759 = vadd.f32 0.0, %v5758
    %v5760 = vpop.f32.mrb[0].mxu0
    %v5761 = vadd.f32 0.0, %v5760
    %v5762 = vpop.f32.mrb[0].mxu0
    %v5763 = vpop.f32.mrb[0].mxu0
    %5764 = vdwg.mxu0
    %5765 = vmatprep.subr.bf16.mxu0 %v2300
    %5766 = vmatpush1.bf16.msra.mxu0 %v2299
    %5767 = vmatprep.subr.bf16.mxu0 %v2308
    %5768 = vmatpush1.bf16.msra.mxu0 %v2307
    %5769 = vmatprep.subr.bf16.mxu0 %v2316
    %5770 = vmatpush1.bf16.msra.mxu0 %v2315
    %5771 = vmatprep.subr.bf16.mxu0 %v2324
    %5772 = vmatpush1.bf16.msra.mxu0 %v2323
    %5773 = vmatprep.subr.bf16.mxu0 %v2332
    %5774 = vmatpush1.bf16.msra.mxu0 %v2331
    %5775 = vmatprep.subr.bf16.mxu0 %v2340
    %5776 = vmatpush1.bf16.msra.mxu0 %v2339
    %5777 = vmatprep.subr.bf16.mxu0 %v2348
    %5778 = vmatpush1.bf16.msra.mxu0 %v2347
    %5779 = vmatprep.subr.bf16.mxu0 %v2356
    %5780 = vmatpush1.bf16.msra.mxu0 %v2355
    %5781 = vmatprep.subr.bf16.mxu0 %v2364
    %5782 = vmatpush1.bf16.msra.mxu0 %v2363
    %5783 = vmatprep.subr.bf16.mxu0 %v2372
    %5784 = vmatpush1.bf16.msra.mxu0 %v2371
    %5785 = vmatprep.subr.bf16.mxu0 %v2380
    %5786 = vmatpush1.bf16.msra.mxu0 %v2379
    %5787 = vmatprep.subr.bf16.mxu0 %v2388
    %5788 = vmatpush1.bf16.msra.mxu0 %v2387
    %5789 = vmatprep.subr.bf16.mxu0 %v2396
    %5790 = vmatpush1.bf16.msra.mxu0 %v2395
    %5791 = vmatprep.subr.bf16.mxu0 %v2404
    %5792 = vmatpush1.bf16.msra.mxu0 %v2403
    %5793 = vmatprep.subr.bf16.mxu0 %v2412
    %5794 = vmatpush1.bf16.msra.mxu0 %v2411
    %5795 = vmatprep.subr.bf16.mxu0 %v2420
    %5796 = vmatpush1.bf16.msra.mxu0 %v2419
    %5797 = vmatprep.mubr.bf16.mxu0 %v5286
    %5798 = vmatmul.mubr.bf16.gmra.mrb[0].mxu0 %v5285
    %v5799 = vpop.f32.mrb[0].mxu0
    %v5800 = vadd.f32 0.0, %v5799
    %v5801 = vpop.f32.mrb[0].mxu0
    %v5802 = vadd.f32 0.0, %v5801
    %v5803 = vpop.f32.mrb[0].mxu0
    %v5804 = vpop.f32.mrb[0].mxu0
    %5805 = vdwg.mxu0
    %5806 = vmatprep.subr.bf16.mxu0 %v2302
    %5807 = vmatpush1.bf16.msra.mxu0 %v2301
    %5808 = vmatprep.subr.bf16.mxu0 %v2310
    %5809 = vmatpush1.bf16.msra.mxu0 %v2309
    %5810 = vmatprep.subr.bf16.mxu0 %v2318
    %5811 = vmatpush1.bf16.msra.mxu0 %v2317
    %5812 = vmatprep.subr.bf16.mxu0 %v2326
    %5813 = vmatpush1.bf16.msra.mxu0 %v2325
    %5814 = vmatprep.subr.bf16.mxu0 %v2334
    %5815 = vmatpush1.bf16.msra.mxu0 %v2333
    %5816 = vmatprep.subr.bf16.mxu0 %v2342
    %5817 = vmatpush1.bf16.msra.mxu0 %v2341
    %5818 = vmatprep.subr.bf16.mxu0 %v2350
    %5819 = vmatpush1.bf16.msra.mxu0 %v2349
    %5820 = vmatprep.subr.bf16.mxu0 %v2358
    %5821 = vmatpush1.bf16.msra.mxu0 %v2357
    %5822 = vmatprep.subr.bf16.mxu0 %v2366
    %5823 = vmatpush1.bf16.msra.mxu0 %v2365
    %5824 = vmatprep.subr.bf16.mxu0 %v2374
    %5825 = vmatpush1.bf16.msra.mxu0 %v2373
    %5826 = vmatprep.subr.bf16.mxu0 %v2382
    %5827 = vmatpush1.bf16.msra.mxu0 %v2381
    %5828 = vmatprep.subr.bf16.mxu0 %v2390
    %5829 = vmatpush1.bf16.msra.mxu0 %v2389
    %5830 = vmatprep.subr.bf16.mxu0 %v2398
    %5831 = vmatpush1.bf16.msra.mxu0 %v2397
    %5832 = vmatprep.subr.bf16.mxu0 %v2406
    %5833 = vmatpush1.bf16.msra.mxu0 %v2405
    %5834 = vmatprep.subr.bf16.mxu0 %v2414
    %5835 = vmatpush1.bf16.msra.mxu0 %v2413
    %5836 = vmatprep.subr.bf16.mxu0 %v2422
    %5837 = vmatpush1.bf16.msra.mxu0 %v2421
    %5838 = vmatprep.mubr.bf16.mxu0 %v5286
    %5839 = vmatmul.mubr.bf16.gmra.mrb[0].mxu0 %v5285
    %v5840 = vpop.f32.mrb[0].mxu0
    %v5841 = vadd.f32 0.0, %v5840
    %v5842 = vpop.f32.mrb[0].mxu0
    %v5843 = vadd.f32 0.0, %v5842
    %v5844 = vpop.f32.mrb[0].mxu0
    %v5845 = vpop.f32.mrb[0].mxu0
    %5846 = vdwg.mxu0
    %v5847 = vadd.f32 %v5675, %v5718
    %v5848 = vadd.f32 %v5676, %v5720
    %v5849 = vadd.f32 %v5677, %v5759
    %v5850 = vadd.f32 %v5678, %v5761
    %v5851 = vadd.f32 %v5679, %v5800
    %v5852 = vadd.f32 %v5680, %v5802
    %v5853 = vadd.f32 %v5681, %v5841
    %v5854 = vadd.f32 %v5682, %v5843
    %v5855 = vxor.u32 %v5847, 2147483648
    %v5856 = vxor.u32 %v5848, 2147483648
    %v5857 = vmul.f32 %v5855, 1.442695
    %v5858 = vpow.pop %v5857
    %v5859 = vmul.f32 %v5856, 1.442695
    %v5860 = vpow.pop %v5859
    %v5861 = vadd.f32 %v5858, 1.0
    %v5862 = vadd.f32 %v5860, 1.0
    %v5863 = vrcp.pop %v5861
    %v5864 = vmul.f32 1.0, %v5863
    %v5865 = vrcp.pop %v5862
    %v5866 = vmul.f32 1.0, %v5865
    %v5867 = vxor.u32 %v5849, 2147483648
    %v5868 = vxor.u32 %v5850, 2147483648
    %v5869 = vmul.f32 %v5867, 1.442695
    %v5870 = vpow.pop %v5869
    %v5871 = vmul.f32 %v5868, 1.442695
    %v5872 = vpow.pop %v5871
    %v5873 = vadd.f32 %v5870, 1.0
    %v5874 = vadd.f32 %v5872, 1.0
    %v5875 = vrcp.pop %v5873
    %v5876 = vmul.f32 1.0, %v5875
    %v5877 = vrcp.pop %v5874
    %v5878 = vmul.f32 1.0, %v5877
    %v5879 = vtanh.pop %v5851
    %v5880 = vtanh.pop %v5852
    %v5881 = vxor.u32 %v5853, 2147483648
    %v5882 = vxor.u32 %v5854, 2147483648
    %v5883 = vmul.f32 %v5881, 1.442695
    %v5884 = vpow.pop %v5883
    %v5885 = vmul.f32 %v5882, 1.442695
    %v5886 = vpow.pop %v5885
    %v5887 = vadd.f32 %v5884, 1.0
    %v5888 = vadd.f32 %v5886, 1.0
    %v5889 = vrcp.pop %v5887
    %v5890 = vmul.f32 1.0, %v5889
    %v5891 = vrcp.pop %v5888
    %v5892 = vmul.f32 1.0, %v5891
    %v5893 = vmul.f32 %v5876, %v5279
    %v5894 = vmul.f32 %v5878, %v5280
    %v5895 = vmul.f32 %v5864, %v5879
    %v5896 = vmul.f32 %v5866, %v5880
    %v5897 = vadd.f32 %v5893, %v5895
    %v5898 = vadd.f32 %v5894, %v5896
    %v5899 = vtanh.pop %v5897
    %v5900 = vtanh.pop %v5898
    %v5901 = vmul.f32 %v5890, %v5899
    %v5902 = vmul.f32 %v5892, %v5900
    %v5903 = vpack.c.bf16 %v5901, %v5901
    %v5904 = vpack.c.bf16 %v5902, %v5902
    %v5905 = vpack.c.bf16 %v5671, %v5671
    %v5906 = vpack.c.bf16 %v5672, %v5672
    %5907 = vmatprep.subr.bf16.mxu0 %v3158
    %5908 = vmatpush1.bf16.msra.mxu0 %v3157
    %5909 = vmatprep.subr.bf16.mxu0 %v3166
    %5910 = vmatpush1.bf16.msra.mxu0 %v3165
    %5911 = vmatprep.subr.bf16.mxu0 %v3174
    %5912 = vmatpush1.bf16.msra.mxu0 %v3173
    %5913 = vmatprep.subr.bf16.mxu0 %v3182
    %5914 = vmatpush1.bf16.msra.mxu0 %v3181
    %5915 = vmatprep.subr.bf16.mxu0 %v3190
    %5916 = vmatpush1.bf16.msra.mxu0 %v3189
    %5917 = vmatprep.subr.bf16.mxu0 %v3198
    %5918 = vmatpush1.bf16.msra.mxu0 %v3197
    %5919 = vmatprep.subr.bf16.mxu0 %v3206
    %5920 = vmatpush1.bf16.msra.mxu0 %v3205
    %5921 = vmatprep.subr.bf16.mxu0 %v3214
    %5922 = vmatpush1.bf16.msra.mxu0 %v3213
    %5923 = vmatprep.subr.bf16.mxu0 %v3222
    %5924 = vmatpush1.bf16.msra.mxu0 %v3221
    %5925 = vmatprep.subr.bf16.mxu0 %v3230
    %5926 = vmatpush1.bf16.msra.mxu0 %v3229
    %5927 = vmatprep.subr.bf16.mxu0 %v3238
    %5928 = vmatpush1.bf16.msra.mxu0 %v3237
    %5929 = vmatprep.subr.bf16.mxu0 %v3246
    %5930 = vmatpush1.bf16.msra.mxu0 %v3245
    %5931 = vmatprep.subr.bf16.mxu0 %v3254
    %5932 = vmatpush1.bf16.msra.mxu0 %v3253
    %5933 = vmatprep.subr.bf16.mxu0 %v3262
    %5934 = vmatpush1.bf16.msra.mxu0 %v3261
    %5935 = vmatprep.subr.bf16.mxu0 %v3270
    %5936 = vmatpush1.bf16.msra.mxu0 %v3269
    %5937 = vmatprep.subr.bf16.mxu0 %v3278
    %5938 = vmatpush1.bf16.msra.mxu0 %v3277
    %5939 = vmatprep.mubr.bf16.mxu0 %v5906
    %5940 = vmatmul.mubr.bf16.gmra.mrb[0].mxu0 %v5905
    %v5941 = vpop.f32.mrb[0].mxu0
    %v5942 = vadd.f32 0.0, %v5941
    %v5943 = vpop.f32.mrb[0].mxu0
    %v5944 = vadd.f32 0.0, %v5943
    %v5945 = vpop.f32.mrb[0].mxu0
    %v5946 = vpop.f32.mrb[0].mxu0
    %5947 = vdwg.mxu0
    %5948 = vmatprep.subr.bf16.mxu0 %v3160
    %5949 = vmatpush1.bf16.msra.mxu0 %v3159
    %5950 = vmatprep.subr.bf16.mxu0 %v3168
    %5951 = vmatpush1.bf16.msra.mxu0 %v3167
    %5952 = vmatprep.subr.bf16.mxu0 %v3176
    %5953 = vmatpush1.bf16.msra.mxu0 %v3175
    %5954 = vmatprep.subr.bf16.mxu0 %v3184
    %5955 = vmatpush1.bf16.msra.mxu0 %v3183
    %5956 = vmatprep.subr.bf16.mxu0 %v3192
    %5957 = vmatpush1.bf16.msra.mxu0 %v3191
    %5958 = vmatprep.subr.bf16.mxu0 %v3200
    %5959 = vmatpush1.bf16.msra.mxu0 %v3199
    %5960 = vmatprep.subr.bf16.mxu0 %v3208
    %5961 = vmatpush1.bf16.msra.mxu0 %v3207
    %5962 = vmatprep.subr.bf16.mxu0 %v3216
    %5963 = vmatpush1.bf16.msra.mxu0 %v3215
    %5964 = vmatprep.subr.bf16.mxu0 %v3224
    %5965 = vmatpush1.bf16.msra.mxu0 %v3223
    %5966 = vmatprep.subr.bf16.mxu0 %v3232
    %5967 = vmatpush1.bf16.msra.mxu0 %v3231
    %5968 = vmatprep.subr.bf16.mxu0 %v3240
    %5969 = vmatpush1.bf16.msra.mxu0 %v3239
    %5970 = vmatprep.subr.bf16.mxu0 %v3248
    %5971 = vmatpush1.bf16.msra.mxu0 %v3247
    %5972 = vmatprep.subr.bf16.mxu0 %v3256
    %5973 = vmatpush1.bf16.msra.mxu0 %v3255
    %5974 = vmatprep.subr.bf16.mxu0 %v3264
    %5975 = vmatpush1.bf16.msra.mxu0 %v3263
    %5976 = vmatprep.subr.bf16.mxu0 %v3272
    %5977 = vmatpush1.bf16.msra.mxu0 %v3271
    %5978 = vmatprep.subr.bf16.mxu0 %v3280
    %5979 = vmatpush1.bf16.msra.mxu0 %v3279
    %5980 = vmatprep.mubr.bf16.mxu0 %v5906
    %5981 = vmatmul.mubr.bf16.gmra.mrb[0].mxu0 %v5905
    %v5982 = vpop.f32.mrb[0].mxu0
    %v5983 = vadd.f32 0.0, %v5982
    %v5984 = vpop.f32.mrb[0].mxu0
    %v5985 = vadd.f32 0.0, %v5984
    %v5986 = vpop.f32.mrb[0].mxu0
    %v5987 = vpop.f32.mrb[0].mxu0
    %5988 = vdwg.mxu0
    %5989 = vmatprep.subr.bf16.mxu0 %v3162
    %5990 = vmatpush1.bf16.msra.mxu0 %v3161
    %5991 = vmatprep.subr.bf16.mxu0 %v3170
    %5992 = vmatpush1.bf16.msra.mxu0 %v3169
    %5993 = vmatprep.subr.bf16.mxu0 %v3178
    %5994 = vmatpush1.bf16.msra.mxu0 %v3177
    %5995 = vmatprep.subr.bf16.mxu0 %v3186
    %5996 = vmatpush1.bf16.msra.mxu0 %v3185
    %5997 = vmatprep.subr.bf16.mxu0 %v3194
    %5998 = vmatpush1.bf16.msra.mxu0 %v3193
    %5999 = vmatprep.subr.bf16.mxu0 %v3202
    %6000 = vmatpush1.bf16.msra.mxu0 %v3201
    %6001 = vmatprep.subr.bf16.mxu0 %v3210
    %6002 = vmatpush1.bf16.msra.mxu0 %v3209
    %6003 = vmatprep.subr.bf16.mxu0 %v3218
    %6004 = vmatpush1.bf16.msra.mxu0 %v3217
    %6005 = vmatprep.subr.bf16.mxu0 %v3226
    %6006 = vmatpush1.bf16.msra.mxu0 %v3225
    %6007 = vmatprep.subr.bf16.mxu0 %v3234
    %6008 = vmatpush1.bf16.msra.mxu0 %v3233
    %6009 = vmatprep.subr.bf16.mxu0 %v3242
    %6010 = vmatpush1.bf16.msra.mxu0 %v3241
    %6011 = vmatprep.subr.bf16.mxu0 %v3250
    %6012 = vmatpush1.bf16.msra.mxu0 %v3249
    %6013 = vmatprep.subr.bf16.mxu0 %v3258
    %6014 = vmatpush1.bf16.msra.mxu0 %v3257
    %6015 = vmatprep.subr.bf16.mxu0 %v3266
    %6016 = vmatpush1.bf16.msra.mxu0 %v3265
    %6017 = vmatprep.subr.bf16.mxu0 %v3274
    %6018 = vmatpush1.bf16.msra.mxu0 %v3273
    %6019 = vmatprep.subr.bf16.mxu0 %v3282
    %6020 = vmatpush1.bf16.msra.mxu0 %v3281
    %6021 = vmatprep.mubr.bf16.mxu0 %v5906
    %6022 = vmatmul.mubr.bf16.gmra.mrb[0].mxu0 %v5905
    %v6023 = vpop.f32.mrb[0].mxu0
    %v6024 = vadd.f32 0.0, %v6023
    %v6025 = vpop.f32.mrb[0].mxu0
    %v6026 = vadd.f32 0.0, %v6025
    %v6027 = vpop.f32.mrb[0].mxu0
    %v6028 = vpop.f32.mrb[0].mxu0
    %6029 = vdwg.mxu0
    %6030 = vmatprep.subr.bf16.mxu0 %v3164
    %6031 = vmatpush1.bf16.msra.mxu0 %v3163
    %6032 = vmatprep.subr.bf16.mxu0 %v3172
    %6033 = vmatpush1.bf16.msra.mxu0 %v3171
    %6034 = vmatprep.subr.bf16.mxu0 %v3180
    %6035 = vmatpush1.bf16.msra.mxu0 %v3179
    %6036 = vmatprep.subr.bf16.mxu0 %v3188
    %6037 = vmatpush1.bf16.msra.mxu0 %v3187
    %6038 = vmatprep.subr.bf16.mxu0 %v3196
    %6039 = vmatpush1.bf16.msra.mxu0 %v3195
    %6040 = vmatprep.subr.bf16.mxu0 %v3204
    %6041 = vmatpush1.bf16.msra.mxu0 %v3203
    %6042 = vmatprep.subr.bf16.mxu0 %v3212
    %6043 = vmatpush1.bf16.msra.mxu0 %v3211
    %6044 = vmatprep.subr.bf16.mxu0 %v3220
    %6045 = vmatpush1.bf16.msra.mxu0 %v3219
    %6046 = vmatprep.subr.bf16.mxu0 %v3228
    %6047 = vmatpush1.bf16.msra.mxu0 %v3227
    %6048 = vmatprep.subr.bf16.mxu0 %v3236
    %6049 = vmatpush1.bf16.msra.mxu0 %v3235
    %6050 = vmatprep.subr.bf16.mxu0 %v3244
    %6051 = vmatpush1.bf16.msra.mxu0 %v3243
    %6052 = vmatprep.subr.bf16.mxu0 %v3252
    %6053 = vmatpush1.bf16.msra.mxu0 %v3251
    %6054 = vmatprep.subr.bf16.mxu0 %v3260
    %6055 = vmatpush1.bf16.msra.mxu0 %v3259
    %6056 = vmatprep.subr.bf16.mxu0 %v3268
    %6057 = vmatpush1.bf16.msra.mxu0 %v3267
    %6058 = vmatprep.subr.bf16.mxu0 %v3276
    %6059 = vmatpush1.bf16.msra.mxu0 %v3275
    %6060 = vmatprep.subr.bf16.mxu0 %v3284
    %6061 = vmatpush1.bf16.msra.mxu0 %v3283
    %6062 = vmatprep.mubr.bf16.mxu0 %v5906
    %6063 = vmatmul.mubr.bf16.gmra.mrb[0].mxu0 %v5905
    %v6064 = vpop.f32.mrb[0].mxu0
    %v6065 = vadd.f32 0.0, %v6064
    %v6066 = vpop.f32.mrb[0].mxu0
    %v6067 = vadd.f32 0.0, %v6066
    %v6068 = vpop.f32.mrb[0].mxu0
    %v6069 = vpop.f32.mrb[0].mxu0
    %6070 = vdwg.mxu0
    %6071 = vmatprep.subr.bf16.mxu0 %v3962
    %6072 = vmatpush1.bf16.msra.mxu0 %v3961
    %6073 = vmatprep.subr.bf16.mxu0 %v3970
    %6074 = vmatpush1.bf16.msra.mxu0 %v3969
    %6075 = vmatprep.subr.bf16.mxu0 %v3978
    %6076 = vmatpush1.bf16.msra.mxu0 %v3977
    %6077 = vmatprep.subr.bf16.mxu0 %v3986
    %6078 = vmatpush1.bf16.msra.mxu0 %v3985
    %6079 = vmatprep.subr.bf16.mxu0 %v3994
    %6080 = vmatpush1.bf16.msra.mxu0 %v3993
    %6081 = vmatprep.subr.bf16.mxu0 %v4002
    %6082 = vmatpush1.bf16.msra.mxu0 %v4001
    %6083 = vmatprep.subr.bf16.mxu0 %v4010
    %6084 = vmatpush1.bf16.msra.mxu0 %v4009
    %6085 = vmatprep.subr.bf16.mxu0 %v4018
    %6086 = vmatpush1.bf16.msra.mxu0 %v4017
    %6087 = vmatprep.subr.bf16.mxu0 %v4026
    %6088 = vmatpush1.bf16.msra.mxu0 %v4025
    %6089 = vmatprep.subr.bf16.mxu0 %v4034
    %6090 = vmatpush1.bf16.msra.mxu0 %v4033
    %6091 = vmatprep.subr.bf16.mxu0 %v4042
    %6092 = vmatpush1.bf16.msra.mxu0 %v4041
    %6093 = vmatprep.subr.bf16.mxu0 %v4050
    %6094 = vmatpush1.bf16.msra.mxu0 %v4049
    %6095 = vmatprep.subr.bf16.mxu0 %v4058
    %6096 = vmatpush1.bf16.msra.mxu0 %v4057
    %6097 = vmatprep.subr.bf16.mxu0 %v4066
    %6098 = vmatpush1.bf16.msra.mxu0 %v4065
    %6099 = vmatprep.subr.bf16.mxu0 %v4074
    %6100 = vmatpush1.bf16.msra.mxu0 %v4073
    %6101 = vmatprep.subr.bf16.mxu0 %v4082
    %6102 = vmatpush1.bf16.msra.mxu0 %v4081
    %6103 = vmatprep.mubr.bf16.mxu0 %v5904
    %6104 = vmatmul.mubr.bf16.gmra.mrb[0].mxu0 %v5903
    %v6105 = vpop.f32.mrb[0].mxu0
    %v6106 = vadd.f32 %v5942, %v6105
    %v6107 = vpop.f32.mrb[0].mxu0
    %v6108 = vadd.f32 %v5944, %v6107
    %v6109 = vpop.f32.mrb[0].mxu0
    %v6110 = vpop.f32.mrb[0].mxu0
    %6111 = vdwg.mxu0
    %6112 = vmatprep.subr.bf16.mxu0 %v3964
    %6113 = vmatpush1.bf16.msra.mxu0 %v3963
    %6114 = vmatprep.subr.bf16.mxu0 %v3972
    %6115 = vmatpush1.bf16.msra.mxu0 %v3971
    %6116 = vmatprep.subr.bf16.mxu0 %v3980
    %6117 = vmatpush1.bf16.msra.mxu0 %v3979
    %6118 = vmatprep.subr.bf16.mxu0 %v3988
    %6119 = vmatpush1.bf16.msra.mxu0 %v3987
    %6120 = vmatprep.subr.bf16.mxu0 %v3996
    %6121 = vmatpush1.bf16.msra.mxu0 %v3995
    %6122 = vmatprep.subr.bf16.mxu0 %v4004
    %6123 = vmatpush1.bf16.msra.mxu0 %v4003
    %6124 = vmatprep.subr.bf16.mxu0 %v4012
    %6125 = vmatpush1.bf16.msra.mxu0 %v4011
    %6126 = vmatprep.subr.bf16.mxu0 %v4020
    %6127 = vmatpush1.bf16.msra.mxu0 %v4019
    %6128 = vmatprep.subr.bf16.mxu0 %v4028
    %6129 = vmatpush1.bf16.msra.mxu0 %v4027
    %6130 = vmatprep.subr.bf16.mxu0 %v4036
    %6131 = vmatpush1.bf16.msra.mxu0 %v4035
    %6132 = vmatprep.subr.bf16.mxu0 %v4044
    %6133 = vmatpush1.bf16.msra.mxu0 %v4043
    %6134 = vmatprep.subr.bf16.mxu0 %v4052
    %6135 = vmatpush1.bf16.msra.mxu0 %v4051
    %6136 = vmatprep.subr.bf16.mxu0 %v4060
    %6137 = vmatpush1.bf16.msra.mxu0 %v4059
    %6138 = vmatprep.subr.bf16.mxu0 %v4068
    %6139 = vmatpush1.bf16.msra.mxu0 %v4067
    %6140 = vmatprep.subr.bf16.mxu0 %v4076
    %6141 = vmatpush1.bf16.msra.mxu0 %v4075
    %6142 = vmatprep.subr.bf16.mxu0 %v4084
    %6143 = vmatpush1.bf16.msra.mxu0 %v4083
    %6144 = vmatprep.mubr.bf16.mxu0 %v5904
    %6145 = vmatmul.mubr.bf16.gmra.mrb[0].mxu0 %v5903
    %v6146 = vpop.f32.mrb[0].mxu0
    %v6147 = vadd.f32 %v5983, %v6146
    %v6148 = vpop.f32.mrb[0].mxu0
    %v6149 = vadd.f32 %v5985, %v6148
    %v6150 = vpop.f32.mrb[0].mxu0
    %v6151 = vpop.f32.mrb[0].mxu0
    %6152 = vdwg.mxu0
    %6153 = vmatprep.subr.bf16.mxu0 %v3966
    %6154 = vmatpush1.bf16.msra.mxu0 %v3965
    %6155 = vmatprep.subr.bf16.mxu0 %v3974
    %6156 = vmatpush1.bf16.msra.mxu0 %v3973
    %6157 = vmatprep.subr.bf16.mxu0 %v3982
    %6158 = vmatpush1.bf16.msra.mxu0 %v3981
    %6159 = vmatprep.subr.bf16.mxu0 %v3990
    %6160 = vmatpush1.bf16.msra.mxu0 %v3989
    %6161 = vmatprep.subr.bf16.mxu0 %v3998
    %6162 = vmatpush1.bf16.msra.mxu0 %v3997
    %6163 = vmatprep.subr.bf16.mxu0 %v4006
    %6164 = vmatpush1.bf16.msra.mxu0 %v4005
    %6165 = vmatprep.subr.bf16.mxu0 %v4014
    %6166 = vmatpush1.bf16.msra.mxu0 %v4013
    %6167 = vmatprep.subr.bf16.mxu0 %v4022
    %6168 = vmatpush1.bf16.msra.mxu0 %v4021
    %6169 = vmatprep.subr.bf16.mxu0 %v4030
    %6170 = vmatpush1.bf16.msra.mxu0 %v4029
    %6171 = vmatprep.subr.bf16.mxu0 %v4038
    %6172 = vmatpush1.bf16.msra.mxu0 %v4037
    %6173 = vmatprep.subr.bf16.mxu0 %v4046
    %6174 = vmatpush1.bf16.msra.mxu0 %v4045
    %6175 = vmatprep.subr.bf16.mxu0 %v4054
    %6176 = vmatpush1.bf16.msra.mxu0 %v4053
    %6177 = vmatprep.subr.bf16.mxu0 %v4062
    %6178 = vmatpush1.bf16.msra.mxu0 %v4061
    %6179 = vmatprep.subr.bf16.mxu0 %v4070
    %6180 = vmatpush1.bf16.msra.mxu0 %v4069
    %6181 = vmatprep.subr.bf16.mxu0 %v4078
    %6182 = vmatpush1.bf16.msra.mxu0 %v4077
    %6183 = vmatprep.subr.bf16.mxu0 %v4086
    %6184 = vmatpush1.bf16.msra.mxu0 %v4085
    %6185 = vmatprep.mubr.bf16.mxu0 %v5904
    %6186 = vmatmul.mubr.bf16.gmra.mrb[0].mxu0 %v5903
    %v6187 = vpop.f32.mrb[0].mxu0
    %v6188 = vadd.f32 %v6024, %v6187
    %v6189 = vpop.f32.mrb[0].mxu0
    %v6190 = vadd.f32 %v6026, %v6189
    %v6191 = vpop.f32.mrb[0].mxu0
    %v6192 = vpop.f32.mrb[0].mxu0
    %6193 = vdwg.mxu0
    %6194 = vmatprep.subr.bf16.mxu0 %v3968
    %6195 = vmatpush1.bf16.msra.mxu0 %v3967
    %6196 = vmatprep.subr.bf16.mxu0 %v3976
    %6197 = vmatpush1.bf16.msra.mxu0 %v3975
    %6198 = vmatprep.subr.bf16.mxu0 %v3984
    %6199 = vmatpush1.bf16.msra.mxu0 %v3983
    %6200 = vmatprep.subr.bf16.mxu0 %v3992
    %6201 = vmatpush1.bf16.msra.mxu0 %v3991
    %6202 = vmatprep.subr.bf16.mxu0 %v4000
    %6203 = vmatpush1.bf16.msra.mxu0 %v3999
    %6204 = vmatprep.subr.bf16.mxu0 %v4008
    %6205 = vmatpush1.bf16.msra.mxu0 %v4007
    %6206 = vmatprep.subr.bf16.mxu0 %v4016
    %6207 = vmatpush1.bf16.msra.mxu0 %v4015
    %6208 = vmatprep.subr.bf16.mxu0 %v4024
    %6209 = vmatpush1.bf16.msra.mxu0 %v4023
    %6210 = vmatprep.subr.bf16.mxu0 %v4032
    %6211 = vmatpush1.bf16.msra.mxu0 %v4031
    %6212 = vmatprep.subr.bf16.mxu0 %v4040
    %6213 = vmatpush1.bf16.msra.mxu0 %v4039
    %6214 = vmatprep.subr.bf16.mxu0 %v4048
    %6215 = vmatpush1.bf16.msra.mxu0 %v4047
    %6216 = vmatprep.subr.bf16.mxu0 %v4056
    %6217 = vmatpush1.bf16.msra.mxu0 %v4055
    %6218 = vmatprep.subr.bf16.mxu0 %v4064
    %6219 = vmatpush1.bf16.msra.mxu0 %v4063
    %6220 = vmatprep.subr.bf16.mxu0 %v4072
    %6221 = vmatpush1.bf16.msra.mxu0 %v4071
    %6222 = vmatprep.subr.bf16.mxu0 %v4080
    %6223 = vmatpush1.bf16.msra.mxu0 %v4079
    %6224 = vmatprep.subr.bf16.mxu0 %v4088
    %6225 = vmatpush1.bf16.msra.mxu0 %v4087
    %6226 = vmatprep.mubr.bf16.mxu0 %v5904
    %6227 = vmatmul.mubr.bf16.gmra.mrb[0].mxu0 %v5903
    %v6228 = vpop.f32.mrb[0].mxu0
    %v6229 = vadd.f32 %v6065, %v6228
    %v6230 = vpop.f32.mrb[0].mxu0
    %v6231 = vadd.f32 %v6067, %v6230
    %v6232 = vpop.f32.mrb[0].mxu0
    %v6233 = vpop.f32.mrb[0].mxu0
    %6234 = vdwg.mxu0
    %v6235 = vadd.f32 %v6106, %v1866
    %v6236 = vadd.f32 %v6108, %v1870
    %v6237 = vadd.f32 %v6147, %v1874
    %v6238 = vadd.f32 %v6149, %v1878
    %v6239 = vadd.f32 %v6188, %v1882
    %v6240 = vadd.f32 %v6190, %v1886
    %v6241 = vadd.f32 %v6229, %v1890
    %v6242 = vadd.f32 %v6231, %v1894
    %v6243 = vxor.u32 %v6235, 2147483648
    %v6244 = vxor.u32 %v6236, 2147483648
    %v6245 = vmul.f32 %v6243, 1.442695
    %v6246 = vpow.pop %v6245
    %v6247 = vmul.f32 %v6244, 1.442695
    %v6248 = vpow.pop %v6247
    %v6249 = vadd.f32 %v6246, 1.0
    %v6250 = vadd.f32 %v6248, 1.0
    %v6251 = vrcp.pop %v6249
    %v6252 = vmul.f32 1.0, %v6251
    %v6253 = vrcp.pop %v6250
    %v6254 = vmul.f32 1.0, %v6253
    %v6255 = vxor.u32 %v6237, 2147483648
    %v6256 = vxor.u32 %v6238, 2147483648
    %v6257 = vmul.f32 %v6255, 1.442695
    %v6258 = vpow.pop %v6257
    %v6259 = vmul.f32 %v6256, 1.442695
    %v6260 = vpow.pop %v6259
    %v6261 = vadd.f32 %v6258, 1.0
    %v6262 = vadd.f32 %v6260, 1.0
    %v6263 = vrcp.pop %v6261
    %v6264 = vmul.f32 1.0, %v6263
    %v6265 = vrcp.pop %v6262
    %v6266 = vmul.f32 1.0, %v6265
    %v6267 = vtanh.pop %v6239
    %v6268 = vtanh.pop %v6240
    %v6269 = vxor.u32 %v6241, 2147483648
    %v6270 = vxor.u32 %v6242, 2147483648
    %v6271 = vmul.f32 %v6269, 1.442695
    %v6272 = vpow.pop %v6271
    %v6273 = vmul.f32 %v6270, 1.442695
    %v6274 = vpow.pop %v6273
    %v6275 = vadd.f32 %v6272, 1.0
    %v6276 = vadd.f32 %v6274, 1.0
    %v6277 = vrcp.pop %v6275
    %v6278 = vmul.f32 1.0, %v6277
    %v6279 = vrcp.pop %v6276
    %v6280 = vmul.f32 1.0, %v6279
    %v6281 = vmul.f32 %v6264, %v5667
    %v6282 = vmul.f32 %v6266, %v5668
    %v6283 = vmul.f32 %v6252, %v6267
    %v6284 = vmul.f32 %v6254, %v6268
    %v6285 = vadd.f32 %v6281, %v6283
    %v6286 = vadd.f32 %v6282, %v6284
    %v6287 = vtanh.pop %v6285
    %v6288 = vtanh.pop %v6286
    %v6289 = vmul.f32 %v6278, %v6287
    %v6290 = vmul.f32 %v6280, %v6288
    %6291 = vst [vmem:[#allocation3 + $0x30] sm:$0xff] %v6289
    %6292 = vst [vmem:[#allocation3 + $0x38] sm:$0xff] %v6290
    %v6293 = vld [vmem:[#allocation2 + $0x100] sm:$0xff]
    %v6294 = vld [vmem:[#allocation2 + $0x108] sm:$0xff]
    %v6295 = vld [vmem:[#allocation2 + $0x110] sm:$0xff]
    %v6296 = vld [vmem:[#allocation2 + $0x118] sm:$0xff]
    %v6297 = vld [vmem:[#allocation2 + $0x120] sm:$0xff]
    %v6298 = vld [vmem:[#allocation2 + $0x128] sm:$0xff]
    %v6299 = vld [vmem:[#allocation2 + $0x130] sm:$0xff]
    %v6300 = vld [vmem:[#allocation2 + $0x138] sm:$0xff]
    %6301 = vmatprep.subr.bf16.mxu0 %v2296
    %6302 = vmatpush1.bf16.msra.mxu0 %v2295
    %6303 = vmatprep.subr.bf16.mxu0 %v2304
    %6304 = vmatpush1.bf16.msra.mxu0 %v2303
    %6305 = vmatprep.subr.bf16.mxu0 %v2312
    %6306 = vmatpush1.bf16.msra.mxu0 %v2311
    %6307 = vmatprep.subr.bf16.mxu0 %v2320
    %6308 = vmatpush1.bf16.msra.mxu0 %v2319
    %6309 = vmatprep.subr.bf16.mxu0 %v2328
    %6310 = vmatpush1.bf16.msra.mxu0 %v2327
    %6311 = vmatprep.subr.bf16.mxu0 %v2336
    %6312 = vmatpush1.bf16.msra.mxu0 %v2335
    %6313 = vmatprep.subr.bf16.mxu0 %v2344
    %6314 = vmatpush1.bf16.msra.mxu0 %v2343
    %6315 = vmatprep.subr.bf16.mxu0 %v2352
    %6316 = vmatpush1.bf16.msra.mxu0 %v2351
    %6317 = vmatprep.subr.bf16.mxu0 %v2360
    %6318 = vmatpush1.bf16.msra.mxu0 %v2359
    %6319 = vmatprep.subr.bf16.mxu0 %v2368
    %6320 = vmatpush1.bf16.msra.mxu0 %v2367
    %6321 = vmatprep.subr.bf16.mxu0 %v2376
    %6322 = vmatpush1.bf16.msra.mxu0 %v2375
    %6323 = vmatprep.subr.bf16.mxu0 %v2384
    %6324 = vmatpush1.bf16.msra.mxu0 %v2383
    %6325 = vmatprep.subr.bf16.mxu0 %v2392
    %6326 = vmatpush1.bf16.msra.mxu0 %v2391
    %6327 = vmatprep.subr.bf16.mxu0 %v2400
    %6328 = vmatpush1.bf16.msra.mxu0 %v2399
    %6329 = vmatprep.subr.bf16.mxu0 %v2408
    %6330 = vmatpush1.bf16.msra.mxu0 %v2407
    %6331 = vmatprep.subr.bf16.mxu0 %v2416
    %6332 = vmatpush1.bf16.msra.mxu0 %v2415
    %6333 = vmatprep.mubr.bf16.mxu0 %v5904
    %6334 = vmatmul.mubr.bf16.gmra.mrb[0].mxu0 %v5903
    %v6335 = vpop.f32.mrb[0].mxu0
    %v6336 = vadd.f32 0.0, %v6335
    %v6337 = vpop.f32.mrb[0].mxu0
    %v6338 = vadd.f32 0.0, %v6337
    %v6339 = vpop.f32.mrb[0].mxu0
    %v6340 = vpop.f32.mrb[0].mxu0
    %6341 = vdwg.mxu0
    %6342 = vmatprep.subr.bf16.mxu0 %v2298
    %6343 = vmatpush1.bf16.msra.mxu0 %v2297
    %6344 = vmatprep.subr.bf16.mxu0 %v2306
    %6345 = vmatpush1.bf16.msra.mxu0 %v2305
    %6346 = vmatprep.subr.bf16.mxu0 %v2314
    %6347 = vmatpush1.bf16.msra.mxu0 %v2313
    %6348 = vmatprep.subr.bf16.mxu0 %v2322
    %6349 = vmatpush1.bf16.msra.mxu0 %v2321
    %6350 = vmatprep.subr.bf16.mxu0 %v2330
    %6351 = vmatpush1.bf16.msra.mxu0 %v2329
    %6352 = vmatprep.subr.bf16.mxu0 %v2338
    %6353 = vmatpush1.bf16.msra.mxu0 %v2337
    %6354 = vmatprep.subr.bf16.mxu0 %v2346
    %6355 = vmatpush1.bf16.msra.mxu0 %v2345
    %6356 = vmatprep.subr.bf16.mxu0 %v2354
    %6357 = vmatpush1.bf16.msra.mxu0 %v2353
    %6358 = vmatprep.subr.bf16.mxu0 %v2362
    %6359 = vmatpush1.bf16.msra.mxu0 %v2361
    %6360 = vmatprep.subr.bf16.mxu0 %v2370
    %6361 = vmatpush1.bf16.msra.mxu0 %v2369
    %6362 = vmatprep.subr.bf16.mxu0 %v2378
    %6363 = vmatpush1.bf16.msra.mxu0 %v2377
    %6364 = vmatprep.subr.bf16.mxu0 %v2386
    %6365 = vmatpush1.bf16.msra.mxu0 %v2385
    %6366 = vmatprep.subr.bf16.mxu0 %v2394
    %6367 = vmatpush1.bf16.msra.mxu0 %v2393
    %6368 = vmatprep.subr.bf16.mxu0 %v2402
    %6369 = vmatpush1.bf16.msra.mxu0 %v2401
    %6370 = vmatprep.subr.bf16.mxu0 %v2410
    %6371 = vmatpush1.bf16.msra.mxu0 %v2409
    %6372 = vmatprep.subr.bf16.mxu0 %v2418
    %6373 = vmatpush1.bf16.msra.mxu0 %v2417
    %6374 = vmatprep.mubr.bf16.mxu0 %v5904
    %6375 = vmatmul.mubr.bf16.gmra.mrb[0].mxu0 %v5903
    %v6376 = vpop.f32.mrb[0].mxu0
    %v6377 = vadd.f32 0.0, %v6376
    %v6378 = vpop.f32.mrb[0].mxu0
    %v6379 = vadd.f32 0.0, %v6378
    %v6380 = vpop.f32.mrb[0].mxu0
    %v6381 = vpop.f32.mrb[0].mxu0
    %6382 = vdwg.mxu0
    %6383 = vmatprep.subr.bf16.mxu0 %v2300
    %6384 = vmatpush1.bf16.msra.mxu0 %v2299
    %6385 = vmatprep.subr.bf16.mxu0 %v2308
    %6386 = vmatpush1.bf16.msra.mxu0 %v2307
    %6387 = vmatprep.subr.bf16.mxu0 %v2316
    %6388 = vmatpush1.bf16.msra.mxu0 %v2315
    %6389 = vmatprep.subr.bf16.mxu0 %v2324
    %6390 = vmatpush1.bf16.msra.mxu0 %v2323
    %6391 = vmatprep.subr.bf16.mxu0 %v2332
    %6392 = vmatpush1.bf16.msra.mxu0 %v2331
    %6393 = vmatprep.subr.bf16.mxu0 %v2340
    %6394 = vmatpush1.bf16.msra.mxu0 %v2339
    %6395 = vmatprep.subr.bf16.mxu0 %v2348
    %6396 = vmatpush1.bf16.msra.mxu0 %v2347
    %6397 = vmatprep.subr.bf16.mxu0 %v2356
    %6398 = vmatpush1.bf16.msra.mxu0 %v2355
    %6399 = vmatprep.subr.bf16.mxu0 %v2364
    %6400 = vmatpush1.bf16.msra.mxu0 %v2363
    %6401 = vmatprep.subr.bf16.mxu0 %v2372
    %6402 = vmatpush1.bf16.msra.mxu0 %v2371
    %6403 = vmatprep.subr.bf16.mxu0 %v2380
    %6404 = vmatpush1.bf16.msra.mxu0 %v2379
    %6405 = vmatprep.subr.bf16.mxu0 %v2388
    %6406 = vmatpush1.bf16.msra.mxu0 %v2387
    %6407 = vmatprep.subr.bf16.mxu0 %v2396
    %6408 = vmatpush1.bf16.msra.mxu0 %v2395
    %6409 = vmatprep.subr.bf16.mxu0 %v2404
    %6410 = vmatpush1.bf16.msra.mxu0 %v2403
    %6411 = vmatprep.subr.bf16.mxu0 %v2412
    %6412 = vmatpush1.bf16.msra.mxu0 %v2411
    %6413 = vmatprep.subr.bf16.mxu0 %v2420
    %6414 = vmatpush1.bf16.msra.mxu0 %v2419
    %6415 = vmatprep.mubr.bf16.mxu0 %v5904
    %6416 = vmatmul.mubr.bf16.gmra.mrb[0].mxu0 %v5903
    %v6417 = vpop.f32.mrb[0].mxu0
    %v6418 = vadd.f32 0.0, %v6417
    %v6419 = vpop.f32.mrb[0].mxu0
    %v6420 = vadd.f32 0.0, %v6419
    %v6421 = vpop.f32.mrb[0].mxu0
    %v6422 = vpop.f32.mrb[0].mxu0
    %6423 = vdwg.mxu0
    %6424 = vmatprep.subr.bf16.mxu0 %v2302
    %6425 = vmatpush1.bf16.msra.mxu0 %v2301
    %6426 = vmatprep.subr.bf16.mxu0 %v2310
    %6427 = vmatpush1.bf16.msra.mxu0 %v2309
    %6428 = vmatprep.subr.bf16.mxu0 %v2318
    %6429 = vmatpush1.bf16.msra.mxu0 %v2317
    %6430 = vmatprep.subr.bf16.mxu0 %v2326
    %6431 = vmatpush1.bf16.msra.mxu0 %v2325
    %6432 = vmatprep.subr.bf16.mxu0 %v2334
    %6433 = vmatpush1.bf16.msra.mxu0 %v2333
    %6434 = vmatprep.subr.bf16.mxu0 %v2342
    %6435 = vmatpush1.bf16.msra.mxu0 %v2341
    %6436 = vmatprep.subr.bf16.mxu0 %v2350
    %6437 = vmatpush1.bf16.msra.mxu0 %v2349
    %6438 = vmatprep.subr.bf16.mxu0 %v2358
    %6439 = vmatpush1.bf16.msra.mxu0 %v2357
    %6440 = vmatprep.subr.bf16.mxu0 %v2366
    %6441 = vmatpush1.bf16.msra.mxu0 %v2365
    %6442 = vmatprep.subr.bf16.mxu0 %v2374
    %6443 = vmatpush1.bf16.msra.mxu0 %v2373
    %6444 = vmatprep.subr.bf16.mxu0 %v2382
    %6445 = vmatpush1.bf16.msra.mxu0 %v2381
    %6446 = vmatprep.subr.bf16.mxu0 %v2390
    %6447 = vmatpush1.bf16.msra.mxu0 %v2389
    %6448 = vmatprep.subr.bf16.mxu0 %v2398
    %6449 = vmatpush1.bf16.msra.mxu0 %v2397
    %6450 = vmatprep.subr.bf16.mxu0 %v2406
    %6451 = vmatpush1.bf16.msra.mxu0 %v2405
    %6452 = vmatprep.subr.bf16.mxu0 %v2414
    %6453 = vmatpush1.bf16.msra.mxu0 %v2413
    %6454 = vmatprep.subr.bf16.mxu0 %v2422
    %6455 = vmatpush1.bf16.msra.mxu0 %v2421
    %6456 = vmatprep.mubr.bf16.mxu0 %v5904
    %6457 = vmatmul.mubr.bf16.gmra.mrb[0].mxu0 %v5903
    %v6458 = vpop.f32.mrb[0].mxu0
    %v6459 = vadd.f32 0.0, %v6458
    %v6460 = vpop.f32.mrb[0].mxu0
    %v6461 = vadd.f32 0.0, %v6460
    %v6462 = vpop.f32.mrb[0].mxu0
    %v6463 = vpop.f32.mrb[0].mxu0
    %6464 = vdwg.mxu0
    %v6465 = vadd.f32 %v6293, %v6336
    %v6466 = vadd.f32 %v6294, %v6338
    %v6467 = vadd.f32 %v6295, %v6377
    %v6468 = vadd.f32 %v6296, %v6379
    %v6469 = vadd.f32 %v6297, %v6418
    %v6470 = vadd.f32 %v6298, %v6420
    %v6471 = vadd.f32 %v6299, %v6459
    %v6472 = vadd.f32 %v6300, %v6461
    %v6473 = vxor.u32 %v6465, 2147483648
    %v6474 = vxor.u32 %v6466, 2147483648
    %v6475 = vmul.f32 %v6473, 1.442695
    %v6476 = vpow.pop %v6475
    %v6477 = vmul.f32 %v6474, 1.442695
    %v6478 = vpow.pop %v6477
    %v6479 = vadd.f32 %v6476, 1.0
    %v6480 = vadd.f32 %v6478, 1.0
    %v6481 = vrcp.pop %v6479
    %v6482 = vmul.f32 1.0, %v6481
    %v6483 = vrcp.pop %v6480
    %v6484 = vmul.f32 1.0, %v6483
    %v6485 = vxor.u32 %v6467, 2147483648
    %v6486 = vxor.u32 %v6468, 2147483648
    %v6487 = vmul.f32 %v6485, 1.442695
    %v6488 = vpow.pop %v6487
    %v6489 = vmul.f32 %v6486, 1.442695
    %v6490 = vpow.pop %v6489
    %v6491 = vadd.f32 %v6488, 1.0
    %v6492 = vadd.f32 %v6490, 1.0
    %v6493 = vrcp.pop %v6491
    %v6494 = vmul.f32 1.0, %v6493
    %v6495 = vrcp.pop %v6492
    %v6496 = vmul.f32 1.0, %v6495
    %v6497 = vtanh.pop %v6469
    %v6498 = vtanh.pop %v6470
    %v6499 = vxor.u32 %v6471, 2147483648
    %v6500 = vxor.u32 %v6472, 2147483648
    %v6501 = vmul.f32 %v6499, 1.442695
    %v6502 = vpow.pop %v6501
    %v6503 = vmul.f32 %v6500, 1.442695
    %v6504 = vpow.pop %v6503
    %v6505 = vadd.f32 %v6502, 1.0
    %v6506 = vadd.f32 %v6504, 1.0
    %v6507 = vrcp.pop %v6505
    %v6508 = vmul.f32 1.0, %v6507
    %v6509 = vrcp.pop %v6506
    %v6510 = vmul.f32 1.0, %v6509
    %v6511 = vmul.f32 %v6494, %v5897
    %v6512 = vmul.f32 %v6496, %v5898
    %v6513 = vmul.f32 %v6482, %v6497
    %v6514 = vmul.f32 %v6484, %v6498
    %v6515 = vadd.f32 %v6511, %v6513
    %v6516 = vadd.f32 %v6512, %v6514
    %v6517 = vtanh.pop %v6515
    %v6518 = vtanh.pop %v6516
    %v6519 = vmul.f32 %v6508, %v6517
    %v6520 = vmul.f32 %v6510, %v6518
    %v6521 = vpack.c.bf16 %v6519, %v6519
    %v6522 = vpack.c.bf16 %v6520, %v6520
    %v6523 = vpack.c.bf16 %v6289, %v6289
    %v6524 = vpack.c.bf16 %v6290, %v6290
    %6525 = vmatprep.subr.bf16.mxu0 %v3158
    %6526 = vmatpush1.bf16.msra.mxu0 %v3157
    %6527 = vmatprep.subr.bf16.mxu0 %v3166
    %6528 = vmatpush1.bf16.msra.mxu0 %v3165
    %6529 = vmatprep.subr.bf16.mxu0 %v3174
    %6530 = vmatpush1.bf16.msra.mxu0 %v3173
    %6531 = vmatprep.subr.bf16.mxu0 %v3182
    %6532 = vmatpush1.bf16.msra.mxu0 %v3181
    %6533 = vmatprep.subr.bf16.mxu0 %v3190
    %6534 = vmatpush1.bf16.msra.mxu0 %v3189
    %6535 = vmatprep.subr.bf16.mxu0 %v3198
    %6536 = vmatpush1.bf16.msra.mxu0 %v3197
    %6537 = vmatprep.subr.bf16.mxu0 %v3206
    %6538 = vmatpush1.bf16.msra.mxu0 %v3205
    %6539 = vmatprep.subr.bf16.mxu0 %v3214
    %6540 = vmatpush1.bf16.msra.mxu0 %v3213
    %6541 = vmatprep.subr.bf16.mxu0 %v3222
    %6542 = vmatpush1.bf16.msra.mxu0 %v3221
    %6543 = vmatprep.subr.bf16.mxu0 %v3230
    %6544 = vmatpush1.bf16.msra.mxu0 %v3229
    %6545 = vmatprep.subr.bf16.mxu0 %v3238
    %6546 = vmatpush1.bf16.msra.mxu0 %v3237
    %6547 = vmatprep.subr.bf16.mxu0 %v3246
    %6548 = vmatpush1.bf16.msra.mxu0 %v3245
    %6549 = vmatprep.subr.bf16.mxu0 %v3254
    %6550 = vmatpush1.bf16.msra.mxu0 %v3253
    %6551 = vmatprep.subr.bf16.mxu0 %v3262
    %6552 = vmatpush1.bf16.msra.mxu0 %v3261
    %6553 = vmatprep.subr.bf16.mxu0 %v3270
    %6554 = vmatpush1.bf16.msra.mxu0 %v3269
    %6555 = vmatprep.subr.bf16.mxu0 %v3278
    %6556 = vmatpush1.bf16.msra.mxu0 %v3277
    %6557 = vmatprep.mubr.bf16.mxu0 %v6524
    %6558 = vmatmul.mubr.bf16.gmra.mrb[0].mxu0 %v6523
    %v6559 = vpop.f32.mrb[0].mxu0
    %v6560 = vadd.f32 0.0, %v6559
    %v6561 = vpop.f32.mrb[0].mxu0
    %v6562 = vadd.f32 0.0, %v6561
    %v6563 = vpop.f32.mrb[0].mxu0
    %v6564 = vpop.f32.mrb[0].mxu0
    %6565 = vdwg.mxu0
    %6566 = vmatprep.subr.bf16.mxu0 %v3160
    %6567 = vmatpush1.bf16.msra.mxu0 %v3159
    %6568 = vmatprep.subr.bf16.mxu0 %v3168
    %6569 = vmatpush1.bf16.msra.mxu0 %v3167
    %6570 = vmatprep.subr.bf16.mxu0 %v3176
    %6571 = vmatpush1.bf16.msra.mxu0 %v3175
    %6572 = vmatprep.subr.bf16.mxu0 %v3184
    %6573 = vmatpush1.bf16.msra.mxu0 %v3183
    %6574 = vmatprep.subr.bf16.mxu0 %v3192
    %6575 = vmatpush1.bf16.msra.mxu0 %v3191
    %6576 = vmatprep.subr.bf16.mxu0 %v3200
    %6577 = vmatpush1.bf16.msra.mxu0 %v3199
    %6578 = vmatprep.subr.bf16.mxu0 %v3208
    %6579 = vmatpush1.bf16.msra.mxu0 %v3207
    %6580 = vmatprep.subr.bf16.mxu0 %v3216
    %6581 = vmatpush1.bf16.msra.mxu0 %v3215
    %6582 = vmatprep.subr.bf16.mxu0 %v3224
    %6583 = vmatpush1.bf16.msra.mxu0 %v3223
    %6584 = vmatprep.subr.bf16.mxu0 %v3232
    %6585 = vmatpush1.bf16.msra.mxu0 %v3231
    %6586 = vmatprep.subr.bf16.mxu0 %v3240
    %6587 = vmatpush1.bf16.msra.mxu0 %v3239
    %6588 = vmatprep.subr.bf16.mxu0 %v3248
    %6589 = vmatpush1.bf16.msra.mxu0 %v3247
    %6590 = vmatprep.subr.bf16.mxu0 %v3256
    %6591 = vmatpush1.bf16.msra.mxu0 %v3255
    %6592 = vmatprep.subr.bf16.mxu0 %v3264
    %6593 = vmatpush1.bf16.msra.mxu0 %v3263
    %6594 = vmatprep.subr.bf16.mxu0 %v3272
    %6595 = vmatpush1.bf16.msra.mxu0 %v3271
    %6596 = vmatprep.subr.bf16.mxu0 %v3280
    %6597 = vmatpush1.bf16.msra.mxu0 %v3279
    %6598 = vmatprep.mubr.bf16.mxu0 %v6524
    %6599 = vmatmul.mubr.bf16.gmra.mrb[0].mxu0 %v6523
    %v6600 = vpop.f32.mrb[0].mxu0
    %v6601 = vadd.f32 0.0, %v6600
    %v6602 = vpop.f32.mrb[0].mxu0
    %v6603 = vadd.f32 0.0, %v6602
    %v6604 = vpop.f32.mrb[0].mxu0
    %v6605 = vpop.f32.mrb[0].mxu0
    %6606 = vdwg.mxu0
    %6607 = vmatprep.subr.bf16.mxu0 %v3162
    %6608 = vmatpush1.bf16.msra.mxu0 %v3161
    %6609 = vmatprep.subr.bf16.mxu0 %v3170
    %6610 = vmatpush1.bf16.msra.mxu0 %v3169
    %6611 = vmatprep.subr.bf16.mxu0 %v3178
    %6612 = vmatpush1.bf16.msra.mxu0 %v3177
    %6613 = vmatprep.subr.bf16.mxu0 %v3186
    %6614 = vmatpush1.bf16.msra.mxu0 %v3185
    %6615 = vmatprep.subr.bf16.mxu0 %v3194
    %6616 = vmatpush1.bf16.msra.mxu0 %v3193
    %6617 = vmatprep.subr.bf16.mxu0 %v3202
    %6618 = vmatpush1.bf16.msra.mxu0 %v3201
    %6619 = vmatprep.subr.bf16.mxu0 %v3210
    %6620 = vmatpush1.bf16.msra.mxu0 %v3209
    %6621 = vmatprep.subr.bf16.mxu0 %v3218
    %6622 = vmatpush1.bf16.msra.mxu0 %v3217
    %6623 = vmatprep.subr.bf16.mxu0 %v3226
    %6624 = vmatpush1.bf16.msra.mxu0 %v3225
    %6625 = vmatprep.subr.bf16.mxu0 %v3234
    %6626 = vmatpush1.bf16.msra.mxu0 %v3233
    %6627 = vmatprep.subr.bf16.mxu0 %v3242
    %6628 = vmatpush1.bf16.msra.mxu0 %v3241
    %6629 = vmatprep.subr.bf16.mxu0 %v3250
    %6630 = vmatpush1.bf16.msra.mxu0 %v3249
    %6631 = vmatprep.subr.bf16.mxu0 %v3258
    %6632 = vmatpush1.bf16.msra.mxu0 %v3257
    %6633 = vmatprep.subr.bf16.mxu0 %v3266
    %6634 = vmatpush1.bf16.msra.mxu0 %v3265
    %6635 = vmatprep.subr.bf16.mxu0 %v3274
    %6636 = vmatpush1.bf16.msra.mxu0 %v3273
    %6637 = vmatprep.subr.bf16.mxu0 %v3282
    %6638 = vmatpush1.bf16.msra.mxu0 %v3281
    %6639 = vmatprep.mubr.bf16.mxu0 %v6524
    %6640 = vmatmul.mubr.bf16.gmra.mrb[0].mxu0 %v6523
    %v6641 = vpop.f32.mrb[0].mxu0
    %v6642 = vadd.f32 0.0, %v6641
    %v6643 = vpop.f32.mrb[0].mxu0
    %v6644 = vadd.f32 0.0, %v6643
    %v6645 = vpop.f32.mrb[0].mxu0
    %v6646 = vpop.f32.mrb[0].mxu0
    %6647 = vdwg.mxu0
    %6648 = vmatprep.subr.bf16.mxu0 %v3164
    %6649 = vmatpush1.bf16.msra.mxu0 %v3163
    %6650 = vmatprep.subr.bf16.mxu0 %v3172
    %6651 = vmatpush1.bf16.msra.mxu0 %v3171
    %6652 = vmatprep.subr.bf16.mxu0 %v3180
    %6653 = vmatpush1.bf16.msra.mxu0 %v3179
    %6654 = vmatprep.subr.bf16.mxu0 %v3188
    %6655 = vmatpush1.bf16.msra.mxu0 %v3187
    %6656 = vmatprep.subr.bf16.mxu0 %v3196
    %6657 = vmatpush1.bf16.msra.mxu0 %v3195
    %6658 = vmatprep.subr.bf16.mxu0 %v3204
    %6659 = vmatpush1.bf16.msra.mxu0 %v3203
    %6660 = vmatprep.subr.bf16.mxu0 %v3212
    %6661 = vmatpush1.bf16.msra.mxu0 %v3211
    %6662 = vmatprep.subr.bf16.mxu0 %v3220
    %6663 = vmatpush1.bf16.msra.mxu0 %v3219
    %6664 = vmatprep.subr.bf16.mxu0 %v3228
    %6665 = vmatpush1.bf16.msra.mxu0 %v3227
    %6666 = vmatprep.subr.bf16.mxu0 %v3236
    %6667 = vmatpush1.bf16.msra.mxu0 %v3235
    %6668 = vmatprep.subr.bf16.mxu0 %v3244
    %6669 = vmatpush1.bf16.msra.mxu0 %v3243
    %6670 = vmatprep.subr.bf16.mxu0 %v3252
    %6671 = vmatpush1.bf16.msra.mxu0 %v3251
    %6672 = vmatprep.subr.bf16.mxu0 %v3260
    %6673 = vmatpush1.bf16.msra.mxu0 %v3259
    %6674 = vmatprep.subr.bf16.mxu0 %v3268
    %6675 = vmatpush1.bf16.msra.mxu0 %v3267
    %6676 = vmatprep.subr.bf16.mxu0 %v3276
    %6677 = vmatpush1.bf16.msra.mxu0 %v3275
    %6678 = vmatprep.subr.bf16.mxu0 %v3284
    %6679 = vmatpush1.bf16.msra.mxu0 %v3283
    %6680 = vmatprep.mubr.bf16.mxu0 %v6524
    %6681 = vmatmul.mubr.bf16.gmra.mrb[0].mxu0 %v6523
    %v6682 = vpop.f32.mrb[0].mxu0
    %v6683 = vadd.f32 0.0, %v6682
    %v6684 = vpop.f32.mrb[0].mxu0
    %v6685 = vadd.f32 0.0, %v6684
    %v6686 = vpop.f32.mrb[0].mxu0
    %v6687 = vpop.f32.mrb[0].mxu0
    %6688 = vdwg.mxu0
    %6689 = vmatprep.subr.bf16.mxu0 %v3962
    %6690 = vmatpush1.bf16.msra.mxu0 %v3961
    %6691 = vmatprep.subr.bf16.mxu0 %v3970
    %6692 = vmatpush1.bf16.msra.mxu0 %v3969
    %6693 = vmatprep.subr.bf16.mxu0 %v3978
    %6694 = vmatpush1.bf16.msra.mxu0 %v3977
    %6695 = vmatprep.subr.bf16.mxu0 %v3986
    %6696 = vmatpush1.bf16.msra.mxu0 %v3985
    %6697 = vmatprep.subr.bf16.mxu0 %v3994
    %6698 = vmatpush1.bf16.msra.mxu0 %v3993
    %6699 = vmatprep.subr.bf16.mxu0 %v4002
    %6700 = vmatpush1.bf16.msra.mxu0 %v4001
    %6701 = vmatprep.subr.bf16.mxu0 %v4010
    %6702 = vmatpush1.bf16.msra.mxu0 %v4009
    %6703 = vmatprep.subr.bf16.mxu0 %v4018
    %6704 = vmatpush1.bf16.msra.mxu0 %v4017
    %6705 = vmatprep.subr.bf16.mxu0 %v4026
    %6706 = vmatpush1.bf16.msra.mxu0 %v4025
    %6707 = vmatprep.subr.bf16.mxu0 %v4034
    %6708 = vmatpush1.bf16.msra.mxu0 %v4033
    %6709 = vmatprep.subr.bf16.mxu0 %v4042
    %6710 = vmatpush1.bf16.msra.mxu0 %v4041
    %6711 = vmatprep.subr.bf16.mxu0 %v4050
    %6712 = vmatpush1.bf16.msra.mxu0 %v4049
    %6713 = vmatprep.subr.bf16.mxu0 %v4058
    %6714 = vmatpush1.bf16.msra.mxu0 %v4057
    %6715 = vmatprep.subr.bf16.mxu0 %v4066
    %6716 = vmatpush1.bf16.msra.mxu0 %v4065
    %6717 = vmatprep.subr.bf16.mxu0 %v4074
    %6718 = vmatpush1.bf16.msra.mxu0 %v4073
    %6719 = vmatprep.subr.bf16.mxu0 %v4082
    %6720 = vmatpush1.bf16.msra.mxu0 %v4081
    %6721 = vmatprep.mubr.bf16.mxu0 %v6522
    %6722 = vmatmul.mubr.bf16.gmra.mrb[0].mxu0 %v6521
    %v6723 = vpop.f32.mrb[0].mxu0
    %v6724 = vadd.f32 %v6560, %v6723
    %v6725 = vpop.f32.mrb[0].mxu0
    %v6726 = vadd.f32 %v6562, %v6725
    %v6727 = vpop.f32.mrb[0].mxu0
    %v6728 = vpop.f32.mrb[0].mxu0
    %6729 = vdwg.mxu0
    %6730 = vmatprep.subr.bf16.mxu0 %v3964
    %6731 = vmatpush1.bf16.msra.mxu0 %v3963
    %6732 = vmatprep.subr.bf16.mxu0 %v3972
    %6733 = vmatpush1.bf16.msra.mxu0 %v3971
    %6734 = vmatprep.subr.bf16.mxu0 %v3980
    %6735 = vmatpush1.bf16.msra.mxu0 %v3979
    %6736 = vmatprep.subr.bf16.mxu0 %v3988
    %6737 = vmatpush1.bf16.msra.mxu0 %v3987
    %6738 = vmatprep.subr.bf16.mxu0 %v3996
    %6739 = vmatpush1.bf16.msra.mxu0 %v3995
    %6740 = vmatprep.subr.bf16.mxu0 %v4004
    %6741 = vmatpush1.bf16.msra.mxu0 %v4003
    %6742 = vmatprep.subr.bf16.mxu0 %v4012
    %6743 = vmatpush1.bf16.msra.mxu0 %v4011
    %6744 = vmatprep.subr.bf16.mxu0 %v4020
    %6745 = vmatpush1.bf16.msra.mxu0 %v4019
    %6746 = vmatprep.subr.bf16.mxu0 %v4028
    %6747 = vmatpush1.bf16.msra.mxu0 %v4027
    %6748 = vmatprep.subr.bf16.mxu0 %v4036
    %6749 = vmatpush1.bf16.msra.mxu0 %v4035
    %6750 = vmatprep.subr.bf16.mxu0 %v4044
    %6751 = vmatpush1.bf16.msra.mxu0 %v4043
    %6752 = vmatprep.subr.bf16.mxu0 %v4052
    %6753 = vmatpush1.bf16.msra.mxu0 %v4051
    %6754 = vmatprep.subr.bf16.mxu0 %v4060
    %6755 = vmatpush1.bf16.msra.mxu0 %v4059
    %6756 = vmatprep.subr.bf16.mxu0 %v4068
    %6757 = vmatpush1.bf16.msra.mxu0 %v4067
    %6758 = vmatprep.subr.bf16.mxu0 %v4076
    %6759 = vmatpush1.bf16.msra.mxu0 %v4075
    %6760 = vmatprep.subr.bf16.mxu0 %v4084
    %6761 = vmatpush1.bf16.msra.mxu0 %v4083
    %6762 = vmatprep.mubr.bf16.mxu0 %v6522
    %6763 = vmatmul.mubr.bf16.gmra.mrb[0].mxu0 %v6521
    %v6764 = vpop.f32.mrb[0].mxu0
    %v6765 = vadd.f32 %v6601, %v6764
    %v6766 = vpop.f32.mrb[0].mxu0
    %v6767 = vadd.f32 %v6603, %v6766
    %v6768 = vpop.f32.mrb[0].mxu0
    %v6769 = vpop.f32.mrb[0].mxu0
    %6770 = vdwg.mxu0
    %6771 = vmatprep.subr.bf16.mxu0 %v3966
    %6772 = vmatpush1.bf16.msra.mxu0 %v3965
    %6773 = vmatprep.subr.bf16.mxu0 %v3974
    %6774 = vmatpush1.bf16.msra.mxu0 %v3973
    %6775 = vmatprep.subr.bf16.mxu0 %v3982
    %6776 = vmatpush1.bf16.msra.mxu0 %v3981
    %6777 = vmatprep.subr.bf16.mxu0 %v3990
    %6778 = vmatpush1.bf16.msra.mxu0 %v3989
    %6779 = vmatprep.subr.bf16.mxu0 %v3998
    %6780 = vmatpush1.bf16.msra.mxu0 %v3997
    %6781 = vmatprep.subr.bf16.mxu0 %v4006
    %6782 = vmatpush1.bf16.msra.mxu0 %v4005
    %6783 = vmatprep.subr.bf16.mxu0 %v4014
    %6784 = vmatpush1.bf16.msra.mxu0 %v4013
    %6785 = vmatprep.subr.bf16.mxu0 %v4022
    %6786 = vmatpush1.bf16.msra.mxu0 %v4021
    %6787 = vmatprep.subr.bf16.mxu0 %v4030
    %6788 = vmatpush1.bf16.msra.mxu0 %v4029
    %6789 = vmatprep.subr.bf16.mxu0 %v4038
    %6790 = vmatpush1.bf16.msra.mxu0 %v4037
    %6791 = vmatprep.subr.bf16.mxu0 %v4046
    %6792 = vmatpush1.bf16.msra.mxu0 %v4045
    %6793 = vmatprep.subr.bf16.mxu0 %v4054
    %6794 = vmatpush1.bf16.msra.mxu0 %v4053
    %6795 = vmatprep.subr.bf16.mxu0 %v4062
    %6796 = vmatpush1.bf16.msra.mxu0 %v4061
    %6797 = vmatprep.subr.bf16.mxu0 %v4070
    %6798 = vmatpush1.bf16.msra.mxu0 %v4069
    %6799 = vmatprep.subr.bf16.mxu0 %v4078
    %6800 = vmatpush1.bf16.msra.mxu0 %v4077
    %6801 = vmatprep.subr.bf16.mxu0 %v4086
    %6802 = vmatpush1.bf16.msra.mxu0 %v4085
    %6803 = vmatprep.mubr.bf16.mxu0 %v6522
    %6804 = vmatmul.mubr.bf16.gmra.mrb[0].mxu0 %v6521
    %v6805 = vpop.f32.mrb[0].mxu0
    %v6806 = vadd.f32 %v6642, %v6805
    %v6807 = vpop.f32.mrb[0].mxu0
    %v6808 = vadd.f32 %v6644, %v6807
    %v6809 = vpop.f32.mrb[0].mxu0
    %v6810 = vpop.f32.mrb[0].mxu0
    %6811 = vdwg.mxu0
    %6812 = vmatprep.subr.bf16.mxu0 %v3968
    %6813 = vmatpush1.bf16.msra.mxu0 %v3967
    %6814 = vmatprep.subr.bf16.mxu0 %v3976
    %6815 = vmatpush1.bf16.msra.mxu0 %v3975
    %6816 = vmatprep.subr.bf16.mxu0 %v3984
    %6817 = vmatpush1.bf16.msra.mxu0 %v3983
    %6818 = vmatprep.subr.bf16.mxu0 %v3992
    %6819 = vmatpush1.bf16.msra.mxu0 %v3991
    %6820 = vmatprep.subr.bf16.mxu0 %v4000
    %6821 = vmatpush1.bf16.msra.mxu0 %v3999
    %6822 = vmatprep.subr.bf16.mxu0 %v4008
    %6823 = vmatpush1.bf16.msra.mxu0 %v4007
    %6824 = vmatprep.subr.bf16.mxu0 %v4016
    %6825 = vmatpush1.bf16.msra.mxu0 %v4015
    %6826 = vmatprep.subr.bf16.mxu0 %v4024
    %6827 = vmatpush1.bf16.msra.mxu0 %v4023
    %6828 = vmatprep.subr.bf16.mxu0 %v4032
    %6829 = vmatpush1.bf16.msra.mxu0 %v4031
    %6830 = vmatprep.subr.bf16.mxu0 %v4040
    %6831 = vmatpush1.bf16.msra.mxu0 %v4039
    %6832 = vmatprep.subr.bf16.mxu0 %v4048
    %6833 = vmatpush1.bf16.msra.mxu0 %v4047
    %6834 = vmatprep.subr.bf16.mxu0 %v4056
    %6835 = vmatpush1.bf16.msra.mxu0 %v4055
    %6836 = vmatprep.subr.bf16.mxu0 %v4064
    %6837 = vmatpush1.bf16.msra.mxu0 %v4063
    %6838 = vmatprep.subr.bf16.mxu0 %v4072
    %6839 = vmatpush1.bf16.msra.mxu0 %v4071
    %6840 = vmatprep.subr.bf16.mxu0 %v4080
    %6841 = vmatpush1.bf16.msra.mxu0 %v4079
    %6842 = vmatprep.subr.bf16.mxu0 %v4088
    %6843 = vmatpush1.bf16.msra.mxu0 %v4087
    %6844 = vmatprep.mubr.bf16.mxu0 %v6522
    %6845 = vmatmul.mubr.bf16.gmra.mrb[0].mxu0 %v6521
    %v6846 = vpop.f32.mrb[0].mxu0
    %v6847 = vadd.f32 %v6683, %v6846
    %v6848 = vpop.f32.mrb[0].mxu0
    %v6849 = vadd.f32 %v6685, %v6848
    %v6850 = vpop.f32.mrb[0].mxu0
    %v6851 = vpop.f32.mrb[0].mxu0
    %6852 = vdwg.mxu0
    %v6853 = vadd.f32 %v6724, %v1866
    %v6854 = vadd.f32 %v6726, %v1870
    %v6855 = vadd.f32 %v6765, %v1874
    %v6856 = vadd.f32 %v6767, %v1878
    %v6857 = vadd.f32 %v6806, %v1882
    %v6858 = vadd.f32 %v6808, %v1886
    %v6859 = vadd.f32 %v6847, %v1890
    %v6860 = vadd.f32 %v6849, %v1894
    %v6861 = vxor.u32 %v6853, 2147483648
    %v6862 = vxor.u32 %v6854, 2147483648
    %v6863 = vmul.f32 %v6861, 1.442695
    %v6864 = vpow.pop %v6863
    %v6865 = vmul.f32 %v6862, 1.442695
    %v6866 = vpow.pop %v6865
    %v6867 = vadd.f32 %v6864, 1.0
    %v6868 = vadd.f32 %v6866, 1.0
    %v6869 = vrcp.pop %v6867
    %v6870 = vmul.f32 1.0, %v6869
    %v6871 = vrcp.pop %v6868
    %v6872 = vmul.f32 1.0, %v6871
    %v6873 = vxor.u32 %v6855, 2147483648
    %v6874 = vxor.u32 %v6856, 2147483648
    %v6875 = vmul.f32 %v6873, 1.442695
    %v6876 = vpow.pop %v6875
    %v6877 = vmul.f32 %v6874, 1.442695
    %v6878 = vpow.pop %v6877
    %v6879 = vadd.f32 %v6876, 1.0
    %v6880 = vadd.f32 %v6878, 1.0
    %v6881 = vrcp.pop %v6879
    %v6882 = vmul.f32 1.0, %v6881
    %v6883 = vrcp.pop %v6880
    %v6884 = vmul.f32 1.0, %v6883
    %v6885 = vtanh.pop %v6857
    %v6886 = vtanh.pop %v6858
    %v6887 = vxor.u32 %v6859, 2147483648
    %v6888 = vxor.u32 %v6860, 2147483648
    %v6889 = vmul.f32 %v6887, 1.442695
    %v6890 = vpow.pop %v6889
    %v6891 = vmul.f32 %v6888, 1.442695
    %v6892 = vpow.pop %v6891
    %v6893 = vadd.f32 %v6890, 1.0
    %v6894 = vadd.f32 %v6892, 1.0
    %v6895 = vrcp.pop %v6893
    %v6896 = vmul.f32 1.0, %v6895
    %v6897 = vrcp.pop %v6894
    %v6898 = vmul.f32 1.0, %v6897
    %v6899 = vmul.f32 %v6882, %v6285
    %v6900 = vmul.f32 %v6884, %v6286
    %v6901 = vmul.f32 %v6870, %v6885
    %v6902 = vmul.f32 %v6872, %v6886
    %v6903 = vadd.f32 %v6899, %v6901
    %v6904 = vadd.f32 %v6900, %v6902
    %v6905 = vtanh.pop %v6903
    %v6906 = vtanh.pop %v6904
    %v6907 = vmul.f32 %v6896, %v6905
    %v6908 = vmul.f32 %v6898, %v6906
    %6909 = vst [vmem:[#allocation3 + $0x40] sm:$0xff] %v6907
    %6910 = vst [vmem:[#allocation3 + $0x48] sm:$0xff] %v6908
    %v6911 = vld [vmem:[#allocation2 + $0x140] sm:$0xff]
    %v6912 = vld [vmem:[#allocation2 + $0x148] sm:$0xff]
    %v6913 = vld [vmem:[#allocation2 + $0x150] sm:$0xff]
    %v6914 = vld [vmem:[#allocation2 + $0x158] sm:$0xff]
    %v6915 = vld [vmem:[#allocation2 + $0x160] sm:$0xff]
    %v6916 = vld [vmem:[#allocation2 + $0x168] sm:$0xff]
    %v6917 = vld [vmem:[#allocation2 + $0x170] sm:$0xff]
    %v6918 = vld [vmem:[#allocation2 + $0x178] sm:$0xff]
    %6919 = vmatprep.subr.bf16.mxu0 %v2296
    %6920 = vmatpush1.bf16.msra.mxu0 %v2295
    %6921 = vmatprep.subr.bf16.mxu0 %v2304
    %6922 = vmatpush1.bf16.msra.mxu0 %v2303
    %6923 = vmatprep.subr.bf16.mxu0 %v2312
    %6924 = vmatpush1.bf16.msra.mxu0 %v2311
    %6925 = vmatprep.subr.bf16.mxu0 %v2320
    %6926 = vmatpush1.bf16.msra.mxu0 %v2319
    %6927 = vmatprep.subr.bf16.mxu0 %v2328
    %6928 = vmatpush1.bf16.msra.mxu0 %v2327
    %6929 = vmatprep.subr.bf16.mxu0 %v2336
    %6930 = vmatpush1.bf16.msra.mxu0 %v2335
    %6931 = vmatprep.subr.bf16.mxu0 %v2344
    %6932 = vmatpush1.bf16.msra.mxu0 %v2343
    %6933 = vmatprep.subr.bf16.mxu0 %v2352
    %6934 = vmatpush1.bf16.msra.mxu0 %v2351
    %6935 = vmatprep.subr.bf16.mxu0 %v2360
    %6936 = vmatpush1.bf16.msra.mxu0 %v2359
    %6937 = vmatprep.subr.bf16.mxu0 %v2368
    %6938 = vmatpush1.bf16.msra.mxu0 %v2367
    %6939 = vmatprep.subr.bf16.mxu0 %v2376
    %6940 = vmatpush1.bf16.msra.mxu0 %v2375
    %6941 = vmatprep.subr.bf16.mxu0 %v2384
    %6942 = vmatpush1.bf16.msra.mxu0 %v2383
    %6943 = vmatprep.subr.bf16.mxu0 %v2392
    %6944 = vmatpush1.bf16.msra.mxu0 %v2391
    %6945 = vmatprep.subr.bf16.mxu0 %v2400
    %6946 = vmatpush1.bf16.msra.mxu0 %v2399
    %6947 = vmatprep.subr.bf16.mxu0 %v2408
    %6948 = vmatpush1.bf16.msra.mxu0 %v2407
    %6949 = vmatprep.subr.bf16.mxu0 %v2416
    %6950 = vmatpush1.bf16.msra.mxu0 %v2415
    %6951 = vmatprep.mubr.bf16.mxu0 %v6522
    %6952 = vmatmul.mubr.bf16.gmra.mrb[0].mxu0 %v6521
    %v6953 = vpop.f32.mrb[0].mxu0
    %v6954 = vadd.f32 0.0, %v6953
    %v6955 = vpop.f32.mrb[0].mxu0
    %v6956 = vadd.f32 0.0, %v6955
    %v6957 = vpop.f32.mrb[0].mxu0
    %v6958 = vpop.f32.mrb[0].mxu0
    %6959 = vdwg.mxu0
    %6960 = vmatprep.subr.bf16.mxu0 %v2298
    %6961 = vmatpush1.bf16.msra.mxu0 %v2297
    %6962 = vmatprep.subr.bf16.mxu0 %v2306
    %6963 = vmatpush1.bf16.msra.mxu0 %v2305
    %6964 = vmatprep.subr.bf16.mxu0 %v2314
    %6965 = vmatpush1.bf16.msra.mxu0 %v2313
    %6966 = vmatprep.subr.bf16.mxu0 %v2322
    %6967 = vmatpush1.bf16.msra.mxu0 %v2321
    %6968 = vmatprep.subr.bf16.mxu0 %v2330
    %6969 = vmatpush1.bf16.msra.mxu0 %v2329
    %6970 = vmatprep.subr.bf16.mxu0 %v2338
    %6971 = vmatpush1.bf16.msra.mxu0 %v2337
    %6972 = vmatprep.subr.bf16.mxu0 %v2346
    %6973 = vmatpush1.bf16.msra.mxu0 %v2345
    %6974 = vmatprep.subr.bf16.mxu0 %v2354
    %6975 = vmatpush1.bf16.msra.mxu0 %v2353
    %6976 = vmatprep.subr.bf16.mxu0 %v2362
    %6977 = vmatpush1.bf16.msra.mxu0 %v2361
    %6978 = vmatprep.subr.bf16.mxu0 %v2370
    %6979 = vmatpush1.bf16.msra.mxu0 %v2369
    %6980 = vmatprep.subr.bf16.mxu0 %v2378
    %6981 = vmatpush1.bf16.msra.mxu0 %v2377
    %6982 = vmatprep.subr.bf16.mxu0 %v2386
    %6983 = vmatpush1.bf16.msra.mxu0 %v2385
    %6984 = vmatprep.subr.bf16.mxu0 %v2394
    %6985 = vmatpush1.bf16.msra.mxu0 %v2393
    %6986 = vmatprep.subr.bf16.mxu0 %v2402
    %6987 = vmatpush1.bf16.msra.mxu0 %v2401
    %6988 = vmatprep.subr.bf16.mxu0 %v2410
    %6989 = vmatpush1.bf16.msra.mxu0 %v2409
    %6990 = vmatprep.subr.bf16.mxu0 %v2418
    %6991 = vmatpush1.bf16.msra.mxu0 %v2417
    %6992 = vmatprep.mubr.bf16.mxu0 %v6522
    %6993 = vmatmul.mubr.bf16.gmra.mrb[0].mxu0 %v6521
    %v6994 = vpop.f32.mrb[0].mxu0
    %v6995 = vadd.f32 0.0, %v6994
    %v6996 = vpop.f32.mrb[0].mxu0
    %v6997 = vadd.f32 0.0, %v6996
    %v6998 = vpop.f32.mrb[0].mxu0
    %v6999 = vpop.f32.mrb[0].mxu0
    %7000 = vdwg.mxu0
    %7001 = vmatprep.subr.bf16.mxu0 %v2300
    %7002 = vmatpush1.bf16.msra.mxu0 %v2299
    %7003 = vmatprep.subr.bf16.mxu0 %v2308
    %7004 = vmatpush1.bf16.msra.mxu0 %v2307
    %7005 = vmatprep.subr.bf16.mxu0 %v2316
    %7006 = vmatpush1.bf16.msra.mxu0 %v2315
    %7007 = vmatprep.subr.bf16.mxu0 %v2324
    %7008 = vmatpush1.bf16.msra.mxu0 %v2323
    %7009 = vmatprep.subr.bf16.mxu0 %v2332
    %7010 = vmatpush1.bf16.msra.mxu0 %v2331
    %7011 = vmatprep.subr.bf16.mxu0 %v2340
    %7012 = vmatpush1.bf16.msra.mxu0 %v2339
    %7013 = vmatprep.subr.bf16.mxu0 %v2348
    %7014 = vmatpush1.bf16.msra.mxu0 %v2347
    %7015 = vmatprep.subr.bf16.mxu0 %v2356
    %7016 = vmatpush1.bf16.msra.mxu0 %v2355
    %7017 = vmatprep.subr.bf16.mxu0 %v2364
    %7018 = vmatpush1.bf16.msra.mxu0 %v2363
    %7019 = vmatprep.subr.bf16.mxu0 %v2372
    %7020 = vmatpush1.bf16.msra.mxu0 %v2371
    %7021 = vmatprep.subr.bf16.mxu0 %v2380
    %7022 = vmatpush1.bf16.msra.mxu0 %v2379
    %7023 = vmatprep.subr.bf16.mxu0 %v2388
    %7024 = vmatpush1.bf16.msra.mxu0 %v2387
    %7025 = vmatprep.subr.bf16.mxu0 %v2396
    %7026 = vmatpush1.bf16.msra.mxu0 %v2395
    %7027 = vmatprep.subr.bf16.mxu0 %v2404
    %7028 = vmatpush1.bf16.msra.mxu0 %v2403
    %7029 = vmatprep.subr.bf16.mxu0 %v2412
    %7030 = vmatpush1.bf16.msra.mxu0 %v2411
    %7031 = vmatprep.subr.bf16.mxu0 %v2420
    %7032 = vmatpush1.bf16.msra.mxu0 %v2419
    %7033 = vmatprep.mubr.bf16.mxu0 %v6522
    %7034 = vmatmul.mubr.bf16.gmra.mrb[0].mxu0 %v6521
    %v7035 = vpop.f32.mrb[0].mxu0
    %v7036 = vadd.f32 0.0, %v7035
    %v7037 = vpop.f32.mrb[0].mxu0
    %v7038 = vadd.f32 0.0, %v7037
    %v7039 = vpop.f32.mrb[0].mxu0
    %v7040 = vpop.f32.mrb[0].mxu0
    %7041 = vdwg.mxu0
    %7042 = vmatprep.subr.bf16.mxu0 %v2302
    %7043 = vmatpush1.bf16.msra.mxu0 %v2301
    %7044 = vmatprep.subr.bf16.mxu0 %v2310
    %7045 = vmatpush1.bf16.msra.mxu0 %v2309
    %7046 = vmatprep.subr.bf16.mxu0 %v2318
    %7047 = vmatpush1.bf16.msra.mxu0 %v2317
    %7048 = vmatprep.subr.bf16.mxu0 %v2326
    %7049 = vmatpush1.bf16.msra.mxu0 %v2325
    %7050 = vmatprep.subr.bf16.mxu0 %v2334
    %7051 = vmatpush1.bf16.msra.mxu0 %v2333
    %7052 = vmatprep.subr.bf16.mxu0 %v2342
    %7053 = vmatpush1.bf16.msra.mxu0 %v2341
    %7054 = vmatprep.subr.bf16.mxu0 %v2350
    %7055 = vmatpush1.bf16.msra.mxu0 %v2349
    %7056 = vmatprep.subr.bf16.mxu0 %v2358
    %7057 = vmatpush1.bf16.msra.mxu0 %v2357
    %7058 = vmatprep.subr.bf16.mxu0 %v2366
    %7059 = vmatpush1.bf16.msra.mxu0 %v2365
    %7060 = vmatprep.subr.bf16.mxu0 %v2374
    %7061 = vmatpush1.bf16.msra.mxu0 %v2373
    %7062 = vmatprep.subr.bf16.mxu0 %v2382
    %7063 = vmatpush1.bf16.msra.mxu0 %v2381
    %7064 = vmatprep.subr.bf16.mxu0 %v2390
    %7065 = vmatpush1.bf16.msra.mxu0 %v2389
    %7066 = vmatprep.subr.bf16.mxu0 %v2398
    %7067 = vmatpush1.bf16.msra.mxu0 %v2397
    %7068 = vmatprep.subr.bf16.mxu0 %v2406
    %7069 = vmatpush1.bf16.msra.mxu0 %v2405
    %7070 = vmatprep.subr.bf16.mxu0 %v2414
    %7071 = vmatpush1.bf16.msra.mxu0 %v2413
    %7072 = vmatprep.subr.bf16.mxu0 %v2422
    %7073 = vmatpush1.bf16.msra.mxu0 %v2421
    %7074 = vmatprep.mubr.bf16.mxu0 %v6522
    %7075 = vmatmul.mubr.bf16.gmra.mrb[0].mxu0 %v6521
    %v7076 = vpop.f32.mrb[0].mxu0
    %v7077 = vadd.f32 0.0, %v7076
    %v7078 = vpop.f32.mrb[0].mxu0
    %v7079 = vadd.f32 0.0, %v7078
    %v7080 = vpop.f32.mrb[0].mxu0
    %v7081 = vpop.f32.mrb[0].mxu0
    %7082 = vdwg.mxu0
    %v7083 = vadd.f32 %v6911, %v6954
    %v7084 = vadd.f32 %v6912, %v6956
    %v7085 = vadd.f32 %v6913, %v6995
    %v7086 = vadd.f32 %v6914, %v6997
    %v7087 = vadd.f32 %v6915, %v7036
    %v7088 = vadd.f32 %v6916, %v7038
    %v7089 = vadd.f32 %v6917, %v7077
    %v7090 = vadd.f32 %v6918, %v7079
    %v7091 = vxor.u32 %v7083, 2147483648
    %v7092 = vxor.u32 %v7084, 2147483648
    %v7093 = vmul.f32 %v7091, 1.442695
    %v7094 = vpow.pop %v7093
    %v7095 = vmul.f32 %v7092, 1.442695
    %v7096 = vpow.pop %v7095
    %v7097 = vadd.f32 %v7094, 1.0
    %v7098 = vadd.f32 %v7096, 1.0
    %v7099 = vrcp.pop %v7097
    %v7100 = vmul.f32 1.0, %v7099
    %v7101 = vrcp.pop %v7098
    %v7102 = vmul.f32 1.0, %v7101
    %v7103 = vxor.u32 %v7085, 2147483648
    %v7104 = vxor.u32 %v7086, 2147483648
    %v7105 = vmul.f32 %v7103, 1.442695
    %v7106 = vpow.pop %v7105
    %v7107 = vmul.f32 %v7104, 1.442695
    %v7108 = vpow.pop %v7107
    %v7109 = vadd.f32 %v7106, 1.0
    %v7110 = vadd.f32 %v7108, 1.0
    %v7111 = vrcp.pop %v7109
    %v7112 = vmul.f32 1.0, %v7111
    %v7113 = vrcp.pop %v7110
    %v7114 = vmul.f32 1.0, %v7113
    %v7115 = vtanh.pop %v7087
    %v7116 = vtanh.pop %v7088
    %v7117 = vxor.u32 %v7089, 2147483648
    %v7118 = vxor.u32 %v7090, 2147483648
    %v7119 = vmul.f32 %v7117, 1.442695
    %v7120 = vpow.pop %v7119
    %v7121 = vmul.f32 %v7118, 1.442695
    %v7122 = vpow.pop %v7121
    %v7123 = vadd.f32 %v7120, 1.0
    %v7124 = vadd.f32 %v7122, 1.0
    %v7125 = vrcp.pop %v7123
    %v7126 = vmul.f32 1.0, %v7125
    %v7127 = vrcp.pop %v7124
    %v7128 = vmul.f32 1.0, %v7127
    %v7129 = vmul.f32 %v7112, %v6515
    %v7130 = vmul.f32 %v7114, %v6516
    %v7131 = vmul.f32 %v7100, %v7115
    %v7132 = vmul.f32 %v7102, %v7116
    %v7133 = vadd.f32 %v7129, %v7131
    %v7134 = vadd.f32 %v7130, %v7132
    %v7135 = vtanh.pop %v7133
    %v7136 = vtanh.pop %v7134
    %v7137 = vmul.f32 %v7126, %v7135
    %v7138 = vmul.f32 %v7128, %v7136
    %v7139 = vpack.c.bf16 %v7137, %v7137
    %v7140 = vpack.c.bf16 %v7138, %v7138
    %v7141 = vpack.c.bf16 %v6907, %v6907
    %v7142 = vpack.c.bf16 %v6908, %v6908
    %7143 = vmatprep.subr.bf16.mxu0 %v3158
    %7144 = vmatpush1.bf16.msra.mxu0 %v3157
    %7145 = vmatprep.subr.bf16.mxu0 %v3166
    %7146 = vmatpush1.bf16.msra.mxu0 %v3165
    %7147 = vmatprep.subr.bf16.mxu0 %v3174
    %7148 = vmatpush1.bf16.msra.mxu0 %v3173
    %7149 = vmatprep.subr.bf16.mxu0 %v3182
    %7150 = vmatpush1.bf16.msra.mxu0 %v3181
    %7151 = vmatprep.subr.bf16.mxu0 %v3190
    %7152 = vmatpush1.bf16.msra.mxu0 %v3189
    %7153 = vmatprep.subr.bf16.mxu0 %v3198
    %7154 = vmatpush1.bf16.msra.mxu0 %v3197
    %7155 = vmatprep.subr.bf16.mxu0 %v3206
    %7156 = vmatpush1.bf16.msra.mxu0 %v3205
    %7157 = vmatprep.subr.bf16.mxu0 %v3214
    %7158 = vmatpush1.bf16.msra.mxu0 %v3213
    %7159 = vmatprep.subr.bf16.mxu0 %v3222
    %7160 = vmatpush1.bf16.msra.mxu0 %v3221
    %7161 = vmatprep.subr.bf16.mxu0 %v3230
    %7162 = vmatpush1.bf16.msra.mxu0 %v3229
    %7163 = vmatprep.subr.bf16.mxu0 %v3238
    %7164 = vmatpush1.bf16.msra.mxu0 %v3237
    %7165 = vmatprep.subr.bf16.mxu0 %v3246
    %7166 = vmatpush1.bf16.msra.mxu0 %v3245
    %7167 = vmatprep.subr.bf16.mxu0 %v3254
    %7168 = vmatpush1.bf16.msra.mxu0 %v3253
    %7169 = vmatprep.subr.bf16.mxu0 %v3262
    %7170 = vmatpush1.bf16.msra.mxu0 %v3261
    %7171 = vmatprep.subr.bf16.mxu0 %v3270
    %7172 = vmatpush1.bf16.msra.mxu0 %v3269
    %7173 = vmatprep.subr.bf16.mxu0 %v3278
    %7174 = vmatpush1.bf16.msra.mxu0 %v3277
    %7175 = vmatprep.mubr.bf16.mxu0 %v7142
    %7176 = vmatmul.mubr.bf16.gmra.mrb[0].mxu0 %v7141
    %v7177 = vpop.f32.mrb[0].mxu0
    %v7178 = vadd.f32 0.0, %v7177
    %v7179 = vpop.f32.mrb[0].mxu0
    %v7180 = vadd.f32 0.0, %v7179
    %v7181 = vpop.f32.mrb[0].mxu0
    %v7182 = vpop.f32.mrb[0].mxu0
    %7183 = vdwg.mxu0
    %7184 = vmatprep.subr.bf16.mxu0 %v3160
    %7185 = vmatpush1.bf16.msra.mxu0 %v3159
    %7186 = vmatprep.subr.bf16.mxu0 %v3168
    %7187 = vmatpush1.bf16.msra.mxu0 %v3167
    %7188 = vmatprep.subr.bf16.mxu0 %v3176
    %7189 = vmatpush1.bf16.msra.mxu0 %v3175
    %7190 = vmatprep.subr.bf16.mxu0 %v3184
    %7191 = vmatpush1.bf16.msra.mxu0 %v3183
    %7192 = vmatprep.subr.bf16.mxu0 %v3192
    %7193 = vmatpush1.bf16.msra.mxu0 %v3191
    %7194 = vmatprep.subr.bf16.mxu0 %v3200
    %7195 = vmatpush1.bf16.msra.mxu0 %v3199
    %7196 = vmatprep.subr.bf16.mxu0 %v3208
    %7197 = vmatpush1.bf16.msra.mxu0 %v3207
    %7198 = vmatprep.subr.bf16.mxu0 %v3216
    %7199 = vmatpush1.bf16.msra.mxu0 %v3215
    %7200 = vmatprep.subr.bf16.mxu0 %v3224
    %7201 = vmatpush1.bf16.msra.mxu0 %v3223
    %7202 = vmatprep.subr.bf16.mxu0 %v3232
    %7203 = vmatpush1.bf16.msra.mxu0 %v3231
    %7204 = vmatprep.subr.bf16.mxu0 %v3240
    %7205 = vmatpush1.bf16.msra.mxu0 %v3239
    %7206 = vmatprep.subr.bf16.mxu0 %v3248
    %7207 = vmatpush1.bf16.msra.mxu0 %v3247
    %7208 = vmatprep.subr.bf16.mxu0 %v3256
    %7209 = vmatpush1.bf16.msra.mxu0 %v3255
    %7210 = vmatprep.subr.bf16.mxu0 %v3264
    %7211 = vmatpush1.bf16.msra.mxu0 %v3263
    %7212 = vmatprep.subr.bf16.mxu0 %v3272
    %7213 = vmatpush1.bf16.msra.mxu0 %v3271
    %7214 = vmatprep.subr.bf16.mxu0 %v3280
    %7215 = vmatpush1.bf16.msra.mxu0 %v3279
    %7216 = vmatprep.mubr.bf16.mxu0 %v7142
    %7217 = vmatmul.mubr.bf16.gmra.mrb[0].mxu0 %v7141
    %v7218 = vpop.f32.mrb[0].mxu0
    %v7219 = vadd.f32 0.0, %v7218
    %v7220 = vpop.f32.mrb[0].mxu0
    %v7221 = vadd.f32 0.0, %v7220
    %v7222 = vpop.f32.mrb[0].mxu0
    %v7223 = vpop.f32.mrb[0].mxu0
    %7224 = vdwg.mxu0
    %7225 = vmatprep.subr.bf16.mxu0 %v3162
    %7226 = vmatpush1.bf16.msra.mxu0 %v3161
    %7227 = vmatprep.subr.bf16.mxu0 %v3170
    %7228 = vmatpush1.bf16.msra.mxu0 %v3169
    %7229 = vmatprep.subr.bf16.mxu0 %v3178
    %7230 = vmatpush1.bf16.msra.mxu0 %v3177
    %7231 = vmatprep.subr.bf16.mxu0 %v3186
    %7232 = vmatpush1.bf16.msra.mxu0 %v3185
    %7233 = vmatprep.subr.bf16.mxu0 %v3194
    %7234 = vmatpush1.bf16.msra.mxu0 %v3193
    %7235 = vmatprep.subr.bf16.mxu0 %v3202
    %7236 = vmatpush1.bf16.msra.mxu0 %v3201
    %7237 = vmatprep.subr.bf16.mxu0 %v3210
    %7238 = vmatpush1.bf16.msra.mxu0 %v3209
    %7239 = vmatprep.subr.bf16.mxu0 %v3218
    %7240 = vmatpush1.bf16.msra.mxu0 %v3217
    %7241 = vmatprep.subr.bf16.mxu0 %v3226
    %7242 = vmatpush1.bf16.msra.mxu0 %v3225
    %7243 = vmatprep.subr.bf16.mxu0 %v3234
    %7244 = vmatpush1.bf16.msra.mxu0 %v3233
    %7245 = vmatprep.subr.bf16.mxu0 %v3242
    %7246 = vmatpush1.bf16.msra.mxu0 %v3241
    %7247 = vmatprep.subr.bf16.mxu0 %v3250
    %7248 = vmatpush1.bf16.msra.mxu0 %v3249
    %7249 = vmatprep.subr.bf16.mxu0 %v3258
    %7250 = vmatpush1.bf16.msra.mxu0 %v3257
    %7251 = vmatprep.subr.bf16.mxu0 %v3266
    %7252 = vmatpush1.bf16.msra.mxu0 %v3265
    %7253 = vmatprep.subr.bf16.mxu0 %v3274
    %7254 = vmatpush1.bf16.msra.mxu0 %v3273
    %7255 = vmatprep.subr.bf16.mxu0 %v3282
    %7256 = vmatpush1.bf16.msra.mxu0 %v3281
    %7257 = vmatprep.mubr.bf16.mxu0 %v7142
    %7258 = vmatmul.mubr.bf16.gmra.mrb[0].mxu0 %v7141
    %v7259 = vpop.f32.mrb[0].mxu0
    %v7260 = vadd.f32 0.0, %v7259
    %v7261 = vpop.f32.mrb[0].mxu0
    %v7262 = vadd.f32 0.0, %v7261
    %v7263 = vpop.f32.mrb[0].mxu0
    %v7264 = vpop.f32.mrb[0].mxu0
    %7265 = vdwg.mxu0
    %7266 = vmatprep.subr.bf16.mxu0 %v3164
    %7267 = vmatpush1.bf16.msra.mxu0 %v3163
    %7268 = vmatprep.subr.bf16.mxu0 %v3172
    %7269 = vmatpush1.bf16.msra.mxu0 %v3171
    %7270 = vmatprep.subr.bf16.mxu0 %v3180
    %7271 = vmatpush1.bf16.msra.mxu0 %v3179
    %7272 = vmatprep.subr.bf16.mxu0 %v3188
    %7273 = vmatpush1.bf16.msra.mxu0 %v3187
    %7274 = vmatprep.subr.bf16.mxu0 %v3196
    %7275 = vmatpush1.bf16.msra.mxu0 %v3195
    %7276 = vmatprep.subr.bf16.mxu0 %v3204
    %7277 = vmatpush1.bf16.msra.mxu0 %v3203
    %7278 = vmatprep.subr.bf16.mxu0 %v3212
    %7279 = vmatpush1.bf16.msra.mxu0 %v3211
    %7280 = vmatprep.subr.bf16.mxu0 %v3220
    %7281 = vmatpush1.bf16.msra.mxu0 %v3219
    %7282 = vmatprep.subr.bf16.mxu0 %v3228
    %7283 = vmatpush1.bf16.msra.mxu0 %v3227
    %7284 = vmatprep.subr.bf16.mxu0 %v3236
    %7285 = vmatpush1.bf16.msra.mxu0 %v3235
    %7286 = vmatprep.subr.bf16.mxu0 %v3244
    %7287 = vmatpush1.bf16.msra.mxu0 %v3243
    %7288 = vmatprep.subr.bf16.mxu0 %v3252
    %7289 = vmatpush1.bf16.msra.mxu0 %v3251
    %7290 = vmatprep.subr.bf16.mxu0 %v3260
    %7291 = vmatpush1.bf16.msra.mxu0 %v3259
    %7292 = vmatprep.subr.bf16.mxu0 %v3268
    %7293 = vmatpush1.bf16.msra.mxu0 %v3267
    %7294 = vmatprep.subr.bf16.mxu0 %v3276
    %7295 = vmatpush1.bf16.msra.mxu0 %v3275
    %7296 = vmatprep.subr.bf16.mxu0 %v3284
    %7297 = vmatpush1.bf16.msra.mxu0 %v3283
    %7298 = vmatprep.mubr.bf16.mxu0 %v7142
    %7299 = vmatmul.mubr.bf16.gmra.mrb[0].mxu0 %v7141
    %v7300 = vpop.f32.mrb[0].mxu0
    %v7301 = vadd.f32 0.0, %v7300
    %v7302 = vpop.f32.mrb[0].mxu0
    %v7303 = vadd.f32 0.0, %v7302
    %v7304 = vpop.f32.mrb[0].mxu0
    %v7305 = vpop.f32.mrb[0].mxu0
    %7306 = vdwg.mxu0
    %7307 = vmatprep.subr.bf16.mxu0 %v3962
    %7308 = vmatpush1.bf16.msra.mxu0 %v3961
    %7309 = vmatprep.subr.bf16.mxu0 %v3970
    %7310 = vmatpush1.bf16.msra.mxu0 %v3969
    %7311 = vmatprep.subr.bf16.mxu0 %v3978
    %7312 = vmatpush1.bf16.msra.mxu0 %v3977
    %7313 = vmatprep.subr.bf16.mxu0 %v3986
    %7314 = vmatpush1.bf16.msra.mxu0 %v3985
    %7315 = vmatprep.subr.bf16.mxu0 %v3994
    %7316 = vmatpush1.bf16.msra.mxu0 %v3993
    %7317 = vmatprep.subr.bf16.mxu0 %v4002
    %7318 = vmatpush1.bf16.msra.mxu0 %v4001
    %7319 = vmatprep.subr.bf16.mxu0 %v4010
    %7320 = vmatpush1.bf16.msra.mxu0 %v4009
    %7321 = vmatprep.subr.bf16.mxu0 %v4018
    %7322 = vmatpush1.bf16.msra.mxu0 %v4017
    %7323 = vmatprep.subr.bf16.mxu0 %v4026
    %7324 = vmatpush1.bf16.msra.mxu0 %v4025
    %7325 = vmatprep.subr.bf16.mxu0 %v4034
    %7326 = vmatpush1.bf16.msra.mxu0 %v4033
    %7327 = vmatprep.subr.bf16.mxu0 %v4042
    %7328 = vmatpush1.bf16.msra.mxu0 %v4041
    %7329 = vmatprep.subr.bf16.mxu0 %v4050
    %7330 = vmatpush1.bf16.msra.mxu0 %v4049
    %7331 = vmatprep.subr.bf16.mxu0 %v4058
    %7332 = vmatpush1.bf16.msra.mxu0 %v4057
    %7333 = vmatprep.subr.bf16.mxu0 %v4066
    %7334 = vmatpush1.bf16.msra.mxu0 %v4065
    %7335 = vmatprep.subr.bf16.mxu0 %v4074
    %7336 = vmatpush1.bf16.msra.mxu0 %v4073
    %7337 = vmatprep.subr.bf16.mxu0 %v4082
    %7338 = vmatpush1.bf16.msra.mxu0 %v4081
    %7339 = vmatprep.mubr.bf16.mxu0 %v7140
    %7340 = vmatmul.mubr.bf16.gmra.mrb[0].mxu0 %v7139
    %v7341 = vpop.f32.mrb[0].mxu0
    %v7342 = vadd.f32 %v7178, %v7341
    %v7343 = vpop.f32.mrb[0].mxu0
    %v7344 = vadd.f32 %v7180, %v7343
    %v7345 = vpop.f32.mrb[0].mxu0
    %v7346 = vpop.f32.mrb[0].mxu0
    %7347 = vdwg.mxu0
    %7348 = vmatprep.subr.bf16.mxu0 %v3964
    %7349 = vmatpush1.bf16.msra.mxu0 %v3963
    %7350 = vmatprep.subr.bf16.mxu0 %v3972
    %7351 = vmatpush1.bf16.msra.mxu0 %v3971
    %7352 = vmatprep.subr.bf16.mxu0 %v3980
    %7353 = vmatpush1.bf16.msra.mxu0 %v3979
    %7354 = vmatprep.subr.bf16.mxu0 %v3988
    %7355 = vmatpush1.bf16.msra.mxu0 %v3987
    %7356 = vmatprep.subr.bf16.mxu0 %v3996
    %7357 = vmatpush1.bf16.msra.mxu0 %v3995
    %7358 = vmatprep.subr.bf16.mxu0 %v4004
    %7359 = vmatpush1.bf16.msra.mxu0 %v4003
    %7360 = vmatprep.subr.bf16.mxu0 %v4012
    %7361 = vmatpush1.bf16.msra.mxu0 %v4011
    %7362 = vmatprep.subr.bf16.mxu0 %v4020
    %7363 = vmatpush1.bf16.msra.mxu0 %v4019
    %7364 = vmatprep.subr.bf16.mxu0 %v4028
    %7365 = vmatpush1.bf16.msra.mxu0 %v4027
    %7366 = vmatprep.subr.bf16.mxu0 %v4036
    %7367 = vmatpush1.bf16.msra.mxu0 %v4035
    %7368 = vmatprep.subr.bf16.mxu0 %v4044
    %7369 = vmatpush1.bf16.msra.mxu0 %v4043
    %7370 = vmatprep.subr.bf16.mxu0 %v4052
    %7371 = vmatpush1.bf16.msra.mxu0 %v4051
    %7372 = vmatprep.subr.bf16.mxu0 %v4060
    %7373 = vmatpush1.bf16.msra.mxu0 %v4059
    %7374 = vmatprep.subr.bf16.mxu0 %v4068
    %7375 = vmatpush1.bf16.msra.mxu0 %v4067
    %7376 = vmatprep.subr.bf16.mxu0 %v4076
    %7377 = vmatpush1.bf16.msra.mxu0 %v4075
    %7378 = vmatprep.subr.bf16.mxu0 %v4084
    %7379 = vmatpush1.bf16.msra.mxu0 %v4083
    %7380 = vmatprep.mubr.bf16.mxu0 %v7140
    %7381 = vmatmul.mubr.bf16.gmra.mrb[0].mxu0 %v7139
    %v7382 = vpop.f32.mrb[0].mxu0
    %v7383 = vadd.f32 %v7219, %v7382
    %v7384 = vpop.f32.mrb[0].mxu0
    %v7385 = vadd.f32 %v7221, %v7384
    %v7386 = vpop.f32.mrb[0].mxu0
    %v7387 = vpop.f32.mrb[0].mxu0
    %7388 = vdwg.mxu0
    %7389 = vmatprep.subr.bf16.mxu0 %v3966
    %7390 = vmatpush1.bf16.msra.mxu0 %v3965
    %7391 = vmatprep.subr.bf16.mxu0 %v3974
    %7392 = vmatpush1.bf16.msra.mxu0 %v3973
    %7393 = vmatprep.subr.bf16.mxu0 %v3982
    %7394 = vmatpush1.bf16.msra.mxu0 %v3981
    %7395 = vmatprep.subr.bf16.mxu0 %v3990
    %7396 = vmatpush1.bf16.msra.mxu0 %v3989
    %7397 = vmatprep.subr.bf16.mxu0 %v3998
    %7398 = vmatpush1.bf16.msra.mxu0 %v3997
    %7399 = vmatprep.subr.bf16.mxu0 %v4006
    %7400 = vmatpush1.bf16.msra.mxu0 %v4005
    %7401 = vmatprep.subr.bf16.mxu0 %v4014
    %7402 = vmatpush1.bf16.msra.mxu0 %v4013
    %7403 = vmatprep.subr.bf16.mxu0 %v4022
    %7404 = vmatpush1.bf16.msra.mxu0 %v4021
    %7405 = vmatprep.subr.bf16.mxu0 %v4030
    %7406 = vmatpush1.bf16.msra.mxu0 %v4029
    %7407 = vmatprep.subr.bf16.mxu0 %v4038
    %7408 = vmatpush1.bf16.msra.mxu0 %v4037
    %7409 = vmatprep.subr.bf16.mxu0 %v4046
    %7410 = vmatpush1.bf16.msra.mxu0 %v4045
    %7411 = vmatprep.subr.bf16.mxu0 %v4054
    %7412 = vmatpush1.bf16.msra.mxu0 %v4053
    %7413 = vmatprep.subr.bf16.mxu0 %v4062
    %7414 = vmatpush1.bf16.msra.mxu0 %v4061
    %7415 = vmatprep.subr.bf16.mxu0 %v4070
    %7416 = vmatpush1.bf16.msra.mxu0 %v4069
    %7417 = vmatprep.subr.bf16.mxu0 %v4078
    %7418 = vmatpush1.bf16.msra.mxu0 %v4077
    %7419 = vmatprep.subr.bf16.mxu0 %v4086
    %7420 = vmatpush1.bf16.msra.mxu0 %v4085
    %7421 = vmatprep.mubr.bf16.mxu0 %v7140
    %7422 = vmatmul.mubr.bf16.gmra.mrb[0].mxu0 %v7139
    %v7423 = vpop.f32.mrb[0].mxu0
    %v7424 = vadd.f32 %v7260, %v7423
    %v7425 = vpop.f32.mrb[0].mxu0
    %v7426 = vadd.f32 %v7262, %v7425
    %v7427 = vpop.f32.mrb[0].mxu0
    %v7428 = vpop.f32.mrb[0].mxu0
    %7429 = vdwg.mxu0
    %7430 = vmatprep.subr.bf16.mxu0 %v3968
    %7431 = vmatpush1.bf16.msra.mxu0 %v3967
    %7432 = vmatprep.subr.bf16.mxu0 %v3976
    %7433 = vmatpush1.bf16.msra.mxu0 %v3975
    %7434 = vmatprep.subr.bf16.mxu0 %v3984
    %7435 = vmatpush1.bf16.msra.mxu0 %v3983
    %7436 = vmatprep.subr.bf16.mxu0 %v3992
    %7437 = vmatpush1.bf16.msra.mxu0 %v3991
    %7438 = vmatprep.subr.bf16.mxu0 %v4000
    %7439 = vmatpush1.bf16.msra.mxu0 %v3999
    %7440 = vmatprep.subr.bf16.mxu0 %v4008
    %7441 = vmatpush1.bf16.msra.mxu0 %v4007
    %7442 = vmatprep.subr.bf16.mxu0 %v4016
    %7443 = vmatpush1.bf16.msra.mxu0 %v4015
    %7444 = vmatprep.subr.bf16.mxu0 %v4024
    %7445 = vmatpush1.bf16.msra.mxu0 %v4023
    %7446 = vmatprep.subr.bf16.mxu0 %v4032
    %7447 = vmatpush1.bf16.msra.mxu0 %v4031
    %7448 = vmatprep.subr.bf16.mxu0 %v4040
    %7449 = vmatpush1.bf16.msra.mxu0 %v4039
    %7450 = vmatprep.subr.bf16.mxu0 %v4048
    %7451 = vmatpush1.bf16.msra.mxu0 %v4047
    %7452 = vmatprep.subr.bf16.mxu0 %v4056
    %7453 = vmatpush1.bf16.msra.mxu0 %v4055
    %7454 = vmatprep.subr.bf16.mxu0 %v4064
    %7455 = vmatpush1.bf16.msra.mxu0 %v4063
    %7456 = vmatprep.subr.bf16.mxu0 %v4072
    %7457 = vmatpush1.bf16.msra.mxu0 %v4071
    %7458 = vmatprep.subr.bf16.mxu0 %v4080
    %7459 = vmatpush1.bf16.msra.mxu0 %v4079
    %7460 = vmatprep.subr.bf16.mxu0 %v4088
    %7461 = vmatpush1.bf16.msra.mxu0 %v4087
    %7462 = vmatprep.mubr.bf16.mxu0 %v7140
    %7463 = vmatmul.mubr.bf16.gmra.mrb[0].mxu0 %v7139
    %v7464 = vpop.f32.mrb[0].mxu0
    %v7465 = vadd.f32 %v7301, %v7464
    %v7466 = vpop.f32.mrb[0].mxu0
    %v7467 = vadd.f32 %v7303, %v7466
    %v7468 = vpop.f32.mrb[0].mxu0
    %v7469 = vpop.f32.mrb[0].mxu0
    %7470 = vdwg.mxu0
    %v7471 = vadd.f32 %v7342, %v1866
    %v7472 = vadd.f32 %v7344, %v1870
    %v7473 = vadd.f32 %v7383, %v1874
    %v7474 = vadd.f32 %v7385, %v1878
    %v7475 = vadd.f32 %v7424, %v1882
    %v7476 = vadd.f32 %v7426, %v1886
    %v7477 = vadd.f32 %v7465, %v1890
    %v7478 = vadd.f32 %v7467, %v1894
    %v7479 = vxor.u32 %v7471, 2147483648
    %v7480 = vxor.u32 %v7472, 2147483648
    %v7481 = vmul.f32 %v7479, 1.442695
    %v7482 = vpow.pop %v7481
    %v7483 = vmul.f32 %v7480, 1.442695
    %v7484 = vpow.pop %v7483
    %v7485 = vadd.f32 %v7482, 1.0
    %v7486 = vadd.f32 %v7484, 1.0
    %v7487 = vrcp.pop %v7485
    %v7488 = vmul.f32 1.0, %v7487
    %v7489 = vrcp.pop %v7486
    %v7490 = vmul.f32 1.0, %v7489
    %v7491 = vxor.u32 %v7473, 2147483648
    %v7492 = vxor.u32 %v7474, 2147483648
    %v7493 = vmul.f32 %v7491, 1.442695
    %v7494 = vpow.pop %v7493
    %v7495 = vmul.f32 %v7492, 1.442695
    %v7496 = vpow.pop %v7495
    %v7497 = vadd.f32 %v7494, 1.0
    %v7498 = vadd.f32 %v7496, 1.0
    %v7499 = vrcp.pop %v7497
    %v7500 = vmul.f32 1.0, %v7499
    %v7501 = vrcp.pop %v7498
    %v7502 = vmul.f32 1.0, %v7501
    %v7503 = vtanh.pop %v7475
    %v7504 = vtanh.pop %v7476
    %v7505 = vxor.u32 %v7477, 2147483648
    %v7506 = vxor.u32 %v7478, 2147483648
    %v7507 = vmul.f32 %v7505, 1.442695
    %v7508 = vpow.pop %v7507
    %v7509 = vmul.f32 %v7506, 1.442695
    %v7510 = vpow.pop %v7509
    %v7511 = vadd.f32 %v7508, 1.0
    %v7512 = vadd.f32 %v7510, 1.0
    %v7513 = vrcp.pop %v7511
    %v7514 = vmul.f32 1.0, %v7513
    %v7515 = vrcp.pop %v7512
    %v7516 = vmul.f32 1.0, %v7515
    %v7517 = vmul.f32 %v7500, %v6903
    %v7518 = vmul.f32 %v7502, %v6904
    %v7519 = vmul.f32 %v7488, %v7503
    %v7520 = vmul.f32 %v7490, %v7504
    %v7521 = vadd.f32 %v7517, %v7519
    %v7522 = vadd.f32 %v7518, %v7520
    %v7523 = vtanh.pop %v7521
    %v7524 = vtanh.pop %v7522
    %v7525 = vmul.f32 %v7514, %v7523
    %v7526 = vmul.f32 %v7516, %v7524
    %7527 = vst [vmem:[#allocation3 + $0x50] sm:$0xff] %v7525
    %7528 = vst [vmem:[#allocation3 + $0x58] sm:$0xff] %v7526
    %v7529 = vld [vmem:[#allocation2 + $0x180] sm:$0xff]
    %v7530 = vld [vmem:[#allocation2 + $0x188] sm:$0xff]
    %v7531 = vld [vmem:[#allocation2 + $0x190] sm:$0xff]
    %v7532 = vld [vmem:[#allocation2 + $0x198] sm:$0xff]
    %v7533 = vld [vmem:[#allocation2 + $0x1a0] sm:$0xff]
    %v7534 = vld [vmem:[#allocation2 + $0x1a8] sm:$0xff]
    %v7535 = vld [vmem:[#allocation2 + $0x1b0] sm:$0xff]
    %v7536 = vld [vmem:[#allocation2 + $0x1b8] sm:$0xff]
    %7537 = vmatprep.subr.bf16.mxu0 %v2296
    %7538 = vmatpush1.bf16.msra.mxu0 %v2295
    %7539 = vmatprep.subr.bf16.mxu0 %v2304
    %7540 = vmatpush1.bf16.msra.mxu0 %v2303
    %7541 = vmatprep.subr.bf16.mxu0 %v2312
    %7542 = vmatpush1.bf16.msra.mxu0 %v2311
    %7543 = vmatprep.subr.bf16.mxu0 %v2320
    %7544 = vmatpush1.bf16.msra.mxu0 %v2319
    %7545 = vmatprep.subr.bf16.mxu0 %v2328
    %7546 = vmatpush1.bf16.msra.mxu0 %v2327
    %7547 = vmatprep.subr.bf16.mxu0 %v2336
    %7548 = vmatpush1.bf16.msra.mxu0 %v2335
    %7549 = vmatprep.subr.bf16.mxu0 %v2344
    %7550 = vmatpush1.bf16.msra.mxu0 %v2343
    %7551 = vmatprep.subr.bf16.mxu0 %v2352
    %7552 = vmatpush1.bf16.msra.mxu0 %v2351
    %7553 = vmatprep.subr.bf16.mxu0 %v2360
    %7554 = vmatpush1.bf16.msra.mxu0 %v2359
    %7555 = vmatprep.subr.bf16.mxu0 %v2368
    %7556 = vmatpush1.bf16.msra.mxu0 %v2367
    %7557 = vmatprep.subr.bf16.mxu0 %v2376
    %7558 = vmatpush1.bf16.msra.mxu0 %v2375
    %7559 = vmatprep.subr.bf16.mxu0 %v2384
    %7560 = vmatpush1.bf16.msra.mxu0 %v2383
    %7561 = vmatprep.subr.bf16.mxu0 %v2392
    %7562 = vmatpush1.bf16.msra.mxu0 %v2391
    %7563 = vmatprep.subr.bf16.mxu0 %v2400
    %7564 = vmatpush1.bf16.msra.mxu0 %v2399
    %7565 = vmatprep.subr.bf16.mxu0 %v2408
    %7566 = vmatpush1.bf16.msra.mxu0 %v2407
    %7567 = vmatprep.subr.bf16.mxu0 %v2416
    %7568 = vmatpush1.bf16.msra.mxu0 %v2415
    %7569 = vmatprep.mubr.bf16.mxu0 %v7140
    %7570 = vmatmul.mubr.bf16.gmra.mrb[0].mxu0 %v7139
    %v7571 = vpop.f32.mrb[0].mxu0
    %v7572 = vadd.f32 0.0, %v7571
    %v7573 = vpop.f32.mrb[0].mxu0
    %v7574 = vadd.f32 0.0, %v7573
    %v7575 = vpop.f32.mrb[0].mxu0
    %v7576 = vpop.f32.mrb[0].mxu0
    %7577 = vdwg.mxu0
    %7578 = vmatprep.subr.bf16.mxu0 %v2298
    %7579 = vmatpush1.bf16.msra.mxu0 %v2297
    %7580 = vmatprep.subr.bf16.mxu0 %v2306
    %7581 = vmatpush1.bf16.msra.mxu0 %v2305
    %7582 = vmatprep.subr.bf16.mxu0 %v2314
    %7583 = vmatpush1.bf16.msra.mxu0 %v2313
    %7584 = vmatprep.subr.bf16.mxu0 %v2322
    %7585 = vmatpush1.bf16.msra.mxu0 %v2321
    %7586 = vmatprep.subr.bf16.mxu0 %v2330
    %7587 = vmatpush1.bf16.msra.mxu0 %v2329
    %7588 = vmatprep.subr.bf16.mxu0 %v2338
    %7589 = vmatpush1.bf16.msra.mxu0 %v2337
    %7590 = vmatprep.subr.bf16.mxu0 %v2346
    %7591 = vmatpush1.bf16.msra.mxu0 %v2345
    %7592 = vmatprep.subr.bf16.mxu0 %v2354
    %7593 = vmatpush1.bf16.msra.mxu0 %v2353
    %7594 = vmatprep.subr.bf16.mxu0 %v2362
    %7595 = vmatpush1.bf16.msra.mxu0 %v2361
    %7596 = vmatprep.subr.bf16.mxu0 %v2370
    %7597 = vmatpush1.bf16.msra.mxu0 %v2369
    %7598 = vmatprep.subr.bf16.mxu0 %v2378
    %7599 = vmatpush1.bf16.msra.mxu0 %v2377
    %7600 = vmatprep.subr.bf16.mxu0 %v2386
    %7601 = vmatpush1.bf16.msra.mxu0 %v2385
    %7602 = vmatprep.subr.bf16.mxu0 %v2394
    %7603 = vmatpush1.bf16.msra.mxu0 %v2393
    %7604 = vmatprep.subr.bf16.mxu0 %v2402
    %7605 = vmatpush1.bf16.msra.mxu0 %v2401
    %7606 = vmatprep.subr.bf16.mxu0 %v2410
    %7607 = vmatpush1.bf16.msra.mxu0 %v2409
    %7608 = vmatprep.subr.bf16.mxu0 %v2418
    %7609 = vmatpush1.bf16.msra.mxu0 %v2417
    %7610 = vmatprep.mubr.bf16.mxu0 %v7140
    %7611 = vmatmul.mubr.bf16.gmra.mrb[0].mxu0 %v7139
    %v7612 = vpop.f32.mrb[0].mxu0
    %v7613 = vadd.f32 0.0, %v7612
    %v7614 = vpop.f32.mrb[0].mxu0
    %v7615 = vadd.f32 0.0, %v7614
    %v7616 = vpop.f32.mrb[0].mxu0
    %v7617 = vpop.f32.mrb[0].mxu0
    %7618 = vdwg.mxu0
    %7619 = vmatprep.subr.bf16.mxu0 %v2300
    %7620 = vmatpush1.bf16.msra.mxu0 %v2299
    %7621 = vmatprep.subr.bf16.mxu0 %v2308
    %7622 = vmatpush1.bf16.msra.mxu0 %v2307
    %7623 = vmatprep.subr.bf16.mxu0 %v2316
    %7624 = vmatpush1.bf16.msra.mxu0 %v2315
    %7625 = vmatprep.subr.bf16.mxu0 %v2324
    %7626 = vmatpush1.bf16.msra.mxu0 %v2323
    %7627 = vmatprep.subr.bf16.mxu0 %v2332
    %7628 = vmatpush1.bf16.msra.mxu0 %v2331
    %7629 = vmatprep.subr.bf16.mxu0 %v2340
    %7630 = vmatpush1.bf16.msra.mxu0 %v2339
    %7631 = vmatprep.subr.bf16.mxu0 %v2348
    %7632 = vmatpush1.bf16.msra.mxu0 %v2347
    %7633 = vmatprep.subr.bf16.mxu0 %v2356
    %7634 = vmatpush1.bf16.msra.mxu0 %v2355
    %7635 = vmatprep.subr.bf16.mxu0 %v2364
    %7636 = vmatpush1.bf16.msra.mxu0 %v2363
    %7637 = vmatprep.subr.bf16.mxu0 %v2372
    %7638 = vmatpush1.bf16.msra.mxu0 %v2371
    %7639 = vmatprep.subr.bf16.mxu0 %v2380
    %7640 = vmatpush1.bf16.msra.mxu0 %v2379
    %7641 = vmatprep.subr.bf16.mxu0 %v2388
    %7642 = vmatpush1.bf16.msra.mxu0 %v2387
    %7643 = vmatprep.subr.bf16.mxu0 %v2396
    %7644 = vmatpush1.bf16.msra.mxu0 %v2395
    %7645 = vmatprep.subr.bf16.mxu0 %v2404
    %7646 = vmatpush1.bf16.msra.mxu0 %v2403
    %7647 = vmatprep.subr.bf16.mxu0 %v2412
    %7648 = vmatpush1.bf16.msra.mxu0 %v2411
    %7649 = vmatprep.subr.bf16.mxu0 %v2420
    %7650 = vmatpush1.bf16.msra.mxu0 %v2419
    %7651 = vmatprep.mubr.bf16.mxu0 %v7140
    %7652 = vmatmul.mubr.bf16.gmra.mrb[0].mxu0 %v7139
    %v7653 = vpop.f32.mrb[0].mxu0
    %v7654 = vadd.f32 0.0, %v7653
    %v7655 = vpop.f32.mrb[0].mxu0
    %v7656 = vadd.f32 0.0, %v7655
    %v7657 = vpop.f32.mrb[0].mxu0
    %v7658 = vpop.f32.mrb[0].mxu0
    %7659 = vdwg.mxu0
    %7660 = vmatprep.subr.bf16.mxu0 %v2302
    %7661 = vmatpush1.bf16.msra.mxu0 %v2301
    %7662 = vmatprep.subr.bf16.mxu0 %v2310
    %7663 = vmatpush1.bf16.msra.mxu0 %v2309
    %7664 = vmatprep.subr.bf16.mxu0 %v2318
    %7665 = vmatpush1.bf16.msra.mxu0 %v2317
    %7666 = vmatprep.subr.bf16.mxu0 %v2326
    %7667 = vmatpush1.bf16.msra.mxu0 %v2325
    %7668 = vmatprep.subr.bf16.mxu0 %v2334
    %7669 = vmatpush1.bf16.msra.mxu0 %v2333
    %7670 = vmatprep.subr.bf16.mxu0 %v2342
    %7671 = vmatpush1.bf16.msra.mxu0 %v2341
    %7672 = vmatprep.subr.bf16.mxu0 %v2350
    %7673 = vmatpush1.bf16.msra.mxu0 %v2349
    %7674 = vmatprep.subr.bf16.mxu0 %v2358
    %7675 = vmatpush1.bf16.msra.mxu0 %v2357
    %7676 = vmatprep.subr.bf16.mxu0 %v2366
    %7677 = vmatpush1.bf16.msra.mxu0 %v2365
    %7678 = vmatprep.subr.bf16.mxu0 %v2374
    %7679 = vmatpush1.bf16.msra.mxu0 %v2373
    %7680 = vmatprep.subr.bf16.mxu0 %v2382
    %7681 = vmatpush1.bf16.msra.mxu0 %v2381
    %7682 = vmatprep.subr.bf16.mxu0 %v2390
    %7683 = vmatpush1.bf16.msra.mxu0 %v2389
    %7684 = vmatprep.subr.bf16.mxu0 %v2398
    %7685 = vmatpush1.bf16.msra.mxu0 %v2397
    %7686 = vmatprep.subr.bf16.mxu0 %v2406
    %7687 = vmatpush1.bf16.msra.mxu0 %v2405
    %7688 = vmatprep.subr.bf16.mxu0 %v2414
    %7689 = vmatpush1.bf16.msra.mxu0 %v2413
    %7690 = vmatprep.subr.bf16.mxu0 %v2422
    %7691 = vmatpush1.bf16.msra.mxu0 %v2421
    %7692 = vmatprep.mubr.bf16.mxu0 %v7140
    %7693 = vmatmul.mubr.bf16.gmra.mrb[0].mxu0 %v7139
    %v7694 = vpop.f32.mrb[0].mxu0
    %v7695 = vadd.f32 0.0, %v7694
    %v7696 = vpop.f32.mrb[0].mxu0
    %v7697 = vadd.f32 0.0, %v7696
    %v7698 = vpop.f32.mrb[0].mxu0
    %v7699 = vpop.f32.mrb[0].mxu0
    %7700 = vdwg.mxu0
    %v7701 = vadd.f32 %v7529, %v7572
    %v7702 = vadd.f32 %v7530, %v7574
    %v7703 = vadd.f32 %v7531, %v7613
    %v7704 = vadd.f32 %v7532, %v7615
    %v7705 = vadd.f32 %v7533, %v7654
    %v7706 = vadd.f32 %v7534, %v7656
    %v7707 = vadd.f32 %v7535, %v7695
    %v7708 = vadd.f32 %v7536, %v7697
    %v7709 = vxor.u32 %v7701, 2147483648
    %v7710 = vxor.u32 %v7702, 2147483648
    %v7711 = vmul.f32 %v7709, 1.442695
    %v7712 = vpow.pop %v7711
    %v7713 = vmul.f32 %v7710, 1.442695
    %v7714 = vpow.pop %v7713
    %v7715 = vadd.f32 %v7712, 1.0
    %v7716 = vadd.f32 %v7714, 1.0
    %v7717 = vrcp.pop %v7715
    %v7718 = vmul.f32 1.0, %v7717
    %v7719 = vrcp.pop %v7716
    %v7720 = vmul.f32 1.0, %v7719
    %v7721 = vxor.u32 %v7703, 2147483648
    %v7722 = vxor.u32 %v7704, 2147483648
    %v7723 = vmul.f32 %v7721, 1.442695
    %v7724 = vpow.pop %v7723
    %v7725 = vmul.f32 %v7722, 1.442695
    %v7726 = vpow.pop %v7725
    %v7727 = vadd.f32 %v7724, 1.0
    %v7728 = vadd.f32 %v7726, 1.0
    %v7729 = vrcp.pop %v7727
    %v7730 = vmul.f32 1.0, %v7729
    %v7731 = vrcp.pop %v7728
    %v7732 = vmul.f32 1.0, %v7731
    %v7733 = vtanh.pop %v7705
    %v7734 = vtanh.pop %v7706
    %v7735 = vxor.u32 %v7707, 2147483648
    %v7736 = vxor.u32 %v7708, 2147483648
    %v7737 = vmul.f32 %v7735, 1.442695
    %v7738 = vpow.pop %v7737
    %v7739 = vmul.f32 %v7736, 1.442695
    %v7740 = vpow.pop %v7739
    %v7741 = vadd.f32 %v7738, 1.0
    %v7742 = vadd.f32 %v7740, 1.0
    %v7743 = vrcp.pop %v7741
    %v7744 = vmul.f32 1.0, %v7743
    %v7745 = vrcp.pop %v7742
    %v7746 = vmul.f32 1.0, %v7745
    %v7747 = vmul.f32 %v7730, %v7133
    %v7748 = vmul.f32 %v7732, %v7134
    %v7749 = vmul.f32 %v7718, %v7733
    %v7750 = vmul.f32 %v7720, %v7734
    %v7751 = vadd.f32 %v7747, %v7749
    %v7752 = vadd.f32 %v7748, %v7750
    %v7753 = vtanh.pop %v7751
    %v7754 = vtanh.pop %v7752
    %v7755 = vmul.f32 %v7744, %v7753
    %v7756 = vmul.f32 %v7746, %v7754
    %v7757 = vpack.c.bf16 %v7755, %v7755
    %v7758 = vpack.c.bf16 %v7756, %v7756
    %v7759 = vpack.c.bf16 %v7525, %v7525
    %v7760 = vpack.c.bf16 %v7526, %v7526
    %7761 = vmatprep.subr.bf16.mxu0 %v3158
    %7762 = vmatpush1.bf16.msra.mxu0 %v3157
    %7763 = vmatprep.subr.bf16.mxu0 %v3166
    %7764 = vmatpush1.bf16.msra.mxu0 %v3165
    %7765 = vmatprep.subr.bf16.mxu0 %v3174
    %7766 = vmatpush1.bf16.msra.mxu0 %v3173
    %7767 = vmatprep.subr.bf16.mxu0 %v3182
    %7768 = vmatpush1.bf16.msra.mxu0 %v3181
    %7769 = vmatprep.subr.bf16.mxu0 %v3190
    %7770 = vmatpush1.bf16.msra.mxu0 %v3189
    %7771 = vmatprep.subr.bf16.mxu0 %v3198
    %7772 = vmatpush1.bf16.msra.mxu0 %v3197
    %7773 = vmatprep.subr.bf16.mxu0 %v3206
    %7774 = vmatpush1.bf16.msra.mxu0 %v3205
    %7775 = vmatprep.subr.bf16.mxu0 %v3214
    %7776 = vmatpush1.bf16.msra.mxu0 %v3213
    %7777 = vmatprep.subr.bf16.mxu0 %v3222
    %7778 = vmatpush1.bf16.msra.mxu0 %v3221
    %7779 = vmatprep.subr.bf16.mxu0 %v3230
    %7780 = vmatpush1.bf16.msra.mxu0 %v3229
    %7781 = vmatprep.subr.bf16.mxu0 %v3238
    %7782 = vmatpush1.bf16.msra.mxu0 %v3237
    %7783 = vmatprep.subr.bf16.mxu0 %v3246
    %7784 = vmatpush1.bf16.msra.mxu0 %v3245
    %7785 = vmatprep.subr.bf16.mxu0 %v3254
    %7786 = vmatpush1.bf16.msra.mxu0 %v3253
    %7787 = vmatprep.subr.bf16.mxu0 %v3262
    %7788 = vmatpush1.bf16.msra.mxu0 %v3261
    %7789 = vmatprep.subr.bf16.mxu0 %v3270
    %7790 = vmatpush1.bf16.msra.mxu0 %v3269
    %7791 = vmatprep.subr.bf16.mxu0 %v3278
    %7792 = vmatpush1.bf16.msra.mxu0 %v3277
    %7793 = vmatprep.mubr.bf16.mxu0 %v7760
    %7794 = vmatmul.mubr.bf16.gmra.mrb[0].mxu0 %v7759
    %v7795 = vpop.f32.mrb[0].mxu0
    %v7796 = vadd.f32 0.0, %v7795
    %v7797 = vpop.f32.mrb[0].mxu0
    %v7798 = vadd.f32 0.0, %v7797
    %v7799 = vpop.f32.mrb[0].mxu0
    %v7800 = vpop.f32.mrb[0].mxu0
    %7801 = vdwg.mxu0
    %7802 = vmatprep.subr.bf16.mxu0 %v3160
    %7803 = vmatpush1.bf16.msra.mxu0 %v3159
    %7804 = vmatprep.subr.bf16.mxu0 %v3168
    %7805 = vmatpush1.bf16.msra.mxu0 %v3167
    %7806 = vmatprep.subr.bf16.mxu0 %v3176
    %7807 = vmatpush1.bf16.msra.mxu0 %v3175
    %7808 = vmatprep.subr.bf16.mxu0 %v3184
    %7809 = vmatpush1.bf16.msra.mxu0 %v3183
    %7810 = vmatprep.subr.bf16.mxu0 %v3192
    %7811 = vmatpush1.bf16.msra.mxu0 %v3191
    %7812 = vmatprep.subr.bf16.mxu0 %v3200
    %7813 = vmatpush1.bf16.msra.mxu0 %v3199
    %7814 = vmatprep.subr.bf16.mxu0 %v3208
    %7815 = vmatpush1.bf16.msra.mxu0 %v3207
    %7816 = vmatprep.subr.bf16.mxu0 %v3216
    %7817 = vmatpush1.bf16.msra.mxu0 %v3215
    %7818 = vmatprep.subr.bf16.mxu0 %v3224
    %7819 = vmatpush1.bf16.msra.mxu0 %v3223
    %7820 = vmatprep.subr.bf16.mxu0 %v3232
    %7821 = vmatpush1.bf16.msra.mxu0 %v3231
    %7822 = vmatprep.subr.bf16.mxu0 %v3240
    %7823 = vmatpush1.bf16.msra.mxu0 %v3239
    %7824 = vmatprep.subr.bf16.mxu0 %v3248
    %7825 = vmatpush1.bf16.msra.mxu0 %v3247
    %7826 = vmatprep.subr.bf16.mxu0 %v3256
    %7827 = vmatpush1.bf16.msra.mxu0 %v3255
    %7828 = vmatprep.subr.bf16.mxu0 %v3264
    %7829 = vmatpush1.bf16.msra.mxu0 %v3263
    %7830 = vmatprep.subr.bf16.mxu0 %v3272
    %7831 = vmatpush1.bf16.msra.mxu0 %v3271
    %7832 = vmatprep.subr.bf16.mxu0 %v3280
    %7833 = vmatpush1.bf16.msra.mxu0 %v3279
    %7834 = vmatprep.mubr.bf16.mxu0 %v7760
    %7835 = vmatmul.mubr.bf16.gmra.mrb[0].mxu0 %v7759
    %v7836 = vpop.f32.mrb[0].mxu0
    %v7837 = vadd.f32 0.0, %v7836
    %v7838 = vpop.f32.mrb[0].mxu0
    %v7839 = vadd.f32 0.0, %v7838
    %v7840 = vpop.f32.mrb[0].mxu0
    %v7841 = vpop.f32.mrb[0].mxu0
    %7842 = vdwg.mxu0
    %7843 = vmatprep.subr.bf16.mxu0 %v3162
    %7844 = vmatpush1.bf16.msra.mxu0 %v3161
    %7845 = vmatprep.subr.bf16.mxu0 %v3170
    %7846 = vmatpush1.bf16.msra.mxu0 %v3169
    %7847 = vmatprep.subr.bf16.mxu0 %v3178
    %7848 = vmatpush1.bf16.msra.mxu0 %v3177
    %7849 = vmatprep.subr.bf16.mxu0 %v3186
    %7850 = vmatpush1.bf16.msra.mxu0 %v3185
    %7851 = vmatprep.subr.bf16.mxu0 %v3194
    %7852 = vmatpush1.bf16.msra.mxu0 %v3193
    %7853 = vmatprep.subr.bf16.mxu0 %v3202
    %7854 = vmatpush1.bf16.msra.mxu0 %v3201
    %7855 = vmatprep.subr.bf16.mxu0 %v3210
    %7856 = vmatpush1.bf16.msra.mxu0 %v3209
    %7857 = vmatprep.subr.bf16.mxu0 %v3218
    %7858 = vmatpush1.bf16.msra.mxu0 %v3217
    %7859 = vmatprep.subr.bf16.mxu0 %v3226
    %7860 = vmatpush1.bf16.msra.mxu0 %v3225
    %7861 = vmatprep.subr.bf16.mxu0 %v3234
    %7862 = vmatpush1.bf16.msra.mxu0 %v3233
    %7863 = vmatprep.subr.bf16.mxu0 %v3242
    %7864 = vmatpush1.bf16.msra.mxu0 %v3241
    %7865 = vmatprep.subr.bf16.mxu0 %v3250
    %7866 = vmatpush1.bf16.msra.mxu0 %v3249
    %7867 = vmatprep.subr.bf16.mxu0 %v3258
    %7868 = vmatpush1.bf16.msra.mxu0 %v3257
    %7869 = vmatprep.subr.bf16.mxu0 %v3266
    %7870 = vmatpush1.bf16.msra.mxu0 %v3265
    %7871 = vmatprep.subr.bf16.mxu0 %v3274
    %7872 = vmatpush1.bf16.msra.mxu0 %v3273
    %7873 = vmatprep.subr.bf16.mxu0 %v3282
    %7874 = vmatpush1.bf16.msra.mxu0 %v3281
    %7875 = vmatprep.mubr.bf16.mxu0 %v7760
    %7876 = vmatmul.mubr.bf16.gmra.mrb[0].mxu0 %v7759
    %v7877 = vpop.f32.mrb[0].mxu0
    %v7878 = vadd.f32 0.0, %v7877
    %v7879 = vpop.f32.mrb[0].mxu0
    %v7880 = vadd.f32 0.0, %v7879
    %v7881 = vpop.f32.mrb[0].mxu0
    %v7882 = vpop.f32.mrb[0].mxu0
    %7883 = vdwg.mxu0
    %7884 = vmatprep.subr.bf16.mxu0 %v3164
    %7885 = vmatpush1.bf16.msra.mxu0 %v3163
    %7886 = vmatprep.subr.bf16.mxu0 %v3172
    %7887 = vmatpush1.bf16.msra.mxu0 %v3171
    %7888 = vmatprep.subr.bf16.mxu0 %v3180
    %7889 = vmatpush1.bf16.msra.mxu0 %v3179
    %7890 = vmatprep.subr.bf16.mxu0 %v3188
    %7891 = vmatpush1.bf16.msra.mxu0 %v3187
    %7892 = vmatprep.subr.bf16.mxu0 %v3196
    %7893 = vmatpush1.bf16.msra.mxu0 %v3195
    %7894 = vmatprep.subr.bf16.mxu0 %v3204
    %7895 = vmatpush1.bf16.msra.mxu0 %v3203
    %7896 = vmatprep.subr.bf16.mxu0 %v3212
    %7897 = vmatpush1.bf16.msra.mxu0 %v3211
    %7898 = vmatprep.subr.bf16.mxu0 %v3220
    %7899 = vmatpush1.bf16.msra.mxu0 %v3219
    %7900 = vmatprep.subr.bf16.mxu0 %v3228
    %7901 = vmatpush1.bf16.msra.mxu0 %v3227
    %7902 = vmatprep.subr.bf16.mxu0 %v3236
    %7903 = vmatpush1.bf16.msra.mxu0 %v3235
    %7904 = vmatprep.subr.bf16.mxu0 %v3244
    %7905 = vmatpush1.bf16.msra.mxu0 %v3243
    %7906 = vmatprep.subr.bf16.mxu0 %v3252
    %7907 = vmatpush1.bf16.msra.mxu0 %v3251
    %7908 = vmatprep.subr.bf16.mxu0 %v3260
    %7909 = vmatpush1.bf16.msra.mxu0 %v3259
    %7910 = vmatprep.subr.bf16.mxu0 %v3268
    %7911 = vmatpush1.bf16.msra.mxu0 %v3267
    %7912 = vmatprep.subr.bf16.mxu0 %v3276
    %7913 = vmatpush1.bf16.msra.mxu0 %v3275
    %7914 = vmatprep.subr.bf16.mxu0 %v3284
    %7915 = vmatpush1.bf16.msra.mxu0 %v3283
    %7916 = vmatprep.mubr.bf16.mxu0 %v7760
    %7917 = vmatmul.mubr.bf16.gmra.mrb[0].mxu0 %v7759
    %v7918 = vpop.f32.mrb[0].mxu0
    %v7919 = vadd.f32 0.0, %v7918
    %v7920 = vpop.f32.mrb[0].mxu0
    %v7921 = vadd.f32 0.0, %v7920
    %v7922 = vpop.f32.mrb[0].mxu0
    %v7923 = vpop.f32.mrb[0].mxu0
    %7924 = vdwg.mxu0
    %7925 = vmatprep.subr.bf16.mxu0 %v3962
    %7926 = vmatpush1.bf16.msra.mxu0 %v3961
    %7927 = vmatprep.subr.bf16.mxu0 %v3970
    %7928 = vmatpush1.bf16.msra.mxu0 %v3969
    %7929 = vmatprep.subr.bf16.mxu0 %v3978
    %7930 = vmatpush1.bf16.msra.mxu0 %v3977
    %7931 = vmatprep.subr.bf16.mxu0 %v3986
    %7932 = vmatpush1.bf16.msra.mxu0 %v3985
    %7933 = vmatprep.subr.bf16.mxu0 %v3994
    %7934 = vmatpush1.bf16.msra.mxu0 %v3993
    %7935 = vmatprep.subr.bf16.mxu0 %v4002
    %7936 = vmatpush1.bf16.msra.mxu0 %v4001
    %7937 = vmatprep.subr.bf16.mxu0 %v4010
    %7938 = vmatpush1.bf16.msra.mxu0 %v4009
    %7939 = vmatprep.subr.bf16.mxu0 %v4018
    %7940 = vmatpush1.bf16.msra.mxu0 %v4017
    %7941 = vmatprep.subr.bf16.mxu0 %v4026
    %7942 = vmatpush1.bf16.msra.mxu0 %v4025
    %7943 = vmatprep.subr.bf16.mxu0 %v4034
    %7944 = vmatpush1.bf16.msra.mxu0 %v4033
    %7945 = vmatprep.subr.bf16.mxu0 %v4042
    %7946 = vmatpush1.bf16.msra.mxu0 %v4041
    %7947 = vmatprep.subr.bf16.mxu0 %v4050
    %7948 = vmatpush1.bf16.msra.mxu0 %v4049
    %7949 = vmatprep.subr.bf16.mxu0 %v4058
    %7950 = vmatpush1.bf16.msra.mxu0 %v4057
    %7951 = vmatprep.subr.bf16.mxu0 %v4066
    %7952 = vmatpush1.bf16.msra.mxu0 %v4065
    %7953 = vmatprep.subr.bf16.mxu0 %v4074
    %7954 = vmatpush1.bf16.msra.mxu0 %v4073
    %7955 = vmatprep.subr.bf16.mxu0 %v4082
    %7956 = vmatpush1.bf16.msra.mxu0 %v4081
    %7957 = vmatprep.mubr.bf16.mxu0 %v7758
    %7958 = vmatmul.mubr.bf16.gmra.mrb[0].mxu0 %v7757
    %v7959 = vpop.f32.mrb[0].mxu0
    %v7960 = vadd.f32 %v7796, %v7959
    %v7961 = vpop.f32.mrb[0].mxu0
    %v7962 = vadd.f32 %v7798, %v7961
    %v7963 = vpop.f32.mrb[0].mxu0
    %v7964 = vpop.f32.mrb[0].mxu0
    %7965 = vdwg.mxu0
    %7966 = vmatprep.subr.bf16.mxu0 %v3964
    %7967 = vmatpush1.bf16.msra.mxu0 %v3963
    %7968 = vmatprep.subr.bf16.mxu0 %v3972
    %7969 = vmatpush1.bf16.msra.mxu0 %v3971
    %7970 = vmatprep.subr.bf16.mxu0 %v3980
    %7971 = vmatpush1.bf16.msra.mxu0 %v3979
    %7972 = vmatprep.subr.bf16.mxu0 %v3988
    %7973 = vmatpush1.bf16.msra.mxu0 %v3987
    %7974 = vmatprep.subr.bf16.mxu0 %v3996
    %7975 = vmatpush1.bf16.msra.mxu0 %v3995
    %7976 = vmatprep.subr.bf16.mxu0 %v4004
    %7977 = vmatpush1.bf16.msra.mxu0 %v4003
    %7978 = vmatprep.subr.bf16.mxu0 %v4012
    %7979 = vmatpush1.bf16.msra.mxu0 %v4011
    %7980 = vmatprep.subr.bf16.mxu0 %v4020
    %7981 = vmatpush1.bf16.msra.mxu0 %v4019
    %7982 = vmatprep.subr.bf16.mxu0 %v4028
    %7983 = vmatpush1.bf16.msra.mxu0 %v4027
    %7984 = vmatprep.subr.bf16.mxu0 %v4036
    %7985 = vmatpush1.bf16.msra.mxu0 %v4035
    %7986 = vmatprep.subr.bf16.mxu0 %v4044
    %7987 = vmatpush1.bf16.msra.mxu0 %v4043
    %7988 = vmatprep.subr.bf16.mxu0 %v4052
    %7989 = vmatpush1.bf16.msra.mxu0 %v4051
    %7990 = vmatprep.subr.bf16.mxu0 %v4060
    %7991 = vmatpush1.bf16.msra.mxu0 %v4059
    %7992 = vmatprep.subr.bf16.mxu0 %v4068
    %7993 = vmatpush1.bf16.msra.mxu0 %v4067
    %7994 = vmatprep.subr.bf16.mxu0 %v4076
    %7995 = vmatpush1.bf16.msra.mxu0 %v4075
    %7996 = vmatprep.subr.bf16.mxu0 %v4084
    %7997 = vmatpush1.bf16.msra.mxu0 %v4083
    %7998 = vmatprep.mubr.bf16.mxu0 %v7758
    %7999 = vmatmul.mubr.bf16.gmra.mrb[0].mxu0 %v7757
    %v8000 = vpop.f32.mrb[0].mxu0
    %v8001 = vadd.f32 %v7837, %v8000
    %v8002 = vpop.f32.mrb[0].mxu0
    %v8003 = vadd.f32 %v7839, %v8002
    %v8004 = vpop.f32.mrb[0].mxu0
    %v8005 = vpop.f32.mrb[0].mxu0
    %8006 = vdwg.mxu0
    %8007 = vmatprep.subr.bf16.mxu0 %v3966
    %8008 = vmatpush1.bf16.msra.mxu0 %v3965
    %8009 = vmatprep.subr.bf16.mxu0 %v3974
    %8010 = vmatpush1.bf16.msra.mxu0 %v3973
    %8011 = vmatprep.subr.bf16.mxu0 %v3982
    %8012 = vmatpush1.bf16.msra.mxu0 %v3981
    %8013 = vmatprep.subr.bf16.mxu0 %v3990
    %8014 = vmatpush1.bf16.msra.mxu0 %v3989
    %8015 = vmatprep.subr.bf16.mxu0 %v3998
    %8016 = vmatpush1.bf16.msra.mxu0 %v3997
    %8017 = vmatprep.subr.bf16.mxu0 %v4006
    %8018 = vmatpush1.bf16.msra.mxu0 %v4005
    %8019 = vmatprep.subr.bf16.mxu0 %v4014
    %8020 = vmatpush1.bf16.msra.mxu0 %v4013
    %8021 = vmatprep.subr.bf16.mxu0 %v4022
    %8022 = vmatpush1.bf16.msra.mxu0 %v4021
    %8023 = vmatprep.subr.bf16.mxu0 %v4030
    %8024 = vmatpush1.bf16.msra.mxu0 %v4029
    %8025 = vmatprep.subr.bf16.mxu0 %v4038
    %8026 = vmatpush1.bf16.msra.mxu0 %v4037
    %8027 = vmatprep.subr.bf16.mxu0 %v4046
    %8028 = vmatpush1.bf16.msra.mxu0 %v4045
    %8029 = vmatprep.subr.bf16.mxu0 %v4054
    %8030 = vmatpush1.bf16.msra.mxu0 %v4053
    %8031 = vmatprep.subr.bf16.mxu0 %v4062
    %8032 = vmatpush1.bf16.msra.mxu0 %v4061
    %8033 = vmatprep.subr.bf16.mxu0 %v4070
    %8034 = vmatpush1.bf16.msra.mxu0 %v4069
    %8035 = vmatprep.subr.bf16.mxu0 %v4078
    %8036 = vmatpush1.bf16.msra.mxu0 %v4077
    %8037 = vmatprep.subr.bf16.mxu0 %v4086
    %8038 = vmatpush1.bf16.msra.mxu0 %v4085
    %8039 = vmatprep.mubr.bf16.mxu0 %v7758
    %8040 = vmatmul.mubr.bf16.gmra.mrb[0].mxu0 %v7757
    %v8041 = vpop.f32.mrb[0].mxu0
    %v8042 = vadd.f32 %v7878, %v8041
    %v8043 = vpop.f32.mrb[0].mxu0
    %v8044 = vadd.f32 %v7880, %v8043
    %v8045 = vpop.f32.mrb[0].mxu0
    %v8046 = vpop.f32.mrb[0].mxu0
    %8047 = vdwg.mxu0
    %8048 = vmatprep.subr.bf16.mxu0 %v3968
    %8049 = vmatpush1.bf16.msra.mxu0 %v3967
    %8050 = vmatprep.subr.bf16.mxu0 %v3976
    %8051 = vmatpush1.bf16.msra.mxu0 %v3975
    %8052 = vmatprep.subr.bf16.mxu0 %v3984
    %8053 = vmatpush1.bf16.msra.mxu0 %v3983
    %8054 = vmatprep.subr.bf16.mxu0 %v3992
    %8055 = vmatpush1.bf16.msra.mxu0 %v3991
    %8056 = vmatprep.subr.bf16.mxu0 %v4000
    %8057 = vmatpush1.bf16.msra.mxu0 %v3999
    %8058 = vmatprep.subr.bf16.mxu0 %v4008
    %8059 = vmatpush1.bf16.msra.mxu0 %v4007
    %8060 = vmatprep.subr.bf16.mxu0 %v4016
    %8061 = vmatpush1.bf16.msra.mxu0 %v4015
    %8062 = vmatprep.subr.bf16.mxu0 %v4024
    %8063 = vmatpush1.bf16.msra.mxu0 %v4023
    %8064 = vmatprep.subr.bf16.mxu0 %v4032
    %8065 = vmatpush1.bf16.msra.mxu0 %v4031
    %8066 = vmatprep.subr.bf16.mxu0 %v4040
    %8067 = vmatpush1.bf16.msra.mxu0 %v4039
    %8068 = vmatprep.subr.bf16.mxu0 %v4048
    %8069 = vmatpush1.bf16.msra.mxu0 %v4047
    %8070 = vmatprep.subr.bf16.mxu0 %v4056
    %8071 = vmatpush1.bf16.msra.mxu0 %v4055
    %8072 = vmatprep.subr.bf16.mxu0 %v4064
    %8073 = vmatpush1.bf16.msra.mxu0 %v4063
    %8074 = vmatprep.subr.bf16.mxu0 %v4072
    %8075 = vmatpush1.bf16.msra.mxu0 %v4071
    %8076 = vmatprep.subr.bf16.mxu0 %v4080
    %8077 = vmatpush1.bf16.msra.mxu0 %v4079
    %8078 = vmatprep.subr.bf16.mxu0 %v4088
    %8079 = vmatpush1.bf16.msra.mxu0 %v4087
    %8080 = vmatprep.mubr.bf16.mxu0 %v7758
    %8081 = vmatmul.mubr.bf16.gmra.mrb[0].mxu0 %v7757
    %v8082 = vpop.f32.mrb[0].mxu0
    %v8083 = vadd.f32 %v7919, %v8082
    %v8084 = vpop.f32.mrb[0].mxu0
    %v8085 = vadd.f32 %v7921, %v8084
    %v8086 = vpop.f32.mrb[0].mxu0
    %v8087 = vpop.f32.mrb[0].mxu0
    %8088 = vdwg.mxu0
    %v8089 = vadd.f32 %v7960, %v1866
    %v8090 = vadd.f32 %v7962, %v1870
    %v8091 = vadd.f32 %v8001, %v1874
    %v8092 = vadd.f32 %v8003, %v1878
    %v8093 = vadd.f32 %v8042, %v1882
    %v8094 = vadd.f32 %v8044, %v1886
    %v8095 = vadd.f32 %v8083, %v1890
    %v8096 = vadd.f32 %v8085, %v1894
    %v8097 = vxor.u32 %v8089, 2147483648
    %v8098 = vxor.u32 %v8090, 2147483648
    %v8099 = vmul.f32 %v8097, 1.442695
    %v8100 = vpow.pop %v8099
    %v8101 = vmul.f32 %v8098, 1.442695
    %v8102 = vpow.pop %v8101
    %v8103 = vadd.f32 %v8100, 1.0
    %v8104 = vadd.f32 %v8102, 1.0
    %v8105 = vrcp.pop %v8103
    %v8106 = vmul.f32 1.0, %v8105
    %v8107 = vrcp.pop %v8104
    %v8108 = vmul.f32 1.0, %v8107
    %v8109 = vxor.u32 %v8091, 2147483648
    %v8110 = vxor.u32 %v8092, 2147483648
    %v8111 = vmul.f32 %v8109, 1.442695
    %v8112 = vpow.pop %v8111
    %v8113 = vmul.f32 %v8110, 1.442695
    %v8114 = vpow.pop %v8113
    %v8115 = vadd.f32 %v8112, 1.0
    %v8116 = vadd.f32 %v8114, 1.0
    %v8117 = vrcp.pop %v8115
    %v8118 = vmul.f32 1.0, %v8117
    %v8119 = vrcp.pop %v8116
    %v8120 = vmul.f32 1.0, %v8119
    %v8121 = vtanh.pop %v8093
    %v8122 = vtanh.pop %v8094
    %v8123 = vxor.u32 %v8095, 2147483648
    %v8124 = vxor.u32 %v8096, 2147483648
    %v8125 = vmul.f32 %v8123, 1.442695
    %v8126 = vpow.pop %v8125
    %v8127 = vmul.f32 %v8124, 1.442695
    %v8128 = vpow.pop %v8127
    %v8129 = vadd.f32 %v8126, 1.0
    %v8130 = vadd.f32 %v8128, 1.0
    %v8131 = vrcp.pop %v8129
    %v8132 = vmul.f32 1.0, %v8131
    %v8133 = vrcp.pop %v8130
    %v8134 = vmul.f32 1.0, %v8133
    %v8135 = vmul.f32 %v8118, %v7521
    %v8136 = vmul.f32 %v8120, %v7522
    %v8137 = vmul.f32 %v8106, %v8121
    %v8138 = vmul.f32 %v8108, %v8122
    %v8139 = vadd.f32 %v8135, %v8137
    %v8140 = vadd.f32 %v8136, %v8138
    %v8141 = vtanh.pop %v8139
    %v8142 = vtanh.pop %v8140
    %v8143 = vmul.f32 %v8132, %v8141
    %v8144 = vmul.f32 %v8134, %v8142
    %8145 = vst [vmem:[#allocation3 + $0x60] sm:$0xff] %v8143
    %8146 = vst [vmem:[#allocation3 + $0x68] sm:$0xff] %v8144
    %v8147 = vld [vmem:[#allocation2 + $0x1c0] sm:$0xff]
    %v8148 = vld [vmem:[#allocation2 + $0x1c8] sm:$0xff]
    %v8149 = vld [vmem:[#allocation2 + $0x1d0] sm:$0xff]
    %v8150 = vld [vmem:[#allocation2 + $0x1d8] sm:$0xff]
    %v8151 = vld [vmem:[#allocation2 + $0x1e0] sm:$0xff]
    %v8152 = vld [vmem:[#allocation2 + $0x1e8] sm:$0xff]
    %v8153 = vld [vmem:[#allocation2 + $0x1f0] sm:$0xff]
    %v8154 = vld [vmem:[#allocation2 + $0x1f8] sm:$0xff]
    %8155 = vmatprep.subr.bf16.mxu0 %v2296
    %8156 = vmatpush1.bf16.msra.mxu0 %v2295
    %8157 = vmatprep.subr.bf16.mxu0 %v2304
    %8158 = vmatpush1.bf16.msra.mxu0 %v2303
    %8159 = vmatprep.subr.bf16.mxu0 %v2312
    %8160 = vmatpush1.bf16.msra.mxu0 %v2311
    %8161 = vmatprep.subr.bf16.mxu0 %v2320
    %8162 = vmatpush1.bf16.msra.mxu0 %v2319
    %8163 = vmatprep.subr.bf16.mxu0 %v2328
    %8164 = vmatpush1.bf16.msra.mxu0 %v2327
    %8165 = vmatprep.subr.bf16.mxu0 %v2336
    %8166 = vmatpush1.bf16.msra.mxu0 %v2335
    %8167 = vmatprep.subr.bf16.mxu0 %v2344
    %8168 = vmatpush1.bf16.msra.mxu0 %v2343
    %8169 = vmatprep.subr.bf16.mxu0 %v2352
    %8170 = vmatpush1.bf16.msra.mxu0 %v2351
    %8171 = vmatprep.subr.bf16.mxu0 %v2360
    %8172 = vmatpush1.bf16.msra.mxu0 %v2359
    %8173 = vmatprep.subr.bf16.mxu0 %v2368
    %8174 = vmatpush1.bf16.msra.mxu0 %v2367
    %8175 = vmatprep.subr.bf16.mxu0 %v2376
    %8176 = vmatpush1.bf16.msra.mxu0 %v2375
    %8177 = vmatprep.subr.bf16.mxu0 %v2384
    %8178 = vmatpush1.bf16.msra.mxu0 %v2383
    %8179 = vmatprep.subr.bf16.mxu0 %v2392
    %8180 = vmatpush1.bf16.msra.mxu0 %v2391
    %8181 = vmatprep.subr.bf16.mxu0 %v2400
    %8182 = vmatpush1.bf16.msra.mxu0 %v2399
    %8183 = vmatprep.subr.bf16.mxu0 %v2408
    %8184 = vmatpush1.bf16.msra.mxu0 %v2407
    %8185 = vmatprep.subr.bf16.mxu0 %v2416
    %8186 = vmatpush1.bf16.msra.mxu0 %v2415
    %8187 = vmatprep.mubr.bf16.mxu0 %v7758
    %8188 = vmatmul.mubr.bf16.gmra.mrb[0].mxu0 %v7757
    %v8189 = vpop.f32.mrb[0].mxu0
    %v8190 = vadd.f32 0.0, %v8189
    %v8191 = vpop.f32.mrb[0].mxu0
    %v8192 = vadd.f32 0.0, %v8191
    %v8193 = vpop.f32.mrb[0].mxu0
    %v8194 = vpop.f32.mrb[0].mxu0
    %8195 = vdwg.mxu0
    %8196 = vmatprep.subr.bf16.mxu0 %v2298
    %8197 = vmatpush1.bf16.msra.mxu0 %v2297
    %8198 = vmatprep.subr.bf16.mxu0 %v2306
    %8199 = vmatpush1.bf16.msra.mxu0 %v2305
    %8200 = vmatprep.subr.bf16.mxu0 %v2314
    %8201 = vmatpush1.bf16.msra.mxu0 %v2313
    %8202 = vmatprep.subr.bf16.mxu0 %v2322
    %8203 = vmatpush1.bf16.msra.mxu0 %v2321
    %8204 = vmatprep.subr.bf16.mxu0 %v2330
    %8205 = vmatpush1.bf16.msra.mxu0 %v2329
    %8206 = vmatprep.subr.bf16.mxu0 %v2338
    %8207 = vmatpush1.bf16.msra.mxu0 %v2337
    %8208 = vmatprep.subr.bf16.mxu0 %v2346
    %8209 = vmatpush1.bf16.msra.mxu0 %v2345
    %8210 = vmatprep.subr.bf16.mxu0 %v2354
    %8211 = vmatpush1.bf16.msra.mxu0 %v2353
    %8212 = vmatprep.subr.bf16.mxu0 %v2362
    %8213 = vmatpush1.bf16.msra.mxu0 %v2361
    %8214 = vmatprep.subr.bf16.mxu0 %v2370
    %8215 = vmatpush1.bf16.msra.mxu0 %v2369
    %8216 = vmatprep.subr.bf16.mxu0 %v2378
    %8217 = vmatpush1.bf16.msra.mxu0 %v2377
    %8218 = vmatprep.subr.bf16.mxu0 %v2386
    %8219 = vmatpush1.bf16.msra.mxu0 %v2385
    %8220 = vmatprep.subr.bf16.mxu0 %v2394
    %8221 = vmatpush1.bf16.msra.mxu0 %v2393
    %8222 = vmatprep.subr.bf16.mxu0 %v2402
    %8223 = vmatpush1.bf16.msra.mxu0 %v2401
    %8224 = vmatprep.subr.bf16.mxu0 %v2410
    %8225 = vmatpush1.bf16.msra.mxu0 %v2409
    %8226 = vmatprep.subr.bf16.mxu0 %v2418
    %8227 = vmatpush1.bf16.msra.mxu0 %v2417
    %8228 = vmatprep.mubr.bf16.mxu0 %v7758
    %8229 = vmatmul.mubr.bf16.gmra.mrb[0].mxu0 %v7757
    %v8230 = vpop.f32.mrb[0].mxu0
    %v8231 = vadd.f32 0.0, %v8230
    %v8232 = vpop.f32.mrb[0].mxu0
    %v8233 = vadd.f32 0.0, %v8232
    %v8234 = vpop.f32.mrb[0].mxu0
    %v8235 = vpop.f32.mrb[0].mxu0
    %8236 = vdwg.mxu0
    %8237 = vmatprep.subr.bf16.mxu0 %v2300
    %8238 = vmatpush1.bf16.msra.mxu0 %v2299
    %8239 = vmatprep.subr.bf16.mxu0 %v2308
    %8240 = vmatpush1.bf16.msra.mxu0 %v2307
    %8241 = vmatprep.subr.bf16.mxu0 %v2316
    %8242 = vmatpush1.bf16.msra.mxu0 %v2315
    %8243 = vmatprep.subr.bf16.mxu0 %v2324
    %8244 = vmatpush1.bf16.msra.mxu0 %v2323
    %8245 = vmatprep.subr.bf16.mxu0 %v2332
    %8246 = vmatpush1.bf16.msra.mxu0 %v2331
    %8247 = vmatprep.subr.bf16.mxu0 %v2340
    %8248 = vmatpush1.bf16.msra.mxu0 %v2339
    %8249 = vmatprep.subr.bf16.mxu0 %v2348
    %8250 = vmatpush1.bf16.msra.mxu0 %v2347
    %8251 = vmatprep.subr.bf16.mxu0 %v2356
    %8252 = vmatpush1.bf16.msra.mxu0 %v2355
    %8253 = vmatprep.subr.bf16.mxu0 %v2364
    %8254 = vmatpush1.bf16.msra.mxu0 %v2363
    %8255 = vmatprep.subr.bf16.mxu0 %v2372
    %8256 = vmatpush1.bf16.msra.mxu0 %v2371
    %8257 = vmatprep.subr.bf16.mxu0 %v2380
    %8258 = vmatpush1.bf16.msra.mxu0 %v2379
    %8259 = vmatprep.subr.bf16.mxu0 %v2388
    %8260 = vmatpush1.bf16.msra.mxu0 %v2387
    %8261 = vmatprep.subr.bf16.mxu0 %v2396
    %8262 = vmatpush1.bf16.msra.mxu0 %v2395
    %8263 = vmatprep.subr.bf16.mxu0 %v2404
    %8264 = vmatpush1.bf16.msra.mxu0 %v2403
    %8265 = vmatprep.subr.bf16.mxu0 %v2412
    %8266 = vmatpush1.bf16.msra.mxu0 %v2411
    %8267 = vmatprep.subr.bf16.mxu0 %v2420
    %8268 = vmatpush1.bf16.msra.mxu0 %v2419
    %8269 = vmatprep.mubr.bf16.mxu0 %v7758
    %8270 = vmatmul.mubr.bf16.gmra.mrb[0].mxu0 %v7757
    %v8271 = vpop.f32.mrb[0].mxu0
    %v8272 = vadd.f32 0.0, %v8271
    %v8273 = vpop.f32.mrb[0].mxu0
    %v8274 = vadd.f32 0.0, %v8273
    %v8275 = vpop.f32.mrb[0].mxu0
    %v8276 = vpop.f32.mrb[0].mxu0
    %8277 = vdwg.mxu0
    %8278 = vmatprep.subr.bf16.mxu0 %v2302
    %8279 = vmatpush1.bf16.msra.mxu0 %v2301
    %8280 = vmatprep.subr.bf16.mxu0 %v2310
    %8281 = vmatpush1.bf16.msra.mxu0 %v2309
    %8282 = vmatprep.subr.bf16.mxu0 %v2318
    %8283 = vmatpush1.bf16.msra.mxu0 %v2317
    %8284 = vmatprep.subr.bf16.mxu0 %v2326
    %8285 = vmatpush1.bf16.msra.mxu0 %v2325
    %8286 = vmatprep.subr.bf16.mxu0 %v2334
    %8287 = vmatpush1.bf16.msra.mxu0 %v2333
    %8288 = vmatprep.subr.bf16.mxu0 %v2342
    %8289 = vmatpush1.bf16.msra.mxu0 %v2341
    %8290 = vmatprep.subr.bf16.mxu0 %v2350
    %8291 = vmatpush1.bf16.msra.mxu0 %v2349
    %8292 = vmatprep.subr.bf16.mxu0 %v2358
    %8293 = vmatpush1.bf16.msra.mxu0 %v2357
    %8294 = vmatprep.subr.bf16.mxu0 %v2366
    %8295 = vmatpush1.bf16.msra.mxu0 %v2365
    %8296 = vmatprep.subr.bf16.mxu0 %v2374
    %8297 = vmatpush1.bf16.msra.mxu0 %v2373
    %8298 = vmatprep.subr.bf16.mxu0 %v2382
    %8299 = vmatpush1.bf16.msra.mxu0 %v2381
    %8300 = vmatprep.subr.bf16.mxu0 %v2390
    %8301 = vmatpush1.bf16.msra.mxu0 %v2389
    %8302 = vmatprep.subr.bf16.mxu0 %v2398
    %8303 = vmatpush1.bf16.msra.mxu0 %v2397
    %8304 = vmatprep.subr.bf16.mxu0 %v2406
    %8305 = vmatpush1.bf16.msra.mxu0 %v2405
    %8306 = vmatprep.subr.bf16.mxu0 %v2414
    %8307 = vmatpush1.bf16.msra.mxu0 %v2413
    %8308 = vmatprep.subr.bf16.mxu0 %v2422
    %8309 = vmatpush1.bf16.msra.mxu0 %v2421
    %8310 = vmatprep.mubr.bf16.mxu0 %v7758
    %8311 = vmatmul.mubr.bf16.gmra.mrb[0].mxu0 %v7757
    %v8312 = vpop.f32.mrb[0].mxu0
    %v8313 = vadd.f32 0.0, %v8312
    %v8314 = vpop.f32.mrb[0].mxu0
    %v8315 = vadd.f32 0.0, %v8314
    %v8316 = vpop.f32.mrb[0].mxu0
    %v8317 = vpop.f32.mrb[0].mxu0
    %8318 = vdwg.mxu0
    %v8319 = vadd.f32 %v8147, %v8190
    %v8320 = vadd.f32 %v8148, %v8192
    %v8321 = vadd.f32 %v8149, %v8231
    %v8322 = vadd.f32 %v8150, %v8233
    %v8323 = vadd.f32 %v8151, %v8272
    %v8324 = vadd.f32 %v8152, %v8274
    %v8325 = vadd.f32 %v8153, %v8313
    %v8326 = vadd.f32 %v8154, %v8315
    %v8327 = vxor.u32 %v8319, 2147483648
    %v8328 = vxor.u32 %v8320, 2147483648
    %v8329 = vmul.f32 %v8327, 1.442695
    %v8330 = vpow.pop %v8329
    %v8331 = vmul.f32 %v8328, 1.442695
    %v8332 = vpow.pop %v8331
    %v8333 = vadd.f32 %v8330, 1.0
    %v8334 = vadd.f32 %v8332, 1.0
    %v8335 = vrcp.pop %v8333
    %v8336 = vmul.f32 1.0, %v8335
    %v8337 = vrcp.pop %v8334
    %v8338 = vmul.f32 1.0, %v8337
    %v8339 = vxor.u32 %v8321, 2147483648
    %v8340 = vxor.u32 %v8322, 2147483648
    %v8341 = vmul.f32 %v8339, 1.442695
    %v8342 = vpow.pop %v8341
    %v8343 = vmul.f32 %v8340, 1.442695
    %v8344 = vpow.pop %v8343
    %v8345 = vadd.f32 %v8342, 1.0
    %v8346 = vadd.f32 %v8344, 1.0
    %v8347 = vrcp.pop %v8345
    %v8348 = vmul.f32 1.0, %v8347
    %v8349 = vrcp.pop %v8346
    %v8350 = vmul.f32 1.0, %v8349
    %v8351 = vtanh.pop %v8323
    %v8352 = vtanh.pop %v8324
    %v8353 = vxor.u32 %v8325, 2147483648
    %v8354 = vxor.u32 %v8326, 2147483648
    %v8355 = vmul.f32 %v8353, 1.442695
    %v8356 = vpow.pop %v8355
    %v8357 = vmul.f32 %v8354, 1.442695
    %v8358 = vpow.pop %v8357
    %v8359 = vadd.f32 %v8356, 1.0
    %v8360 = vadd.f32 %v8358, 1.0
    %v8361 = vrcp.pop %v8359
    %v8362 = vmul.f32 1.0, %v8361
    %v8363 = vrcp.pop %v8360
    %v8364 = vmul.f32 1.0, %v8363
    %v8365 = vmul.f32 %v8348, %v7751
    %v8366 = vmul.f32 %v8350, %v7752
    %v8367 = vmul.f32 %v8336, %v8351
    %v8368 = vmul.f32 %v8338, %v8352
    %v8369 = vadd.f32 %v8365, %v8367
    %v8370 = vadd.f32 %v8366, %v8368
    %v8371 = vtanh.pop %v8369
    %v8372 = vtanh.pop %v8370
    %v8373 = vmul.f32 %v8362, %v8371
    %v8374 = vmul.f32 %v8364, %v8372
    %v8375 = vpack.c.bf16 %v8373, %v8373
    %v8376 = vpack.c.bf16 %v8374, %v8374
    %v8377 = vpack.c.bf16 %v8143, %v8143
    %v8378 = vpack.c.bf16 %v8144, %v8144
    %8379 = vmatprep.subr.bf16.mxu0 %v3158
    %8380 = vmatpush1.bf16.msra.mxu0 %v3157
    %8381 = vmatprep.subr.bf16.mxu0 %v3166
    %8382 = vmatpush1.bf16.msra.mxu0 %v3165
    %8383 = vmatprep.subr.bf16.mxu0 %v3174
    %8384 = vmatpush1.bf16.msra.mxu0 %v3173
    %8385 = vmatprep.subr.bf16.mxu0 %v3182
    %8386 = vmatpush1.bf16.msra.mxu0 %v3181
    %8387 = vmatprep.subr.bf16.mxu0 %v3190
    %8388 = vmatpush1.bf16.msra.mxu0 %v3189
    %8389 = vmatprep.subr.bf16.mxu0 %v3198
    %8390 = vmatpush1.bf16.msra.mxu0 %v3197
    %8391 = vmatprep.subr.bf16.mxu0 %v3206
    %8392 = vmatpush1.bf16.msra.mxu0 %v3205
    %8393 = vmatprep.subr.bf16.mxu0 %v3214
    %8394 = vmatpush1.bf16.msra.mxu0 %v3213
    %8395 = vmatprep.subr.bf16.mxu0 %v3222
    %8396 = vmatpush1.bf16.msra.mxu0 %v3221
    %8397 = vmatprep.subr.bf16.mxu0 %v3230
    %8398 = vmatpush1.bf16.msra.mxu0 %v3229
    %8399 = vmatprep.subr.bf16.mxu0 %v3238
    %8400 = vmatpush1.bf16.msra.mxu0 %v3237
    %8401 = vmatprep.subr.bf16.mxu0 %v3246
    %8402 = vmatpush1.bf16.msra.mxu0 %v3245
    %8403 = vmatprep.subr.bf16.mxu0 %v3254
    %8404 = vmatpush1.bf16.msra.mxu0 %v3253
    %8405 = vmatprep.subr.bf16.mxu0 %v3262
    %8406 = vmatpush1.bf16.msra.mxu0 %v3261
    %8407 = vmatprep.subr.bf16.mxu0 %v3270
    %8408 = vmatpush1.bf16.msra.mxu0 %v3269
    %8409 = vmatprep.subr.bf16.mxu0 %v3278
    %8410 = vmatpush1.bf16.msra.mxu0 %v3277
    %8411 = vmatprep.mubr.bf16.mxu0 %v8378
    %8412 = vmatmul.mubr.bf16.gmra.mrb[0].mxu0 %v8377
    %v8413 = vpop.f32.mrb[0].mxu0
    %v8414 = vadd.f32 0.0, %v8413
    %v8415 = vpop.f32.mrb[0].mxu0
    %v8416 = vadd.f32 0.0, %v8415
    %v8417 = vpop.f32.mrb[0].mxu0
    %v8418 = vpop.f32.mrb[0].mxu0
    %8419 = vdwg.mxu0
    %8420 = vmatprep.subr.bf16.mxu0 %v3160
    %8421 = vmatpush1.bf16.msra.mxu0 %v3159
    %8422 = vmatprep.subr.bf16.mxu0 %v3168
    %8423 = vmatpush1.bf16.msra.mxu0 %v3167
    %8424 = vmatprep.subr.bf16.mxu0 %v3176
    %8425 = vmatpush1.bf16.msra.mxu0 %v3175
    %8426 = vmatprep.subr.bf16.mxu0 %v3184
    %8427 = vmatpush1.bf16.msra.mxu0 %v3183
    %8428 = vmatprep.subr.bf16.mxu0 %v3192
    %8429 = vmatpush1.bf16.msra.mxu0 %v3191
    %8430 = vmatprep.subr.bf16.mxu0 %v3200
    %8431 = vmatpush1.bf16.msra.mxu0 %v3199
    %8432 = vmatprep.subr.bf16.mxu0 %v3208
    %8433 = vmatpush1.bf16.msra.mxu0 %v3207
    %8434 = vmatprep.subr.bf16.mxu0 %v3216
    %8435 = vmatpush1.bf16.msra.mxu0 %v3215
    %8436 = vmatprep.subr.bf16.mxu0 %v3224
    %8437 = vmatpush1.bf16.msra.mxu0 %v3223
    %8438 = vmatprep.subr.bf16.mxu0 %v3232
    %8439 = vmatpush1.bf16.msra.mxu0 %v3231
    %8440 = vmatprep.subr.bf16.mxu0 %v3240
    %8441 = vmatpush1.bf16.msra.mxu0 %v3239
    %8442 = vmatprep.subr.bf16.mxu0 %v3248
    %8443 = vmatpush1.bf16.msra.mxu0 %v3247
    %8444 = vmatprep.subr.bf16.mxu0 %v3256
    %8445 = vmatpush1.bf16.msra.mxu0 %v3255
    %8446 = vmatprep.subr.bf16.mxu0 %v3264
    %8447 = vmatpush1.bf16.msra.mxu0 %v3263
    %8448 = vmatprep.subr.bf16.mxu0 %v3272
    %8449 = vmatpush1.bf16.msra.mxu0 %v3271
    %8450 = vmatprep.subr.bf16.mxu0 %v3280
    %8451 = vmatpush1.bf16.msra.mxu0 %v3279
    %8452 = vmatprep.mubr.bf16.mxu0 %v8378
    %8453 = vmatmul.mubr.bf16.gmra.mrb[0].mxu0 %v8377
    %v8454 = vpop.f32.mrb[0].mxu0
    %v8455 = vadd.f32 0.0, %v8454
    %v8456 = vpop.f32.mrb[0].mxu0
    %v8457 = vadd.f32 0.0, %v8456
    %v8458 = vpop.f32.mrb[0].mxu0
    %v8459 = vpop.f32.mrb[0].mxu0
    %8460 = vdwg.mxu0
    %8461 = vmatprep.subr.bf16.mxu0 %v3162
    %8462 = vmatpush1.bf16.msra.mxu0 %v3161
    %8463 = vmatprep.subr.bf16.mxu0 %v3170
    %8464 = vmatpush1.bf16.msra.mxu0 %v3169
    %8465 = vmatprep.subr.bf16.mxu0 %v3178
    %8466 = vmatpush1.bf16.msra.mxu0 %v3177
    %8467 = vmatprep.subr.bf16.mxu0 %v3186
    %8468 = vmatpush1.bf16.msra.mxu0 %v3185
    %8469 = vmatprep.subr.bf16.mxu0 %v3194
    %8470 = vmatpush1.bf16.msra.mxu0 %v3193
    %8471 = vmatprep.subr.bf16.mxu0 %v3202
    %8472 = vmatpush1.bf16.msra.mxu0 %v3201
    %8473 = vmatprep.subr.bf16.mxu0 %v3210
    %8474 = vmatpush1.bf16.msra.mxu0 %v3209
    %8475 = vmatprep.subr.bf16.mxu0 %v3218
    %8476 = vmatpush1.bf16.msra.mxu0 %v3217
    %8477 = vmatprep.subr.bf16.mxu0 %v3226
    %8478 = vmatpush1.bf16.msra.mxu0 %v3225
    %8479 = vmatprep.subr.bf16.mxu0 %v3234
    %8480 = vmatpush1.bf16.msra.mxu0 %v3233
    %8481 = vmatprep.subr.bf16.mxu0 %v3242
    %8482 = vmatpush1.bf16.msra.mxu0 %v3241
    %8483 = vmatprep.subr.bf16.mxu0 %v3250
    %8484 = vmatpush1.bf16.msra.mxu0 %v3249
    %8485 = vmatprep.subr.bf16.mxu0 %v3258
    %8486 = vmatpush1.bf16.msra.mxu0 %v3257
    %8487 = vmatprep.subr.bf16.mxu0 %v3266
    %8488 = vmatpush1.bf16.msra.mxu0 %v3265
    %8489 = vmatprep.subr.bf16.mxu0 %v3274
    %8490 = vmatpush1.bf16.msra.mxu0 %v3273
    %8491 = vmatprep.subr.bf16.mxu0 %v3282
    %8492 = vmatpush1.bf16.msra.mxu0 %v3281
    %8493 = vmatprep.mubr.bf16.mxu0 %v8378
    %8494 = vmatmul.mubr.bf16.gmra.mrb[0].mxu0 %v8377
    %v8495 = vpop.f32.mrb[0].mxu0
    %v8496 = vadd.f32 0.0, %v8495
    %v8497 = vpop.f32.mrb[0].mxu0
    %v8498 = vadd.f32 0.0, %v8497
    %v8499 = vpop.f32.mrb[0].mxu0
    %v8500 = vpop.f32.mrb[0].mxu0
    %8501 = vdwg.mxu0
    %8502 = vmatprep.subr.bf16.mxu0 %v3164
    %8503 = vmatpush1.bf16.msra.mxu0 %v3163
    %8504 = vmatprep.subr.bf16.mxu0 %v3172
    %8505 = vmatpush1.bf16.msra.mxu0 %v3171
    %8506 = vmatprep.subr.bf16.mxu0 %v3180
    %8507 = vmatpush1.bf16.msra.mxu0 %v3179
    %8508 = vmatprep.subr.bf16.mxu0 %v3188
    %8509 = vmatpush1.bf16.msra.mxu0 %v3187
    %8510 = vmatprep.subr.bf16.mxu0 %v3196
    %8511 = vmatpush1.bf16.msra.mxu0 %v3195
    %8512 = vmatprep.subr.bf16.mxu0 %v3204
    %8513 = vmatpush1.bf16.msra.mxu0 %v3203
    %8514 = vmatprep.subr.bf16.mxu0 %v3212
    %8515 = vmatpush1.bf16.msra.mxu0 %v3211
    %8516 = vmatprep.subr.bf16.mxu0 %v3220
    %8517 = vmatpush1.bf16.msra.mxu0 %v3219
    %8518 = vmatprep.subr.bf16.mxu0 %v3228
    %8519 = vmatpush1.bf16.msra.mxu0 %v3227
    %8520 = vmatprep.subr.bf16.mxu0 %v3236
    %8521 = vmatpush1.bf16.msra.mxu0 %v3235
    %8522 = vmatprep.subr.bf16.mxu0 %v3244
    %8523 = vmatpush1.bf16.msra.mxu0 %v3243
    %8524 = vmatprep.subr.bf16.mxu0 %v3252
    %8525 = vmatpush1.bf16.msra.mxu0 %v3251
    %8526 = vmatprep.subr.bf16.mxu0 %v3260
    %8527 = vmatpush1.bf16.msra.mxu0 %v3259
    %8528 = vmatprep.subr.bf16.mxu0 %v3268
    %8529 = vmatpush1.bf16.msra.mxu0 %v3267
    %8530 = vmatprep.subr.bf16.mxu0 %v3276
    %8531 = vmatpush1.bf16.msra.mxu0 %v3275
    %8532 = vmatprep.subr.bf16.mxu0 %v3284
    %8533 = vmatpush1.bf16.msra.mxu0 %v3283
    %8534 = vmatprep.mubr.bf16.mxu0 %v8378
    %8535 = vmatmul.mubr.bf16.gmra.mrb[0].mxu0 %v8377
    %v8536 = vpop.f32.mrb[0].mxu0
    %v8537 = vadd.f32 0.0, %v8536
    %v8538 = vpop.f32.mrb[0].mxu0
    %v8539 = vadd.f32 0.0, %v8538
    %v8540 = vpop.f32.mrb[0].mxu0
    %v8541 = vpop.f32.mrb[0].mxu0
    %8542 = vdwg.mxu0
    %8543 = vmatprep.subr.bf16.mxu0 %v3962
    %8544 = vmatpush1.bf16.msra.mxu0 %v3961
    %8545 = vmatprep.subr.bf16.mxu0 %v3970
    %8546 = vmatpush1.bf16.msra.mxu0 %v3969
    %8547 = vmatprep.subr.bf16.mxu0 %v3978
    %8548 = vmatpush1.bf16.msra.mxu0 %v3977
    %8549 = vmatprep.subr.bf16.mxu0 %v3986
    %8550 = vmatpush1.bf16.msra.mxu0 %v3985
    %8551 = vmatprep.subr.bf16.mxu0 %v3994
    %8552 = vmatpush1.bf16.msra.mxu0 %v3993
    %8553 = vmatprep.subr.bf16.mxu0 %v4002
    %8554 = vmatpush1.bf16.msra.mxu0 %v4001
    %8555 = vmatprep.subr.bf16.mxu0 %v4010
    %8556 = vmatpush1.bf16.msra.mxu0 %v4009
    %8557 = vmatprep.subr.bf16.mxu0 %v4018
    %8558 = vmatpush1.bf16.msra.mxu0 %v4017
    %8559 = vmatprep.subr.bf16.mxu0 %v4026
    %8560 = vmatpush1.bf16.msra.mxu0 %v4025
    %8561 = vmatprep.subr.bf16.mxu0 %v4034
    %8562 = vmatpush1.bf16.msra.mxu0 %v4033
    %8563 = vmatprep.subr.bf16.mxu0 %v4042
    %8564 = vmatpush1.bf16.msra.mxu0 %v4041
    %8565 = vmatprep.subr.bf16.mxu0 %v4050
    %8566 = vmatpush1.bf16.msra.mxu0 %v4049
    %8567 = vmatprep.subr.bf16.mxu0 %v4058
    %8568 = vmatpush1.bf16.msra.mxu0 %v4057
    %8569 = vmatprep.subr.bf16.mxu0 %v4066
    %8570 = vmatpush1.bf16.msra.mxu0 %v4065
    %8571 = vmatprep.subr.bf16.mxu0 %v4074
    %8572 = vmatpush1.bf16.msra.mxu0 %v4073
    %8573 = vmatprep.subr.bf16.mxu0 %v4082
    %8574 = vmatpush1.bf16.msra.mxu0 %v4081
    %8575 = vmatprep.mubr.bf16.mxu0 %v8376
    %8576 = vmatmul.mubr.bf16.gmra.mrb[0].mxu0 %v8375
    %v8577 = vpop.f32.mrb[0].mxu0
    %v8578 = vadd.f32 %v8414, %v8577
    %v8579 = vpop.f32.mrb[0].mxu0
    %v8580 = vadd.f32 %v8416, %v8579
    %v8581 = vpop.f32.mrb[0].mxu0
    %v8582 = vpop.f32.mrb[0].mxu0
    %8583 = vdwg.mxu0
    %8584 = vmatprep.subr.bf16.mxu0 %v3964
    %8585 = vmatpush1.bf16.msra.mxu0 %v3963
    %8586 = vmatprep.subr.bf16.mxu0 %v3972
    %8587 = vmatpush1.bf16.msra.mxu0 %v3971
    %8588 = vmatprep.subr.bf16.mxu0 %v3980
    %8589 = vmatpush1.bf16.msra.mxu0 %v3979
    %8590 = vmatprep.subr.bf16.mxu0 %v3988
    %8591 = vmatpush1.bf16.msra.mxu0 %v3987
    %8592 = vmatprep.subr.bf16.mxu0 %v3996
    %8593 = vmatpush1.bf16.msra.mxu0 %v3995
    %8594 = vmatprep.subr.bf16.mxu0 %v4004
    %8595 = vmatpush1.bf16.msra.mxu0 %v4003
    %8596 = vmatprep.subr.bf16.mxu0 %v4012
    %8597 = vmatpush1.bf16.msra.mxu0 %v4011
    %8598 = vmatprep.subr.bf16.mxu0 %v4020
    %8599 = vmatpush1.bf16.msra.mxu0 %v4019
    %8600 = vmatprep.subr.bf16.mxu0 %v4028
    %8601 = vmatpush1.bf16.msra.mxu0 %v4027
    %8602 = vmatprep.subr.bf16.mxu0 %v4036
    %8603 = vmatpush1.bf16.msra.mxu0 %v4035
    %8604 = vmatprep.subr.bf16.mxu0 %v4044
    %8605 = vmatpush1.bf16.msra.mxu0 %v4043
    %8606 = vmatprep.subr.bf16.mxu0 %v4052
    %8607 = vmatpush1.bf16.msra.mxu0 %v4051
    %8608 = vmatprep.subr.bf16.mxu0 %v4060
    %8609 = vmatpush1.bf16.msra.mxu0 %v4059
    %8610 = vmatprep.subr.bf16.mxu0 %v4068
    %8611 = vmatpush1.bf16.msra.mxu0 %v4067
    %8612 = vmatprep.subr.bf16.mxu0 %v4076
    %8613 = vmatpush1.bf16.msra.mxu0 %v4075
    %8614 = vmatprep.subr.bf16.mxu0 %v4084
    %8615 = vmatpush1.bf16.msra.mxu0 %v4083
    %8616 = vmatprep.mubr.bf16.mxu0 %v8376
    %8617 = vmatmul.mubr.bf16.gmra.mrb[0].mxu0 %v8375
    %v8618 = vpop.f32.mrb[0].mxu0
    %v8619 = vadd.f32 %v8455, %v8618
    %v8620 = vpop.f32.mrb[0].mxu0
    %v8621 = vadd.f32 %v8457, %v8620
    %v8622 = vpop.f32.mrb[0].mxu0
    %v8623 = vpop.f32.mrb[0].mxu0
    %8624 = vdwg.mxu0
    %8625 = vmatprep.subr.bf16.mxu0 %v3966
    %8626 = vmatpush1.bf16.msra.mxu0 %v3965
    %8627 = vmatprep.subr.bf16.mxu0 %v3974
    %8628 = vmatpush1.bf16.msra.mxu0 %v3973
    %8629 = vmatprep.subr.bf16.mxu0 %v3982
    %8630 = vmatpush1.bf16.msra.mxu0 %v3981
    %8631 = vmatprep.subr.bf16.mxu0 %v3990
    %8632 = vmatpush1.bf16.msra.mxu0 %v3989
    %8633 = vmatprep.subr.bf16.mxu0 %v3998
    %8634 = vmatpush1.bf16.msra.mxu0 %v3997
    %8635 = vmatprep.subr.bf16.mxu0 %v4006
    %8636 = vmatpush1.bf16.msra.mxu0 %v4005
    %8637 = vmatprep.subr.bf16.mxu0 %v4014
    %8638 = vmatpush1.bf16.msra.mxu0 %v4013
    %8639 = vmatprep.subr.bf16.mxu0 %v4022
    %8640 = vmatpush1.bf16.msra.mxu0 %v4021
    %8641 = vmatprep.subr.bf16.mxu0 %v4030
    %8642 = vmatpush1.bf16.msra.mxu0 %v4029
    %8643 = vmatprep.subr.bf16.mxu0 %v4038
    %8644 = vmatpush1.bf16.msra.mxu0 %v4037
    %8645 = vmatprep.subr.bf16.mxu0 %v4046
    %8646 = vmatpush1.bf16.msra.mxu0 %v4045
    %8647 = vmatprep.subr.bf16.mxu0 %v4054
    %8648 = vmatpush1.bf16.msra.mxu0 %v4053
    %8649 = vmatprep.subr.bf16.mxu0 %v4062
    %8650 = vmatpush1.bf16.msra.mxu0 %v4061
    %8651 = vmatprep.subr.bf16.mxu0 %v4070
    %8652 = vmatpush1.bf16.msra.mxu0 %v4069
    %8653 = vmatprep.subr.bf16.mxu0 %v4078
    %8654 = vmatpush1.bf16.msra.mxu0 %v4077
    %8655 = vmatprep.subr.bf16.mxu0 %v4086
    %8656 = vmatpush1.bf16.msra.mxu0 %v4085
    %8657 = vmatprep.mubr.bf16.mxu0 %v8376
    %8658 = vmatmul.mubr.bf16.gmra.mrb[0].mxu0 %v8375
    %v8659 = vpop.f32.mrb[0].mxu0
    %v8660 = vadd.f32 %v8496, %v8659
    %v8661 = vpop.f32.mrb[0].mxu0
    %v8662 = vadd.f32 %v8498, %v8661
    %v8663 = vpop.f32.mrb[0].mxu0
    %v8664 = vpop.f32.mrb[0].mxu0
    %8665 = vdwg.mxu0
    %8666 = vmatprep.subr.bf16.mxu0 %v3968
    %8667 = vmatpush1.bf16.msra.mxu0 %v3967
    %8668 = vmatprep.subr.bf16.mxu0 %v3976
    %8669 = vmatpush1.bf16.msra.mxu0 %v3975
    %8670 = vmatprep.subr.bf16.mxu0 %v3984
    %8671 = vmatpush1.bf16.msra.mxu0 %v3983
    %8672 = vmatprep.subr.bf16.mxu0 %v3992
    %8673 = vmatpush1.bf16.msra.mxu0 %v3991
    %8674 = vmatprep.subr.bf16.mxu0 %v4000
    %8675 = vmatpush1.bf16.msra.mxu0 %v3999
    %8676 = vmatprep.subr.bf16.mxu0 %v4008
    %8677 = vmatpush1.bf16.msra.mxu0 %v4007
    %8678 = vmatprep.subr.bf16.mxu0 %v4016
    %8679 = vmatpush1.bf16.msra.mxu0 %v4015
    %8680 = vmatprep.subr.bf16.mxu0 %v4024
    %8681 = vmatpush1.bf16.msra.mxu0 %v4023
    %8682 = vmatprep.subr.bf16.mxu0 %v4032
    %8683 = vmatpush1.bf16.msra.mxu0 %v4031
    %8684 = vmatprep.subr.bf16.mxu0 %v4040
    %8685 = vmatpush1.bf16.msra.mxu0 %v4039
    %8686 = vmatprep.subr.bf16.mxu0 %v4048
    %8687 = vmatpush1.bf16.msra.mxu0 %v4047
    %8688 = vmatprep.subr.bf16.mxu0 %v4056
    %8689 = vmatpush1.bf16.msra.mxu0 %v4055
    %8690 = vmatprep.subr.bf16.mxu0 %v4064
    %8691 = vmatpush1.bf16.msra.mxu0 %v4063
    %8692 = vmatprep.subr.bf16.mxu0 %v4072
    %8693 = vmatpush1.bf16.msra.mxu0 %v4071
    %8694 = vmatprep.subr.bf16.mxu0 %v4080
    %8695 = vmatpush1.bf16.msra.mxu0 %v4079
    %8696 = vmatprep.subr.bf16.mxu0 %v4088
    %8697 = vmatpush1.bf16.msra.mxu0 %v4087
    %8698 = vmatprep.mubr.bf16.mxu0 %v8376
    %8699 = vmatmul.mubr.bf16.gmra.mrb[0].mxu0 %v8375
    %v8700 = vpop.f32.mrb[0].mxu0
    %v8701 = vadd.f32 %v8537, %v8700
    %v8702 = vpop.f32.mrb[0].mxu0
    %v8703 = vadd.f32 %v8539, %v8702
    %v8704 = vpop.f32.mrb[0].mxu0
    %v8705 = vpop.f32.mrb[0].mxu0
    %8706 = vdwg.mxu0
    %v8707 = vadd.f32 %v8578, %v1866
    %v8708 = vadd.f32 %v8580, %v1870
    %v8709 = vadd.f32 %v8619, %v1874
    %v8710 = vadd.f32 %v8621, %v1878
    %v8711 = vadd.f32 %v8660, %v1882
    %v8712 = vadd.f32 %v8662, %v1886
    %v8713 = vadd.f32 %v8701, %v1890
    %v8714 = vadd.f32 %v8703, %v1894
    %v8715 = vxor.u32 %v8707, 2147483648
    %v8716 = vxor.u32 %v8708, 2147483648
    %v8717 = vmul.f32 %v8715, 1.442695
    %v8718 = vpow.pop %v8717
    %v8719 = vmul.f32 %v8716, 1.442695
    %v8720 = vpow.pop %v8719
    %v8721 = vadd.f32 %v8718, 1.0
    %v8722 = vadd.f32 %v8720, 1.0
    %v8723 = vrcp.pop %v8721
    %v8724 = vmul.f32 1.0, %v8723
    %v8725 = vrcp.pop %v8722
    %v8726 = vmul.f32 1.0, %v8725
    %v8727 = vxor.u32 %v8709, 2147483648
    %v8728 = vxor.u32 %v8710, 2147483648
    %v8729 = vmul.f32 %v8727, 1.442695
    %v8730 = vpow.pop %v8729
    %v8731 = vmul.f32 %v8728, 1.442695
    %v8732 = vpow.pop %v8731
    %v8733 = vadd.f32 %v8730, 1.0
    %v8734 = vadd.f32 %v8732, 1.0
    %v8735 = vrcp.pop %v8733
    %v8736 = vmul.f32 1.0, %v8735
    %v8737 = vrcp.pop %v8734
    %v8738 = vmul.f32 1.0, %v8737
    %v8739 = vtanh.pop %v8711
    %v8740 = vtanh.pop %v8712
    %v8741 = vxor.u32 %v8713, 2147483648
    %v8742 = vxor.u32 %v8714, 2147483648
    %v8743 = vmul.f32 %v8741, 1.442695
    %v8744 = vpow.pop %v8743
    %v8745 = vmul.f32 %v8742, 1.442695
    %v8746 = vpow.pop %v8745
    %v8747 = vadd.f32 %v8744, 1.0
    %v8748 = vadd.f32 %v8746, 1.0
    %v8749 = vrcp.pop %v8747
    %v8750 = vmul.f32 1.0, %v8749
    %v8751 = vrcp.pop %v8748
    %v8752 = vmul.f32 1.0, %v8751
    %v8753 = vmul.f32 %v8736, %v8139
    %v8754 = vmul.f32 %v8738, %v8140
    %v8755 = vmul.f32 %v8724, %v8739
    %v8756 = vmul.f32 %v8726, %v8740
    %v8757 = vadd.f32 %v8753, %v8755
    %v8758 = vadd.f32 %v8754, %v8756
    %v8759 = vtanh.pop %v8757
    %v8760 = vtanh.pop %v8758
    %v8761 = vmul.f32 %v8750, %v8759
    %v8762 = vmul.f32 %v8752, %v8760
    %8763 = vst [vmem:[#allocation3 + $0x70] sm:$0xff] %v8761
    %8764 = vst [vmem:[#allocation3 + $0x78] sm:$0xff] %v8762
    %v8765 = vld [vmem:[#allocation3] sm:$0xff]
    %v8766 = vld [vmem:[#allocation3 + $0x8] sm:$0xff]
    %v8767 = vld [vmem:[#allocation3 + $0x10] sm:$0xff]
    %v8768 = vld [vmem:[#allocation3 + $0x18] sm:$0xff]
    %v8769 = vld [vmem:[#allocation3 + $0x20] sm:$0xff]
    %v8770 = vld [vmem:[#allocation3 + $0x28] sm:$0xff]
    %v8771 = vld [vmem:[#allocation3 + $0x30] sm:$0xff]
    %v8772 = vld [vmem:[#allocation3 + $0x38] sm:$0xff]
    %v8773 = vld [vmem:[#allocation3 + $0x40] sm:$0xff]
    %v8774 = vld [vmem:[#allocation3 + $0x48] sm:$0xff]
    %v8775 = vld [vmem:[#allocation3 + $0x50] sm:$0xff]
    %v8776 = vld [vmem:[#allocation3 + $0x58] sm:$0xff]
    %v8777 = vld [vmem:[#allocation3 + $0x60] sm:$0xff]
    %v8778 = vld [vmem:[#allocation3 + $0x68] sm:$0xff]
    %v8779 = vld [vmem:[#allocation3 + $0x70] sm:$0xff]
    %v8780 = vld [vmem:[#allocation3 + $0x78] sm:$0xff]
    %v8781 = vpack.c.bf16 %v8767, %v8765
    %v8782 = vpack.c.bf16 %v8768, %v8766
    %v8783 = vpack.c.bf16 %v8771, %v8769
    %v8784 = vpack.c.bf16 %v8772, %v8770
    %v8785 = vpack.c.bf16 %v8775, %v8773
    %v8786 = vpack.c.bf16 %v8776, %v8774
    %v8787 = vpack.c.bf16 %v8779, %v8777
    %v8788 = vpack.c.bf16 %v8780, %v8778
    %v8789 = vld [vmem:[%s6] sm:$0xf]
    %v8790 = vld [vmem:[%s6 + $0x4] sm:$0xf]
    %v8791 = vld [vmem:[%s6 + $0x8] sm:$0xf]
    %v8792 = vld [vmem:[%s6 + $0xc] sm:$0xf]
    %v8793 = vld [vmem:[%s6 + $0x10] sm:$0xf]
    %v8794 = vld [vmem:[%s6 + $0x14] sm:$0xf]
    %v8795 = vld [vmem:[%s6 + $0x18] sm:$0xf]
    %v8796 = vld [vmem:[%s6 + $0x1c] sm:$0xf]
    %v8797 = vld [vmem:[%s6 + $0x20] sm:$0xf]
    %v8798 = vld [vmem:[%s6 + $0x24] sm:$0xf]
    %v8799 = vld [vmem:[%s6 + $0x28] sm:$0xf]
    %v8800 = vld [vmem:[%s6 + $0x2c] sm:$0xf]
    %v8801 = vld [vmem:[%s6 + $0x30] sm:$0xf]
    %v8802 = vld [vmem:[%s6 + $0x34] sm:$0xf]
    %v8803 = vld [vmem:[%s6 + $0x38] sm:$0xf]
    %v8804 = vld [vmem:[%s6 + $0x3c] sm:$0xf]
    %v8805 = vld [vmem:[%s6 + $0x40] sm:$0xf]
    %v8806 = vld [vmem:[%s6 + $0x44] sm:$0xf]
    %v8807 = vld [vmem:[%s6 + $0x48] sm:$0xf]
    %v8808 = vld [vmem:[%s6 + $0x4c] sm:$0xf]
    %v8809 = vld [vmem:[%s6 + $0x50] sm:$0xf]
    %v8810 = vld [vmem:[%s6 + $0x54] sm:$0xf]
    %v8811 = vld [vmem:[%s6 + $0x58] sm:$0xf]
    %v8812 = vld [vmem:[%s6 + $0x5c] sm:$0xf]
    %v8813 = vld [vmem:[%s6 + $0x60] sm:$0xf]
    %v8814 = vld [vmem:[%s6 + $0x64] sm:$0xf]
    %v8815 = vld [vmem:[%s6 + $0x68] sm:$0xf]
    %v8816 = vld [vmem:[%s6 + $0x6c] sm:$0xf]
    %v8817 = vld [vmem:[%s6 + $0x70] sm:$0xf]
    %v8818 = vld [vmem:[%s6 + $0x74] sm:$0xf]
    %v8819 = vld [vmem:[%s6 + $0x78] sm:$0xf]
    %v8820 = vld [vmem:[%s6 + $0x7c] sm:$0xf]
    %v8822 = vlaneseq
    %v8823 = vshrl.u32 %v8822, 7
    %v8824 = vsub.s32 0, %v8823
    %v8825 = vrot.slane %v152, %v8824
    %v8859 = vunpack.c.l.b16 %v8789
    %v8860 = vunpack.c.l.b16 %v8790
    %v8861 = vunpack.c.l.b16 %v8791
    %v8862 = vunpack.c.l.b16 %v8792
    %v8863 = vunpack.c.l.b16 %v8793
    %v8864 = vunpack.c.l.b16 %v8794
    %v8865 = vunpack.c.l.b16 %v8795
    %v8866 = vunpack.c.l.b16 %v8796
    %v8867 = vunpack.c.l.b16 %v8797
    %v8868 = vunpack.c.l.b16 %v8798
    %v8869 = vunpack.c.l.b16 %v8799
    %v8870 = vunpack.c.l.b16 %v8800
    %v8871 = vunpack.c.l.b16 %v8801
    %v8872 = vunpack.c.l.b16 %v8802
    %v8873 = vunpack.c.l.b16 %v8803
    %v8874 = vunpack.c.l.b16 %v8804
    %v8875 = vunpack.c.l.b16 %v8805
    %v8876 = vunpack.c.l.b16 %v8806
    %v8877 = vunpack.c.l.b16 %v8807
    %v8878 = vunpack.c.l.b16 %v8808
    %v8879 = vunpack.c.l.b16 %v8809
    %v8880 = vunpack.c.l.b16 %v8810
    %v8881 = vunpack.c.l.b16 %v8811
    %v8882 = vunpack.c.l.b16 %v8812
    %v8883 = vunpack.c.l.b16 %v8813
    %v8884 = vunpack.c.l.b16 %v8814
    %v8885 = vunpack.c.l.b16 %v8815
    %v8886 = vunpack.c.l.b16 %v8816
    %v8887 = vunpack.c.l.b16 %v8817
    %v8888 = vunpack.c.l.b16 %v8818
    %v8889 = vunpack.c.l.b16 %v8819
    %v8890 = vunpack.c.l.b16 %v8820
    %v8891 = vpack.c.b16 %v8860, %v8859
    %v8892 = vpack.c.b16 %v8862, %v8861
    %v8893 = vpack.c.b16 %v8864, %v8863
    %v8894 = vpack.c.b16 %v8866, %v8865
    %v8895 = vpack.c.b16 %v8868, %v8867
    %v8896 = vpack.c.b16 %v8870, %v8869
    %v8897 = vpack.c.b16 %v8872, %v8871
    %v8898 = vpack.c.b16 %v8874, %v8873
    %v8899 = vpack.c.b16 %v8876, %v8875
    %v8900 = vpack.c.b16 %v8878, %v8877
    %v8901 = vpack.c.b16 %v8880, %v8879
    %v8902 = vpack.c.b16 %v8882, %v8881
    %v8903 = vpack.c.b16 %v8884, %v8883
    %v8904 = vpack.c.b16 %v8886, %v8885
    %v8905 = vpack.c.b16 %v8888, %v8887
    %v8906 = vpack.c.b16 %v8890, %v8889
    %8923 = vmatprep.subr.bf16.mxu0 0
    %8924 = vmatpush1.bf16.msra.mxu0 %v8891
    %8925 = vmatprep.subr.bf16.mxu0 0
    %8926 = vmatpush1.bf16.msra.mxu0 %v8892
    %8927 = vmatprep.subr.bf16.mxu0 0
    %8928 = vmatpush1.bf16.msra.mxu0 %v8893
    %8929 = vmatprep.subr.bf16.mxu0 0
    %8930 = vmatpush1.bf16.msra.mxu0 %v8894
    %8931 = vmatprep.subr.bf16.mxu0 0
    %8932 = vmatpush1.bf16.msra.mxu0 %v8895
    %8933 = vmatprep.subr.bf16.mxu0 0
    %8934 = vmatpush1.bf16.msra.mxu0 %v8896
    %8935 = vmatprep.subr.bf16.mxu0 0
    %8936 = vmatpush1.bf16.msra.mxu0 %v8897
    %8937 = vmatprep.subr.bf16.mxu0 0
    %8938 = vmatpush1.bf16.msra.mxu0 %v8898
    %8939 = vmatprep.subr.bf16.mxu0 0
    %8940 = vmatpush1.bf16.msra.mxu0 %v8899
    %8941 = vmatprep.subr.bf16.mxu0 0
    %8942 = vmatpush1.bf16.msra.mxu0 %v8900
    %8943 = vmatprep.subr.bf16.mxu0 0
    %8944 = vmatpush1.bf16.msra.mxu0 %v8901
    %8945 = vmatprep.subr.bf16.mxu0 0
    %8946 = vmatpush1.bf16.msra.mxu0 %v8902
    %8947 = vmatprep.subr.bf16.mxu0 0
    %8948 = vmatpush1.bf16.msra.mxu0 %v8903
    %8949 = vmatprep.subr.bf16.mxu0 0
    %8950 = vmatpush1.bf16.msra.mxu0 %v8904
    %8951 = vmatprep.subr.bf16.mxu0 0
    %8952 = vmatpush1.bf16.msra.mxu0 %v8905
    %8953 = vmatprep.subr.bf16.mxu0 0
    %8954 = vmatpush1.bf16.msra.mxu0 %v8906
    %8955 = vmatprep.mubr.bf16.mxu0 %v8782
    %8956 = vmatmul.mubr.bf16.gmra.mrb[0].mxu0 %v8781
    %v8957 = vpop.f32.mrb[0].mxu0
    %v8958 = vadd.f32 %v8825, %v8957
    %v8959 = vpop.f32.mrb[0].mxu0
    %v8960 = vpop.f32.mrb[0].mxu0
    %v8961 = vadd.f32 %v8825, %v8960
    %v8962 = vpop.f32.mrb[0].mxu0
    %8963 = vmatprep.mubr.bf16.mxu0 %v8784
    %8964 = vmatmul.mubr.bf16.gmra.mrb[0].mxu0 %v8783
    %v8965 = vpop.f32.mrb[0].mxu0
    %v8966 = vadd.f32 %v8825, %v8965
    %v8967 = vpop.f32.mrb[0].mxu0
    %v8968 = vpop.f32.mrb[0].mxu0
    %v8969 = vadd.f32 %v8825, %v8968
    %v8970 = vpop.f32.mrb[0].mxu0
    %8971 = vmatprep.mubr.bf16.mxu0 %v8786
    %8972 = vmatmul.mubr.bf16.gmra.mrb[0].mxu0 %v8785
    %v8973 = vpop.f32.mrb[0].mxu0
    %v8974 = vadd.f32 %v8825, %v8973
    %v8975 = vpop.f32.mrb[0].mxu0
    %v8976 = vpop.f32.mrb[0].mxu0
    %v8977 = vadd.f32 %v8825, %v8976
    %v8978 = vpop.f32.mrb[0].mxu0
    %8979 = vmatprep.mubr.bf16.mxu0 %v8788
    %8980 = vmatmul.mubr.bf16.gmra.mrb[0].mxu0 %v8787
    %v8981 = vpop.f32.mrb[0].mxu0
    %v8982 = vadd.f32 %v8825, %v8981
    %v8983 = vpop.f32.mrb[0].mxu0
    %v8984 = vpop.f32.mrb[0].mxu0
    %v8985 = vadd.f32 %v8825, %v8984
    %v8986 = vpop.f32.mrb[0].mxu0
    %8987 = vdwg.mxu0
    %v8988 = vmax.f32 %v8958, 0.0
    %v8989 = vmax.f32 %v8961, 0.0
    %v8990 = vmax.f32 %v8966, 0.0
    %v8991 = vmax.f32 %v8969, 0.0
    %v8992 = vmax.f32 %v8974, 0.0
    %v8993 = vmax.f32 %v8977, 0.0
    %v8994 = vmax.f32 %v8982, 0.0
    %v8995 = vmax.f32 %v8985, 0.0
    %v8996 = vpack.c.bf16 %v8989, %v8988
    %v8997 = vpack.c.bf16 %v8991, %v8990
    %v8998 = vpack.c.bf16 %v8993, %v8992
    %v8999 = vpack.c.bf16 %v8995, %v8994
    %v9000 = vld [vmem:[%s7] sm:$0xf]
    %v9001 = vld [vmem:[%s7 + $0x4] sm:$0xf]
    %v9002 = vld [vmem:[%s7 + $0x8] sm:$0xf]
    %v9003 = vld [vmem:[%s7 + $0xc] sm:$0xf]
    %v9004 = vld [vmem:[%s7 + $0x10] sm:$0xf]
    %v9005 = vld [vmem:[%s7 + $0x14] sm:$0xf]
    %v9006 = vld [vmem:[%s7 + $0x18] sm:$0xf]
    %v9007 = vld [vmem:[%s7 + $0x1c] sm:$0xf]
    %v9008 = vld [vmem:[%s7 + $0x20] sm:$0xf]
    %v9009 = vld [vmem:[%s7 + $0x24] sm:$0xf]
    %v9010 = vld [vmem:[%s7 + $0x28] sm:$0xf]
    %v9011 = vld [vmem:[%s7 + $0x2c] sm:$0xf]
    %v9012 = vld [vmem:[%s7 + $0x30] sm:$0xf]
    %v9013 = vld [vmem:[%s7 + $0x34] sm:$0xf]
    %v9014 = vld [vmem:[%s7 + $0x38] sm:$0xf]
    %v9015 = vld [vmem:[%s7 + $0x3c] sm:$0xf]
    %v9017 = vlaneseq
    %v9018 = vshrl.u32 %v9017, 7
    %v9019 = vsub.s32 0, %v9018
    %v9020 = vrot.slane %v153, %v9019
    %v9038 = vunpack.c.l.b16 %v9000
    %v9039 = vunpack.c.l.b16 %v9001
    %v9040 = vunpack.c.l.b16 %v9002
    %v9041 = vunpack.c.l.b16 %v9003
    %v9042 = vunpack.c.l.b16 %v9004
    %v9043 = vunpack.c.l.b16 %v9005
    %v9044 = vunpack.c.l.b16 %v9006
    %v9045 = vunpack.c.l.b16 %v9007
    %v9046 = vunpack.c.l.b16 %v9008
    %v9047 = vunpack.c.l.b16 %v9009
    %v9048 = vunpack.c.l.b16 %v9010
    %v9049 = vunpack.c.l.b16 %v9011
    %v9050 = vunpack.c.l.b16 %v9012
    %v9051 = vunpack.c.l.b16 %v9013
    %v9052 = vunpack.c.l.b16 %v9014
    %v9053 = vunpack.c.l.b16 %v9015
    %v9054 = vpack.c.b16 %v9039, %v9038
    %v9055 = vpack.c.b16 %v9041, %v9040
    %v9056 = vpack.c.b16 %v9043, %v9042
    %v9057 = vpack.c.b16 %v9045, %v9044
    %v9058 = vpack.c.b16 %v9047, %v9046
    %v9059 = vpack.c.b16 %v9049, %v9048
    %v9060 = vpack.c.b16 %v9051, %v9050
    %v9061 = vpack.c.b16 %v9053, %v9052
    %9070 = vmatprep.subr.bf16.mxu0 0
    %9071 = vmatpush1.bf16.msra.mxu0 %v9054
    %9072 = vmatprep.subr.bf16.mxu0 0
    %9073 = vmatpush1.bf16.msra.mxu0 %v9055
    %9074 = vmatprep.subr.bf16.mxu0 0
    %9075 = vmatpush1.bf16.msra.mxu0 %v9056
    %9076 = vmatprep.subr.bf16.mxu0 0
    %9077 = vmatpush1.bf16.msra.mxu0 %v9057
    %9078 = vmatprep.subr.bf16.mxu0 0
    %9079 = vmatpush1.bf16.msra.mxu0 %v9058
    %9080 = vmatprep.subr.bf16.mxu0 0
    %9081 = vmatpush1.bf16.msra.mxu0 %v9059
    %9082 = vmatprep.subr.bf16.mxu0 0
    %9083 = vmatpush1.bf16.msra.mxu0 %v9060
    %9084 = vmatprep.subr.bf16.mxu0 0
    %9085 = vmatpush1.bf16.msra.mxu0 %v9061
    %9086 = vmatprep.subr.bf16.mxu0 0
    %9087 = vmatpush1.bf16.msra.mxu0 0
    %9088 = vmatprep.subr.bf16.mxu0 0
    %9089 = vmatpush1.bf16.msra.mxu0 0
    %9090 = vmatprep.subr.bf16.mxu0 0
    %9091 = vmatpush1.bf16.msra.mxu0 0
    %9092 = vmatprep.subr.bf16.mxu0 0
    %9093 = vmatpush1.bf16.msra.mxu0 0
    %9094 = vmatprep.subr.bf16.mxu0 0
    %9095 = vmatpush1.bf16.msra.mxu0 0
    %9096 = vmatprep.subr.bf16.mxu0 0
    %9097 = vmatpush1.bf16.msra.mxu0 0
    %9098 = vmatprep.subr.bf16.mxu0 0
    %9099 = vmatpush1.bf16.msra.mxu0 0
    %9100 = vmatprep.subr.bf16.mxu0 0
    %9101 = vmatpush1.bf16.msra.mxu0 0
    %9102 = vmatprep.mubr.bf16.mxu0 0
    %9103 = vmatmul.mubr.bf16.gmra.mrb[0].mxu0 %v8996
    %v9104 = vpop.f32.mrb[0].mxu0
    %v9105 = vadd.f32 %v9020, %v9104
    %v9106 = vpop.f32.mrb[0].mxu0
    %v9107 = vpop.f32.mrb[0].mxu0
    %v9108 = vadd.f32 %v9020, %v9107
    %v9109 = vpop.f32.mrb[0].mxu0
    %9110 = vmatprep.mubr.bf16.mxu0 0
    %9111 = vmatmul.mubr.bf16.gmra.mrb[0].mxu0 %v8997
    %v9112 = vpop.f32.mrb[0].mxu0
    %v9113 = vadd.f32 %v9020, %v9112
    %v9114 = vpop.f32.mrb[0].mxu0
    %v9115 = vpop.f32.mrb[0].mxu0
    %v9116 = vadd.f32 %v9020, %v9115
    %v9117 = vpop.f32.mrb[0].mxu0
    %9118 = vmatprep.mubr.bf16.mxu0 0
    %9119 = vmatmul.mubr.bf16.gmra.mrb[0].mxu0 %v8998
    %v9120 = vpop.f32.mrb[0].mxu0
    %v9121 = vadd.f32 %v9020, %v9120
    %v9122 = vpop.f32.mrb[0].mxu0
    %v9123 = vpop.f32.mrb[0].mxu0
    %v9124 = vadd.f32 %v9020, %v9123
    %v9125 = vpop.f32.mrb[0].mxu0
    %9126 = vmatprep.mubr.bf16.mxu0 0
    %9127 = vmatmul.mubr.bf16.gmra.mrb[0].mxu0 %v8999
    %v9128 = vpop.f32.mrb[0].mxu0
    %v9129 = vadd.f32 %v9020, %v9128
    %v9130 = vpop.f32.mrb[0].mxu0
    %v9131 = vpop.f32.mrb[0].mxu0
    %v9132 = vadd.f32 %v9020, %v9131
    %v9133 = vpop.f32.mrb[0].mxu0
    %9134 = vdwg.mxu0
    %v9135 = vtanh.pop %v9105
    %v9136 = vtanh.pop %v9108
    %v9137 = vtanh.pop %v9113
    %v9138 = vtanh.pop %v9116
    %v9139 = vtanh.pop %v9121
    %v9140 = vtanh.pop %v9124
    %v9141 = vtanh.pop %v9129
    %v9142 = vtanh.pop %v9132
    %v9143 = vld [vmem:[#allocation11] sm:$0xff]
    %v9144 = vld [vmem:[#allocation11 + $0x8] sm:$0xff]
    %v9145 = vld [vmem:[#allocation11 + $0x10] sm:$0xff]
    %v9146 = vld [vmem:[#allocation11 + $0x18] sm:$0xff]
    %v9147 = vld [vmem:[#allocation11 + $0x20] sm:$0xff]
    %v9148 = vld [vmem:[#allocation11 + $0x28] sm:$0xff]
    %v9149 = vld [vmem:[#allocation11 + $0x30] sm:$0xff]
    %v9150 = vld [vmem:[#allocation11 + $0x38] sm:$0xff]
    %v9151 = vld [vmem:[#allocation11 + $0x40] sm:$0xff]
    %v9152 = vld [vmem:[#allocation11 + $0x48] sm:$0xff]
    %v9153 = vld [vmem:[#allocation11 + $0x50] sm:$0xff]
    %v9154 = vld [vmem:[#allocation11 + $0x58] sm:$0xff]
    %v9155 = vld [vmem:[#allocation11 + $0x60] sm:$0xff]
    %v9156 = vld [vmem:[#allocation11 + $0x68] sm:$0xff]
    %v9157 = vld [vmem:[#allocation11 + $0x70] sm:$0xff]
    %v9158 = vld [vmem:[#allocation11 + $0x78] sm:$0xff]
    %v9159 = vld [vmem:[#allocation11 + $0x80] sm:$0xff]
    %v9160 = vld [vmem:[#allocation11 + $0x88] sm:$0xff]
    %v9161 = vld [vmem:[#allocation11 + $0x90] sm:$0xff]
    %v9162 = vld [vmem:[#allocation11 + $0x98] sm:$0xff]
    %v9163 = vld [vmem:[#allocation11 + $0xa0] sm:$0xff]
    %v9164 = vld [vmem:[#allocation11 + $0xa8] sm:$0xff]
    %v9165 = vld [vmem:[#allocation11 + $0xb0] sm:$0xff]
    %v9166 = vld [vmem:[#allocation11 + $0xb8] sm:$0xff]
    %v9167 = vld [vmem:[#allocation11 + $0xc0] sm:$0xff]
    %v9168 = vld [vmem:[#allocation11 + $0xc8] sm:$0xff]
    %v9169 = vld [vmem:[#allocation11 + $0xd0] sm:$0xff]
    %v9170 = vld [vmem:[#allocation11 + $0xd8] sm:$0xff]
    %v9171 = vld [vmem:[#allocation11 + $0xe0] sm:$0xff]
    %v9172 = vld [vmem:[#allocation11 + $0xe8] sm:$0xff]
    %v9173 = vld [vmem:[#allocation11 + $0xf0] sm:$0xff]
    %v9174 = vld [vmem:[#allocation11 + $0xf8] sm:$0xff]
    %v9175 = vpack.c.bf16 %v9136, %v9135
    %v9176 = vpack.c.bf16 %v9138, %v9137
    %v9177 = vpack.c.bf16 %v9140, %v9139
    %v9178 = vpack.c.bf16 %v9142, %v9141
    %v9179 = vld [vmem:[#allocation12] sm:$0xff]
    %v9180 = vld [vmem:[#allocation12 + $0x8] sm:$0xff]
    %v9181 = vld [vmem:[#allocation12 + $0x10] sm:$0xff]
    %v9182 = vld [vmem:[#allocation12 + $0x18] sm:$0xff]
    %v9183 = vld [vmem:[#allocation12 + $0x20] sm:$0xff]
    %v9184 = vld [vmem:[#allocation12 + $0x28] sm:$0xff]
    %v9185 = vld [vmem:[#allocation12 + $0x30] sm:$0xff]
    %v9186 = vld [vmem:[#allocation12 + $0x38] sm:$0xff]
    %v9187 = vld [vmem:[#allocation12 + $0x40] sm:$0xff]
    %v9188 = vld [vmem:[#allocation12 + $0x48] sm:$0xff]
    %v9189 = vld [vmem:[#allocation12 + $0x50] sm:$0xff]
    %v9190 = vld [vmem:[#allocation12 + $0x58] sm:$0xff]
    %v9191 = vld [vmem:[#allocation12 + $0x60] sm:$0xff]
    %v9192 = vld [vmem:[#allocation12 + $0x68] sm:$0xff]
    %v9193 = vld [vmem:[#allocation12 + $0x70] sm:$0xff]
    %v9194 = vld [vmem:[#allocation12 + $0x78] sm:$0xff]
    %v9211 = vunpack.c.l.b16 %v9179
    %v9212 = vunpack.c.h.b16 %v9179
    %v9213 = vunpack.c.l.b16 %v9180
    %v9214 = vunpack.c.h.b16 %v9180
    %v9215 = vunpack.c.l.b16 %v9181
    %v9216 = vunpack.c.h.b16 %v9181
    %v9217 = vunpack.c.l.b16 %v9182
    %v9218 = vunpack.c.h.b16 %v9182
    %v9219 = vunpack.c.l.b16 %v9183
    %v9220 = vunpack.c.h.b16 %v9183
    %v9221 = vunpack.c.l.b16 %v9184
    %v9222 = vunpack.c.h.b16 %v9184
    %v9223 = vunpack.c.l.b16 %v9185
    %v9224 = vunpack.c.h.b16 %v9185
    %v9225 = vunpack.c.l.b16 %v9186
    %v9226 = vunpack.c.h.b16 %v9186
    %v9227 = vunpack.c.l.b16 %v9187
    %v9228 = vunpack.c.h.b16 %v9187
    %v9229 = vunpack.c.l.b16 %v9188
    %v9230 = vunpack.c.h.b16 %v9188
    %v9231 = vunpack.c.l.b16 %v9189
    %v9232 = vunpack.c.h.b16 %v9189
    %v9233 = vunpack.c.l.b16 %v9190
    %v9234 = vunpack.c.h.b16 %v9190
    %v9235 = vunpack.c.l.b16 %v9191
    %v9236 = vunpack.c.h.b16 %v9191
    %v9237 = vunpack.c.l.b16 %v9192
    %v9238 = vunpack.c.h.b16 %v9192
    %v9239 = vunpack.c.l.b16 %v9193
    %v9240 = vunpack.c.h.b16 %v9193
    %v9241 = vunpack.c.l.b16 %v9194
    %v9242 = vunpack.c.h.b16 %v9194
    %v9243 = vpack.c.b16 %v9213, %v9211
    %v9244 = vpack.c.b16 %v9214, %v9212
    %v9245 = vpack.c.b16 %v9217, %v9215
    %v9246 = vpack.c.b16 %v9218, %v9216
    %v9247 = vpack.c.b16 %v9221, %v9219
    %v9248 = vpack.c.b16 %v9222, %v9220
    %v9249 = vpack.c.b16 %v9225, %v9223
    %v9250 = vpack.c.b16 %v9226, %v9224
    %v9251 = vpack.c.b16 %v9229, %v9227
    %v9252 = vpack.c.b16 %v9230, %v9228
    %v9253 = vpack.c.b16 %v9233, %v9231
    %v9254 = vpack.c.b16 %v9234, %v9232
    %v9255 = vpack.c.b16 %v9237, %v9235
    %v9256 = vpack.c.b16 %v9238, %v9236
    %v9257 = vpack.c.b16 %v9241, %v9239
    %v9258 = vpack.c.b16 %v9242, %v9240
    %9275 = vmatprep.subr.bf16.mxu0 %v9244
    %9276 = vmatpush1.bf16.msra.mxu0 %v9243
    %9277 = vmatprep.subr.bf16.mxu0 %v9246
    %9278 = vmatpush1.bf16.msra.mxu0 %v9245
    %9279 = vmatprep.subr.bf16.mxu0 %v9248
    %9280 = vmatpush1.bf16.msra.mxu0 %v9247
    %9281 = vmatprep.subr.bf16.mxu0 %v9250
    %9282 = vmatpush1.bf16.msra.mxu0 %v9249
    %9283 = vmatprep.subr.bf16.mxu0 %v9252
    %9284 = vmatpush1.bf16.msra.mxu0 %v9251
    %9285 = vmatprep.subr.bf16.mxu0 %v9254
    %9286 = vmatpush1.bf16.msra.mxu0 %v9253
    %9287 = vmatprep.subr.bf16.mxu0 %v9256
    %9288 = vmatpush1.bf16.msra.mxu0 %v9255
    %9289 = vmatprep.subr.bf16.mxu0 %v9258
    %9290 = vmatpush1.bf16.msra.mxu0 %v9257
    %9291 = vmatprep.subr.bf16.mxu0 0
    %9292 = vmatpush1.bf16.msra.mxu0 0
    %9293 = vmatprep.subr.bf16.mxu0 0
    %9294 = vmatpush1.bf16.msra.mxu0 0
    %9295 = vmatprep.subr.bf16.mxu0 0
    %9296 = vmatpush1.bf16.msra.mxu0 0
    %9297 = vmatprep.subr.bf16.mxu0 0
    %9298 = vmatpush1.bf16.msra.mxu0 0
    %9299 = vmatprep.subr.bf16.mxu0 0
    %9300 = vmatpush1.bf16.msra.mxu0 0
    %9301 = vmatprep.subr.bf16.mxu0 0
    %9302 = vmatpush1.bf16.msra.mxu0 0
    %9303 = vmatprep.subr.bf16.mxu0 0
    %9304 = vmatpush1.bf16.msra.mxu0 0
    %9305 = vmatprep.subr.bf16.mxu0 0
    %9306 = vmatpush1.bf16.msra.mxu0 0
    %9307 = vmatprep.mubr.bf16.mxu0 0
    %9308 = vmatmul.mubr.bf16.gmra.mrb[0].mxu0 %v9175
    %v9309 = vpop.f32.mrb[0].mxu0
    %v9310 = vadd.f32 0.0, %v9309
    %v9311 = vpop.f32.mrb[0].mxu0
    %v9312 = vadd.f32 0.0, %v9311
    %v9313 = vpop.f32.mrb[0].mxu0
    %v9314 = vadd.f32 0.0, %v9313
    %v9315 = vpop.f32.mrb[0].mxu0
    %v9316 = vadd.f32 0.0, %v9315
    %9317 = vmatprep.mubr.bf16.mxu0 0
    %9318 = vmatmul.mubr.bf16.gmra.mrb[0].mxu0 %v9176
    %v9319 = vpop.f32.mrb[0].mxu0
    %v9320 = vadd.f32 0.0, %v9319
    %v9321 = vpop.f32.mrb[0].mxu0
    %v9322 = vadd.f32 0.0, %v9321
    %v9323 = vpop.f32.mrb[0].mxu0
    %v9324 = vadd.f32 0.0, %v9323
    %v9325 = vpop.f32.mrb[0].mxu0
    %v9326 = vadd.f32 0.0, %v9325
    %9327 = vmatprep.mubr.bf16.mxu0 0
    %9328 = vmatmul.mubr.bf16.gmra.mrb[0].mxu0 %v9177
    %v9329 = vpop.f32.mrb[0].mxu0
    %v9330 = vadd.f32 0.0, %v9329
    %v9331 = vpop.f32.mrb[0].mxu0
    %v9332 = vadd.f32 0.0, %v9331
    %v9333 = vpop.f32.mrb[0].mxu0
    %v9334 = vadd.f32 0.0, %v9333
    %v9335 = vpop.f32.mrb[0].mxu0
    %v9336 = vadd.f32 0.0, %v9335
    %9337 = vmatprep.mubr.bf16.mxu0 0
    %9338 = vmatmul.mubr.bf16.gmra.mrb[0].mxu0 %v9178
    %v9339 = vpop.f32.mrb[0].mxu0
    %v9340 = vadd.f32 0.0, %v9339
    %v9341 = vpop.f32.mrb[0].mxu0
    %v9342 = vadd.f32 0.0, %v9341
    %v9343 = vpop.f32.mrb[0].mxu0
    %v9344 = vadd.f32 0.0, %v9343
    %v9345 = vpop.f32.mrb[0].mxu0
    %v9346 = vadd.f32 0.0, %v9345
    %9347 = vdwg.mxu0
    %v9380 = vunpack.c.l.b16 %v9143
    %v9381 = vunpack.c.h.b16 %v9143
    %v9382 = vunpack.c.l.b16 %v9144
    %v9383 = vunpack.c.h.b16 %v9144
    %v9384 = vunpack.c.l.b16 %v9145
    %v9385 = vunpack.c.h.b16 %v9145
    %v9386 = vunpack.c.l.b16 %v9146
    %v9387 = vunpack.c.h.b16 %v9146
    %v9388 = vunpack.c.l.b16 %v9147
    %v9389 = vunpack.c.h.b16 %v9147
    %v9390 = vunpack.c.l.b16 %v9148
    %v9391 = vunpack.c.h.b16 %v9148
    %v9392 = vunpack.c.l.b16 %v9149
    %v9393 = vunpack.c.h.b16 %v9149
    %v9394 = vunpack.c.l.b16 %v9150
    %v9395 = vunpack.c.h.b16 %v9150
    %v9396 = vunpack.c.l.b16 %v9151
    %v9397 = vunpack.c.h.b16 %v9151
    %v9398 = vunpack.c.l.b16 %v9152
    %v9399 = vunpack.c.h.b16 %v9152
    %v9400 = vunpack.c.l.b16 %v9153
    %v9401 = vunpack.c.h.b16 %v9153
    %v9402 = vunpack.c.l.b16 %v9154
    %v9403 = vunpack.c.h.b16 %v9154
    %v9404 = vunpack.c.l.b16 %v9155
    %v9405 = vunpack.c.h.b16 %v9155
    %v9406 = vunpack.c.l.b16 %v9156
    %v9407 = vunpack.c.h.b16 %v9156
    %v9408 = vunpack.c.l.b16 %v9157
    %v9409 = vunpack.c.h.b16 %v9157
    %v9410 = vunpack.c.l.b16 %v9158
    %v9411 = vunpack.c.h.b16 %v9158
    %v9412 = vunpack.c.l.b16 %v9159
    %v9413 = vunpack.c.h.b16 %v9159
    %v9414 = vunpack.c.l.b16 %v9160
    %v9415 = vunpack.c.h.b16 %v9160
    %v9416 = vunpack.c.l.b16 %v9161
    %v9417 = vunpack.c.h.b16 %v9161
    %v9418 = vunpack.c.l.b16 %v9162
    %v9419 = vunpack.c.h.b16 %v9162
    %v9420 = vunpack.c.l.b16 %v9163
    %v9421 = vunpack.c.h.b16 %v9163
    %v9422 = vunpack.c.l.b16 %v9164
    %v9423 = vunpack.c.h.b16 %v9164
    %v9424 = vunpack.c.l.b16 %v9165
    %v9425 = vunpack.c.h.b16 %v9165
    %v9426 = vunpack.c.l.b16 %v9166
    %v9427 = vunpack.c.h.b16 %v9166
    %v9428 = vunpack.c.l.b16 %v9167
    %v9429 = vunpack.c.h.b16 %v9167
    %v9430 = vunpack.c.l.b16 %v9168
    %v9431 = vunpack.c.h.b16 %v9168
    %v9432 = vunpack.c.l.b16 %v9169
    %v9433 = vunpack.c.h.b16 %v9169
    %v9434 = vunpack.c.l.b16 %v9170
    %v9435 = vunpack.c.h.b16 %v9170
    %v9436 = vunpack.c.l.b16 %v9171
    %v9437 = vunpack.c.h.b16 %v9171
    %v9438 = vunpack.c.l.b16 %v9172
    %v9439 = vunpack.c.h.b16 %v9172
    %v9440 = vunpack.c.l.b16 %v9173
    %v9441 = vunpack.c.h.b16 %v9173
    %v9442 = vunpack.c.l.b16 %v9174
    %v9443 = vunpack.c.h.b16 %v9174
    %v9444 = vpack.c.b16 %v9382, %v9380
    %v9445 = vpack.c.b16 %v9383, %v9381
    %v9446 = vpack.c.b16 %v9386, %v9384
    %v9447 = vpack.c.b16 %v9387, %v9385
    %v9448 = vpack.c.b16 %v9390, %v9388
    %v9449 = vpack.c.b16 %v9391, %v9389
    %v9450 = vpack.c.b16 %v9394, %v9392
    %v9451 = vpack.c.b16 %v9395, %v9393
    %v9452 = vpack.c.b16 %v9398, %v9396
    %v9453 = vpack.c.b16 %v9399, %v9397
    %v9454 = vpack.c.b16 %v9402, %v9400
    %v9455 = vpack.c.b16 %v9403, %v9401
    %v9456 = vpack.c.b16 %v9406, %v9404
    %v9457 = vpack.c.b16 %v9407, %v9405
    %v9458 = vpack.c.b16 %v9410, %v9408
    %v9459 = vpack.c.b16 %v9411, %v9409
    %v9460 = vpack.c.b16 %v9414, %v9412
    %v9461 = vpack.c.b16 %v9415, %v9413
    %v9462 = vpack.c.b16 %v9418, %v9416
    %v9463 = vpack.c.b16 %v9419, %v9417
    %v9464 = vpack.c.b16 %v9422, %v9420
    %v9465 = vpack.c.b16 %v9423, %v9421
    %v9466 = vpack.c.b16 %v9426, %v9424
    %v9467 = vpack.c.b16 %v9427, %v9425
    %v9468 = vpack.c.b16 %v9430, %v9428
    %v9469 = vpack.c.b16 %v9431, %v9429
    %v9470 = vpack.c.b16 %v9434, %v9432
    %v9471 = vpack.c.b16 %v9435, %v9433
    %v9472 = vpack.c.b16 %v9438, %v9436
    %v9473 = vpack.c.b16 %v9439, %v9437
    %v9474 = vpack.c.b16 %v9442, %v9440
    %v9475 = vpack.c.b16 %v9443, %v9441
    %9508 = vmatprep.subr.bf16.mxu0 %v9445
    %9509 = vmatpush1.bf16.msra.mxu0 %v9444
    %9510 = vmatprep.subr.bf16.mxu0 %v9447
    %9511 = vmatpush1.bf16.msra.mxu0 %v9446
    %9512 = vmatprep.subr.bf16.mxu0 %v9449
    %9513 = vmatpush1.bf16.msra.mxu0 %v9448
    %9514 = vmatprep.subr.bf16.mxu0 %v9451
    %9515 = vmatpush1.bf16.msra.mxu0 %v9450
    %9516 = vmatprep.subr.bf16.mxu0 %v9453
    %9517 = vmatpush1.bf16.msra.mxu0 %v9452
    %9518 = vmatprep.subr.bf16.mxu0 %v9455
    %9519 = vmatpush1.bf16.msra.mxu0 %v9454
    %9520 = vmatprep.subr.bf16.mxu0 %v9457
    %9521 = vmatpush1.bf16.msra.mxu0 %v9456
    %9522 = vmatprep.subr.bf16.mxu0 %v9459
    %9523 = vmatpush1.bf16.msra.mxu0 %v9458
    %9524 = vmatprep.subr.bf16.mxu0 %v9461
    %9525 = vmatpush1.bf16.msra.mxu0 %v9460
    %9526 = vmatprep.subr.bf16.mxu0 %v9463
    %9527 = vmatpush1.bf16.msra.mxu0 %v9462
    %9528 = vmatprep.subr.bf16.mxu0 %v9465
    %9529 = vmatpush1.bf16.msra.mxu0 %v9464
    %9530 = vmatprep.subr.bf16.mxu0 %v9467
    %9531 = vmatpush1.bf16.msra.mxu0 %v9466
    %9532 = vmatprep.subr.bf16.mxu0 %v9469
    %9533 = vmatpush1.bf16.msra.mxu0 %v9468
    %9534 = vmatprep.subr.bf16.mxu0 %v9471
    %9535 = vmatpush1.bf16.msra.mxu0 %v9470
    %9536 = vmatprep.subr.bf16.mxu0 %v9473
    %9537 = vmatpush1.bf16.msra.mxu0 %v9472
    %9538 = vmatprep.subr.bf16.mxu0 %v9475
    %9539 = vmatpush1.bf16.msra.mxu0 %v9474
    %9540 = vmatprep.mubr.bf16.mxu0 %v8782
    %9541 = vmatmul.mubr.bf16.gmra.mrb[0].mxu0 %v8781
    %v9542 = vpop.f32.mrb[0].mxu0
    %v9543 = vadd.f32 %v9310, %v9542
    %v9544 = vpop.f32.mrb[0].mxu0
    %v9545 = vadd.f32 %v9312, %v9544
    %v9546 = vpop.f32.mrb[0].mxu0
    %v9547 = vadd.f32 %v9314, %v9546
    %v9548 = vpop.f32.mrb[0].mxu0
    %v9549 = vadd.f32 %v9316, %v9548
    %9550 = vmatprep.mubr.bf16.mxu0 %v8784
    %9551 = vmatmul.mubr.bf16.gmra.mrb[0].mxu0 %v8783
    %v9552 = vpop.f32.mrb[0].mxu0
    %v9553 = vadd.f32 %v9320, %v9552
    %v9554 = vpop.f32.mrb[0].mxu0
    %v9555 = vadd.f32 %v9322, %v9554
    %v9556 = vpop.f32.mrb[0].mxu0
    %v9557 = vadd.f32 %v9324, %v9556
    %v9558 = vpop.f32.mrb[0].mxu0
    %v9559 = vadd.f32 %v9326, %v9558
    %9560 = vmatprep.mubr.bf16.mxu0 %v8786
    %9561 = vmatmul.mubr.bf16.gmra.mrb[0].mxu0 %v8785
    %v9562 = vpop.f32.mrb[0].mxu0
    %v9563 = vadd.f32 %v9330, %v9562
    %v9564 = vpop.f32.mrb[0].mxu0
    %v9565 = vadd.f32 %v9332, %v9564
    %v9566 = vpop.f32.mrb[0].mxu0
    %v9567 = vadd.f32 %v9334, %v9566
    %v9568 = vpop.f32.mrb[0].mxu0
    %v9569 = vadd.f32 %v9336, %v9568
    %9570 = vmatprep.mubr.bf16.mxu0 %v8788
    %9571 = vmatmul.mubr.bf16.gmra.mrb[0].mxu0 %v8787
    %v9572 = vpop.f32.mrb[0].mxu0
    %v9573 = vadd.f32 %v9340, %v9572
    %v9574 = vpop.f32.mrb[0].mxu0
    %v9575 = vadd.f32 %v9342, %v9574
    %v9576 = vpop.f32.mrb[0].mxu0
    %v9577 = vadd.f32 %v9344, %v9576
    %v9578 = vpop.f32.mrb[0].mxu0
    %v9579 = vadd.f32 %v9346, %v9578
    %9580 = vdwg.mxu0
    %v9582 = vlaneseq
    %v9583 = vshrl.u32 %v9582, 7
    %v9584 = vsub.s32 0, %v9583
    %v9585 = vrot.slane %v154, %v9584
    %v9586 = vlaneseq
    %v9587 = vshrl.u32 %v9586, 7
    %v9588 = vsub.s32 1, %v9587
    %v9589 = vrot.slane %v154, %v9588
    %v9592 = vadd.f32 %v9543, %v9585
    %v9593 = vadd.f32 %v9545, %v9589
    %v9594 = vadd.f32 %v9547, %v9585
    %v9595 = vadd.f32 %v9549, %v9589
    %v9596 = vadd.f32 %v9553, %v9585
    %v9597 = vadd.f32 %v9555, %v9589
    %v9598 = vadd.f32 %v9557, %v9585
    %v9599 = vadd.f32 %v9559, %v9589
    %v9600 = vadd.f32 %v9563, %v9585
    %v9601 = vadd.f32 %v9565, %v9589
    %v9602 = vadd.f32 %v9567, %v9585
    %v9603 = vadd.f32 %v9569, %v9589
    %v9604 = vadd.f32 %v9573, %v9585
    %v9605 = vadd.f32 %v9575, %v9589
    %v9606 = vadd.f32 %v9577, %v9585
    %v9607 = vadd.f32 %v9579, %v9589
    %v9608 = vmax.f32 %v9592, 0.0
    %v9609 = vmax.f32 %v9593, 0.0
    %v9610 = vmax.f32 %v9594, 0.0
    %v9611 = vmax.f32 %v9595, 0.0
    %v9612 = vmax.f32 %v9596, 0.0
    %v9613 = vmax.f32 %v9597, 0.0
    %v9614 = vmax.f32 %v9598, 0.0
    %v9615 = vmax.f32 %v9599, 0.0
    %v9616 = vmax.f32 %v9600, 0.0
    %v9617 = vmax.f32 %v9601, 0.0
    %v9618 = vmax.f32 %v9602, 0.0
    %v9619 = vmax.f32 %v9603, 0.0
    %v9620 = vmax.f32 %v9604, 0.0
    %v9621 = vmax.f32 %v9605, 0.0
    %v9622 = vmax.f32 %v9606, 0.0
    %v9623 = vmax.f32 %v9607, 0.0
    %v9624 = vpack.c.bf16 %v9610, %v9608
    %v9625 = vpack.c.bf16 %v9611, %v9609
    %v9626 = vpack.c.bf16 %v9614, %v9612
    %v9627 = vpack.c.bf16 %v9615, %v9613
    %v9628 = vpack.c.bf16 %v9618, %v9616
    %v9629 = vpack.c.bf16 %v9619, %v9617
    %v9630 = vpack.c.bf16 %v9622, %v9620
    %v9631 = vpack.c.bf16 %v9623, %v9621
    %v9632 = vld [vmem:[#allocation14] sm:$0xf]
    %v9633 = vld [vmem:[#allocation14 + $0x4] sm:$0xf]
    %v9634 = vld [vmem:[#allocation14 + $0x8] sm:$0xf]
    %v9635 = vld [vmem:[#allocation14 + $0xc] sm:$0xf]
    %v9636 = vld [vmem:[#allocation14 + $0x10] sm:$0xf]
    %v9637 = vld [vmem:[#allocation14 + $0x14] sm:$0xf]
    %v9638 = vld [vmem:[#allocation14 + $0x18] sm:$0xf]
    %v9639 = vld [vmem:[#allocation14 + $0x1c] sm:$0xf]
    %v9640 = vld [vmem:[#allocation14 + $0x20] sm:$0xf]
    %v9641 = vld [vmem:[#allocation14 + $0x24] sm:$0xf]
    %v9642 = vld [vmem:[#allocation14 + $0x28] sm:$0xf]
    %v9643 = vld [vmem:[#allocation14 + $0x2c] sm:$0xf]
    %v9644 = vld [vmem:[#allocation14 + $0x30] sm:$0xf]
    %v9645 = vld [vmem:[#allocation14 + $0x34] sm:$0xf]
    %v9646 = vld [vmem:[#allocation14 + $0x38] sm:$0xf]
    %v9647 = vld [vmem:[#allocation14 + $0x3c] sm:$0xf]
    %v9648 = vld [vmem:[#allocation14 + $0x40] sm:$0xf]
    %v9649 = vld [vmem:[#allocation14 + $0x44] sm:$0xf]
    %v9650 = vld [vmem:[#allocation14 + $0x48] sm:$0xf]
    %v9651 = vld [vmem:[#allocation14 + $0x4c] sm:$0xf]
    %v9652 = vld [vmem:[#allocation14 + $0x50] sm:$0xf]
    %v9653 = vld [vmem:[#allocation14 + $0x54] sm:$0xf]
    %v9654 = vld [vmem:[#allocation14 + $0x58] sm:$0xf]
    %v9655 = vld [vmem:[#allocation14 + $0x5c] sm:$0xf]
    %v9656 = vld [vmem:[#allocation14 + $0x60] sm:$0xf]
    %v9657 = vld [vmem:[#allocation14 + $0x64] sm:$0xf]
    %v9658 = vld [vmem:[#allocation14 + $0x68] sm:$0xf]
    %v9659 = vld [vmem:[#allocation14 + $0x6c] sm:$0xf]
    %v9660 = vld [vmem:[#allocation14 + $0x70] sm:$0xf]
    %v9661 = vld [vmem:[#allocation14 + $0x74] sm:$0xf]
    %v9662 = vld [vmem:[#allocation14 + $0x78] sm:$0xf]
    %v9663 = vld [vmem:[#allocation14 + $0x7c] sm:$0xf]
    %v9665 = vlaneseq
    %v9666 = vshrl.u32 %v9665, 7
    %v9667 = vsub.s32 0, %v9666
    %v9668 = vrot.slane %v155, %v9667
    %v9702 = vunpack.c.l.b16 %v9632
    %v9703 = vunpack.c.l.b16 %v9633
    %v9704 = vunpack.c.l.b16 %v9634
    %v9705 = vunpack.c.l.b16 %v9635
    %v9706 = vunpack.c.l.b16 %v9636
    %v9707 = vunpack.c.l.b16 %v9637
    %v9708 = vunpack.c.l.b16 %v9638
    %v9709 = vunpack.c.l.b16 %v9639
    %v9710 = vunpack.c.l.b16 %v9640
    %v9711 = vunpack.c.l.b16 %v9641
    %v9712 = vunpack.c.l.b16 %v9642
    %v9713 = vunpack.c.l.b16 %v9643
    %v9714 = vunpack.c.l.b16 %v9644
    %v9715 = vunpack.c.l.b16 %v9645
    %v9716 = vunpack.c.l.b16 %v9646
    %v9717 = vunpack.c.l.b16 %v9647
    %v9718 = vunpack.c.l.b16 %v9648
    %v9719 = vunpack.c.l.b16 %v9649
    %v9720 = vunpack.c.l.b16 %v9650
    %v9721 = vunpack.c.l.b16 %v9651
    %v9722 = vunpack.c.l.b16 %v9652
    %v9723 = vunpack.c.l.b16 %v9653
    %v9724 = vunpack.c.l.b16 %v9654
    %v9725 = vunpack.c.l.b16 %v9655
    %v9726 = vunpack.c.l.b16 %v9656
    %v9727 = vunpack.c.l.b16 %v9657
    %v9728 = vunpack.c.l.b16 %v9658
    %v9729 = vunpack.c.l.b16 %v9659
    %v9730 = vunpack.c.l.b16 %v9660
    %v9731 = vunpack.c.l.b16 %v9661
    %v9732 = vunpack.c.l.b16 %v9662
    %v9733 = vunpack.c.l.b16 %v9663
    %v9734 = vpack.c.b16 %v9703, %v9702
    %v9735 = vpack.c.b16 %v9705, %v9704
    %v9736 = vpack.c.b16 %v9707, %v9706
    %v9737 = vpack.c.b16 %v9709, %v9708
    %v9738 = vpack.c.b16 %v9711, %v9710
    %v9739 = vpack.c.b16 %v9713, %v9712
    %v9740 = vpack.c.b16 %v9715, %v9714
    %v9741 = vpack.c.b16 %v9717, %v9716
    %v9742 = vpack.c.b16 %v9719, %v9718
    %v9743 = vpack.c.b16 %v9721, %v9720
    %v9744 = vpack.c.b16 %v9723, %v9722
    %v9745 = vpack.c.b16 %v9725, %v9724
    %v9746 = vpack.c.b16 %v9727, %v9726
    %v9747 = vpack.c.b16 %v9729, %v9728
    %v9748 = vpack.c.b16 %v9731, %v9730
    %v9749 = vpack.c.b16 %v9733, %v9732
    %9766 = vmatprep.subr.bf16.mxu0 0
    %9767 = vmatpush1.bf16.msra.mxu0 %v9734
    %9768 = vmatprep.subr.bf16.mxu0 0
    %9769 = vmatpush1.bf16.msra.mxu0 %v9735
    %9770 = vmatprep.subr.bf16.mxu0 0
    %9771 = vmatpush1.bf16.msra.mxu0 %v9736
    %9772 = vmatprep.subr.bf16.mxu0 0
    %9773 = vmatpush1.bf16.msra.mxu0 %v9737
    %9774 = vmatprep.subr.bf16.mxu0 0
    %9775 = vmatpush1.bf16.msra.mxu0 %v9738
    %9776 = vmatprep.subr.bf16.mxu0 0
    %9777 = vmatpush1.bf16.msra.mxu0 %v9739
    %9778 = vmatprep.subr.bf16.mxu0 0
    %9779 = vmatpush1.bf16.msra.mxu0 %v9740
    %9780 = vmatprep.subr.bf16.mxu0 0
    %9781 = vmatpush1.bf16.msra.mxu0 %v9741
    %9782 = vmatprep.subr.bf16.mxu0 0
    %9783 = vmatpush1.bf16.msra.mxu0 %v9742
    %9784 = vmatprep.subr.bf16.mxu0 0
    %9785 = vmatpush1.bf16.msra.mxu0 %v9743
    %9786 = vmatprep.subr.bf16.mxu0 0
    %9787 = vmatpush1.bf16.msra.mxu0 %v9744
    %9788 = vmatprep.subr.bf16.mxu0 0
    %9789 = vmatpush1.bf16.msra.mxu0 %v9745
    %9790 = vmatprep.subr.bf16.mxu0 0
    %9791 = vmatpush1.bf16.msra.mxu0 %v9746
    %9792 = vmatprep.subr.bf16.mxu0 0
    %9793 = vmatpush1.bf16.msra.mxu0 %v9747
    %9794 = vmatprep.subr.bf16.mxu0 0
    %9795 = vmatpush1.bf16.msra.mxu0 %v9748
    %9796 = vmatprep.subr.bf16.mxu0 0
    %9797 = vmatpush1.bf16.msra.mxu0 %v9749
    %9798 = vmatprep.mubr.bf16.mxu0 %v9625
    %9799 = vmatmul.mubr.bf16.gmra.mrb[0].mxu0 %v9624
    %v9800 = vpop.f32.mrb[0].mxu0
    %v9801 = vadd.f32 %v9668, %v9800
    %v9802 = vpop.f32.mrb[0].mxu0
    %v9803 = vpop.f32.mrb[0].mxu0
    %v9804 = vadd.f32 %v9668, %v9803
    %v9805 = vpop.f32.mrb[0].mxu0
    %9806 = vmatprep.mubr.bf16.mxu0 %v9627
    %9807 = vmatmul.mubr.bf16.gmra.mrb[0].mxu0 %v9626
    %v9808 = vpop.f32.mrb[0].mxu0
    %v9809 = vadd.f32 %v9668, %v9808
    %v9810 = vpop.f32.mrb[0].mxu0
    %v9811 = vpop.f32.mrb[0].mxu0
    %v9812 = vadd.f32 %v9668, %v9811
    %v9813 = vpop.f32.mrb[0].mxu0
    %9814 = vmatprep.mubr.bf16.mxu0 %v9629
    %9815 = vmatmul.mubr.bf16.gmra.mrb[0].mxu0 %v9628
    %v9816 = vpop.f32.mrb[0].mxu0
    %v9817 = vadd.f32 %v9668, %v9816
    %v9818 = vpop.f32.mrb[0].mxu0
    %v9819 = vpop.f32.mrb[0].mxu0
    %v9820 = vadd.f32 %v9668, %v9819
    %v9821 = vpop.f32.mrb[0].mxu0
    %9822 = vmatprep.mubr.bf16.mxu0 %v9631
    %9823 = vmatmul.mubr.bf16.gmra.mrb[0].mxu0 %v9630
    %v9824 = vpop.f32.mrb[0].mxu0
    %v9825 = vadd.f32 %v9668, %v9824
    %v9826 = vpop.f32.mrb[0].mxu0
    %v9827 = vpop.f32.mrb[0].mxu0
    %v9828 = vadd.f32 %v9668, %v9827
    %v9829 = vpop.f32.mrb[0].mxu0
    %9830 = vdwg.mxu0
    %9831 = vst [vmem:[%s12] sm:$0xff] %v9801
    %9832 = vst [vmem:[%s12 + $0x8] sm:$0xff] %v9804
    %9833 = vst [vmem:[%s12 + $0x10] sm:$0xff] %v9809
    %9834 = vst [vmem:[%s12 + $0x18] sm:$0xff] %v9812
    %9835 = vst [vmem:[%s12 + $0x20] sm:$0xff] %v9817
    %9836 = vst [vmem:[%s12 + $0x28] sm:$0xff] %v9820
    %9837 = vst [vmem:[%s12 + $0x30] sm:$0xff] %v9825
    %9838 = vst [vmem:[%s12 + $0x38] sm:$0xff] %v9828
    // Predicated region
    $region82: #{damus_voice_forward.1} parent=1 // pred_check
      _
    $region83: #{damus_voice_forward.1} parent=1 // pred_check_branch
      %9840 = sbr.rel (0) target = $region85
    $region84: #{damus_voice_forward.1} parent=1 // pred_region
      _
    $region85: #{damus_voice_forward.1} parent=1 // pred_fallthru
      _
    // Predicated region
    $region86: #{damus_voice_forward.1} parent=1 // pred_check
      _
    $region87: #{damus_voice_forward.1} parent=1 // pred_check_branch
      %9842 = sbr.rel (0) target = $region89
    $region88: #{damus_voice_forward.1} parent=1 // pred_region
      _
    $region89: #{damus_voice_forward.1} parent=1 // pred_fallthru
      _
    %9843 = vsyncpa [#allocation5], 1
    %9844 = vsyncpa [#allocation7], 1
    %9845 = vsyncpa [#allocation10], 1
    %9846 = vsyncpa [#allocation13], 1
    %9847 = vsyncpa [#allocation16], 1

</llo_original>
